<compile_context>
chip_gen: v5e
topology: v5e:2x2
jax: 0.10.0
libtpu: 0.0.40
codegen_flags: <defaults>
</compile_context>

<pallas_src>
import functools

import jax
import jax.numpy as jnp
from jax.experimental import pallas as pl
from jax.experimental.pallas import tpu as pltpu

_EPS = 1e-5                       # torch.nn.InstanceNorm1d default eps


def _tpu_vmem_bytes():
    try:
        return int(pltpu.get_tpu_info().vmem_capacity_bytes)
    except Exception:             # conservative fallback (v7x-sized VMEM)
        return 64 * 1024 * 1024


_VMEM_PHYS = _tpu_vmem_bytes()
_VMEM_LIMIT_BYTES = min(int(_VMEM_PHYS * 0.75), 112 * 1024 * 1024)
_BIG_VMEM = _VMEM_PHYS >= 96 * 1024 * 1024
_COUT_CAP = 512 if _BIG_VMEM else 128       # channel-tile cap
_W_CAP = 2048 if _BIG_VMEM else 1024        # time-tile cap


def _cparams(semantics):
    return pltpu.CompilerParams(dimension_semantics=semantics,
                                vmem_limit_bytes=_VMEM_LIMIT_BYTES)


def _pick_tile(n, cap, align=128):
    """Largest divisor of n <= cap, preferring 128-, then 8-aligned tiles."""
    if n <= cap:
        return n
    for a in (align, 8):
        t = (cap // a) * a
        while t >= a:
            if n % t == 0:
                return t
            t -= a
    return n   # nothing divides: fall back to the full dimension


# ---------------------------------------------------------------------------
# Fused conv kernel: taps accumulated in VMEM + bias [+ReLU] [+res] [+IN]
# ---------------------------------------------------------------------------
def _conv_kernel(x_ref, w_ref, b_ref, *rest, k, s, pad, w_in, wo, ct,
                 relu, residual, norm, eps, use_scratch):
    i = 0
    if norm:
        g_ref, be_ref = rest[0], rest[1]
        i = 2
    o_ref = rest[i]
    xpad_ref = rest[i + 1] if use_scratch else None

    if s == 1:
        if use_scratch:
            # Build the zero-padded input in VMEM: no HBM pad pass in the wrapper.
            xv = x_ref[0].astype(jnp.bfloat16)              # (cin, w_in)
            cin = xv.shape[0]
            zpad = jnp.zeros((cin, pad), jnp.bfloat16)
            xpad_ref[:, 0:pad] = zpad
            xpad_ref[:, pad + w_in:pad + w_in + pad] = zpad
            xpad_ref[:, pad:pad + w_in] = xv

            def tap(j):
                return xpad_ref[:, j:j + wo]
        else:                                               # pad == 0 (1x1 conv)
            def tap(j):
                return x_ref[0, :, j:j + wo].astype(jnp.bfloat16)
    else:
        # Polyphase view: tap j reads phase (j % s) at offset (j // s).
        def tap(j):
            r, q = j % s, j // s
            return x_ref[r, 0, :, q:q + wo].astype(jnp.bfloat16)

    acc = jnp.zeros((ct, wo), jnp.float32)
    for j in range(k):                    # all taps accumulate inside one step
        acc = acc + jnp.dot(w_ref[j], tap(j), preferred_element_type=jnp.float32)
    acc = acc + b_ref[...]                # (ct, 1) broadcast over lanes
    if relu:
        acc = jnp.maximum(acc, 0.0)
    if residual:                          # torch: ReLU(conv(x)) + x
        c0 = pl.program_id(1) * ct
        if ct % 8 == 0:
            c0 = pl.multiple_of(c0, 8)
        acc = acc + x_ref[0, pl.ds(c0, ct), :].astype(jnp.float32)
    if norm:                              # InstanceNorm1d, centered f32 variance
        mean = jnp.mean(acc, axis=1, keepdims=True)
        cen = acc - mean
        var = jnp.mean(cen * cen, axis=1, keepdims=True)
        acc = cen * jax.lax.rsqrt(var + eps) * g_ref[...] + be_ref[...]
    o_ref[0] = acc.astype(o_ref.dtype)


def conv1d_fused(x, wt, bias, *, stride=1, padding=0, relu=False,
                 residual=False, norm=False, gamma=None, beta=None,
                 out_dtype=jnp.bfloat16, eps=_EPS):
    """Fused 1-D conv (+bias [+ReLU] [+residual] [+InstanceNorm1d(affine)]).

    x: (B, Cin, W); wt: (k, Cout, Cin); bias: (Cout,) -> (B, Cout, Wo).
    """
    B, cin, W = x.shape
    k, cout, _ = wt.shape
    s, p = stride, padding
    wo = (W + 2 * p - k) // s + 1
    assert wo >= 1
    if residual:
        assert s == 1 and cin == cout and p == k // 2

    ct = _pick_tile(cout, _COUT_CAP)
    grid = (B, cout // ct)

    use_scratch = (s == 1 and p > 0)
    scratch = [pltpu.VMEM((cin, W + 2 * p), jnp.bfloat16)] if use_scratch else []

    if s == 1:
        xs = x                                  # raw input: zero extra HBM passes
        x_spec = pl.BlockSpec((1, cin, W), lambda b, c: (b, 0, 0))
    else:
        # Strided conv: build the s polyphase views once in the wrapper
        # (~1x extra HBM pass; only the single per-group stride conv hits it).
        # TODO(synk): move the phase split in-kernel once lane-strided
        # pl.ds(..., stride=s) loads lower reliably on all generations.
        xp = jnp.pad(x, ((0, 0), (0, 0), (p, p)))
        wp = W + 2 * p
        lp = -(-wp // s)
        phases = []
        for r in range(s):
            ph = xp[:, :, r::s]
            if ph.shape[-1] < lp:
                ph = jnp.pad(ph, ((0, 0), (0, 0), (0, lp - ph.shape[-1])))
            phases.append(ph)
        xs = jnp.stack(phases, axis=0)          # (s, B, Cin, Lp)
        x_spec = pl.BlockSpec((s, 1, cin, lp), lambda b, c: (0, b, 0, 0))

    in_specs = [
        x_spec,
        pl.BlockSpec((k, ct, cin), lambda b, c: (0, c, 0)),
        pl.BlockSpec((ct, 1), lambda b, c: (c, 0)),
    ]
    args = [xs, wt.astype(jnp.bfloat16),
            bias.reshape(cout, 1).astype(jnp.float32)]
    if norm:
        in_specs += [pl.BlockSpec((ct, 1), lambda b, c: (c, 0)),
                     pl.BlockSpec((ct, 1), lambda b, c: (c, 0))]
        args += [gamma.reshape(cout, 1).astype(jnp.float32),
                 beta.reshape(cout, 1).astype(jnp.float32)]

    kernel = functools.partial(
        _conv_kernel, k=k, s=s, pad=p, w_in=W, wo=wo, ct=ct, relu=relu,
        residual=residual, norm=norm, eps=eps, use_scratch=use_scratch)

    cost = pl.CostEstimate(
        flops=2 * B * cout * cin * k * wo,
        transcendentals=(B * cout) if norm else 0,
        bytes_accessed=int(xs.size * xs.dtype.itemsize + wt.size * 2
                           + B * cout * wo * jnp.dtype(out_dtype).itemsize))

    return pl.pallas_call(
        kernel,
        out_shape=jax.ShapeDtypeStruct((B, cout, wo), out_dtype),
        grid=grid,
        in_specs=in_specs,
        out_specs=pl.BlockSpec((1, ct, wo), lambda b, c: (b, c, 0)),
        scratch_shapes=scratch,
        # batch axis "parallel" (megacore split stays on b), cout-tile axis
        # "arbitrary" so both TensorCores never duplicate the shared x block.
        compiler_params=_cparams(("parallel", "arbitrary")),
        cost_estimate=cost,
    )(*args)


# ---------------------------------------------------------------------------
# Fused fc1 -> ReLU -> fc2 -> +residual [-> InstanceNorm1d]
# ---------------------------------------------------------------------------
def _mlp_kernel(x_ref, w1_ref, b1_ref, w2_ref, b2_ref, *rest, norm, eps):
    if norm:
        g_ref, be_ref, o_ref = rest
    else:
        (o_ref,) = rest
    x = x_ref[0]                                                   # (CH, tw)
    xb = x.astype(jnp.bfloat16)
    h = jnp.dot(w1_ref[...], xb, preferred_element_type=jnp.float32) + b1_ref[...]
    h = jnp.maximum(h, 0.0).astype(jnp.bfloat16)
    y = jnp.dot(w2_ref[...], h, preferred_element_type=jnp.float32) + b2_ref[...]
    y = y + x.astype(jnp.float32)                                  # fused residual
    if norm:                                                       # fused InstanceNorm1d
        mean = jnp.mean(y, axis=1, keepdims=True)
        cen = y - mean
        var = jnp.mean(cen * cen, axis=1, keepdims=True)
        y = cen * jax.lax.rsqrt(var + eps) * g_ref[...] + be_ref[...]
    o_ref[0] = y.astype(o_ref.dtype)


def mlp_block_fused(x, w1, b1, w2, b2, gamma, beta, *, out_dtype=jnp.bfloat16,
                    eps=_EPS):
    """InstanceNorm1d(fc2(relu(fc1(x))) + x) on channels-first (B, CH, W).

    fc1/fc2 are left matmuls over the channel axis (time stays on lanes); the
    fc1 activation, the residual add and -- whenever W fits one time tile --
    the InstanceNorm all stay in VMEM (one HBM round trip per block).
    """
    B, ch, W = x.shape
    tw = W if W <= _W_CAP else _pick_tile(W, _W_CAP, align=128)
    norm_fused = (tw == W)
    grid = (B, W // tw)

    in_specs = [
        pl.BlockSpec((1, ch, tw), lambda b, t: (b, 0, t)),
        pl.BlockSpec((ch, ch), lambda b, t: (0, 0)),
        pl.BlockSpec((ch, 1), lambda b, t: (0, 0)),
        pl.BlockSpec((ch, ch), lambda b, t: (0, 0)),
        pl.BlockSpec((ch, 1), lambda b, t: (0, 0)),
    ]
    args = [x, w1.astype(jnp.bfloat16), b1.reshape(ch, 1).astype(jnp.float32),
            w2.astype(jnp.bfloat16), b2.reshape(ch, 1).astype(jnp.float32)]
    if norm_fused:
        in_specs += [pl.BlockSpec((ch, 1), lambda b, t: (0, 0)),
                     pl.BlockSpec((ch, 1), lambda b, t: (0, 0))]
        args += [gamma.reshape(ch, 1).astype(jnp.float32),
                 beta.reshape(ch, 1).astype(jnp.float32)]

    cost = pl.CostEstimate(
        flops=4 * B * ch * ch * W,
        transcendentals=(B * ch) if norm_fused else 0,
        bytes_accessed=int(2 * x.size * x.dtype.itemsize + 4 * ch * ch))

    y = pl.pallas_call(
        functools.partial(_mlp_kernel, norm=norm_fused, eps=eps),
        out_shape=jax.ShapeDtypeStruct((B, ch, W), out_dtype),
        grid=grid,
        in_specs=in_specs,
        out_specs=pl.BlockSpec((1, ch, tw), lambda b, t: (b, 0, t)),
        compiler_params=_cparams(("parallel", "parallel")),
        cost_estimate=cost,
    )(*args)
    if not norm_fused:
        y = instance_norm(y, gamma, beta, eps=eps, out_dtype=out_dtype)
    return y


# ---------------------------------------------------------------------------
# Standalone InstanceNorm1d(affine): only used when W is too long to fuse
# the norm into the MLP kernel (time axis had to be tiled).
# ---------------------------------------------------------------------------
def _in_kernel(x_ref, g_ref, b_ref, o_ref, *, eps):
    v = x_ref[0].astype(jnp.float32)
    mean = jnp.mean(v, axis=1, keepdims=True)
    cen = v - mean
    var = jnp.mean(cen * cen, axis=1, keepdims=True)
    o_ref[0] = (cen * jax.lax.rsqrt(var + eps) * g_ref[...]
                + b_ref[...]).astype(o_ref.dtype)


def instance_norm(x, gamma, beta, *, eps=_EPS, out_dtype=jnp.bfloat16):
    B, C, W = x.shape
    ct = _pick_tile(C, _COUT_CAP)
    return pl.pallas_call(
        functools.partial(_in_kernel, eps=eps),
        out_shape=jax.ShapeDtypeStruct((B, C, W), out_dtype),
        grid=(B, C // ct),
        in_specs=[pl.BlockSpec((1, ct, W), lambda b, c: (b, c, 0)),
                  pl.BlockSpec((ct, 1), lambda b, c: (c, 0)),
                  pl.BlockSpec((ct, 1), lambda b, c: (c, 0))],
        out_specs=pl.BlockSpec((1, ct, W), lambda b, c: (b, c, 0)),
        compiler_params=_cparams(("parallel", "parallel")),
    )(x, gamma.reshape(C, 1).astype(jnp.float32),
      beta.reshape(C, 1).astype(jnp.float32))


# ---------------------------------------------------------------------------
# Parameter initialization (deterministic, synthetic; torch shapes/semantics)
# ---------------------------------------------------------------------------
def _randn(key, shape, scale=0.1):
    return scale * jax.random.normal(key, shape, dtype=jnp.float32)


def init_tds_block(key, channels, num_features, kernel_size):
    """TDSBlock(in_channels=channels, num_features, kernel_size) parameters."""
    C, H, k = channels, num_features, kernel_size
    ch = C * H
    ks = jax.random.split(key, 10)
    w_conv = _randn(ks[0], (C, C, k))            # torch Conv2d(C, C, (1, k)) weight
    b_conv = _randn(ks[1], (C,))
    # Pre-expand each tap to kron(w_j, I_H): the per-feature-row (1, k) conv on
    # the (B, C, H, W) view becomes one lane-dense (CH, CH) @ (CH, W) matmul on
    # the flat (B, CH, W) layout (no activation reshape/transpose needed).
    eye = jnp.eye(H, dtype=jnp.float32)
    w_kron = jnp.stack([jnp.kron(w_conv[:, :, j], eye) for j in range(k)], 0)
    return {
        "conv_w": w_kron.astype(jnp.bfloat16),   # (k, CH, CH)
        "conv_b": jnp.repeat(b_conv, H),         # flat channel c*H + h -> bias[c]
        "fc1_w": _randn(ks[2], (ch, ch)).astype(jnp.bfloat16),
        "fc1_b": _randn(ks[3], (ch,)),
        "fc2_w": _randn(ks[4], (ch, ch)).astype(jnp.bfloat16),
        "fc2_b": _randn(ks[5], (ch,)),
        "in0_g": 1.0 + _randn(ks[6], (ch,)),
        "in0_b": _randn(ks[7], (ch,)),
        "in1_g": 1.0 + _randn(ks[8], (ch,)),
        "in1_b": _randn(ks[9], (ch,)),
    }


def init_tds(key, input_size, output_size, tds_groups, kernel_size, dropout=0.0):
    # TODO(synk): dropout is the identity here (p=0 / eval mode); training-mode
    # RNG dropout masks are not implemented.
    del dropout
    params = {"kernel_size": kernel_size, "groups": []}
    in_ch = input_size
    for g in tds_groups:
        out_ch = input_size * g["channels"]
        key, k0, k1, k2, k3 = jax.random.split(key, 5)
        gp = {
            # torch Conv1d weight (Cout, Cin, k), stored per-tap as (k, Cout, Cin)
            "conv_w": jnp.transpose(_randn(k0, (out_ch, in_ch, kernel_size)),
                                    (2, 0, 1)).astype(jnp.bfloat16),
            "conv_b": _randn(k1, (out_ch,)),
            "in_g": 1.0 + _randn(k2, (out_ch,)),
            "in_b": _randn(k3, (out_ch,)),
            "stride": int(g.get("stride", 2)),
            "blocks": [],
        }
        for _ in range(g["num_blocks"]):
            key, bk = jax.random.split(key)
            gp["blocks"].append(
                init_tds_block(bk, g["channels"], input_size, kernel_size))
        params["groups"].append(gp)
        in_ch = out_ch
    key, kl1, kl2 = jax.random.split(key, 3)
    # Final torch Linear (out, in) stored as a 1-tap conv weight (1, out, in).
    params["lin_w"] = _randn(kl1, (output_size, in_ch))[None].astype(jnp.bfloat16)
    params["lin_b"] = _randn(kl2, (output_size,))
    return params


# ---------------------------------------------------------------------------
# Forward passes
# ---------------------------------------------------------------------------
def tds_block_forward(x, p, kernel_size):
    """TDSBlock.forward on channels-first (B, CH, W) -- two fused kernels."""
    k = kernel_size
    # conv(+bias) + ReLU + residual + InstanceNorm0, fused in ONE kernel.
    y = conv1d_fused(x, p["conv_w"], p["conv_b"], stride=1, padding=k // 2,
                     relu=True, residual=True, norm=True,
                     gamma=p["in0_g"], beta=p["in0_b"])
    # fc1 -> ReLU -> fc2 -> +residual -> InstanceNorm1, fused in ONE kernel.
    return mlp_block_fused(y, p["fc1_w"], p["fc1_b"], p["fc2_w"], p["fc2_b"],
                           p["in1_g"], p["in1_b"])


def tds_forward(x, params):
    """TDS.forward: x (B, input_size, T) -> (B, T_out, output_size)."""
    k = params["kernel_size"]
    out = x
    for g in params["groups"]:
        # group Conv1d + ReLU + InstanceNorm1d, fused in ONE kernel.
        out = conv1d_fused(out, g["conv_w"], g["conv_b"], stride=g["stride"],
                           padding=k // 2, relu=True, norm=True,
                           gamma=g["in_g"], beta=g["in_b"])
        for bp in g["blocks"]:
            out = tds_block_forward(out, bp, k)
    # Final Linear == 1x1 conv in channels-first layout; only the small logits
    # tensor (B, output_size, T_out) is transposed at the very end.
    out = conv1d_fused(out, params["lin_w"], params["lin_b"],
                       stride=1, padding=0, out_dtype=jnp.float32)
    return jnp.transpose(out, (0, 2, 1))


# ---------------------------------------------------------------------------
if __name__ == "__main__":
    key = jax.random.PRNGKey(0)

    input_size = 16          # number of input channels == num_features per block
    output_size = 10
    kernel_size = 3
    tds_groups = [
        {"channels": 2, "num_blocks": 2, "stride": 2},
        {"channels": 3, "num_blocks": 2, "stride": 2},
    ]

    pkey, xkey = jax.random.split(key)
    params = init_tds(pkey, input_size, output_size, tds_groups, kernel_size,
                      dropout=0.0)

    B, T = 2, 32
    x = jax.random.normal(xkey, (B, input_size, T), dtype=jnp.float32)

    fwd = jax.jit(lambda inp: tds_forward(inp, params))
    out = jax.block_until_ready(fwd(x))

    T_out = T // 4           # two stride-2 groups
    assert out.shape == (B, T_out, output_size), out.shape
    assert bool(jnp.all(jnp.isfinite(out)))
    print("KERNEL_OK")
</pallas_src>

<mosaic_0001>
module attributes {stable_mosaic.version = 11 : i64} {
  func.func @_conv_kernel(%arg0: i32, %arg1: i32, %arg2: memref<1x32x16xbf16, #tpu.memory_space<vmem>>, %arg3: memref<3x32x32xbf16, #tpu.memory_space<vmem>>, %arg4: memref<32x1xf32, #tpu.memory_space<vmem>>, %arg5: memref<32x1xf32, #tpu.memory_space<vmem>>, %arg6: memref<32x1xf32, #tpu.memory_space<vmem>>, %arg7: memref<1x32x16xbf16, #tpu.memory_space<vmem>>, %arg8: memref<32x18xbf16, #tpu.memory_space<vmem>>) attributes {dimension_semantics = [#tpu.dimension_semantics<parallel>, #tpu.dimension_semantics<arbitrary>], iteration_bounds = array<i64: 2, 1>, scalar_prefetch = 0 : i64, scratch_operands = 1 : i64, tpu.core_type = #tpu.core_type<tc>, window_params = [{transform_indices = @transform_0, window_bounds = array<i64: 1, 32, 16>}, {transform_indices = @transform_1, window_bounds = array<i64: 3, 32, 32>}, {transform_indices = @transform_2, window_bounds = array<i64: 32, 1>}, {transform_indices = @transform_3, window_bounds = array<i64: 32, 1>}, {transform_indices = @transform_4, window_bounds = array<i64: 32, 1>}, {transform_indices = @transform_5, window_bounds = array<i64: 1, 32, 16>}]} {
    %c0 = arith.constant 0 : index
    %c0_0 = arith.constant 0 : index
    %c0_1 = arith.constant 0 : index
    %0 = vector.load %arg2[%c0, %c0_0, %c0_1] : memref<1x32x16xbf16, #tpu.memory_space<vmem>>, vector<1x32x16xbf16>
    %1 = vector.shape_cast %0 : vector<1x32x16xbf16> to vector<32x16xbf16>
    %cst = arith.constant 0.000000e+00 : bf16
    %2 = vector.broadcast %cst : bf16 to vector<32x1xbf16>
    %c0_2 = arith.constant 0 : index
    %c0_3 = arith.constant 0 : index
    %3 = vector.load %arg8[%c0_2, %c0_3] : memref<32x18xbf16, #tpu.memory_space<vmem>>, vector<32x1xbf16>
    tpu.vector_store %arg8[%c0_2, %c0_3], %2 {strides = array<i32>} : memref<32x18xbf16, #tpu.memory_space<vmem>>, vector<32x1xbf16>,
    %c0_4 = arith.constant 0 : index
    %c17 = arith.constant 17 : index
    %4 = vector.load %arg8[%c0_4, %c17] : memref<32x18xbf16, #tpu.memory_space<vmem>>, vector<32x1xbf16>
    tpu.vector_store %arg8[%c0_4, %c17], %2 {strides = array<i32>} : memref<32x18xbf16, #tpu.memory_space<vmem>>, vector<32x1xbf16>,
    %c0_5 = arith.constant 0 : index
    %c1 = arith.constant 1 : index
    %5 = vector.load %arg8[%c0_5, %c1] : memref<32x18xbf16, #tpu.memory_space<vmem>>, vector<32x16xbf16>
    tpu.vector_store %arg8[%c0_5, %c1], %1 {strides = array<i32>} : memref<32x18xbf16, #tpu.memory_space<vmem>>, vector<32x16xbf16>,
    %cst_6 = arith.constant 0.000000e+00 : f32
    %6 = vector.broadcast %cst_6 : f32 to vector<32x16xf32>
    %c0_7 = arith.constant 0 : index
    %c0_8 = arith.constant 0 : index
    %c0_9 = arith.constant 0 : index
    %7 = vector.load %arg3[%c0_7, %c0_8, %c0_9] : memref<3x32x32xbf16, #tpu.memory_space<vmem>>, vector<1x32x32xbf16>
    %8 = vector.shape_cast %7 : vector<1x32x32xbf16> to vector<32x32xbf16>
    %c0_10 = arith.constant 0 : index
    %c0_11 = arith.constant 0 : index
    %9 = vector.load %arg8[%c0_10, %c0_11] : memref<32x18xbf16, #tpu.memory_space<vmem>>, vector<32x16xbf16>
    %cst_12 = arith.constant dense<0.000000e+00> : vector<32x16xf32>
    %10 = tpu.matmul %8, %9, %cst_12 {dimension_numbers = #tpu.dot_dimension_numbers<[1], [0], [0], [1], [0, 0, 1, 1], [], []>} : vector<32x32xbf16>, vector<32x16xbf16>, vector<32x16xf32> -> vector<32x16xf32>
    %11 = arith.addf %6, %10 : vector<32x16xf32>
    %c1_13 = arith.constant 1 : index
    %c0_14 = arith.constant 0 : index
    %c0_15 = arith.constant 0 : index
    %12 = vector.load %arg3[%c1_13, %c0_14, %c0_15] : memref<3x32x32xbf16, #tpu.memory_space<vmem>>, vector<1x32x32xbf16>
    %13 = vector.shape_cast %12 : vector<1x32x32xbf16> to vector<32x32xbf16>
    %c0_16 = arith.constant 0 : index
    %c1_17 = arith.constant 1 : index
    %14 = vector.load %arg8[%c0_16, %c1_17] : memref<32x18xbf16, #tpu.memory_space<vmem>>, vector<32x16xbf16>
    %cst_18 = arith.constant dense<0.000000e+00> : vector<32x16xf32>
    %15 = tpu.matmul %13, %14, %cst_18 {dimension_numbers = #tpu.dot_dimension_numbers<[1], [0], [0], [1], [0, 0, 1, 1], [], []>} : vector<32x32xbf16>, vector<32x16xbf16>, vector<32x16xf32> -> vector<32x16xf32>
    %16 = arith.addf %11, %15 : vector<32x16xf32>
    %c2 = arith.constant 2 : index
    %c0_19 = arith.constant 0 : index
    %c0_20 = arith.constant 0 : index
    %17 = vector.load %arg3[%c2, %c0_19, %c0_20] : memref<3x32x32xbf16, #tpu.memory_space<vmem>>, vector<1x32x32xbf16>
    %18 = vector.shape_cast %17 : vector<1x32x32xbf16> to vector<32x32xbf16>
    %c0_21 = arith.constant 0 : index
    %c2_22 = arith.constant 2 : index
    %19 = vector.load %arg8[%c0_21, %c2_22] : memref<32x18xbf16, #tpu.memory_space<vmem>>, vector<32x16xbf16>
    %cst_23 = arith.constant dense<0.000000e+00> : vector<32x16xf32>
    %20 = tpu.matmul %18, %19, %cst_23 {dimension_numbers = #tpu.dot_dimension_numbers<[1], [0], [0], [1], [0, 0, 1, 1], [], []>} : vector<32x32xbf16>, vector<32x16xbf16>, vector<32x16xf32> -> vector<32x16xf32>
    %21 = arith.addf %16, %20 : vector<32x16xf32>
    %c0_24 = arith.constant 0 : index
    %c0_25 = arith.constant 0 : index
    %22 = vector.load %arg4[%c0_24, %c0_25] : memref<32x1xf32, #tpu.memory_space<vmem>>, vector<32x1xf32>
    %23 = vector.broadcast %22 : vector<32x1xf32> to vector<32x16xf32>
    %24 = arith.addf %21, %23 : vector<32x16xf32>
    %cst_26 = arith.constant 0.000000e+00 : f32
    %25 = vector.broadcast %cst_26 : f32 to vector<32x16xf32>
    %26 = arith.maximumf %24, %25 : vector<32x16xf32>
    %c32_i32 = arith.constant 32 : i32
    %27 = arith.muli %arg1, %c32_i32 : i32
    %28 = tpu.assume_multiple %27, 8 : i32
    %c0_27 = arith.constant 0 : index
    %29 = arith.index_cast %28 : i32 to index
    %c0_28 = arith.constant 0 : index
    %30 = vector.load %arg2[%c0_27, %29, %c0_28] : memref<1x32x16xbf16, #tpu.memory_space<vmem>>, vector<1x32x16xbf16>
    %31 = vector.shape_cast %30 : vector<1x32x16xbf16> to vector<32x16xbf16>
    %32 = arith.extf %31 : vector<32x16xbf16> to vector<32x16xf32>
    %33 = arith.addf %26, %32 : vector<32x16xf32>
    %cst_29 = arith.constant dense<0.000000e+00> : vector<32xf32>
    %34 = vector.multi_reduction <add>, %33, %cst_29 [1] : vector<32x16xf32> to vector<32xf32>
    %35 = vector.shape_cast %34 : vector<32xf32> to vector<32x1xf32>
    %cst_30 = arith.constant 1.600000e+01 : f32
    %36 = vector.broadcast %cst_30 : f32 to vector<32x1xf32>
    %37 = arith.divf %35, %36 : vector<32x1xf32>
    %38 = vector.broadcast %37 : vector<32x1xf32> to vector<32x16xf32>
    %39 = arith.subf %33, %38 : vector<32x16xf32>
    %40 = arith.mulf %39, %39 : vector<32x16xf32>
    %cst_31 = arith.constant dense<0.000000e+00> : vector<32xf32>
    %41 = vector.multi_reduction <add>, %40, %cst_31 [1] : vector<32x16xf32> to vector<32xf32>
    %42 = vector.shape_cast %41 : vector<32xf32> to vector<32x1xf32>
    %cst_32 = arith.constant 1.600000e+01 : f32
    %43 = vector.broadcast %cst_32 : f32 to vector<32x1xf32>
    %44 = arith.divf %42, %43 : vector<32x1xf32>
    %cst_33 = arith.constant 9.99999974E-6 : f32
    %45 = vector.broadcast %cst_33 : f32 to vector<32x1xf32>
    %46 = arith.addf %44, %45 : vector<32x1xf32>
    %47 = math.rsqrt %46 : vector<32x1xf32>
    %48 = vector.broadcast %47 : vector<32x1xf32> to vector<32x16xf32>
    %49 = arith.mulf %39, %48 : vector<32x16xf32>
    %c0_34 = arith.constant 0 : index
    %c0_35 = arith.constant 0 : index
    %50 = vector.load %arg5[%c0_34, %c0_35] : memref<32x1xf32, #tpu.memory_space<vmem>>, vector<32x1xf32>
    %51 = vector.broadcast %50 : vector<32x1xf32> to vector<32x16xf32>
    %52 = arith.mulf %49, %51 : vector<32x16xf32>
    %c0_36 = arith.constant 0 : index
    %c0_37 = arith.constant 0 : index
    %53 = vector.load %arg6[%c0_36, %c0_37] : memref<32x1xf32, #tpu.memory_space<vmem>>, vector<32x1xf32>
    %54 = vector.broadcast %53 : vector<32x1xf32> to vector<32x16xf32>
    %55 = arith.addf %52, %54 : vector<32x16xf32>
    %56 = arith.truncf %55 : vector<32x16xf32> to vector<32x16xbf16>
    %c0_38 = arith.constant 0 : index
    %c0_39 = arith.constant 0 : index
    %c0_40 = arith.constant 0 : index
    %57 = vector.load %arg7[%c0_38, %c0_39, %c0_40] : memref<1x32x16xbf16, #tpu.memory_space<vmem>>, vector<1x32x16xbf16>
    %58 = vector.shape_cast %57 : vector<1x32x16xbf16> to vector<32x16xbf16>
    %59 = vector.shape_cast %56 : vector<32x16xbf16> to vector<1x32x16xbf16>
    tpu.vector_store %arg7[%c0_38, %c0_39, %c0_40], %59 {strides = array<i32>} : memref<1x32x16xbf16, #tpu.memory_space<vmem>>, vector<1x32x16xbf16>,
    return
  }
  func.func @transform_0(%arg0: i32, %arg1: i32) -> (i32, i32, i32) {
    %c0_i32 = arith.constant 0 : i32
    %c0_i32_0 = arith.constant 0 : i32
    %c0_i32_1 = arith.constant 0 : i32
    return %arg0, %c0_i32, %c0_i32_0 : i32, i32, i32
  }
  func.func @transform_1(%arg0: i32, %arg1: i32) -> (i32, i32, i32) {
    %c0_i32 = arith.constant 0 : i32
    %c0_i32_0 = arith.constant 0 : i32
    %c0_i32_1 = arith.constant 0 : i32
    return %c0_i32, %arg1, %c0_i32_0 : i32, i32, i32
  }
  func.func @transform_2(%arg0: i32, %arg1: i32) -> (i32, i32) {
    %c0_i32 = arith.constant 0 : i32
    %c0_i32_0 = arith.constant 0 : i32
    return %arg1, %c0_i32 : i32, i32
  }
  func.func @transform_3(%arg0: i32, %arg1: i32) -> (i32, i32) {
    %c0_i32 = arith.constant 0 : i32
    %c0_i32_0 = arith.constant 0 : i32
    return %arg1, %c0_i32 : i32, i32
  }
  func.func @transform_4(%arg0: i32, %arg1: i32) -> (i32, i32) {
    %c0_i32 = arith.constant 0 : i32
    %c0_i32_0 = arith.constant 0 : i32
    return %arg1, %c0_i32 : i32, i32
  }
  func.func @transform_5(%arg0: i32, %arg1: i32) -> (i32, i32, i32) {
    %c0_i32 = arith.constant 0 : i32
    %c0_i32_0 = arith.constant 0 : i32
    return %arg0, %arg1, %c0_i32 : i32, i32, i32
  }
}

module attributes {stable_mosaic.version = 11 : i64} {
  func.func @_mlp_kernel(%arg0: i32, %arg1: i32, %arg2: memref<1x32x16xbf16, #tpu.memory_space<vmem>>, %arg3: memref<32x32xbf16, #tpu.memory_space<vmem>>, %arg4: memref<32x1xf32, #tpu.memory_space<vmem>>, %arg5: memref<32x32xbf16, #tpu.memory_space<vmem>>, %arg6: memref<32x1xf32, #tpu.memory_space<vmem>>, %arg7: memref<32x1xf32, #tpu.memory_space<vmem>>, %arg8: memref<32x1xf32, #tpu.memory_space<vmem>>, %arg9: memref<1x32x16xbf16, #tpu.memory_space<vmem>>) attributes {dimension_semantics = [#tpu.dimension_semantics<parallel>, #tpu.dimension_semantics<parallel>], iteration_bounds = array<i64: 2, 1>, scalar_prefetch = 0 : i64, scratch_operands = 0 : i64, tpu.core_type = #tpu.core_type<tc>, window_params = [{transform_indices = @transform_0, window_bounds = array<i64: 1, 32, 16>}, {pipeline_mode = #tpu.pipeline_mode<synchronous>, transform_indices = @transform_1, window_bounds = array<i64: 32, 32>}, {pipeline_mode = #tpu.pipeline_mode<synchronous>, transform_indices = @transform_2, window_bounds = array<i64: 32, 1>}, {pipeline_mode = #tpu.pipeline_mode<synchronous>, transform_indices = @transform_3, window_bounds = array<i64: 32, 32>}, {pipeline_mode = #tpu.pipeline_mode<synchronous>, transform_indices = @transform_4, window_bounds = array<i64: 32, 1>}, {pipeline_mode = #tpu.pipeline_mode<synchronous>, transform_indices = @transform_5, window_bounds = array<i64: 32, 1>}, {pipeline_mode = #tpu.pipeline_mode<synchronous>, transform_indices = @transform_6, window_bounds = array<i64: 32, 1>}, {transform_indices = @transform_7, window_bounds = array<i64: 1, 32, 16>}]} {
    %c0 = arith.constant 0 : index
    %c0_0 = arith.constant 0 : index
    %c0_1 = arith.constant 0 : index
    %0 = vector.load %arg2[%c0, %c0_0, %c0_1] : memref<1x32x16xbf16, #tpu.memory_space<vmem>>, vector<1x32x16xbf16>
    %1 = vector.shape_cast %0 : vector<1x32x16xbf16> to vector<32x16xbf16>
    %c0_2 = arith.constant 0 : index
    %c0_3 = arith.constant 0 : index
    %2 = vector.load %arg3[%c0_2, %c0_3] : memref<32x32xbf16, #tpu.memory_space<vmem>>, vector<32x32xbf16>
    %cst = arith.constant dense<0.000000e+00> : vector<32x16xf32>
    %3 = tpu.matmul %2, %1, %cst {dimension_numbers = #tpu.dot_dimension_numbers<[1], [0], [0], [1], [0, 0, 1, 1], [], []>} : vector<32x32xbf16>, vector<32x16xbf16>, vector<32x16xf32> -> vector<32x16xf32>
    %c0_4 = arith.constant 0 : index
    %c0_5 = arith.constant 0 : index
    %4 = vector.load %arg4[%c0_4, %c0_5] : memref<32x1xf32, #tpu.memory_space<vmem>>, vector<32x1xf32>
    %5 = vector.broadcast %4 : vector<32x1xf32> to vector<32x16xf32>
    %6 = arith.addf %3, %5 : vector<32x16xf32>
    %cst_6 = arith.constant 0.000000e+00 : f32
    %7 = vector.broadcast %cst_6 : f32 to vector<32x16xf32>
    %8 = arith.maximumf %6, %7 : vector<32x16xf32>
    %9 = arith.truncf %8 : vector<32x16xf32> to vector<32x16xbf16>
    %c0_7 = arith.constant 0 : index
    %c0_8 = arith.constant 0 : index
    %10 = vector.load %arg5[%c0_7, %c0_8] : memref<32x32xbf16, #tpu.memory_space<vmem>>, vector<32x32xbf16>
    %cst_9 = arith.constant dense<0.000000e+00> : vector<32x16xf32>
    %11 = tpu.matmul %10, %9, %cst_9 {dimension_numbers = #tpu.dot_dimension_numbers<[1], [0], [0], [1], [0, 0, 1, 1], [], []>} : vector<32x32xbf16>, vector<32x16xbf16>, vector<32x16xf32> -> vector<32x16xf32>
    %c0_10 = arith.constant 0 : index
    %c0_11 = arith.constant 0 : index
    %12 = vector.load %arg6[%c0_10, %c0_11] : memref<32x1xf32, #tpu.memory_space<vmem>>, vector<32x1xf32>
    %13 = vector.broadcast %12 : vector<32x1xf32> to vector<32x16xf32>
    %14 = arith.addf %11, %13 : vector<32x16xf32>
    %15 = arith.extf %1 : vector<32x16xbf16> to vector<32x16xf32>
    %16 = arith.addf %14, %15 : vector<32x16xf32>
    %cst_12 = arith.constant dense<0.000000e+00> : vector<32xf32>
    %17 = vector.multi_reduction <add>, %16, %cst_12 [1] : vector<32x16xf32> to vector<32xf32>
    %18 = vector.shape_cast %17 : vector<32xf32> to vector<32x1xf32>
    %cst_13 = arith.constant 1.600000e+01 : f32
    %19 = vector.broadcast %cst_13 : f32 to vector<32x1xf32>
    %20 = arith.divf %18, %19 : vector<32x1xf32>
    %21 = vector.broadcast %20 : vector<32x1xf32> to vector<32x16xf32>
    %22 = arith.subf %16, %21 : vector<32x16xf32>
    %23 = arith.mulf %22, %22 : vector<32x16xf32>
    %cst_14 = arith.constant dense<0.000000e+00> : vector<32xf32>
    %24 = vector.multi_reduction <add>, %23, %cst_14 [1] : vector<32x16xf32> to vector<32xf32>
    %25 = vector.shape_cast %24 : vector<32xf32> to vector<32x1xf32>
    %cst_15 = arith.constant 1.600000e+01 : f32
    %26 = vector.broadcast %cst_15 : f32 to vector<32x1xf32>
    %27 = arith.divf %25, %26 : vector<32x1xf32>
    %cst_16 = arith.constant 9.99999974E-6 : f32
    %28 = vector.broadcast %cst_16 : f32 to vector<32x1xf32>
    %29 = arith.addf %27, %28 : vector<32x1xf32>
    %30 = math.rsqrt %29 : vector<32x1xf32>
    %31 = vector.broadcast %30 : vector<32x1xf32> to vector<32x16xf32>
    %32 = arith.mulf %22, %31 : vector<32x16xf32>
    %c0_17 = arith.constant 0 : index
    %c0_18 = arith.constant 0 : index
    %33 = vector.load %arg7[%c0_17, %c0_18] : memref<32x1xf32, #tpu.memory_space<vmem>>, vector<32x1xf32>
    %34 = vector.broadcast %33 : vector<32x1xf32> to vector<32x16xf32>
    %35 = arith.mulf %32, %34 : vector<32x16xf32>
    %c0_19 = arith.constant 0 : index
    %c0_20 = arith.constant 0 : index
    %36 = vector.load %arg8[%c0_19, %c0_20] : memref<32x1xf32, #tpu.memory_space<vmem>>, vector<32x1xf32>
    %37 = vector.broadcast %36 : vector<32x1xf32> to vector<32x16xf32>
    %38 = arith.addf %35, %37 : vector<32x16xf32>
    %39 = arith.truncf %38 : vector<32x16xf32> to vector<32x16xbf16>
    %c0_21 = arith.constant 0 : index
    %c0_22 = arith.constant 0 : index
    %c0_23 = arith.constant 0 : index
    %40 = vector.load %arg9[%c0_21, %c0_22, %c0_23] : memref<1x32x16xbf16, #tpu.memory_space<vmem>>, vector<1x32x16xbf16>
    %41 = vector.shape_cast %40 : vector<1x32x16xbf16> to vector<32x16xbf16>
    %42 = vector.shape_cast %39 : vector<32x16xbf16> to vector<1x32x16xbf16>
    tpu.vector_store %arg9[%c0_21, %c0_22, %c0_23], %42 {strides = array<i32>} : memref<1x32x16xbf16, #tpu.memory_space<vmem>>, vector<1x32x16xbf16>,
    return
  }
  func.func @transform_0(%arg0: i32, %arg1: i32) -> (i32, i32, i32) {
    %c0_i32 = arith.constant 0 : i32
    %c0_i32_0 = arith.constant 0 : i32
    return %arg0, %c0_i32, %arg1 : i32, i32, i32
  }
  func.func @transform_1(%arg0: i32, %arg1: i32) -> (i32, i32) {
    %c0_i32 = arith.constant 0 : i32
    %c0_i32_0 = arith.constant 0 : i32
    %c0_i32_1 = arith.constant 0 : i32
    return %c0_i32, %c0_i32_0 : i32, i32
  }
  func.func @transform_2(%arg0: i32, %arg1: i32) -> (i32, i32) {
    %c0_i32 = arith.constant 0 : i32
    %c0_i32_0 = arith.constant 0 : i32
    %c0_i32_1 = arith.constant 0 : i32
    return %c0_i32, %c0_i32_0 : i32, i32
  }
  func.func @transform_3(%arg0: i32, %arg1: i32) -> (i32, i32) {
    %c0_i32 = arith.constant 0 : i32
    %c0_i32_0 = arith.constant 0 : i32
    %c0_i32_1 = arith.constant 0 : i32
    return %c0_i32, %c0_i32_0 : i32, i32
  }
  func.func @transform_4(%arg0: i32, %arg1: i32) -> (i32, i32) {
    %c0_i32 = arith.constant 0 : i32
    %c0_i32_0 = arith.constant 0 : i32
    %c0_i32_1 = arith.constant 0 : i32
    return %c0_i32, %c0_i32_0 : i32, i32
  }
  func.func @transform_5(%arg0: i32, %arg1: i32) -> (i32, i32) {
    %c0_i32 = arith.constant 0 : i32
    %c0_i32_0 = arith.constant 0 : i32
    %c0_i32_1 = arith.constant 0 : i32
    return %c0_i32, %c0_i32_0 : i32, i32
  }
  func.func @transform_6(%arg0: i32, %arg1: i32) -> (i32, i32) {
    %c0_i32 = arith.constant 0 : i32
    %c0_i32_0 = arith.constant 0 : i32
    %c0_i32_1 = arith.constant 0 : i32
    return %c0_i32, %c0_i32_0 : i32, i32
  }
  func.func @transform_7(%arg0: i32, %arg1: i32) -> (i32, i32, i32) {
    %c0_i32 = arith.constant 0 : i32
    %c0_i32_0 = arith.constant 0 : i32
    return %arg0, %c0_i32, %arg1 : i32, i32, i32
  }
}

module attributes {stable_mosaic.version = 11 : i64} {
  func.func @_conv_kernel(%arg0: i32, %arg1: i32, %arg2: memref<2x1x16x17xf32, #tpu.memory_space<vmem>>, %arg3: memref<3x32x16xbf16, #tpu.memory_space<vmem>>, %arg4: memref<32x1xf32, #tpu.memory_space<vmem>>, %arg5: memref<32x1xf32, #tpu.memory_space<vmem>>, %arg6: memref<32x1xf32, #tpu.memory_space<vmem>>, %arg7: memref<1x32x16xbf16, #tpu.memory_space<vmem>>) attributes {dimension_semantics = [#tpu.dimension_semantics<parallel>, #tpu.dimension_semantics<arbitrary>], iteration_bounds = array<i64: 2, 1>, scalar_prefetch = 0 : i64, scratch_operands = 0 : i64, tpu.core_type = #tpu.core_type<tc>, window_params = [{transform_indices = @transform_0, window_bounds = array<i64: 2, 1, 16, 17>}, {transform_indices = @transform_1, window_bounds = array<i64: 3, 32, 16>}, {transform_indices = @transform_2, window_bounds = array<i64: 32, 1>}, {transform_indices = @transform_3, window_bounds = array<i64: 32, 1>}, {transform_indices = @transform_4, window_bounds = array<i64: 32, 1>}, {transform_indices = @transform_5, window_bounds = array<i64: 1, 32, 16>}]} {
    %cst = arith.constant 0.000000e+00 : f32
    %0 = vector.broadcast %cst : f32 to vector<32x16xf32>
    %c0 = arith.constant 0 : index
    %c0_0 = arith.constant 0 : index
    %c0_1 = arith.constant 0 : index
    %1 = vector.load %arg3[%c0, %c0_0, %c0_1] : memref<3x32x16xbf16, #tpu.memory_space<vmem>>, vector<1x32x16xbf16>
    %2 = vector.shape_cast %1 : vector<1x32x16xbf16> to vector<32x16xbf16>
    %c0_2 = arith.constant 0 : index
    %c0_3 = arith.constant 0 : index
    %c0_4 = arith.constant 0 : index
    %c0_5 = arith.constant 0 : index
    %3 = vector.load %arg2[%c0_2, %c0_3, %c0_4, %c0_5] : memref<2x1x16x17xf32, #tpu.memory_space<vmem>>, vector<1x1x16x16xf32>
    %4 = vector.shape_cast %3 : vector<1x1x16x16xf32> to vector<16x16xf32>
    %5 = arith.truncf %4 : vector<16x16xf32> to vector<16x16xbf16>
    %cst_6 = arith.constant dense<0.000000e+00> : vector<32x16xf32>
    %6 = tpu.matmul %2, %5, %cst_6 {dimension_numbers = #tpu.dot_dimension_numbers<[1], [0], [0], [1], [0, 0, 1, 1], [], []>} : vector<32x16xbf16>, vector<16x16xbf16>, vector<32x16xf32> -> vector<32x16xf32>
    %7 = arith.addf %0, %6 : vector<32x16xf32>
    %c1 = arith.constant 1 : index
    %c0_7 = arith.constant 0 : index
    %c0_8 = arith.constant 0 : index
    %8 = vector.load %arg3[%c1, %c0_7, %c0_8] : memref<3x32x16xbf16, #tpu.memory_space<vmem>>, vector<1x32x16xbf16>
    %9 = vector.shape_cast %8 : vector<1x32x16xbf16> to vector<32x16xbf16>
    %c1_9 = arith.constant 1 : index
    %c0_10 = arith.constant 0 : index
    %c0_11 = arith.constant 0 : index
    %c0_12 = arith.constant 0 : index
    %10 = vector.load %arg2[%c1_9, %c0_10, %c0_11, %c0_12] : memref<2x1x16x17xf32, #tpu.memory_space<vmem>>, vector<1x1x16x16xf32>
    %11 = vector.shape_cast %10 : vector<1x1x16x16xf32> to vector<16x16xf32>
    %12 = arith.truncf %11 : vector<16x16xf32> to vector<16x16xbf16>
    %cst_13 = arith.constant dense<0.000000e+00> : vector<32x16xf32>
    %13 = tpu.matmul %9, %12, %cst_13 {dimension_numbers = #tpu.dot_dimension_numbers<[1], [0], [0], [1], [0, 0, 1, 1], [], []>} : vector<32x16xbf16>, vector<16x16xbf16>, vector<32x16xf32> -> vector<32x16xf32>
    %14 = arith.addf %7, %13 : vector<32x16xf32>
    %c2 = arith.constant 2 : index
    %c0_14 = arith.constant 0 : index
    %c0_15 = arith.constant 0 : index
    %15 = vector.load %arg3[%c2, %c0_14, %c0_15] : memref<3x32x16xbf16, #tpu.memory_space<vmem>>, vector<1x32x16xbf16>
    %16 = vector.shape_cast %15 : vector<1x32x16xbf16> to vector<32x16xbf16>
    %c0_16 = arith.constant 0 : index
    %c0_17 = arith.constant 0 : index
    %c0_18 = arith.constant 0 : index
    %c1_19 = arith.constant 1 : index
    %17 = vector.load %arg2[%c0_16, %c0_17, %c0_18, %c1_19] : memref<2x1x16x17xf32, #tpu.memory_space<vmem>>, vector<1x1x16x16xf32>
    %18 = vector.shape_cast %17 : vector<1x1x16x16xf32> to vector<16x16xf32>
    %19 = arith.truncf %18 : vector<16x16xf32> to vector<16x16xbf16>
    %cst_20 = arith.constant dense<0.000000e+00> : vector<32x16xf32>
    %20 = tpu.matmul %16, %19, %cst_20 {dimension_numbers = #tpu.dot_dimension_numbers<[1], [0], [0], [1], [0, 0, 1, 1], [], []>} : vector<32x16xbf16>, vector<16x16xbf16>, vector<32x16xf32> -> vector<32x16xf32>
    %21 = arith.addf %14, %20 : vector<32x16xf32>
    %c0_21 = arith.constant 0 : index
    %c0_22 = arith.constant 0 : index
    %22 = vector.load %arg4[%c0_21, %c0_22] : memref<32x1xf32, #tpu.memory_space<vmem>>, vector<32x1xf32>
    %23 = vector.broadcast %22 : vector<32x1xf32> to vector<32x16xf32>
    %24 = arith.addf %21, %23 : vector<32x16xf32>
    %cst_23 = arith.constant 0.000000e+00 : f32
    %25 = vector.broadcast %cst_23 : f32 to vector<32x16xf32>
    %26 = arith.maximumf %24, %25 : vector<32x16xf32>
    %cst_24 = arith.constant dense<0.000000e+00> : vector<32xf32>
    %27 = vector.multi_reduction <add>, %26, %cst_24 [1] : vector<32x16xf32> to vector<32xf32>
    %28 = vector.shape_cast %27 : vector<32xf32> to vector<32x1xf32>
    %cst_25 = arith.constant 1.600000e+01 : f32
    %29 = vector.broadcast %cst_25 : f32 to vector<32x1xf32>
    %30 = arith.divf %28, %29 : vector<32x1xf32>
    %31 = vector.broadcast %30 : vector<32x1xf32> to vector<32x16xf32>
    %32 = arith.subf %26, %31 : vector<32x16xf32>
    %33 = arith.mulf %32, %32 : vector<32x16xf32>
    %cst_26 = arith.constant dense<0.000000e+00> : vector<32xf32>
    %34 = vector.multi_reduction <add>, %33, %cst_26 [1] : vector<32x16xf32> to vector<32xf32>
    %35 = vector.shape_cast %34 : vector<32xf32> to vector<32x1xf32>
    %cst_27 = arith.constant 1.600000e+01 : f32
    %36 = vector.broadcast %cst_27 : f32 to vector<32x1xf32>
    %37 = arith.divf %35, %36 : vector<32x1xf32>
    %cst_28 = arith.constant 9.99999974E-6 : f32
    %38 = vector.broadcast %cst_28 : f32 to vector<32x1xf32>
    %39 = arith.addf %37, %38 : vector<32x1xf32>
    %40 = math.rsqrt %39 : vector<32x1xf32>
    %41 = vector.broadcast %40 : vector<32x1xf32> to vector<32x16xf32>
    %42 = arith.mulf %32, %41 : vector<32x16xf32>
    %c0_29 = arith.constant 0 : index
    %c0_30 = arith.constant 0 : index
    %43 = vector.load %arg5[%c0_29, %c0_30] : memref<32x1xf32, #tpu.memory_space<vmem>>, vector<32x1xf32>
    %44 = vector.broadcast %43 : vector<32x1xf32> to vector<32x16xf32>
    %45 = arith.mulf %42, %44 : vector<32x16xf32>
    %c0_31 = arith.constant 0 : index
    %c0_32 = arith.constant 0 : index
    %46 = vector.load %arg6[%c0_31, %c0_32] : memref<32x1xf32, #tpu.memory_space<vmem>>, vector<32x1xf32>
    %47 = vector.broadcast %46 : vector<32x1xf32> to vector<32x16xf32>
    %48 = arith.addf %45, %47 : vector<32x16xf32>
    %49 = arith.truncf %48 : vector<32x16xf32> to vector<32x16xbf16>
    %c0_33 = arith.constant 0 : index
    %c0_34 = arith.constant 0 : index
    %c0_35 = arith.constant 0 : index
    %50 = vector.load %arg7[%c0_33, %c0_34, %c0_35] : memref<1x32x16xbf16, #tpu.memory_space<vmem>>, vector<1x32x16xbf16>
    %51 = vector.shape_cast %50 : vector<1x32x16xbf16> to vector<32x16xbf16>
    %52 = vector.shape_cast %49 : vector<32x16xbf16> to vector<1x32x16xbf16>
    tpu.vector_store %arg7[%c0_33, %c0_34, %c0_35], %52 {strides = array<i32>} : memref<1x32x16xbf16, #tpu.memory_space<vmem>>, vector<1x32x16xbf16>,
    return
  }
  func.func @transform_0(%arg0: i32, %arg1: i32) -> (i32, i32, i32, i32) {
    %c0_i32 = arith.constant 0 : i32
    %c0_i32_0 = arith.constant 0 : i32
    %c0_i32_1 = arith.constant 0 : i32
    %c0_i32_2 = arith.constant 0 : i32
    return %c0_i32, %arg0, %c0_i32_0, %c0_i32_1 : i32, i32, i32, i32
  }
  func.func @transform_1(%arg0: i32, %arg1: i32) -> (i32, i32, i32) {
    %c0_i32 = arith.constant 0 : i32
    %c0_i32_0 = arith.constant 0 : i32
    %c0_i32_1 = arith.constant 0 : i32
    return %c0_i32, %arg1, %c0_i32_0 : i32, i32, i32
  }
  func.func @transform_2(%arg0: i32, %arg1: i32) -> (i32, i32) {
    %c0_i32 = arith.constant 0 : i32
    %c0_i32_0 = arith.constant 0 : i32
    return %arg1, %c0_i32 : i32, i32
  }
  func.func @transform_3(%arg0: i32, %arg1: i32) -> (i32, i32) {
    %c0_i32 = arith.constant 0 : i32
    %c0_i32_0 = arith.constant 0 : i32
    return %arg1, %c0_i32 : i32, i32
  }
  func.func @transform_4(%arg0: i32, %arg1: i32) -> (i32, i32) {
    %c0_i32 = arith.constant 0 : i32
    %c0_i32_0 = arith.constant 0 : i32
    return %arg1, %c0_i32 : i32, i32
  }
  func.func @transform_5(%arg0: i32, %arg1: i32) -> (i32, i32, i32) {
    %c0_i32 = arith.constant 0 : i32
    %c0_i32_0 = arith.constant 0 : i32
    return %arg0, %arg1, %c0_i32 : i32, i32, i32
  }
}

module attributes {stable_mosaic.version = 11 : i64} {
  func.func @_mlp_kernel(%arg0: i32, %arg1: i32, %arg2: memref<1x32x16xbf16, #tpu.memory_space<vmem>>, %arg3: memref<32x32xbf16, #tpu.memory_space<vmem>>, %arg4: memref<32x1xf32, #tpu.memory_space<vmem>>, %arg5: memref<32x32xbf16, #tpu.memory_space<vmem>>, %arg6: memref<32x1xf32, #tpu.memory_space<vmem>>, %arg7: memref<32x1xf32, #tpu.memory_space<vmem>>, %arg8: memref<32x1xf32, #tpu.memory_space<vmem>>, %arg9: memref<1x32x16xbf16, #tpu.memory_space<vmem>>) attributes {dimension_semantics = [#tpu.dimension_semantics<parallel>, #tpu.dimension_semantics<parallel>], iteration_bounds = array<i64: 2, 1>, scalar_prefetch = 0 : i64, scratch_operands = 0 : i64, tpu.core_type = #tpu.core_type<tc>, window_params = [{transform_indices = @transform_0, window_bounds = array<i64: 1, 32, 16>}, {pipeline_mode = #tpu.pipeline_mode<synchronous>, transform_indices = @transform_1, window_bounds = array<i64: 32, 32>}, {pipeline_mode = #tpu.pipeline_mode<synchronous>, transform_indices = @transform_2, window_bounds = array<i64: 32, 1>}, {pipeline_mode = #tpu.pipeline_mode<synchronous>, transform_indices = @transform_3, window_bounds = array<i64: 32, 32>}, {pipeline_mode = #tpu.pipeline_mode<synchronous>, transform_indices = @transform_4, window_bounds = array<i64: 32, 1>}, {pipeline_mode = #tpu.pipeline_mode<synchronous>, transform_indices = @transform_5, window_bounds = array<i64: 32, 1>}, {pipeline_mode = #tpu.pipeline_mode<synchronous>, transform_indices = @transform_6, window_bounds = array<i64: 32, 1>}, {transform_indices = @transform_7, window_bounds = array<i64: 1, 32, 16>}]} {
    %c0 = arith.constant 0 : index
    %c0_0 = arith.constant 0 : index
    %c0_1 = arith.constant 0 : index
    %0 = vector.load %arg2[%c0, %c0_0, %c0_1] : memref<1x32x16xbf16, #tpu.memory_space<vmem>>, vector<1x32x16xbf16>
    %1 = vector.shape_cast %0 : vector<1x32x16xbf16> to vector<32x16xbf16>
    %c0_2 = arith.constant 0 : index
    %c0_3 = arith.constant 0 : index
    %2 = vector.load %arg3[%c0_2, %c0_3] : memref<32x32xbf16, #tpu.memory_space<vmem>>, vector<32x32xbf16>
    %cst = arith.constant dense<0.000000e+00> : vector<32x16xf32>
    %3 = tpu.matmul %2, %1, %cst {dimension_numbers = #tpu.dot_dimension_numbers<[1], [0], [0], [1], [0, 0, 1, 1], [], []>} : vector<32x32xbf16>, vector<32x16xbf16>, vector<32x16xf32> -> vector<32x16xf32>
    %c0_4 = arith.constant 0 : index
    %c0_5 = arith.constant 0 : index
    %4 = vector.load %arg4[%c0_4, %c0_5] : memref<32x1xf32, #tpu.memory_space<vmem>>, vector<32x1xf32>
    %5 = vector.broadcast %4 : vector<32x1xf32> to vector<32x16xf32>
    %6 = arith.addf %3, %5 : vector<32x16xf32>
    %cst_6 = arith.constant 0.000000e+00 : f32
    %7 = vector.broadcast %cst_6 : f32 to vector<32x16xf32>
    %8 = arith.maximumf %6, %7 : vector<32x16xf32>
    %9 = arith.truncf %8 : vector<32x16xf32> to vector<32x16xbf16>
    %c0_7 = arith.constant 0 : index
    %c0_8 = arith.constant 0 : index
    %10 = vector.load %arg5[%c0_7, %c0_8] : memref<32x32xbf16, #tpu.memory_space<vmem>>, vector<32x32xbf16>
    %cst_9 = arith.constant dense<0.000000e+00> : vector<32x16xf32>
    %11 = tpu.matmul %10, %9, %cst_9 {dimension_numbers = #tpu.dot_dimension_numbers<[1], [0], [0], [1], [0, 0, 1, 1], [], []>} : vector<32x32xbf16>, vector<32x16xbf16>, vector<32x16xf32> -> vector<32x16xf32>
    %c0_10 = arith.constant 0 : index
    %c0_11 = arith.constant 0 : index
    %12 = vector.load %arg6[%c0_10, %c0_11] : memref<32x1xf32, #tpu.memory_space<vmem>>, vector<32x1xf32>
    %13 = vector.broadcast %12 : vector<32x1xf32> to vector<32x16xf32>
    %14 = arith.addf %11, %13 : vector<32x16xf32>
    %15 = arith.extf %1 : vector<32x16xbf16> to vector<32x16xf32>
    %16 = arith.addf %14, %15 : vector<32x16xf32>
    %cst_12 = arith.constant dense<0.000000e+00> : vector<32xf32>
    %17 = vector.multi_reduction <add>, %16, %cst_12 [1] : vector<32x16xf32> to vector<32xf32>
    %18 = vector.shape_cast %17 : vector<32xf32> to vector<32x1xf32>
    %cst_13 = arith.constant 1.600000e+01 : f32
    %19 = vector.broadcast %cst_13 : f32 to vector<32x1xf32>
    %20 = arith.divf %18, %19 : vector<32x1xf32>
    %21 = vector.broadcast %20 : vector<32x1xf32> to vector<32x16xf32>
    %22 = arith.subf %16, %21 : vector<32x16xf32>
    %23 = arith.mulf %22, %22 : vector<32x16xf32>
    %cst_14 = arith.constant dense<0.000000e+00> : vector<32xf32>
    %24 = vector.multi_reduction <add>, %23, %cst_14 [1] : vector<32x16xf32> to vector<32xf32>
    %25 = vector.shape_cast %24 : vector<32xf32> to vector<32x1xf32>
    %cst_15 = arith.constant 1.600000e+01 : f32
    %26 = vector.broadcast %cst_15 : f32 to vector<32x1xf32>
    %27 = arith.divf %25, %26 : vector<32x1xf32>
    %cst_16 = arith.constant 9.99999974E-6 : f32
    %28 = vector.broadcast %cst_16 : f32 to vector<32x1xf32>
    %29 = arith.addf %27, %28 : vector<32x1xf32>
    %30 = math.rsqrt %29 : vector<32x1xf32>
    %31 = vector.broadcast %30 : vector<32x1xf32> to vector<32x16xf32>
    %32 = arith.mulf %22, %31 : vector<32x16xf32>
    %c0_17 = arith.constant 0 : index
    %c0_18 = arith.constant 0 : index
    %33 = vector.load %arg7[%c0_17, %c0_18] : memref<32x1xf32, #tpu.memory_space<vmem>>, vector<32x1xf32>
    %34 = vector.broadcast %33 : vector<32x1xf32> to vector<32x16xf32>
    %35 = arith.mulf %32, %34 : vector<32x16xf32>
    %c0_19 = arith.constant 0 : index
    %c0_20 = arith.constant 0 : index
    %36 = vector.load %arg8[%c0_19, %c0_20] : memref<32x1xf32, #tpu.memory_space<vmem>>, vector<32x1xf32>
    %37 = vector.broadcast %36 : vector<32x1xf32> to vector<32x16xf32>
    %38 = arith.addf %35, %37 : vector<32x16xf32>
    %39 = arith.truncf %38 : vector<32x16xf32> to vector<32x16xbf16>
    %c0_21 = arith.constant 0 : index
    %c0_22 = arith.constant 0 : index
    %c0_23 = arith.constant 0 : index
    %40 = vector.load %arg9[%c0_21, %c0_22, %c0_23] : memref<1x32x16xbf16, #tpu.memory_space<vmem>>, vector<1x32x16xbf16>
    %41 = vector.shape_cast %40 : vector<1x32x16xbf16> to vector<32x16xbf16>
    %42 = vector.shape_cast %39 : vector<32x16xbf16> to vector<1x32x16xbf16>
    tpu.vector_store %arg9[%c0_21, %c0_22, %c0_23], %42 {strides = array<i32>} : memref<1x32x16xbf16, #tpu.memory_space<vmem>>, vector<1x32x16xbf16>,
    return
  }
  func.func @transform_0(%arg0: i32, %arg1: i32) -> (i32, i32, i32) {
    %c0_i32 = arith.constant 0 : i32
    %c0_i32_0 = arith.constant 0 : i32
    return %arg0, %c0_i32, %arg1 : i32, i32, i32
  }
  func.func @transform_1(%arg0: i32, %arg1: i32) -> (i32, i32) {
    %c0_i32 = arith.constant 0 : i32
    %c0_i32_0 = arith.constant 0 : i32
    %c0_i32_1 = arith.constant 0 : i32
    return %c0_i32, %c0_i32_0 : i32, i32
  }
  func.func @transform_2(%arg0: i32, %arg1: i32) -> (i32, i32) {
    %c0_i32 = arith.constant 0 : i32
    %c0_i32_0 = arith.constant 0 : i32
    %c0_i32_1 = arith.constant 0 : i32
    return %c0_i32, %c0_i32_0 : i32, i32
  }
  func.func @transform_3(%arg0: i32, %arg1: i32) -> (i32, i32) {
    %c0_i32 = arith.constant 0 : i32
    %c0_i32_0 = arith.constant 0 : i32
    %c0_i32_1 = arith.constant 0 : i32
    return %c0_i32, %c0_i32_0 : i32, i32
  }
  func.func @transform_4(%arg0: i32, %arg1: i32) -> (i32, i32) {
    %c0_i32 = arith.constant 0 : i32
    %c0_i32_0 = arith.constant 0 : i32
    %c0_i32_1 = arith.constant 0 : i32
    return %c0_i32, %c0_i32_0 : i32, i32
  }
  func.func @transform_5(%arg0: i32, %arg1: i32) -> (i32, i32) {
    %c0_i32 = arith.constant 0 : i32
    %c0_i32_0 = arith.constant 0 : i32
    %c0_i32_1 = arith.constant 0 : i32
    return %c0_i32, %c0_i32_0 : i32, i32
  }
  func.func @transform_6(%arg0: i32, %arg1: i32) -> (i32, i32) {
    %c0_i32 = arith.constant 0 : i32
    %c0_i32_0 = arith.constant 0 : i32
    %c0_i32_1 = arith.constant 0 : i32
    return %c0_i32, %c0_i32_0 : i32, i32
  }
  func.func @transform_7(%arg0: i32, %arg1: i32) -> (i32, i32, i32) {
    %c0_i32 = arith.constant 0 : i32
    %c0_i32_0 = arith.constant 0 : i32
    return %arg0, %c0_i32, %arg1 : i32, i32, i32
  }
}

module attributes {stable_mosaic.version = 11 : i64} {
  func.func @_conv_kernel(%arg0: i32, %arg1: i32, %arg2: memref<2x1x32x9xbf16, #tpu.memory_space<vmem>>, %arg3: memref<3x48x32xbf16, #tpu.memory_space<vmem>>, %arg4: memref<48x1xf32, #tpu.memory_space<vmem>>, %arg5: memref<48x1xf32, #tpu.memory_space<vmem>>, %arg6: memref<48x1xf32, #tpu.memory_space<vmem>>, %arg7: memref<1x48x8xbf16, #tpu.memory_space<vmem>>) attributes {dimension_semantics = [#tpu.dimension_semantics<parallel>, #tpu.dimension_semantics<arbitrary>], iteration_bounds = array<i64: 2, 1>, scalar_prefetch = 0 : i64, scratch_operands = 0 : i64, tpu.core_type = #tpu.core_type<tc>, window_params = [{transform_indices = @transform_0, window_bounds = array<i64: 2, 1, 32, 9>}, {transform_indices = @transform_1, window_bounds = array<i64: 3, 48, 32>}, {transform_indices = @transform_2, window_bounds = array<i64: 48, 1>}, {transform_indices = @transform_3, window_bounds = array<i64: 48, 1>}, {transform_indices = @transform_4, window_bounds = array<i64: 48, 1>}, {transform_indices = @transform_5, window_bounds = array<i64: 1, 48, 8>}]} {
    %cst = arith.constant 0.000000e+00 : f32
    %0 = vector.broadcast %cst : f32 to vector<48x8xf32>
    %c0 = arith.constant 0 : index
    %c0_0 = arith.constant 0 : index
    %c0_1 = arith.constant 0 : index
    %1 = vector.load %arg3[%c0, %c0_0, %c0_1] : memref<3x48x32xbf16, #tpu.memory_space<vmem>>, vector<1x48x32xbf16>
    %2 = vector.shape_cast %1 : vector<1x48x32xbf16> to vector<48x32xbf16>
    %c0_2 = arith.constant 0 : index
    %c0_3 = arith.constant 0 : index
    %c0_4 = arith.constant 0 : index
    %c0_5 = arith.constant 0 : index
    %3 = vector.load %arg2[%c0_2, %c0_3, %c0_4, %c0_5] : memref<2x1x32x9xbf16, #tpu.memory_space<vmem>>, vector<1x1x32x8xbf16>
    %4 = vector.shape_cast %3 : vector<1x1x32x8xbf16> to vector<32x8xbf16>
    %cst_6 = arith.constant dense<0.000000e+00> : vector<48x8xf32>
    %5 = tpu.matmul %2, %4, %cst_6 {dimension_numbers = #tpu.dot_dimension_numbers<[1], [0], [0], [1], [0, 0, 1, 1], [], []>} : vector<48x32xbf16>, vector<32x8xbf16>, vector<48x8xf32> -> vector<48x8xf32>
    %6 = arith.addf %0, %5 : vector<48x8xf32>
    %c1 = arith.constant 1 : index
    %c0_7 = arith.constant 0 : index
    %c0_8 = arith.constant 0 : index
    %7 = vector.load %arg3[%c1, %c0_7, %c0_8] : memref<3x48x32xbf16, #tpu.memory_space<vmem>>, vector<1x48x32xbf16>
    %8 = vector.shape_cast %7 : vector<1x48x32xbf16> to vector<48x32xbf16>
    %c1_9 = arith.constant 1 : index
    %c0_10 = arith.constant 0 : index
    %c0_11 = arith.constant 0 : index
    %c0_12 = arith.constant 0 : index
    %9 = vector.load %arg2[%c1_9, %c0_10, %c0_11, %c0_12] : memref<2x1x32x9xbf16, #tpu.memory_space<vmem>>, vector<1x1x32x8xbf16>
    %10 = vector.shape_cast %9 : vector<1x1x32x8xbf16> to vector<32x8xbf16>
    %cst_13 = arith.constant dense<0.000000e+00> : vector<48x8xf32>
    %11 = tpu.matmul %8, %10, %cst_13 {dimension_numbers = #tpu.dot_dimension_numbers<[1], [0], [0], [1], [0, 0, 1, 1], [], []>} : vector<48x32xbf16>, vector<32x8xbf16>, vector<48x8xf32> -> vector<48x8xf32>
    %12 = arith.addf %6, %11 : vector<48x8xf32>
    %c2 = arith.constant 2 : index
    %c0_14 = arith.constant 0 : index
    %c0_15 = arith.constant 0 : index
    %13 = vector.load %arg3[%c2, %c0_14, %c0_15] : memref<3x48x32xbf16, #tpu.memory_space<vmem>>, vector<1x48x32xbf16>
    %14 = vector.shape_cast %13 : vector<1x48x32xbf16> to vector<48x32xbf16>
    %c0_16 = arith.constant 0 : index
    %c0_17 = arith.constant 0 : index
    %c0_18 = arith.constant 0 : index
    %c1_19 = arith.constant 1 : index
    %15 = vector.load %arg2[%c0_16, %c0_17, %c0_18, %c1_19] : memref<2x1x32x9xbf16, #tpu.memory_space<vmem>>, vector<1x1x32x8xbf16>
    %16 = vector.shape_cast %15 : vector<1x1x32x8xbf16> to vector<32x8xbf16>
    %cst_20 = arith.constant dense<0.000000e+00> : vector<48x8xf32>
    %17 = tpu.matmul %14, %16, %cst_20 {dimension_numbers = #tpu.dot_dimension_numbers<[1], [0], [0], [1], [0, 0, 1, 1], [], []>} : vector<48x32xbf16>, vector<32x8xbf16>, vector<48x8xf32> -> vector<48x8xf32>
    %18 = arith.addf %12, %17 : vector<48x8xf32>
    %c0_21 = arith.constant 0 : index
    %c0_22 = arith.constant 0 : index
    %19 = vector.load %arg4[%c0_21, %c0_22] : memref<48x1xf32, #tpu.memory_space<vmem>>, vector<48x1xf32>
    %20 = vector.broadcast %19 : vector<48x1xf32> to vector<48x8xf32>
    %21 = arith.addf %18, %20 : vector<48x8xf32>
    %cst_23 = arith.constant 0.000000e+00 : f32
    %22 = vector.broadcast %cst_23 : f32 to vector<48x8xf32>
    %23 = arith.maximumf %21, %22 : vector<48x8xf32>
    %cst_24 = arith.constant dense<0.000000e+00> : vector<48xf32>
    %24 = vector.multi_reduction <add>, %23, %cst_24 [1] : vector<48x8xf32> to vector<48xf32>
    %25 = vector.shape_cast %24 : vector<48xf32> to vector<48x1xf32>
    %cst_25 = arith.constant 8.000000e+00 : f32
    %26 = vector.broadcast %cst_25 : f32 to vector<48x1xf32>
    %27 = arith.divf %25, %26 : vector<48x1xf32>
    %28 = vector.broadcast %27 : vector<48x1xf32> to vector<48x8xf32>
    %29 = arith.subf %23, %28 : vector<48x8xf32>
    %30 = arith.mulf %29, %29 : vector<48x8xf32>
    %cst_26 = arith.constant dense<0.000000e+00> : vector<48xf32>
    %31 = vector.multi_reduction <add>, %30, %cst_26 [1] : vector<48x8xf32> to vector<48xf32>
    %32 = vector.shape_cast %31 : vector<48xf32> to vector<48x1xf32>
    %cst_27 = arith.constant 8.000000e+00 : f32
    %33 = vector.broadcast %cst_27 : f32 to vector<48x1xf32>
    %34 = arith.divf %32, %33 : vector<48x1xf32>
    %cst_28 = arith.constant 9.99999974E-6 : f32
    %35 = vector.broadcast %cst_28 : f32 to vector<48x1xf32>
    %36 = arith.addf %34, %35 : vector<48x1xf32>
    %37 = math.rsqrt %36 : vector<48x1xf32>
    %38 = vector.broadcast %37 : vector<48x1xf32> to vector<48x8xf32>
    %39 = arith.mulf %29, %38 : vector<48x8xf32>
    %c0_29 = arith.constant 0 : index
    %c0_30 = arith.constant 0 : index
    %40 = vector.load %arg5[%c0_29, %c0_30] : memref<48x1xf32, #tpu.memory_space<vmem>>, vector<48x1xf32>
    %41 = vector.broadcast %40 : vector<48x1xf32> to vector<48x8xf32>
    %42 = arith.mulf %39, %41 : vector<48x8xf32>
    %c0_31 = arith.constant 0 : index
    %c0_32 = arith.constant 0 : index
    %43 = vector.load %arg6[%c0_31, %c0_32] : memref<48x1xf32, #tpu.memory_space<vmem>>, vector<48x1xf32>
    %44 = vector.broadcast %43 : vector<48x1xf32> to vector<48x8xf32>
    %45 = arith.addf %42, %44 : vector<48x8xf32>
    %46 = arith.truncf %45 : vector<48x8xf32> to vector<48x8xbf16>
    %c0_33 = arith.constant 0 : index
    %c0_34 = arith.constant 0 : index
    %c0_35 = arith.constant 0 : index
    %47 = vector.load %arg7[%c0_33, %c0_34, %c0_35] : memref<1x48x8xbf16, #tpu.memory_space<vmem>>, vector<1x48x8xbf16>
    %48 = vector.shape_cast %47 : vector<1x48x8xbf16> to vector<48x8xbf16>
    %49 = vector.shape_cast %46 : vector<48x8xbf16> to vector<1x48x8xbf16>
    tpu.vector_store %arg7[%c0_33, %c0_34, %c0_35], %49 {strides = array<i32>} : memref<1x48x8xbf16, #tpu.memory_space<vmem>>, vector<1x48x8xbf16>,
    return
  }
  func.func @transform_0(%arg0: i32, %arg1: i32) -> (i32, i32, i32, i32) {
    %c0_i32 = arith.constant 0 : i32
    %c0_i32_0 = arith.constant 0 : i32
    %c0_i32_1 = arith.constant 0 : i32
    %c0_i32_2 = arith.constant 0 : i32
    return %c0_i32, %arg0, %c0_i32_0, %c0_i32_1 : i32, i32, i32, i32
  }
  func.func @transform_1(%arg0: i32, %arg1: i32) -> (i32, i32, i32) {
    %c0_i32 = arith.constant 0 : i32
    %c0_i32_0 = arith.constant 0 : i32
    %c0_i32_1 = arith.constant 0 : i32
    return %c0_i32, %arg1, %c0_i32_0 : i32, i32, i32
  }
  func.func @transform_2(%arg0: i32, %arg1: i32) -> (i32, i32) {
    %c0_i32 = arith.constant 0 : i32
    %c0_i32_0 = arith.constant 0 : i32
    return %arg1, %c0_i32 : i32, i32
  }
  func.func @transform_3(%arg0: i32, %arg1: i32) -> (i32, i32) {
    %c0_i32 = arith.constant 0 : i32
    %c0_i32_0 = arith.constant 0 : i32
    return %arg1, %c0_i32 : i32, i32
  }
  func.func @transform_4(%arg0: i32, %arg1: i32) -> (i32, i32) {
    %c0_i32 = arith.constant 0 : i32
    %c0_i32_0 = arith.constant 0 : i32
    return %arg1, %c0_i32 : i32, i32
  }
  func.func @transform_5(%arg0: i32, %arg1: i32) -> (i32, i32, i32) {
    %c0_i32 = arith.constant 0 : i32
    %c0_i32_0 = arith.constant 0 : i32
    return %arg0, %arg1, %c0_i32 : i32, i32, i32
  }
}

module attributes {stable_mosaic.version = 11 : i64} {
  func.func @_conv_kernel(%arg0: i32, %arg1: i32, %arg2: memref<1x48x8xbf16, #tpu.memory_space<vmem>>, %arg3: memref<3x48x48xbf16, #tpu.memory_space<vmem>>, %arg4: memref<48x1xf32, #tpu.memory_space<vmem>>, %arg5: memref<48x1xf32, #tpu.memory_space<vmem>>, %arg6: memref<48x1xf32, #tpu.memory_space<vmem>>, %arg7: memref<1x48x8xbf16, #tpu.memory_space<vmem>>, %arg8: memref<48x10xbf16, #tpu.memory_space<vmem>>) attributes {dimension_semantics = [#tpu.dimension_semantics<parallel>, #tpu.dimension_semantics<arbitrary>], iteration_bounds = array<i64: 2, 1>, scalar_prefetch = 0 : i64, scratch_operands = 1 : i64, tpu.core_type = #tpu.core_type<tc>, window_params = [{transform_indices = @transform_0, window_bounds = array<i64: 1, 48, 8>}, {transform_indices = @transform_1, window_bounds = array<i64: 3, 48, 48>}, {transform_indices = @transform_2, window_bounds = array<i64: 48, 1>}, {transform_indices = @transform_3, window_bounds = array<i64: 48, 1>}, {transform_indices = @transform_4, window_bounds = array<i64: 48, 1>}, {transform_indices = @transform_5, window_bounds = array<i64: 1, 48, 8>}]} {
    %c0 = arith.constant 0 : index
    %c0_0 = arith.constant 0 : index
    %c0_1 = arith.constant 0 : index
    %0 = vector.load %arg2[%c0, %c0_0, %c0_1] : memref<1x48x8xbf16, #tpu.memory_space<vmem>>, vector<1x48x8xbf16>
    %1 = vector.shape_cast %0 : vector<1x48x8xbf16> to vector<48x8xbf16>
    %cst = arith.constant 0.000000e+00 : bf16
    %2 = vector.broadcast %cst : bf16 to vector<48x1xbf16>
    %c0_2 = arith.constant 0 : index
    %c0_3 = arith.constant 0 : index
    %3 = vector.load %arg8[%c0_2, %c0_3] : memref<48x10xbf16, #tpu.memory_space<vmem>>, vector<48x1xbf16>
    tpu.vector_store %arg8[%c0_2, %c0_3], %2 {strides = array<i32>} : memref<48x10xbf16, #tpu.memory_space<vmem>>, vector<48x1xbf16>,
    %c0_4 = arith.constant 0 : index
    %c9 = arith.constant 9 : index
    %4 = vector.load %arg8[%c0_4, %c9] : memref<48x10xbf16, #tpu.memory_space<vmem>>, vector<48x1xbf16>
    tpu.vector_store %arg8[%c0_4, %c9], %2 {strides = array<i32>} : memref<48x10xbf16, #tpu.memory_space<vmem>>, vector<48x1xbf16>,
    %c0_5 = arith.constant 0 : index
    %c1 = arith.constant 1 : index
    %5 = vector.load %arg8[%c0_5, %c1] : memref<48x10xbf16, #tpu.memory_space<vmem>>, vector<48x8xbf16>
    tpu.vector_store %arg8[%c0_5, %c1], %1 {strides = array<i32>} : memref<48x10xbf16, #tpu.memory_space<vmem>>, vector<48x8xbf16>,
    %cst_6 = arith.constant 0.000000e+00 : f32
    %6 = vector.broadcast %cst_6 : f32 to vector<48x8xf32>
    %c0_7 = arith.constant 0 : index
    %c0_8 = arith.constant 0 : index
    %c0_9 = arith.constant 0 : index
    %7 = vector.load %arg3[%c0_7, %c0_8, %c0_9] : memref<3x48x48xbf16, #tpu.memory_space<vmem>>, vector<1x48x48xbf16>
    %8 = vector.shape_cast %7 : vector<1x48x48xbf16> to vector<48x48xbf16>
    %c0_10 = arith.constant 0 : index
    %c0_11 = arith.constant 0 : index
    %9 = vector.load %arg8[%c0_10, %c0_11] : memref<48x10xbf16, #tpu.memory_space<vmem>>, vector<48x8xbf16>
    %cst_12 = arith.constant dense<0.000000e+00> : vector<48x8xf32>
    %10 = tpu.matmul %8, %9, %cst_12 {dimension_numbers = #tpu.dot_dimension_numbers<[1], [0], [0], [1], [0, 0, 1, 1], [], []>} : vector<48x48xbf16>, vector<48x8xbf16>, vector<48x8xf32> -> vector<48x8xf32>
    %11 = arith.addf %6, %10 : vector<48x8xf32>
    %c1_13 = arith.constant 1 : index
    %c0_14 = arith.constant 0 : index
    %c0_15 = arith.constant 0 : index
    %12 = vector.load %arg3[%c1_13, %c0_14, %c0_15] : memref<3x48x48xbf16, #tpu.memory_space<vmem>>, vector<1x48x48xbf16>
    %13 = vector.shape_cast %12 : vector<1x48x48xbf16> to vector<48x48xbf16>
    %c0_16 = arith.constant 0 : index
    %c1_17 = arith.constant 1 : index
    %14 = vector.load %arg8[%c0_16, %c1_17] : memref<48x10xbf16, #tpu.memory_space<vmem>>, vector<48x8xbf16>
    %cst_18 = arith.constant dense<0.000000e+00> : vector<48x8xf32>
    %15 = tpu.matmul %13, %14, %cst_18 {dimension_numbers = #tpu.dot_dimension_numbers<[1], [0], [0], [1], [0, 0, 1, 1], [], []>} : vector<48x48xbf16>, vector<48x8xbf16>, vector<48x8xf32> -> vector<48x8xf32>
    %16 = arith.addf %11, %15 : vector<48x8xf32>
    %c2 = arith.constant 2 : index
    %c0_19 = arith.constant 0 : index
    %c0_20 = arith.constant 0 : index
    %17 = vector.load %arg3[%c2, %c0_19, %c0_20] : memref<3x48x48xbf16, #tpu.memory_space<vmem>>, vector<1x48x48xbf16>
    %18 = vector.shape_cast %17 : vector<1x48x48xbf16> to vector<48x48xbf16>
    %c0_21 = arith.constant 0 : index
    %c2_22 = arith.constant 2 : index
    %19 = vector.load %arg8[%c0_21, %c2_22] : memref<48x10xbf16, #tpu.memory_space<vmem>>, vector<48x8xbf16>
    %cst_23 = arith.constant dense<0.000000e+00> : vector<48x8xf32>
    %20 = tpu.matmul %18, %19, %cst_23 {dimension_numbers = #tpu.dot_dimension_numbers<[1], [0], [0], [1], [0, 0, 1, 1], [], []>} : vector<48x48xbf16>, vector<48x8xbf16>, vector<48x8xf32> -> vector<48x8xf32>
    %21 = arith.addf %16, %20 : vector<48x8xf32>
    %c0_24 = arith.constant 0 : index
    %c0_25 = arith.constant 0 : index
    %22 = vector.load %arg4[%c0_24, %c0_25] : memref<48x1xf32, #tpu.memory_space<vmem>>, vector<48x1xf32>
    %23 = vector.broadcast %22 : vector<48x1xf32> to vector<48x8xf32>
    %24 = arith.addf %21, %23 : vector<48x8xf32>
    %cst_26 = arith.constant 0.000000e+00 : f32
    %25 = vector.broadcast %cst_26 : f32 to vector<48x8xf32>
    %26 = arith.maximumf %24, %25 : vector<48x8xf32>
    %c48_i32 = arith.constant 48 : i32
    %27 = arith.muli %arg1, %c48_i32 : i32
    %28 = tpu.assume_multiple %27, 8 : i32
    %c0_27 = arith.constant 0 : index
    %29 = arith.index_cast %28 : i32 to index
    %c0_28 = arith.constant 0 : index
    %30 = vector.load %arg2[%c0_27, %29, %c0_28] : memref<1x48x8xbf16, #tpu.memory_space<vmem>>, vector<1x48x8xbf16>
    %31 = vector.shape_cast %30 : vector<1x48x8xbf16> to vector<48x8xbf16>
    %32 = arith.extf %31 : vector<48x8xbf16> to vector<48x8xf32>
    %33 = arith.addf %26, %32 : vector<48x8xf32>
    %cst_29 = arith.constant dense<0.000000e+00> : vector<48xf32>
    %34 = vector.multi_reduction <add>, %33, %cst_29 [1] : vector<48x8xf32> to vector<48xf32>
    %35 = vector.shape_cast %34 : vector<48xf32> to vector<48x1xf32>
    %cst_30 = arith.constant 8.000000e+00 : f32
    %36 = vector.broadcast %cst_30 : f32 to vector<48x1xf32>
    %37 = arith.divf %35, %36 : vector<48x1xf32>
    %38 = vector.broadcast %37 : vector<48x1xf32> to vector<48x8xf32>
    %39 = arith.subf %33, %38 : vector<48x8xf32>
    %40 = arith.mulf %39, %39 : vector<48x8xf32>
    %cst_31 = arith.constant dense<0.000000e+00> : vector<48xf32>
    %41 = vector.multi_reduction <add>, %40, %cst_31 [1] : vector<48x8xf32> to vector<48xf32>
    %42 = vector.shape_cast %41 : vector<48xf32> to vector<48x1xf32>
    %cst_32 = arith.constant 8.000000e+00 : f32
    %43 = vector.broadcast %cst_32 : f32 to vector<48x1xf32>
    %44 = arith.divf %42, %43 : vector<48x1xf32>
    %cst_33 = arith.constant 9.99999974E-6 : f32
    %45 = vector.broadcast %cst_33 : f32 to vector<48x1xf32>
    %46 = arith.addf %44, %45 : vector<48x1xf32>
    %47 = math.rsqrt %46 : vector<48x1xf32>
    %48 = vector.broadcast %47 : vector<48x1xf32> to vector<48x8xf32>
    %49 = arith.mulf %39, %48 : vector<48x8xf32>
    %c0_34 = arith.constant 0 : index
    %c0_35 = arith.constant 0 : index
    %50 = vector.load %arg5[%c0_34, %c0_35] : memref<48x1xf32, #tpu.memory_space<vmem>>, vector<48x1xf32>
    %51 = vector.broadcast %50 : vector<48x1xf32> to vector<48x8xf32>
    %52 = arith.mulf %49, %51 : vector<48x8xf32>
    %c0_36 = arith.constant 0 : index
    %c0_37 = arith.constant 0 : index
    %53 = vector.load %arg6[%c0_36, %c0_37] : memref<48x1xf32, #tpu.memory_space<vmem>>, vector<48x1xf32>
    %54 = vector.broadcast %53 : vector<48x1xf32> to vector<48x8xf32>
    %55 = arith.addf %52, %54 : vector<48x8xf32>
    %56 = arith.truncf %55 : vector<48x8xf32> to vector<48x8xbf16>
    %c0_38 = arith.constant 0 : index
    %c0_39 = arith.constant 0 : index
    %c0_40 = arith.constant 0 : index
    %57 = vector.load %arg7[%c0_38, %c0_39, %c0_40] : memref<1x48x8xbf16, #tpu.memory_space<vmem>>, vector<1x48x8xbf16>
    %58 = vector.shape_cast %57 : vector<1x48x8xbf16> to vector<48x8xbf16>
    %59 = vector.shape_cast %56 : vector<48x8xbf16> to vector<1x48x8xbf16>
    tpu.vector_store %arg7[%c0_38, %c0_39, %c0_40], %59 {strides = array<i32>} : memref<1x48x8xbf16, #tpu.memory_space<vmem>>, vector<1x48x8xbf16>,
    return
  }
  func.func @transform_0(%arg0: i32, %arg1: i32) -> (i32, i32, i32) {
    %c0_i32 = arith.constant 0 : i32
    %c0_i32_0 = arith.constant 0 : i32
    %c0_i32_1 = arith.constant 0 : i32
    return %arg0, %c0_i32, %c0_i32_0 : i32, i32, i32
  }
  func.func @transform_1(%arg0: i32, %arg1: i32) -> (i32, i32, i32) {
    %c0_i32 = arith.constant 0 : i32
    %c0_i32_0 = arith.constant 0 : i32
    %c0_i32_1 = arith.constant 0 : i32
    return %c0_i32, %arg1, %c0_i32_0 : i32, i32, i32
  }
  func.func @transform_2(%arg0: i32, %arg1: i32) -> (i32, i32) {
    %c0_i32 = arith.constant 0 : i32
    %c0_i32_0 = arith.constant 0 : i32
    return %arg1, %c0_i32 : i32, i32
  }
  func.func @transform_3(%arg0: i32, %arg1: i32) -> (i32, i32) {
    %c0_i32 = arith.constant 0 : i32
    %c0_i32_0 = arith.constant 0 : i32
    return %arg1, %c0_i32 : i32, i32
  }
  func.func @transform_4(%arg0: i32, %arg1: i32) -> (i32, i32) {
    %c0_i32 = arith.constant 0 : i32
    %c0_i32_0 = arith.constant 0 : i32
    return %arg1, %c0_i32 : i32, i32
  }
  func.func @transform_5(%arg0: i32, %arg1: i32) -> (i32, i32, i32) {
    %c0_i32 = arith.constant 0 : i32
    %c0_i32_0 = arith.constant 0 : i32
    return %arg0, %arg1, %c0_i32 : i32, i32, i32
  }
}

module attributes {stable_mosaic.version = 11 : i64} {
  func.func @_mlp_kernel(%arg0: i32, %arg1: i32, %arg2: memref<1x48x8xbf16, #tpu.memory_space<vmem>>, %arg3: memref<48x48xbf16, #tpu.memory_space<vmem>>, %arg4: memref<48x1xf32, #tpu.memory_space<vmem>>, %arg5: memref<48x48xbf16, #tpu.memory_space<vmem>>, %arg6: memref<48x1xf32, #tpu.memory_space<vmem>>, %arg7: memref<48x1xf32, #tpu.memory_space<vmem>>, %arg8: memref<48x1xf32, #tpu.memory_space<vmem>>, %arg9: memref<1x48x8xbf16, #tpu.memory_space<vmem>>) attributes {dimension_semantics = [#tpu.dimension_semantics<parallel>, #tpu.dimension_semantics<parallel>], iteration_bounds = array<i64: 2, 1>, scalar_prefetch = 0 : i64, scratch_operands = 0 : i64, tpu.core_type = #tpu.core_type<tc>, window_params = [{transform_indices = @transform_0, window_bounds = array<i64: 1, 48, 8>}, {pipeline_mode = #tpu.pipeline_mode<synchronous>, transform_indices = @transform_1, window_bounds = array<i64: 48, 48>}, {pipeline_mode = #tpu.pipeline_mode<synchronous>, transform_indices = @transform_2, window_bounds = array<i64: 48, 1>}, {pipeline_mode = #tpu.pipeline_mode<synchronous>, transform_indices = @transform_3, window_bounds = array<i64: 48, 48>}, {pipeline_mode = #tpu.pipeline_mode<synchronous>, transform_indices = @transform_4, window_bounds = array<i64: 48, 1>}, {pipeline_mode = #tpu.pipeline_mode<synchronous>, transform_indices = @transform_5, window_bounds = array<i64: 48, 1>}, {pipeline_mode = #tpu.pipeline_mode<synchronous>, transform_indices = @transform_6, window_bounds = array<i64: 48, 1>}, {transform_indices = @transform_7, window_bounds = array<i64: 1, 48, 8>}]} {
    %c0 = arith.constant 0 : index
    %c0_0 = arith.constant 0 : index
    %c0_1 = arith.constant 0 : index
    %0 = vector.load %arg2[%c0, %c0_0, %c0_1] : memref<1x48x8xbf16, #tpu.memory_space<vmem>>, vector<1x48x8xbf16>
    %1 = vector.shape_cast %0 : vector<1x48x8xbf16> to vector<48x8xbf16>
    %c0_2 = arith.constant 0 : index
    %c0_3 = arith.constant 0 : index
    %2 = vector.load %arg3[%c0_2, %c0_3] : memref<48x48xbf16, #tpu.memory_space<vmem>>, vector<48x48xbf16>
    %cst = arith.constant dense<0.000000e+00> : vector<48x8xf32>
    %3 = tpu.matmul %2, %1, %cst {dimension_numbers = #tpu.dot_dimension_numbers<[1], [0], [0], [1], [0, 0, 1, 1], [], []>} : vector<48x48xbf16>, vector<48x8xbf16>, vector<48x8xf32> -> vector<48x8xf32>
    %c0_4 = arith.constant 0 : index
    %c0_5 = arith.constant 0 : index
    %4 = vector.load %arg4[%c0_4, %c0_5] : memref<48x1xf32, #tpu.memory_space<vmem>>, vector<48x1xf32>
    %5 = vector.broadcast %4 : vector<48x1xf32> to vector<48x8xf32>
    %6 = arith.addf %3, %5 : vector<48x8xf32>
    %cst_6 = arith.constant 0.000000e+00 : f32
    %7 = vector.broadcast %cst_6 : f32 to vector<48x8xf32>
    %8 = arith.maximumf %6, %7 : vector<48x8xf32>
    %9 = arith.truncf %8 : vector<48x8xf32> to vector<48x8xbf16>
    %c0_7 = arith.constant 0 : index
    %c0_8 = arith.constant 0 : index
    %10 = vector.load %arg5[%c0_7, %c0_8] : memref<48x48xbf16, #tpu.memory_space<vmem>>, vector<48x48xbf16>
    %cst_9 = arith.constant dense<0.000000e+00> : vector<48x8xf32>
    %11 = tpu.matmul %10, %9, %cst_9 {dimension_numbers = #tpu.dot_dimension_numbers<[1], [0], [0], [1], [0, 0, 1, 1], [], []>} : vector<48x48xbf16>, vector<48x8xbf16>, vector<48x8xf32> -> vector<48x8xf32>
    %c0_10 = arith.constant 0 : index
    %c0_11 = arith.constant 0 : index
    %12 = vector.load %arg6[%c0_10, %c0_11] : memref<48x1xf32, #tpu.memory_space<vmem>>, vector<48x1xf32>
    %13 = vector.broadcast %12 : vector<48x1xf32> to vector<48x8xf32>
    %14 = arith.addf %11, %13 : vector<48x8xf32>
    %15 = arith.extf %1 : vector<48x8xbf16> to vector<48x8xf32>
    %16 = arith.addf %14, %15 : vector<48x8xf32>
    %cst_12 = arith.constant dense<0.000000e+00> : vector<48xf32>
    %17 = vector.multi_reduction <add>, %16, %cst_12 [1] : vector<48x8xf32> to vector<48xf32>
    %18 = vector.shape_cast %17 : vector<48xf32> to vector<48x1xf32>
    %cst_13 = arith.constant 8.000000e+00 : f32
    %19 = vector.broadcast %cst_13 : f32 to vector<48x1xf32>
    %20 = arith.divf %18, %19 : vector<48x1xf32>
    %21 = vector.broadcast %20 : vector<48x1xf32> to vector<48x8xf32>
    %22 = arith.subf %16, %21 : vector<48x8xf32>
    %23 = arith.mulf %22, %22 : vector<48x8xf32>
    %cst_14 = arith.constant dense<0.000000e+00> : vector<48xf32>
    %24 = vector.multi_reduction <add>, %23, %cst_14 [1] : vector<48x8xf32> to vector<48xf32>
    %25 = vector.shape_cast %24 : vector<48xf32> to vector<48x1xf32>
    %cst_15 = arith.constant 8.000000e+00 : f32
    %26 = vector.broadcast %cst_15 : f32 to vector<48x1xf32>
    %27 = arith.divf %25, %26 : vector<48x1xf32>
    %cst_16 = arith.constant 9.99999974E-6 : f32
    %28 = vector.broadcast %cst_16 : f32 to vector<48x1xf32>
    %29 = arith.addf %27, %28 : vector<48x1xf32>
    %30 = math.rsqrt %29 : vector<48x1xf32>
    %31 = vector.broadcast %30 : vector<48x1xf32> to vector<48x8xf32>
    %32 = arith.mulf %22, %31 : vector<48x8xf32>
    %c0_17 = arith.constant 0 : index
    %c0_18 = arith.constant 0 : index
    %33 = vector.load %arg7[%c0_17, %c0_18] : memref<48x1xf32, #tpu.memory_space<vmem>>, vector<48x1xf32>
    %34 = vector.broadcast %33 : vector<48x1xf32> to vector<48x8xf32>
    %35 = arith.mulf %32, %34 : vector<48x8xf32>
    %c0_19 = arith.constant 0 : index
    %c0_20 = arith.constant 0 : index
    %36 = vector.load %arg8[%c0_19, %c0_20] : memref<48x1xf32, #tpu.memory_space<vmem>>, vector<48x1xf32>
    %37 = vector.broadcast %36 : vector<48x1xf32> to vector<48x8xf32>
    %38 = arith.addf %35, %37 : vector<48x8xf32>
    %39 = arith.truncf %38 : vector<48x8xf32> to vector<48x8xbf16>
    %c0_21 = arith.constant 0 : index
    %c0_22 = arith.constant 0 : index
    %c0_23 = arith.constant 0 : index
    %40 = vector.load %arg9[%c0_21, %c0_22, %c0_23] : memref<1x48x8xbf16, #tpu.memory_space<vmem>>, vector<1x48x8xbf16>
    %41 = vector.shape_cast %40 : vector<1x48x8xbf16> to vector<48x8xbf16>
    %42 = vector.shape_cast %39 : vector<48x8xbf16> to vector<1x48x8xbf16>
    tpu.vector_store %arg9[%c0_21, %c0_22, %c0_23], %42 {strides = array<i32>} : memref<1x48x8xbf16, #tpu.memory_space<vmem>>, vector<1x48x8xbf16>,
    return
  }
  func.func @transform_0(%arg0: i32, %arg1: i32) -> (i32, i32, i32) {
    %c0_i32 = arith.constant 0 : i32
    %c0_i32_0 = arith.constant 0 : i32
    return %arg0, %c0_i32, %arg1 : i32, i32, i32
  }
  func.func @transform_1(%arg0: i32, %arg1: i32) -> (i32, i32) {
    %c0_i32 = arith.constant 0 : i32
    %c0_i32_0 = arith.constant 0 : i32
    %c0_i32_1 = arith.constant 0 : i32
    return %c0_i32, %c0_i32_0 : i32, i32
  }
  func.func @transform_2(%arg0: i32, %arg1: i32) -> (i32, i32) {
    %c0_i32 = arith.constant 0 : i32
    %c0_i32_0 = arith.constant 0 : i32
    %c0_i32_1 = arith.constant 0 : i32
    return %c0_i32, %c0_i32_0 : i32, i32
  }
  func.func @transform_3(%arg0: i32, %arg1: i32) -> (i32, i32) {
    %c0_i32 = arith.constant 0 : i32
    %c0_i32_0 = arith.constant 0 : i32
    %c0_i32_1 = arith.constant 0 : i32
    return %c0_i32, %c0_i32_0 : i32, i32
  }
  func.func @transform_4(%arg0: i32, %arg1: i32) -> (i32, i32) {
    %c0_i32 = arith.constant 0 : i32
    %c0_i32_0 = arith.constant 0 : i32
    %c0_i32_1 = arith.constant 0 : i32
    return %c0_i32, %c0_i32_0 : i32, i32
  }
  func.func @transform_5(%arg0: i32, %arg1: i32) -> (i32, i32) {
    %c0_i32 = arith.constant 0 : i32
    %c0_i32_0 = arith.constant 0 : i32
    %c0_i32_1 = arith.constant 0 : i32
    return %c0_i32, %c0_i32_0 : i32, i32
  }
  func.func @transform_6(%arg0: i32, %arg1: i32) -> (i32, i32) {
    %c0_i32 = arith.constant 0 : i32
    %c0_i32_0 = arith.constant 0 : i32
    %c0_i32_1 = arith.constant 0 : i32
    return %c0_i32, %c0_i32_0 : i32, i32
  }
  func.func @transform_7(%arg0: i32, %arg1: i32) -> (i32, i32, i32) {
    %c0_i32 = arith.constant 0 : i32
    %c0_i32_0 = arith.constant 0 : i32
    return %arg0, %c0_i32, %arg1 : i32, i32, i32
  }
}

module attributes {stable_mosaic.version = 11 : i64} {
  func.func @_conv_kernel(%arg0: i32, %arg1: i32, %arg2: memref<1x48x8xbf16, #tpu.memory_space<vmem>>, %arg3: memref<3x48x48xbf16, #tpu.memory_space<vmem>>, %arg4: memref<48x1xf32, #tpu.memory_space<vmem>>, %arg5: memref<48x1xf32, #tpu.memory_space<vmem>>, %arg6: memref<48x1xf32, #tpu.memory_space<vmem>>, %arg7: memref<1x48x8xbf16, #tpu.memory_space<vmem>>, %arg8: memref<48x10xbf16, #tpu.memory_space<vmem>>) attributes {dimension_semantics = [#tpu.dimension_semantics<parallel>, #tpu.dimension_semantics<arbitrary>], iteration_bounds = array<i64: 2, 1>, scalar_prefetch = 0 : i64, scratch_operands = 1 : i64, tpu.core_type = #tpu.core_type<tc>, window_params = [{transform_indices = @transform_0, window_bounds = array<i64: 1, 48, 8>}, {transform_indices = @transform_1, window_bounds = array<i64: 3, 48, 48>}, {transform_indices = @transform_2, window_bounds = array<i64: 48, 1>}, {transform_indices = @transform_3, window_bounds = array<i64: 48, 1>}, {transform_indices = @transform_4, window_bounds = array<i64: 48, 1>}, {transform_indices = @transform_5, window_bounds = array<i64: 1, 48, 8>}]} {
    %c0 = arith.constant 0 : index
    %c0_0 = arith.constant 0 : index
    %c0_1 = arith.constant 0 : index
    %0 = vector.load %arg2[%c0, %c0_0, %c0_1] : memref<1x48x8xbf16, #tpu.memory_space<vmem>>, vector<1x48x8xbf16>
    %1 = vector.shape_cast %0 : vector<1x48x8xbf16> to vector<48x8xbf16>
    %cst = arith.constant 0.000000e+00 : bf16
    %2 = vector.broadcast %cst : bf16 to vector<48x1xbf16>
    %c0_2 = arith.constant 0 : index
    %c0_3 = arith.constant 0 : index
    %3 = vector.load %arg8[%c0_2, %c0_3] : memref<48x10xbf16, #tpu.memory_space<vmem>>, vector<48x1xbf16>
    tpu.vector_store %arg8[%c0_2, %c0_3], %2 {strides = array<i32>} : memref<48x10xbf16, #tpu.memory_space<vmem>>, vector<48x1xbf16>,
    %c0_4 = arith.constant 0 : index
    %c9 = arith.constant 9 : index
    %4 = vector.load %arg8[%c0_4, %c9] : memref<48x10xbf16, #tpu.memory_space<vmem>>, vector<48x1xbf16>
    tpu.vector_store %arg8[%c0_4, %c9], %2 {strides = array<i32>} : memref<48x10xbf16, #tpu.memory_space<vmem>>, vector<48x1xbf16>,
    %c0_5 = arith.constant 0 : index
    %c1 = arith.constant 1 : index
    %5 = vector.load %arg8[%c0_5, %c1] : memref<48x10xbf16, #tpu.memory_space<vmem>>, vector<48x8xbf16>
    tpu.vector_store %arg8[%c0_5, %c1], %1 {strides = array<i32>} : memref<48x10xbf16, #tpu.memory_space<vmem>>, vector<48x8xbf16>,
    %cst_6 = arith.constant 0.000000e+00 : f32
    %6 = vector.broadcast %cst_6 : f32 to vector<48x8xf32>
    %c0_7 = arith.constant 0 : index
    %c0_8 = arith.constant 0 : index
    %c0_9 = arith.constant 0 : index
    %7 = vector.load %arg3[%c0_7, %c0_8, %c0_9] : memref<3x48x48xbf16, #tpu.memory_space<vmem>>, vector<1x48x48xbf16>
    %8 = vector.shape_cast %7 : vector<1x48x48xbf16> to vector<48x48xbf16>
    %c0_10 = arith.constant 0 : index
    %c0_11 = arith.constant 0 : index
    %9 = vector.load %arg8[%c0_10, %c0_11] : memref<48x10xbf16, #tpu.memory_space<vmem>>, vector<48x8xbf16>
    %cst_12 = arith.constant dense<0.000000e+00> : vector<48x8xf32>
    %10 = tpu.matmul %8, %9, %cst_12 {dimension_numbers = #tpu.dot_dimension_numbers<[1], [0], [0], [1], [0, 0, 1, 1], [], []>} : vector<48x48xbf16>, vector<48x8xbf16>, vector<48x8xf32> -> vector<48x8xf32>
    %11 = arith.addf %6, %10 : vector<48x8xf32>
    %c1_13 = arith.constant 1 : index
    %c0_14 = arith.constant 0 : index
    %c0_15 = arith.constant 0 : index
    %12 = vector.load %arg3[%c1_13, %c0_14, %c0_15] : memref<3x48x48xbf16, #tpu.memory_space<vmem>>, vector<1x48x48xbf16>
    %13 = vector.shape_cast %12 : vector<1x48x48xbf16> to vector<48x48xbf16>
    %c0_16 = arith.constant 0 : index
    %c1_17 = arith.constant 1 : index
    %14 = vector.load %arg8[%c0_16, %c1_17] : memref<48x10xbf16, #tpu.memory_space<vmem>>, vector<48x8xbf16>
    %cst_18 = arith.constant dense<0.000000e+00> : vector<48x8xf32>
    %15 = tpu.matmul %13, %14, %cst_18 {dimension_numbers = #tpu.dot_dimension_numbers<[1], [0], [0], [1], [0, 0, 1, 1], [], []>} : vector<48x48xbf16>, vector<48x8xbf16>, vector<48x8xf32> -> vector<48x8xf32>
    %16 = arith.addf %11, %15 : vector<48x8xf32>
    %c2 = arith.constant 2 : index
    %c0_19 = arith.constant 0 : index
    %c0_20 = arith.constant 0 : index
    %17 = vector.load %arg3[%c2, %c0_19, %c0_20] : memref<3x48x48xbf16, #tpu.memory_space<vmem>>, vector<1x48x48xbf16>
    %18 = vector.shape_cast %17 : vector<1x48x48xbf16> to vector<48x48xbf16>
    %c0_21 = arith.constant 0 : index
    %c2_22 = arith.constant 2 : index
    %19 = vector.load %arg8[%c0_21, %c2_22] : memref<48x10xbf16, #tpu.memory_space<vmem>>, vector<48x8xbf16>
    %cst_23 = arith.constant dense<0.000000e+00> : vector<48x8xf32>
    %20 = tpu.matmul %18, %19, %cst_23 {dimension_numbers = #tpu.dot_dimension_numbers<[1], [0], [0], [1], [0, 0, 1, 1], [], []>} : vector<48x48xbf16>, vector<48x8xbf16>, vector<48x8xf32> -> vector<48x8xf32>
    %21 = arith.addf %16, %20 : vector<48x8xf32>
    %c0_24 = arith.constant 0 : index
    %c0_25 = arith.constant 0 : index
    %22 = vector.load %arg4[%c0_24, %c0_25] : memref<48x1xf32, #tpu.memory_space<vmem>>, vector<48x1xf32>
    %23 = vector.broadcast %22 : vector<48x1xf32> to vector<48x8xf32>
    %24 = arith.addf %21, %23 : vector<48x8xf32>
    %cst_26 = arith.constant 0.000000e+00 : f32
    %25 = vector.broadcast %cst_26 : f32 to vector<48x8xf32>
    %26 = arith.maximumf %24, %25 : vector<48x8xf32>
    %c48_i32 = arith.constant 48 : i32
    %27 = arith.muli %arg1, %c48_i32 : i32
    %28 = tpu.assume_multiple %27, 8 : i32
    %c0_27 = arith.constant 0 : index
    %29 = arith.index_cast %28 : i32 to index
    %c0_28 = arith.constant 0 : index
    %30 = vector.load %arg2[%c0_27, %29, %c0_28] : memref<1x48x8xbf16, #tpu.memory_space<vmem>>, vector<1x48x8xbf16>
    %31 = vector.shape_cast %30 : vector<1x48x8xbf16> to vector<48x8xbf16>
    %32 = arith.extf %31 : vector<48x8xbf16> to vector<48x8xf32>
    %33 = arith.addf %26, %32 : vector<48x8xf32>
    %cst_29 = arith.constant dense<0.000000e+00> : vector<48xf32>
    %34 = vector.multi_reduction <add>, %33, %cst_29 [1] : vector<48x8xf32> to vector<48xf32>
    %35 = vector.shape_cast %34 : vector<48xf32> to vector<48x1xf32>
    %cst_30 = arith.constant 8.000000e+00 : f32
    %36 = vector.broadcast %cst_30 : f32 to vector<48x1xf32>
    %37 = arith.divf %35, %36 : vector<48x1xf32>
    %38 = vector.broadcast %37 : vector<48x1xf32> to vector<48x8xf32>
    %39 = arith.subf %33, %38 : vector<48x8xf32>
    %40 = arith.mulf %39, %39 : vector<48x8xf32>
    %cst_31 = arith.constant dense<0.000000e+00> : vector<48xf32>
    %41 = vector.multi_reduction <add>, %40, %cst_31 [1] : vector<48x8xf32> to vector<48xf32>
    %42 = vector.shape_cast %41 : vector<48xf32> to vector<48x1xf32>
    %cst_32 = arith.constant 8.000000e+00 : f32
    %43 = vector.broadcast %cst_32 : f32 to vector<48x1xf32>
    %44 = arith.divf %42, %43 : vector<48x1xf32>
    %cst_33 = arith.constant 9.99999974E-6 : f32
    %45 = vector.broadcast %cst_33 : f32 to vector<48x1xf32>
    %46 = arith.addf %44, %45 : vector<48x1xf32>
    %47 = math.rsqrt %46 : vector<48x1xf32>
    %48 = vector.broadcast %47 : vector<48x1xf32> to vector<48x8xf32>
    %49 = arith.mulf %39, %48 : vector<48x8xf32>
    %c0_34 = arith.constant 0 : index
    %c0_35 = arith.constant 0 : index
    %50 = vector.load %arg5[%c0_34, %c0_35] : memref<48x1xf32, #tpu.memory_space<vmem>>, vector<48x1xf32>
    %51 = vector.broadcast %50 : vector<48x1xf32> to vector<48x8xf32>
    %52 = arith.mulf %49, %51 : vector<48x8xf32>
    %c0_36 = arith.constant 0 : index
    %c0_37 = arith.constant 0 : index
    %53 = vector.load %arg6[%c0_36, %c0_37] : memref<48x1xf32, #tpu.memory_space<vmem>>, vector<48x1xf32>
    %54 = vector.broadcast %53 : vector<48x1xf32> to vector<48x8xf32>
    %55 = arith.addf %52, %54 : vector<48x8xf32>
    %56 = arith.truncf %55 : vector<48x8xf32> to vector<48x8xbf16>
    %c0_38 = arith.constant 0 : index
    %c0_39 = arith.constant 0 : index
    %c0_40 = arith.constant 0 : index
    %57 = vector.load %arg7[%c0_38, %c0_39, %c0_40] : memref<1x48x8xbf16, #tpu.memory_space<vmem>>, vector<1x48x8xbf16>
    %58 = vector.shape_cast %57 : vector<1x48x8xbf16> to vector<48x8xbf16>
    %59 = vector.shape_cast %56 : vector<48x8xbf16> to vector<1x48x8xbf16>
    tpu.vector_store %arg7[%c0_38, %c0_39, %c0_40], %59 {strides = array<i32>} : memref<1x48x8xbf16, #tpu.memory_space<vmem>>, vector<1x48x8xbf16>,
    return
  }
  func.func @transform_0(%arg0: i32, %arg1: i32) -> (i32, i32, i32) {
    %c0_i32 = arith.constant 0 : i32
    %c0_i32_0 = arith.constant 0 : i32
    %c0_i32_1 = arith.constant 0 : i32
    return %arg0, %c0_i32, %c0_i32_0 : i32, i32, i32
  }
  func.func @transform_1(%arg0: i32, %arg1: i32) -> (i32, i32, i32) {
    %c0_i32 = arith.constant 0 : i32
    %c0_i32_0 = arith.constant 0 : i32
    %c0_i32_1 = arith.constant 0 : i32
    return %c0_i32, %arg1, %c0_i32_0 : i32, i32, i32
  }
  func.func @transform_2(%arg0: i32, %arg1: i32) -> (i32, i32) {
    %c0_i32 = arith.constant 0 : i32
    %c0_i32_0 = arith.constant 0 : i32
    return %arg1, %c0_i32 : i32, i32
  }
  func.func @transform_3(%arg0: i32, %arg1: i32) -> (i32, i32) {
    %c0_i32 = arith.constant 0 : i32
    %c0_i32_0 = arith.constant 0 : i32
    return %arg1, %c0_i32 : i32, i32
  }
  func.func @transform_4(%arg0: i32, %arg1: i32) -> (i32, i32) {
    %c0_i32 = arith.constant 0 : i32
    %c0_i32_0 = arith.constant 0 : i32
    return %arg1, %c0_i32 : i32, i32
  }
  func.func @transform_5(%arg0: i32, %arg1: i32) -> (i32, i32, i32) {
    %c0_i32 = arith.constant 0 : i32
    %c0_i32_0 = arith.constant 0 : i32
    return %arg0, %arg1, %c0_i32 : i32, i32, i32
  }
}

module attributes {stable_mosaic.version = 11 : i64} {
  func.func @_mlp_kernel(%arg0: i32, %arg1: i32, %arg2: memref<1x48x8xbf16, #tpu.memory_space<vmem>>, %arg3: memref<48x48xbf16, #tpu.memory_space<vmem>>, %arg4: memref<48x1xf32, #tpu.memory_space<vmem>>, %arg5: memref<48x48xbf16, #tpu.memory_space<vmem>>, %arg6: memref<48x1xf32, #tpu.memory_space<vmem>>, %arg7: memref<48x1xf32, #tpu.memory_space<vmem>>, %arg8: memref<48x1xf32, #tpu.memory_space<vmem>>, %arg9: memref<1x48x8xbf16, #tpu.memory_space<vmem>>) attributes {dimension_semantics = [#tpu.dimension_semantics<parallel>, #tpu.dimension_semantics<parallel>], iteration_bounds = array<i64: 2, 1>, scalar_prefetch = 0 : i64, scratch_operands = 0 : i64, tpu.core_type = #tpu.core_type<tc>, window_params = [{transform_indices = @transform_0, window_bounds = array<i64: 1, 48, 8>}, {pipeline_mode = #tpu.pipeline_mode<synchronous>, transform_indices = @transform_1, window_bounds = array<i64: 48, 48>}, {pipeline_mode = #tpu.pipeline_mode<synchronous>, transform_indices = @transform_2, window_bounds = array<i64: 48, 1>}, {pipeline_mode = #tpu.pipeline_mode<synchronous>, transform_indices = @transform_3, window_bounds = array<i64: 48, 48>}, {pipeline_mode = #tpu.pipeline_mode<synchronous>, transform_indices = @transform_4, window_bounds = array<i64: 48, 1>}, {pipeline_mode = #tpu.pipeline_mode<synchronous>, transform_indices = @transform_5, window_bounds = array<i64: 48, 1>}, {pipeline_mode = #tpu.pipeline_mode<synchronous>, transform_indices = @transform_6, window_bounds = array<i64: 48, 1>}, {transform_indices = @transform_7, window_bounds = array<i64: 1, 48, 8>}]} {
    %c0 = arith.constant 0 : index
    %c0_0 = arith.constant 0 : index
    %c0_1 = arith.constant 0 : index
    %0 = vector.load %arg2[%c0, %c0_0, %c0_1] : memref<1x48x8xbf16, #tpu.memory_space<vmem>>, vector<1x48x8xbf16>
    %1 = vector.shape_cast %0 : vector<1x48x8xbf16> to vector<48x8xbf16>
    %c0_2 = arith.constant 0 : index
    %c0_3 = arith.constant 0 : index
    %2 = vector.load %arg3[%c0_2, %c0_3] : memref<48x48xbf16, #tpu.memory_space<vmem>>, vector<48x48xbf16>
    %cst = arith.constant dense<0.000000e+00> : vector<48x8xf32>
    %3 = tpu.matmul %2, %1, %cst {dimension_numbers = #tpu.dot_dimension_numbers<[1], [0], [0], [1], [0, 0, 1, 1], [], []>} : vector<48x48xbf16>, vector<48x8xbf16>, vector<48x8xf32> -> vector<48x8xf32>
    %c0_4 = arith.constant 0 : index
    %c0_5 = arith.constant 0 : index
    %4 = vector.load %arg4[%c0_4, %c0_5] : memref<48x1xf32, #tpu.memory_space<vmem>>, vector<48x1xf32>
    %5 = vector.broadcast %4 : vector<48x1xf32> to vector<48x8xf32>
    %6 = arith.addf %3, %5 : vector<48x8xf32>
    %cst_6 = arith.constant 0.000000e+00 : f32
    %7 = vector.broadcast %cst_6 : f32 to vector<48x8xf32>
    %8 = arith.maximumf %6, %7 : vector<48x8xf32>
    %9 = arith.truncf %8 : vector<48x8xf32> to vector<48x8xbf16>
    %c0_7 = arith.constant 0 : index
    %c0_8 = arith.constant 0 : index
    %10 = vector.load %arg5[%c0_7, %c0_8] : memref<48x48xbf16, #tpu.memory_space<vmem>>, vector<48x48xbf16>
    %cst_9 = arith.constant dense<0.000000e+00> : vector<48x8xf32>
    %11 = tpu.matmul %10, %9, %cst_9 {dimension_numbers = #tpu.dot_dimension_numbers<[1], [0], [0], [1], [0, 0, 1, 1], [], []>} : vector<48x48xbf16>, vector<48x8xbf16>, vector<48x8xf32> -> vector<48x8xf32>
    %c0_10 = arith.constant 0 : index
    %c0_11 = arith.constant 0 : index
    %12 = vector.load %arg6[%c0_10, %c0_11] : memref<48x1xf32, #tpu.memory_space<vmem>>, vector<48x1xf32>
    %13 = vector.broadcast %12 : vector<48x1xf32> to vector<48x8xf32>
    %14 = arith.addf %11, %13 : vector<48x8xf32>
    %15 = arith.extf %1 : vector<48x8xbf16> to vector<48x8xf32>
    %16 = arith.addf %14, %15 : vector<48x8xf32>
    %cst_12 = arith.constant dense<0.000000e+00> : vector<48xf32>
    %17 = vector.multi_reduction <add>, %16, %cst_12 [1] : vector<48x8xf32> to vector<48xf32>
    %18 = vector.shape_cast %17 : vector<48xf32> to vector<48x1xf32>
    %cst_13 = arith.constant 8.000000e+00 : f32
    %19 = vector.broadcast %cst_13 : f32 to vector<48x1xf32>
    %20 = arith.divf %18, %19 : vector<48x1xf32>
    %21 = vector.broadcast %20 : vector<48x1xf32> to vector<48x8xf32>
    %22 = arith.subf %16, %21 : vector<48x8xf32>
    %23 = arith.mulf %22, %22 : vector<48x8xf32>
    %cst_14 = arith.constant dense<0.000000e+00> : vector<48xf32>
    %24 = vector.multi_reduction <add>, %23, %cst_14 [1] : vector<48x8xf32> to vector<48xf32>
    %25 = vector.shape_cast %24 : vector<48xf32> to vector<48x1xf32>
    %cst_15 = arith.constant 8.000000e+00 : f32
    %26 = vector.broadcast %cst_15 : f32 to vector<48x1xf32>
    %27 = arith.divf %25, %26 : vector<48x1xf32>
    %cst_16 = arith.constant 9.99999974E-6 : f32
    %28 = vector.broadcast %cst_16 : f32 to vector<48x1xf32>
    %29 = arith.addf %27, %28 : vector<48x1xf32>
    %30 = math.rsqrt %29 : vector<48x1xf32>
    %31 = vector.broadcast %30 : vector<48x1xf32> to vector<48x8xf32>
    %32 = arith.mulf %22, %31 : vector<48x8xf32>
    %c0_17 = arith.constant 0 : index
    %c0_18 = arith.constant 0 : index
    %33 = vector.load %arg7[%c0_17, %c0_18] : memref<48x1xf32, #tpu.memory_space<vmem>>, vector<48x1xf32>
    %34 = vector.broadcast %33 : vector<48x1xf32> to vector<48x8xf32>
    %35 = arith.mulf %32, %34 : vector<48x8xf32>
    %c0_19 = arith.constant 0 : index
    %c0_20 = arith.constant 0 : index
    %36 = vector.load %arg8[%c0_19, %c0_20] : memref<48x1xf32, #tpu.memory_space<vmem>>, vector<48x1xf32>
    %37 = vector.broadcast %36 : vector<48x1xf32> to vector<48x8xf32>
    %38 = arith.addf %35, %37 : vector<48x8xf32>
    %39 = arith.truncf %38 : vector<48x8xf32> to vector<48x8xbf16>
    %c0_21 = arith.constant 0 : index
    %c0_22 = arith.constant 0 : index
    %c0_23 = arith.constant 0 : index
    %40 = vector.load %arg9[%c0_21, %c0_22, %c0_23] : memref<1x48x8xbf16, #tpu.memory_space<vmem>>, vector<1x48x8xbf16>
    %41 = vector.shape_cast %40 : vector<1x48x8xbf16> to vector<48x8xbf16>
    %42 = vector.shape_cast %39 : vector<48x8xbf16> to vector<1x48x8xbf16>
    tpu.vector_store %arg9[%c0_21, %c0_22, %c0_23], %42 {strides = array<i32>} : memref<1x48x8xbf16, #tpu.memory_space<vmem>>, vector<1x48x8xbf16>,
    return
  }
  func.func @transform_0(%arg0: i32, %arg1: i32) -> (i32, i32, i32) {
    %c0_i32 = arith.constant 0 : i32
    %c0_i32_0 = arith.constant 0 : i32
    return %arg0, %c0_i32, %arg1 : i32, i32, i32
  }
  func.func @transform_1(%arg0: i32, %arg1: i32) -> (i32, i32) {
    %c0_i32 = arith.constant 0 : i32
    %c0_i32_0 = arith.constant 0 : i32
    %c0_i32_1 = arith.constant 0 : i32
    return %c0_i32, %c0_i32_0 : i32, i32
  }
  func.func @transform_2(%arg0: i32, %arg1: i32) -> (i32, i32) {
    %c0_i32 = arith.constant 0 : i32
    %c0_i32_0 = arith.constant 0 : i32
    %c0_i32_1 = arith.constant 0 : i32
    return %c0_i32, %c0_i32_0 : i32, i32
  }
  func.func @transform_3(%arg0: i32, %arg1: i32) -> (i32, i32) {
    %c0_i32 = arith.constant 0 : i32
    %c0_i32_0 = arith.constant 0 : i32
    %c0_i32_1 = arith.constant 0 : i32
    return %c0_i32, %c0_i32_0 : i32, i32
  }
  func.func @transform_4(%arg0: i32, %arg1: i32) -> (i32, i32) {
    %c0_i32 = arith.constant 0 : i32
    %c0_i32_0 = arith.constant 0 : i32
    %c0_i32_1 = arith.constant 0 : i32
    return %c0_i32, %c0_i32_0 : i32, i32
  }
  func.func @transform_5(%arg0: i32, %arg1: i32) -> (i32, i32) {
    %c0_i32 = arith.constant 0 : i32
    %c0_i32_0 = arith.constant 0 : i32
    %c0_i32_1 = arith.constant 0 : i32
    return %c0_i32, %c0_i32_0 : i32, i32
  }
  func.func @transform_6(%arg0: i32, %arg1: i32) -> (i32, i32) {
    %c0_i32 = arith.constant 0 : i32
    %c0_i32_0 = arith.constant 0 : i32
    %c0_i32_1 = arith.constant 0 : i32
    return %c0_i32, %c0_i32_0 : i32, i32
  }
  func.func @transform_7(%arg0: i32, %arg1: i32) -> (i32, i32, i32) {
    %c0_i32 = arith.constant 0 : i32
    %c0_i32_0 = arith.constant 0 : i32
    return %arg0, %c0_i32, %arg1 : i32, i32, i32
  }
}

module attributes {stable_mosaic.version = 11 : i64} {
  func.func @_conv_kernel(%arg0: i32, %arg1: i32, %arg2: memref<1x48x8xbf16, #tpu.memory_space<vmem>>, %arg3: memref<1x10x48xbf16, #tpu.memory_space<vmem>>, %arg4: memref<10x1xf32, #tpu.memory_space<vmem>>, %arg5: memref<1x10x8xf32, #tpu.memory_space<vmem>>) attributes {dimension_semantics = [#tpu.dimension_semantics<parallel>, #tpu.dimension_semantics<arbitrary>], iteration_bounds = array<i64: 2, 1>, scalar_prefetch = 0 : i64, scratch_operands = 0 : i64, tpu.core_type = #tpu.core_type<tc>, window_params = [{transform_indices = @transform_0, window_bounds = array<i64: 1, 48, 8>}, {transform_indices = @transform_1, window_bounds = array<i64: 1, 10, 48>}, {transform_indices = @transform_2, window_bounds = array<i64: 10, 1>}, {transform_indices = @transform_3, window_bounds = array<i64: 1, 10, 8>}]} {
    %cst = arith.constant 0.000000e+00 : f32
    %0 = vector.broadcast %cst : f32 to vector<10x8xf32>
    %c0 = arith.constant 0 : index
    %c0_0 = arith.constant 0 : index
    %c0_1 = arith.constant 0 : index
    %1 = vector.load %arg3[%c0, %c0_0, %c0_1] : memref<1x10x48xbf16, #tpu.memory_space<vmem>>, vector<1x10x48xbf16>
    %2 = vector.shape_cast %1 : vector<1x10x48xbf16> to vector<10x48xbf16>
    %c0_2 = arith.constant 0 : index
    %c0_3 = arith.constant 0 : index
    %c0_4 = arith.constant 0 : index
    %3 = vector.load %arg2[%c0_2, %c0_3, %c0_4] : memref<1x48x8xbf16, #tpu.memory_space<vmem>>, vector<1x48x8xbf16>
    %4 = vector.shape_cast %3 : vector<1x48x8xbf16> to vector<48x8xbf16>
    %cst_5 = arith.constant dense<0.000000e+00> : vector<10x8xf32>
    %5 = tpu.matmul %2, %4, %cst_5 {dimension_numbers = #tpu.dot_dimension_numbers<[1], [0], [0], [1], [0, 0, 1, 1], [], []>} : vector<10x48xbf16>, vector<48x8xbf16>, vector<10x8xf32> -> vector<10x8xf32>
    %6 = arith.addf %0, %5 : vector<10x8xf32>
    %c0_6 = arith.constant 0 : index
    %c0_7 = arith.constant 0 : index
    %7 = vector.load %arg4[%c0_6, %c0_7] : memref<10x1xf32, #tpu.memory_space<vmem>>, vector<10x1xf32>
    %8 = vector.broadcast %7 : vector<10x1xf32> to vector<10x8xf32>
    %9 = arith.addf %6, %8 : vector<10x8xf32>
    %c0_8 = arith.constant 0 : index
    %c0_9 = arith.constant 0 : index
    %c0_10 = arith.constant 0 : index
    %10 = vector.load %arg5[%c0_8, %c0_9, %c0_10] : memref<1x10x8xf32, #tpu.memory_space<vmem>>, vector<1x10x8xf32>
    %11 = vector.shape_cast %10 : vector<1x10x8xf32> to vector<10x8xf32>
    %12 = vector.shape_cast %9 : vector<10x8xf32> to vector<1x10x8xf32>
    tpu.vector_store %arg5[%c0_8, %c0_9, %c0_10], %12 {strides = array<i32>} : memref<1x10x8xf32, #tpu.memory_space<vmem>>, vector<1x10x8xf32>,
    return
  }
  func.func @transform_0(%arg0: i32, %arg1: i32) -> (i32, i32, i32) {
    %c0_i32 = arith.constant 0 : i32
    %c0_i32_0 = arith.constant 0 : i32
    %c0_i32_1 = arith.constant 0 : i32
    return %arg0, %c0_i32, %c0_i32_0 : i32, i32, i32
  }
  func.func @transform_1(%arg0: i32, %arg1: i32) -> (i32, i32, i32) {
    %c0_i32 = arith.constant 0 : i32
    %c0_i32_0 = arith.constant 0 : i32
    %c0_i32_1 = arith.constant 0 : i32
    return %c0_i32, %arg1, %c0_i32_0 : i32, i32, i32
  }
  func.func @transform_2(%arg0: i32, %arg1: i32) -> (i32, i32) {
    %c0_i32 = arith.constant 0 : i32
    %c0_i32_0 = arith.constant 0 : i32
    return %arg1, %c0_i32 : i32, i32
  }
  func.func @transform_3(%arg0: i32, %arg1: i32) -> (i32, i32, i32) {
    %c0_i32 = arith.constant 0 : i32
    %c0_i32_0 = arith.constant 0 : i32
    return %arg0, %arg1, %c0_i32 : i32, i32, i32
  }
}

</mosaic_0001>

<llo_original>
// kernel: _lambda_.11
$region0: #{_lambda_.11}
  #allocation0 [shape = 'u32[]', space=smem, size = 0x4, offset = 0x4, fixed_abs, tag = 'smem constant byte address 0x4 - core index']
  #allocation1 [shape = 'u32[72,128]{1,0:T(1,128)}', space=vmem, size = 0x9000, scoped, tag = 'internal scratch']
  %s0 = inlined_call_operand.vmem [shape: f32[2,2,16,17], index: 0, kind: input, shape index: {}]
  %s1 = inlined_call_operand.hbm [shape: bf16[3,32,16], index: 1, kind: input, shape index: {}]
  %s2 = inlined_call_operand.hbm [shape: f32[32,1], index: 2, kind: input, shape index: {}]
  %s3 = inlined_call_operand.hbm [shape: f32[32,1], index: 3, kind: input, shape index: {}]
  %s4 = inlined_call_operand.hbm [shape: f32[32,1], index: 4, kind: input, shape index: {}]
  %s5 = inlined_call_operand.vmem [shape: bf16[2,32,16], index: 5, kind: output, shape index: {}]
  %s6 = sld [smem:[#allocation0]]
  $region107: #{_lambda_.11} parent=0
    _
  %s8 = ssub.s32 1, %s6
  %s9 = scalar_select 0, %s8, %s6
  $region1: #{_lambda_.11} parent=0
    #allocation2 [shape = 'u8[32768]{0}', space=vmem, size = 0x8000, scoped, tag = 'input window, operand 0']
    #allocation3 [shape = 'u8[24576]{0}', space=vmem, size = 0x6000, scoped, tag = 'input window, operand 1, single buffered']
    #allocation4 [shape = 's32[2]{0}', space=sflag, size = 0x8, scoped, tag = 'scoped memory for _lambda_.11']
    #allocation5 [shape = 'u8[16384]{0}', space=vmem, size = 0x4000, scoped, tag = 'input window, operand 2, single buffered']
    #allocation6 [shape = 's32[1]{0}', space=sflag, size = 0x4, scoped, tag = 'scoped memory for _lambda_.11']
    #allocation7 [shape = 'u8[16384]{0}', space=vmem, size = 0x4000, scoped, tag = 'input window, operand 3, single buffered']
    #allocation8 [shape = 'u8[16384]{0}', space=vmem, size = 0x4000, scoped, tag = 'input window, operand 4, single buffered']
    #allocation9 [shape = 's32[1]{0}', space=sflag, size = 0x4, scoped, tag = 'scoped memory for _lambda_.11']
    %10 = vsyncpa [#allocation4], 0
    %11 = vsyncpa [#allocation6], 0
    %12 = vsyncpa [#allocation9], 0
    loop: start=0, step=1, limit=4
    $region2: #{_lambda_.11} parent=1 // loop_pre_header
      _
    $region3: #{_lambda_.11} parent=1 // loop_header
      %s14 = sphi 0, %s18
      %p15 = scmp.ge.s32.totalorder %s14, 4
      %s21 = sphi 0, %s33
      %s22 = sphi 0, %s29
      %s23 = sphi 0, %s21
      %s24 = sphi 0, %s22
      %s25 = sphi 0, %s23
      %s26 = sphi 0, %s24
      %s36 = sphi 0, %s38
      %s39 = sphi 0, %s36
      %s40 = sphi 0, %s39
      %s56 = sphi 0, %s40
      %s62 = sphi 0, %s64
      %s65 = sphi 0, %s62
      %s66 = sphi 0, %s65
      %s82 = sphi 0, %s66
      %s88 = sphi 0, %s90
      %s91 = sphi 0, %s88
      %s92 = sphi 0, %s91
      %s108 = sphi 0, %s92
      %s114 = sphi 0, %s116
      %s117 = sphi 0, %s114
      %s118 = sphi 0, %s117
      %s134 = sphi 0, %s118
      %s140 = sphi 0, %s142
      %s143 = sphi 0, %s140
      %s144 = sphi 0, %s143
      %s160 = sphi 0, %s144
      %s168 = sphi 0, %s170
      %s171 = sphi 0, %s168
      %s172 = sphi 0, %s171
      %s188 = sphi 0, %s172
    $region4: #{_lambda_.11} parent=1 // loop_header_branch
      %17 = sbr.rel (%p15) target = $region8
    $region5: #{_lambda_.11} parent=1 // loop_body
      %s19 = ssub.s32 %s14, 1
      %s20 = ssub.s32 %s14, 2
      %s27 = sadd.s32 1, %s22
      %p28 = scmp.ge.s32.totalorder %s27, 1
      %s29 = scalar_select %p28, 0, %s27
      %s30 = sadd.s32 1, %s21
      %s31 = scalar_select %p28, %s30, %s21
      %p32 = scmp.ge.s32.totalorder %s31, 2
      %s33 = scalar_select %p32, 0, %s31
      %s34 = ssub.s32 %s21, %s33
      %p35 = scmp.eq.s32.totalorder %s34, 0
      %s37 = sadd.s32 %s36, 1
      %s38 = scalar_select %p35, %s36, %s37
      %p41 = pneg %p35
      %p42 = scmp.eq.s32.totalorder %s14, 1
      %p43 = por %p41, %p42
      %p44 = scmp.ne.s32.totalorder %s36, %s39
      %p45 = scmp.eq.s32.totalorder %s14, 0
      %p46 = por %p44, %p45
      %p47 = scmp.ne.s32.totalorder %s36, %s39
      %p48 = scmp.eq.s32.totalorder %s19, 1
      %p49 = por %p47, %p48
      %p50 = scmp.ne.s32.totalorder %s39, %s40
      %p51 = scmp.eq.s32.totalorder %s19, 0
      %p52 = por %p50, %p51
      %p53 = scmp.ne.s32.totalorder %s39, %s40
      %p54 = scmp.eq.s32.totalorder %s20, 1
      %p55 = por %p53, %p54
      %p57 = scmp.ne.s32.totalorder %s40, %s56
      %p58 = scmp.eq.s32.totalorder %s20, 0
      %p59 = por %p57, %p58
      %s60 = ssub.s32 %s22, %s29
      %p61 = scmp.eq.s32.totalorder %s60, 0
      %s63 = sadd.s32 %s62, 1
      %s64 = scalar_select %p61, %s62, %s63
      %p67 = pneg %p61
      %p68 = scmp.eq.s32.totalorder %s14, 1
      %p69 = por %p67, %p68
      %p70 = scmp.ne.s32.totalorder %s62, %s65
      %p71 = scmp.eq.s32.totalorder %s14, 0
      %p72 = por %p70, %p71
      %p73 = scmp.ne.s32.totalorder %s62, %s65
      %p74 = scmp.eq.s32.totalorder %s19, 1
      %p75 = por %p73, %p74
      %p76 = scmp.ne.s32.totalorder %s65, %s66
      %p77 = scmp.eq.s32.totalorder %s19, 0
      %p78 = por %p76, %p77
      %p79 = scmp.ne.s32.totalorder %s65, %s66
      %p80 = scmp.eq.s32.totalorder %s20, 1
      %p81 = por %p79, %p80
      %p83 = scmp.ne.s32.totalorder %s66, %s82
      %p84 = scmp.eq.s32.totalorder %s20, 0
      %p85 = por %p83, %p84
      %s86 = ssub.s32 %s22, %s29
      %p87 = scmp.eq.s32.totalorder %s86, 0
      %s89 = sadd.s32 %s88, 1
      %s90 = scalar_select %p87, %s88, %s89
      %p93 = pneg %p87
      %p94 = scmp.eq.s32.totalorder %s14, 1
      %p95 = por %p93, %p94
      %p96 = scmp.ne.s32.totalorder %s88, %s91
      %p97 = scmp.eq.s32.totalorder %s14, 0
      %p98 = por %p96, %p97
      %p99 = scmp.ne.s32.totalorder %s88, %s91
      %p100 = scmp.eq.s32.totalorder %s19, 1
      %p101 = por %p99, %p100
      %p102 = scmp.ne.s32.totalorder %s91, %s92
      %p103 = scmp.eq.s32.totalorder %s19, 0
      %p104 = por %p102, %p103
      %p105 = scmp.ne.s32.totalorder %s91, %s92
      %p106 = scmp.eq.s32.totalorder %s20, 1
      %p107 = por %p105, %p106
      %p109 = scmp.ne.s32.totalorder %s92, %s108
      %p110 = scmp.eq.s32.totalorder %s20, 0
      %p111 = por %p109, %p110
      %s112 = ssub.s32 %s22, %s29
      %p113 = scmp.eq.s32.totalorder %s112, 0
      %s115 = sadd.s32 %s114, 1
      %s116 = scalar_select %p113, %s114, %s115
      %p119 = pneg %p113
      %p120 = scmp.eq.s32.totalorder %s14, 1
      %p121 = por %p119, %p120
      %p122 = scmp.ne.s32.totalorder %s114, %s117
      %p123 = scmp.eq.s32.totalorder %s14, 0
      %p124 = por %p122, %p123
      %p125 = scmp.ne.s32.totalorder %s114, %s117
      %p126 = scmp.eq.s32.totalorder %s19, 1
      %p127 = por %p125, %p126
      %p128 = scmp.ne.s32.totalorder %s117, %s118
      %p129 = scmp.eq.s32.totalorder %s19, 0
      %p130 = por %p128, %p129
      %p131 = scmp.ne.s32.totalorder %s117, %s118
      %p132 = scmp.eq.s32.totalorder %s20, 1
      %p133 = por %p131, %p132
      %p135 = scmp.ne.s32.totalorder %s118, %s134
      %p136 = scmp.eq.s32.totalorder %s20, 0
      %p137 = por %p135, %p136
      %s138 = ssub.s32 %s22, %s29
      %p139 = scmp.eq.s32.totalorder %s138, 0
      %s141 = sadd.s32 %s140, 1
      %s142 = scalar_select %p139, %s140, %s141
      %p145 = pneg %p139
      %p146 = scmp.eq.s32.totalorder %s14, 1
      %p147 = por %p145, %p146
      %p148 = scmp.ne.s32.totalorder %s140, %s143
      %p149 = scmp.eq.s32.totalorder %s14, 0
      %p150 = por %p148, %p149
      %p151 = scmp.ne.s32.totalorder %s140, %s143
      %p152 = scmp.eq.s32.totalorder %s19, 1
      %p153 = por %p151, %p152
      %p154 = scmp.ne.s32.totalorder %s143, %s144
      %p155 = scmp.eq.s32.totalorder %s19, 0
      %p156 = por %p154, %p155
      %p157 = scmp.ne.s32.totalorder %s143, %s144
      %p158 = scmp.eq.s32.totalorder %s20, 1
      %p159 = por %p157, %p158
      %p161 = scmp.ne.s32.totalorder %s144, %s160
      %p162 = scmp.eq.s32.totalorder %s20, 0
      %p163 = por %p161, %p162
      %s164 = ssub.s32 %s21, %s33
      %s165 = ssub.s32 %s22, %s29
      %s166 = sor.u32 %s164, %s165
      %p167 = scmp.eq.s32.totalorder %s166, 0
      %s169 = sadd.s32 %s168, 1
      %s170 = scalar_select %p167, %s168, %s169
      %p173 = pneg %p167
      %p174 = scmp.eq.s32.totalorder %s14, 1
      %p175 = por %p173, %p174
      %p176 = scmp.ne.s32.totalorder %s168, %s171
      %p177 = scmp.eq.s32.totalorder %s14, 0
      %p178 = por %p176, %p177
      %p179 = scmp.ne.s32.totalorder %s168, %s171
      %p180 = scmp.eq.s32.totalorder %s19, 1
      %p181 = por %p179, %p180
      %p182 = scmp.ne.s32.totalorder %s171, %s172
      %p183 = scmp.eq.s32.totalorder %s19, 0
      %p184 = por %p182, %p183
      %p185 = scmp.ne.s32.totalorder %s171, %s172
      %p186 = scmp.eq.s32.totalorder %s20, 1
      %p187 = por %p185, %p186
      %p189 = scmp.ne.s32.totalorder %s172, %s188
      %p190 = scmp.eq.s32.totalorder %s20, 0
      %p191 = por %p189, %p190
      %p192 = scmp.le.s32.totalorder 1, %s14
      %p193 = scmp.lt.s32.totalorder %s14, 3
      %p194 = pnand %p192, %p193
      %p195 = pneg %p194
      // Predicated region
      $region9: #{_lambda_.11} parent=5 // pred_check
        _
      $region10: #{_lambda_.11} parent=5 // pred_check_branch
        %197 = sbr.rel (%p194) target = $region12
      $region11: #{_lambda_.11} parent=5 // pred_region
        %s198 = ssub.s32 %s14, 1
        // Predicated region
        $region13: #{_lambda_.11} parent=11 // pred_check
          %p199 = pneg %p78
        $region14: #{_lambda_.11} parent=11 // pred_check_branch
          %201 = sbr.rel (%p199) target = $region16
        $region15: #{_lambda_.11} parent=11 // pred_region
          %s202 = smul.u32 4, %s24
          %204 = vsyncadd [#allocation4], 0
          %s205 = smul.addr %s202, 4
          %s206 = scalar_lea.hbm %s1, %s205
          %s207 = sshll.u32 %s206, 4
          %s208 = int_to_ptr.hbm [resolvable:$true] %s207
          %s209 = sshll.u32 [#allocation3], 4
          %s210 = int_to_ptr.vmem [resolvable:$true] %s209
          %215 = dma.hbm_to_vmem [thread:$0]  %s208, 768, %s210, [#allocation4], 64, 64, 4
        $region16: #{_lambda_.11} parent=11 // pred_fallthru
          _
        // Predicated region
        $region17: #{_lambda_.11} parent=11 // pred_check
          %p216 = pneg %p104
        $region18: #{_lambda_.11} parent=11 // pred_check_branch
          %218 = sbr.rel (%p216) target = $region20
        $region19: #{_lambda_.11} parent=11 // pred_region
          %s219 = smul.u32 4, %s24
          %221 = vsyncadd [#allocation6], 0
          %s222 = smul.addr %s219, 8
          %s223 = scalar_lea.hbm %s2, %s222
          %s224 = sshll.u32 %s223, 4
          %s225 = int_to_ptr.hbm [resolvable:$true] %s224
          %s226 = sshll.u32 [#allocation5], 4
          %s227 = int_to_ptr.vmem [resolvable:$true] %s226
          %232 = dma.hbm_to_vmem [thread:$0]  %s225, 512, %s227, [#allocation6], 128, 128, 8
        $region20: #{_lambda_.11} parent=11 // pred_fallthru
          _
        // Predicated region
        $region21: #{_lambda_.11} parent=11 // pred_check
          %p233 = pneg %p130
        $region22: #{_lambda_.11} parent=11 // pred_check_branch
          %235 = sbr.rel (%p233) target = $region24
        $region23: #{_lambda_.11} parent=11 // pred_region
          %s236 = smul.u32 4, %s24
          %238 = vsyncadd [#allocation6], 0
          %s239 = smul.addr %s236, 8
          %s240 = scalar_lea.hbm %s3, %s239
          %s241 = sshll.u32 %s240, 4
          %s242 = int_to_ptr.hbm [resolvable:$true] %s241
          %s243 = sshll.u32 [#allocation7], 4
          %s244 = int_to_ptr.vmem [resolvable:$true] %s243
          %249 = dma.hbm_to_vmem [thread:$0]  %s242, 512, %s244, [#allocation6], 128, 128, 8
        $region24: #{_lambda_.11} parent=11 // pred_fallthru
          _
        // Predicated region
        $region25: #{_lambda_.11} parent=11 // pred_check
          %p250 = pneg %p156
        $region26: #{_lambda_.11} parent=11 // pred_check_branch
          %252 = sbr.rel (%p250) target = $region28
        $region27: #{_lambda_.11} parent=11 // pred_region
          %s253 = smul.u32 4, %s24
          %255 = vsyncadd [#allocation9], 0
          %s256 = smul.addr %s253, 8
          %s257 = scalar_lea.hbm %s4, %s256
          %s258 = sshll.u32 %s257, 4
          %s259 = int_to_ptr.hbm [resolvable:$true] %s258
          %s260 = sshll.u32 [#allocation8], 4
          %s261 = int_to_ptr.vmem [resolvable:$true] %s260
          %266 = dma.hbm_to_vmem [thread:$0]  %s259, 512, %s261, [#allocation9], 128, 128, 8
        $region28: #{_lambda_.11} parent=11 // pred_fallthru
          _
      $region12: #{_lambda_.11} parent=5 // pred_fallthru
        _
      %p267 = scmp.lt.s32.totalorder %s14, 2
      // Predicated region
      $region29: #{_lambda_.11} parent=5 // pred_check
        %p268 = pneg %p267
      $region30: #{_lambda_.11} parent=5 // pred_check_branch
        %270 = sbr.rel (%p268) target = $region32
      $region31: #{_lambda_.11} parent=5 // pred_region
        // Predicated region
        $region33: #{_lambda_.11} parent=31 // pred_check
          %p271 = pneg %p46
        $region34: #{_lambda_.11} parent=31 // pred_check_branch
          %273 = sbr.rel (%p271) target = $region36
        $region35: #{_lambda_.11} parent=31 // pred_region
          %s274 = sand.u32 %s36, 1
          %s275 = sand.u32 %s36, 1
          %s276 = smul.addr %s275, 32
          %s277 = scalar_lea.vmem [#allocation2], %s276
          %s278 = smul.addr %s21, 2
          %s279 = smul.addr %s278, 8
          %s280 = scalar_lea.vmem %s0, %s279
          // Predicated region
          $region37: #{_lambda_.11} parent=35 // pred_check
            _
          $region38: #{_lambda_.11} parent=35 // pred_check_branch
            %282 = sbr.rel (0) target = $region40
          $region39: #{_lambda_.11} parent=35 // pred_region
            // Predicated region
            $region41: #{_lambda_.11} parent=39 // pred_check
              _
            $region42: #{_lambda_.11} parent=39 // pred_check_branch
              %284 = sbr.rel (0) target = $region44
            $region43: #{_lambda_.11} parent=39 // pred_region
              // Predicated region
              $region56: #{_lambda_.11} parent=43 // pred_check
                _
              $region57: #{_lambda_.11} parent=43 // pred_check_branch
                %306 = sbr.rel (0) target = $region59
              $region58: #{_lambda_.11} parent=43 // pred_region
                loop: start=0, step=1, limit=1
                $region60: #{_lambda_.11} parent=58 // loop_pre_header
                  _
                $region61: #{_lambda_.11} parent=58 // loop_header
                  %s308 = sphi 0, %s312
                  %p309 = scmp.ge.s32.totalorder %s308, 1
                  %s313 = sphi %s280, %s280
                  %s314 = sphi %s277, %s277
                $region62: #{_lambda_.11} parent=58 // loop_header_branch
                  %311 = sbr.rel (%p309) target = $region66
                $region63: #{_lambda_.11} parent=58 // loop_body
                  %v315 = vld [vmem:[%s313] sm:$0xff]
                  %316 = vst [vmem:[%s314] sm:$0xff] %v315
                  %v317 = vld [vmem:[%s313 + $0x8] sm:$0xff]
                  %318 = vst [vmem:[%s314 + $0x8] sm:$0xff] %v317
                  %v319 = vld [vmem:[%s313 + $0x20] sm:$0xff]
                  %320 = vst [vmem:[%s314 + $0x10] sm:$0xff] %v319
                  %v321 = vld [vmem:[%s313 + $0x28] sm:$0xff]
                  %322 = vst [vmem:[%s314 + $0x18] sm:$0xff] %v321
                $region64: #{_lambda_.11} parent=58 // loop_footer
                  %s312 = sadd.s32 1, %s308
                $region65: #{_lambda_.11} parent=58 // loop_footer_branch
                  %307 = sbr.rel target = $region61
                $region66: #{_lambda_.11} parent=58 // loop_exit
                  _
              $region59: #{_lambda_.11} parent=43 // pred_fallthru
                _
              // Predicated region
              $region67: #{_lambda_.11} parent=43 // pred_check
                _
              $region68: #{_lambda_.11} parent=43 // pred_check_branch
                %324 = sbr.rel target = $region70
              $region69: #{_lambda_.11} parent=43 // pred_region
                _
              $region70: #{_lambda_.11} parent=43 // pred_fallthru
                _
            $region44: #{_lambda_.11} parent=39 // pred_fallthru
              _
            // Predicated region
            $region45: #{_lambda_.11} parent=39 // pred_check
              _
            $region46: #{_lambda_.11} parent=39 // pred_check_branch
              %286 = sbr.rel target = $region48
            $region47: #{_lambda_.11} parent=39 // pred_region
              %s288 = ssub.s32 256, 1
              loop: start=0, step=1, limit=1
              $region49: #{_lambda_.11} parent=47 // loop_pre_header
                _
              $region50: #{_lambda_.11} parent=47 // loop_header
                %s290 = sphi 0, %s294
                %p291 = scmp.ge.s32.totalorder %s290, 1
                %s295 = sphi %s280, %s280
                %s296 = sphi %s277, %s277
              $region51: #{_lambda_.11} parent=47 // loop_header_branch
                %293 = sbr.rel (%p291) target = $region55
              $region52: #{_lambda_.11} parent=47 // loop_body
                %v297 = vld [vmem:[%s295] sm:%s288]
                %298 = vst [vmem:[%s296] sm:%s288] %v297
                %v299 = vld [vmem:[%s295 + $0x8] sm:%s288]
                %300 = vst [vmem:[%s296 + $0x8] sm:%s288] %v299
                %v301 = vld [vmem:[%s295 + $0x20] sm:%s288]
                %302 = vst [vmem:[%s296 + $0x10] sm:%s288] %v301
                %v303 = vld [vmem:[%s295 + $0x28] sm:%s288]
                %304 = vst [vmem:[%s296 + $0x18] sm:%s288] %v303
              $region53: #{_lambda_.11} parent=47 // loop_footer
                %s294 = sadd.s32 1, %s290
              $region54: #{_lambda_.11} parent=47 // loop_footer_branch
                %289 = sbr.rel target = $region50
              $region55: #{_lambda_.11} parent=47 // loop_exit
                _
            $region48: #{_lambda_.11} parent=39 // pred_fallthru
              _
          $region40: #{_lambda_.11} parent=35 // pred_fallthru
            _
          %325 = vnop
        $region36: #{_lambda_.11} parent=31 // pred_fallthru
          _
      $region32: #{_lambda_.11} parent=5 // pred_fallthru
        _
      %p326 = scmp.le.s32.totalorder 1, %s14
      %p327 = scmp.lt.s32.totalorder %s14, 3
      %p328 = pnand %p326, %p327
      %p329 = pneg %p328
      // Predicated region
      $region71: #{_lambda_.11} parent=5 // pred_check
        _
      $region72: #{_lambda_.11} parent=5 // pred_check_branch
        %331 = sbr.rel (%p328) target = $region74
      $region73: #{_lambda_.11} parent=5 // pred_region
        %s332 = ssub.s32 %s14, 1
        %s333 = sand.u32 %s39, 1
        %s334 = sand.u32 %s39, 1
        %s335 = smul.addr %s334, 32
        %s336 = scalar_lea.vmem [#allocation2], %s335
        // Predicated region
        $region75: #{_lambda_.11} parent=73 // pred_check
          %p337 = pneg %p52
        $region76: #{_lambda_.11} parent=73 // pred_check_branch
          %339 = sbr.rel (%p337) target = $region78
        $region77: #{_lambda_.11} parent=73 // pred_region
          _
        $region78: #{_lambda_.11} parent=73 // pred_fallthru
          _
        // Predicated region
        $region79: #{_lambda_.11} parent=73 // pred_check
          %p340 = pneg %p78
        $region80: #{_lambda_.11} parent=73 // pred_check_branch
          %342 = sbr.rel (%p340) target = $region82
        $region81: #{_lambda_.11} parent=73 // pred_region
          %344 = dma.done [#allocation4], 768
        $region82: #{_lambda_.11} parent=73 // pred_fallthru
          _
        // Predicated region
        $region83: #{_lambda_.11} parent=73 // pred_check
          %p345 = pneg %p104
        $region84: #{_lambda_.11} parent=73 // pred_check_branch
          %347 = sbr.rel (%p345) target = $region86
        $region85: #{_lambda_.11} parent=73 // pred_region
          %349 = dma.done [#allocation6], 512
        $region86: #{_lambda_.11} parent=73 // pred_fallthru
          _
        // Predicated region
        $region87: #{_lambda_.11} parent=73 // pred_check
          %p350 = pneg %p130
        $region88: #{_lambda_.11} parent=73 // pred_check_branch
          %352 = sbr.rel (%p350) target = $region90
        $region89: #{_lambda_.11} parent=73 // pred_region
          %354 = dma.done [#allocation6], 512
        $region90: #{_lambda_.11} parent=73 // pred_fallthru
          _
        // Predicated region
        $region91: #{_lambda_.11} parent=73 // pred_check
          %p355 = pneg %p156
        $region92: #{_lambda_.11} parent=73 // pred_check_branch
          %357 = sbr.rel (%p355) target = $region94
        $region93: #{_lambda_.11} parent=73 // pred_region
          %359 = dma.done [#allocation9], 512
        $region94: #{_lambda_.11} parent=73 // pred_fallthru
          _
        %s360 = sand.u32 %s39, 1
        %s361 = sand.u32 %s39, 1
        %s362 = smul.addr %s361, 32
        %s363 = scalar_lea.vmem [#allocation2], %s362
        %p364 = pneg %p52
        %p365 = pneg %p49
        %p366 = pneg %p78
        %p367 = pneg %p75
        %p368 = pneg %p104
        %p369 = pneg %p101
        %p370 = pneg %p130
        %p371 = pneg %p127
        %p372 = pneg %p156
        %p373 = pneg %p153
        %p374 = pneg %p184
        %p375 = pneg %p181
        %s376 = smul.u32 4, %s24
        %p377 = scmp.lt.s32.totalorder %s23, 1
        %s378 = scalar_select %p377, %s23, 1
        %p379 = scmp.lt.s32.totalorder %s376, 3
        %s380 = scalar_select %p379, %s376, 3
        %s381 = smul.addr %s378, 4
        %s382 = sadd.s32 %s380, %s381
        %s383 = smul.addr %s382, 4
        %s384 = scalar_lea.vmem %s5, %s383
        %s385 = smul.u32 4, %s24
        %s386 = smul.u32 4, %s24
        %s387 = smul.u32 4, %s24
        %s388 = smul.u32 4, %s24
        %s389 = smul.u32 4, %s24
        %p390 = scmp.lt.s32.totalorder %s23, 1
        %s391 = scalar_select %p390, %s23, 1
        %p392 = scmp.lt.s32.totalorder %s389, 3
        %s393 = scalar_select %p392, %s389, 3
        %s394 = smul.addr %s391, 4
        %s395 = sadd.s32 %s393, %s394
        %s396 = smul.addr %s395, 4
        %s397 = scalar_lea.vmem %s5, %s396
        %s398 = smul.u32 4, %s24
        %v400 = vld [vmem:[#allocation3] sm:$0xf]
        %v401 = vld [vmem:[#allocation3 + $0x4] sm:$0xf]
        %v402 = vld [vmem:[#allocation3 + $0x8] sm:$0xf]
        %v403 = vld [vmem:[#allocation3 + $0xc] sm:$0xf]
        %v404 = vld [vmem:[%s336] sm:$0xff]
        %v405 = vld [vmem:[%s336 + $0x8] sm:$0xff]
        %v406 = vpack.c.bf16 %v405, %v404
        %s407 = scalar_lea.vmem [#allocation3], 16
        %v408 = vld [vmem:[%s407] sm:$0xf]
        %v409 = vld [vmem:[%s407 + $0x4] sm:$0xf]
        %v410 = vld [vmem:[%s407 + $0x8] sm:$0xf]
        %v411 = vld [vmem:[%s407 + $0xc] sm:$0xf]
        %s412 = scalar_lea.vmem %s336, 16 [#allocation2]
        %v413 = vld [vmem:[%s412] sm:$0xff]
        %v414 = vld [vmem:[%s412 + $0x8] sm:$0xff]
        %v415 = vpack.c.bf16 %v414, %v413
        %v420 = vunpack.c.l.b16 %v408
        %v421 = vunpack.c.l.b16 %v409
        %v422 = vunpack.c.l.b16 %v410
        %v423 = vunpack.c.l.b16 %v411
        %v424 = vpack.c.b16 %v421, %v420
        %v425 = vpack.c.b16 %v423, %v422
        %vm426 = vcmask 130048
        %v428 = vsel %vm426, %v424, 0
        %v431 = vsel %vm426, %v425, 0
        %433 = vmatpush.bf16.msra.mxu0 0
        %434 = vmatpush.bf16.msra.mxu0 0
        %435 = vmatpush.bf16.msra.mxu0 0
        %436 = vmatpush.bf16.msra.mxu0 0
        %437 = vmatpush.bf16.msra.mxu0 0
        %438 = vmatpush.bf16.msra.mxu0 0
        %439 = vmatpush.bf16.msra.mxu0 0
        %440 = vmatpush.bf16.msra.mxu0 %v415
        %441 = vmatmul.bf16.gmra.mxu0 %v428
        %v442 = vpop.f32.mrf.mxu0
        %v443 = vadd.f32 0.0, %v442
        %v444 = vpop.f32.mrf.mxu0
        %v445 = vadd.f32 0.0, %v444
        %446 = vmatmul.bf16.gmra.mxu0 %v431
        %v447 = vpop.f32.mrf.mxu0
        %v448 = vadd.f32 0.0, %v447
        %v449 = vpop.f32.mrf.mxu0
        %v450 = vadd.f32 0.0, %v449
        %451 = vdwg.mxu0
        %v456 = vunpack.c.l.b16 %v400
        %v457 = vunpack.c.l.b16 %v401
        %v458 = vunpack.c.l.b16 %v402
        %v459 = vunpack.c.l.b16 %v403
        %v460 = vpack.c.b16 %v457, %v456
        %v461 = vpack.c.b16 %v459, %v458
        %v463 = vsel %vm426, %v460, 0
        %v466 = vsel %vm426, %v461, 0
        %468 = vmatpush.bf16.msra.mxu0 0
        %469 = vmatpush.bf16.msra.mxu0 0
        %470 = vmatpush.bf16.msra.mxu0 0
        %471 = vmatpush.bf16.msra.mxu0 0
        %472 = vmatpush.bf16.msra.mxu0 0
        %473 = vmatpush.bf16.msra.mxu0 0
        %474 = vmatpush.bf16.msra.mxu0 0
        %475 = vmatpush.bf16.msra.mxu0 %v406
        %476 = vmatmul.bf16.gmra.mxu0 %v463
        %v477 = vpop.f32.mrf.mxu0
        %v478 = vadd.f32 %v443, %v477
        %v479 = vpop.f32.mrf.mxu0
        %v480 = vadd.f32 %v445, %v479
        %481 = vmatmul.bf16.gmra.mxu0 %v466
        %v482 = vpop.f32.mrf.mxu0
        %v483 = vadd.f32 %v448, %v482
        %v484 = vpop.f32.mrf.mxu0
        %v485 = vadd.f32 %v450, %v484
        %486 = vdwg.mxu0
        %s487 = scalar_lea.vmem [#allocation3], 32
        %v488 = vld [vmem:[%s487] sm:$0xf]
        %v489 = vld [vmem:[%s487 + $0x4] sm:$0xf]
        %v490 = vld [vmem:[%s487 + $0x8] sm:$0xf]
        %v491 = vld [vmem:[%s487 + $0xc] sm:$0xf]
        %v496 = vunpack.c.l.b16 %v488
        %v497 = vunpack.c.l.b16 %v489
        %v498 = vunpack.c.l.b16 %v490
        %v499 = vunpack.c.l.b16 %v491
        %v500 = vpack.c.b16 %v497, %v496
        %v501 = vpack.c.b16 %v499, %v498
        %503 = vrot.lane.b32.xlu0 %v406, 127
        %v504 = vpop.permute.xlu0 %503
        %v507 = vsel %vm426, %v500, 0
        %v510 = vsel %vm426, %v501, 0
        %512 = vmatpush.bf16.msra.mxu0 0
        %513 = vmatpush.bf16.msra.mxu0 0
        %514 = vmatpush.bf16.msra.mxu0 0
        %515 = vmatpush.bf16.msra.mxu0 0
        %516 = vmatpush.bf16.msra.mxu0 0
        %517 = vmatpush.bf16.msra.mxu0 0
        %518 = vmatpush.bf16.msra.mxu0 0
        %519 = vmatpush.bf16.msra.mxu0 %v504
        %520 = vmatmul.bf16.gmra.mxu0 %v507
        %v521 = vpop.f32.mrf.mxu0
        %v522 = vadd.f32 0.0, %v521
        %v523 = vpop.f32.mrf.mxu0
        %v524 = vadd.f32 0.0, %v523
        %525 = vmatmul.bf16.gmra.mxu0 %v510
        %v526 = vpop.f32.mrf.mxu0
        %v527 = vadd.f32 0.0, %v526
        %v528 = vpop.f32.mrf.mxu0
        %v529 = vadd.f32 0.0, %v528
        %530 = vdwg.mxu0
        %v531 = vadd.f32 %v478, %v522
        %v532 = vadd.f32 %v480, %v524
        %v533 = vadd.f32 %v483, %v527
        %v534 = vadd.f32 %v485, %v529
        %v535 = vld [vmem:[#allocation5] sm:$0xff]
        %v536 = vld [vmem:[#allocation5 + $0x8] sm:$0xff]
        %v537 = vld [vmem:[#allocation5 + $0x10] sm:$0xff]
        %v538 = vld [vmem:[#allocation5 + $0x18] sm:$0xff]
        %540 = vset.pattern.permute.xlu0 0
        %541 = vperm.xlu0 %540, %v535
        %v542 = vpop.permute.xlu0 %541
        %545 = vset.pattern.permute.xlu0 0
        %546 = vperm.xlu0 %545, %v536
        %v547 = vpop.permute.xlu0 %546
        %550 = vset.pattern.permute.xlu0 0
        %551 = vperm.xlu0 %550, %v537
        %v552 = vpop.permute.xlu0 %551
        %555 = vset.pattern.permute.xlu0 0
        %556 = vperm.xlu0 %555, %v538
        %v557 = vpop.permute.xlu0 %556
        %v559 = vadd.f32 %v531, %v542
        %v560 = vadd.f32 %v532, %v547
        %v561 = vadd.f32 %v533, %v552
        %v562 = vadd.f32 %v534, %v557
        %v563 = vmax.f32 %v559, 0.0
        %v564 = vmax.f32 %v560, 0.0
        %v565 = vmax.f32 %v561, 0.0
        %v566 = vmax.f32 %v562, 0.0
        %v567 = vsel %vm426, %v563, 0.0
        %568 = vadd.xlane.f32.xlu0 %v567
        %v569 = vpop.xlane.xlu0 %568
        %v570 = vsel %vm426, %v564, 0.0
        %571 = vadd.xlane.f32.xlu0 %v570
        %v572 = vpop.xlane.xlu0 %571
        %v573 = vsel %vm426, %v565, 0.0
        %574 = vadd.xlane.f32.xlu0 %v573
        %v575 = vpop.xlane.xlu0 %574
        %v576 = vsel %vm426, %v566, 0.0
        %577 = vadd.xlane.f32.xlu0 %v576
        %v578 = vpop.xlane.xlu0 %577
        %v579 = vrcp.pop 16.0
        %v580 = vmul.f32 16.0, %v579
        %v581 = vsub.f32 1.0, %v580
        %v582 = vmul.f32 %v579, %v581
        %v583 = vadd.f32 %v579, %v582
        %vm584 = vweird.f32 %v579
        %v585 = vsel %vm584, %v579, %v583
        %v586 = vmul.f32 %v569, %v585
        %v587 = vmul.f32 %v572, %v585
        %v588 = vmul.f32 %v575, %v585
        %v589 = vmul.f32 %v578, %v585
        %v590 = vsub.f32 %v563, %v586
        %v591 = vsub.f32 %v564, %v587
        %v592 = vsub.f32 %v565, %v588
        %v593 = vsub.f32 %v566, %v589
        %v594 = vmul.f32 %v590, %v590
        %v595 = vmul.f32 %v591, %v591
        %v596 = vmul.f32 %v592, %v592
        %v597 = vmul.f32 %v593, %v593
        %v598 = vsel %vm426, %v594, 0.0
        %599 = vadd.xlane.f32.xlu0 %v598
        %v600 = vpop.xlane.xlu0 %599
        %v601 = vsel %vm426, %v595, 0.0
        %602 = vadd.xlane.f32.xlu0 %v601
        %v603 = vpop.xlane.xlu0 %602
        %v604 = vsel %vm426, %v596, 0.0
        %605 = vadd.xlane.f32.xlu0 %v604
        %v606 = vpop.xlane.xlu0 %605
        %v607 = vsel %vm426, %v597, 0.0
        %608 = vadd.xlane.f32.xlu0 %v607
        %v609 = vpop.xlane.xlu0 %608
        %v610 = vmul.f32 %v600, %v585
        %v611 = vmul.f32 %v603, %v585
        %v612 = vmul.f32 %v606, %v585
        %v613 = vmul.f32 %v609, %v585
        %v614 = vadd.f32 %v610, 1e-05
        %v615 = vadd.f32 %v611, 1e-05
        %v616 = vadd.f32 %v612, 1e-05
        %v617 = vadd.f32 %v613, 1e-05
        %v618 = vrsqrt.pop %v614
        %v619 = vmul.f32 %v618, %v614
        %v620 = vmul.f32 %v619, %v618
        %v621 = vmul.f32 0.5, %v620
        %v622 = vsub.f32 1.5, %v621
        %v623 = vmul.f32 %v618, %v622
        %vm624 = vweird.f32 %v614
        %vm625 = vweird.f32 %v618
        %vm626 = vmor %vm624, %vm625
        %v627 = vsel %vm626, %v618, %v623
        %v628 = vrsqrt.pop %v615
        %v629 = vmul.f32 %v628, %v615
        %v630 = vmul.f32 %v629, %v628
        %v631 = vmul.f32 0.5, %v630
        %v632 = vsub.f32 1.5, %v631
        %v633 = vmul.f32 %v628, %v632
        %vm634 = vweird.f32 %v615
        %vm635 = vweird.f32 %v628
        %vm636 = vmor %vm634, %vm635
        %v637 = vsel %vm636, %v628, %v633
        %v638 = vrsqrt.pop %v616
        %v639 = vmul.f32 %v638, %v616
        %v640 = vmul.f32 %v639, %v638
        %v641 = vmul.f32 0.5, %v640
        %v642 = vsub.f32 1.5, %v641
        %v643 = vmul.f32 %v638, %v642
        %vm644 = vweird.f32 %v616
        %vm645 = vweird.f32 %v638
        %vm646 = vmor %vm644, %vm645
        %v647 = vsel %vm646, %v638, %v643
        %v648 = vrsqrt.pop %v617
        %v649 = vmul.f32 %v648, %v617
        %v650 = vmul.f32 %v649, %v648
        %v651 = vmul.f32 0.5, %v650
        %v652 = vsub.f32 1.5, %v651
        %v653 = vmul.f32 %v648, %v652
        %vm654 = vweird.f32 %v617
        %vm655 = vweird.f32 %v648
        %vm656 = vmor %vm654, %vm655
        %v657 = vsel %vm656, %v648, %v653
        %v658 = vmul.f32 %v590, %v627
        %v659 = vmul.f32 %v591, %v637
        %v660 = vmul.f32 %v592, %v647
        %v661 = vmul.f32 %v593, %v657
        %v662 = vld [vmem:[#allocation7] sm:$0xff]
        %v663 = vld [vmem:[#allocation7 + $0x8] sm:$0xff]
        %v664 = vld [vmem:[#allocation7 + $0x10] sm:$0xff]
        %v665 = vld [vmem:[#allocation7 + $0x18] sm:$0xff]
        %667 = vset.pattern.permute.xlu0 0
        %668 = vperm.xlu0 %667, %v662
        %v669 = vpop.permute.xlu0 %668
        %672 = vset.pattern.permute.xlu0 0
        %673 = vperm.xlu0 %672, %v663
        %v674 = vpop.permute.xlu0 %673
        %677 = vset.pattern.permute.xlu0 0
        %678 = vperm.xlu0 %677, %v664
        %v679 = vpop.permute.xlu0 %678
        %682 = vset.pattern.permute.xlu0 0
        %683 = vperm.xlu0 %682, %v665
        %v684 = vpop.permute.xlu0 %683
        %v686 = vmul.f32 %v658, %v669
        %v687 = vmul.f32 %v659, %v674
        %v688 = vmul.f32 %v660, %v679
        %v689 = vmul.f32 %v661, %v684
        %v690 = vld [vmem:[#allocation8] sm:$0xff]
        %v691 = vld [vmem:[#allocation8 + $0x8] sm:$0xff]
        %v692 = vld [vmem:[#allocation8 + $0x10] sm:$0xff]
        %v693 = vld [vmem:[#allocation8 + $0x18] sm:$0xff]
        %695 = vset.pattern.permute.xlu0 0
        %696 = vperm.xlu0 %695, %v690
        %v697 = vpop.permute.xlu0 %696
        %700 = vset.pattern.permute.xlu0 0
        %701 = vperm.xlu0 %700, %v691
        %v702 = vpop.permute.xlu0 %701
        %705 = vset.pattern.permute.xlu0 0
        %706 = vperm.xlu0 %705, %v692
        %v707 = vpop.permute.xlu0 %706
        %710 = vset.pattern.permute.xlu0 0
        %711 = vperm.xlu0 %710, %v693
        %v712 = vpop.permute.xlu0 %711
        %v714 = vadd.f32 %v686, %v697
        %v715 = vadd.f32 %v687, %v702
        %v716 = vadd.f32 %v688, %v707
        %v717 = vadd.f32 %v689, %v712
        %v718 = vpack.c.bf16 %v714, %v714
        %v719 = vpack.c.bf16 %v715, %v715
        %v720 = vpack.c.bf16 %v716, %v716
        %v721 = vpack.c.bf16 %v717, %v717
        %vm722 = vcmask 125952
        %723 = vst.msk [vmem:[%s397] sm:$0xf] %vm722, %v718
        %724 = vst.msk [vmem:[%s397 + $0x4] sm:$0xf] %vm722, %v719
        %725 = vst.msk [vmem:[%s397 + $0x8] sm:$0xf] %vm722, %v720
        %726 = vst.msk [vmem:[%s397 + $0xc] sm:$0xf] %vm722, %v721
        %s727 = smul.u32 4, %s24
        %p728 = scmp.lt.s32.totalorder %s23, 1
        %s729 = scalar_select %p728, %s23, 1
        %p730 = scmp.lt.s32.totalorder %s727, 3
        %s731 = scalar_select %p730, %s727, 3
        %s732 = smul.addr %s729, 4
        %s733 = sadd.s32 %s731, %s732
        %s734 = smul.addr %s733, 4
        %s735 = scalar_lea.vmem %s5, %s734
        // Predicated region
        $region95: #{_lambda_.11} parent=73 // pred_check
          %p736 = pneg %p181
        $region96: #{_lambda_.11} parent=73 // pred_check_branch
          %738 = sbr.rel (%p736) target = $region98
        $region97: #{_lambda_.11} parent=73 // pred_region
          %s739 = smul.u32 4, %s24
        $region98: #{_lambda_.11} parent=73 // pred_fallthru
          _
      $region74: #{_lambda_.11} parent=5 // pred_fallthru
        _
      %p740 = scmp.le.s32.totalorder 2, %s14
      // Predicated region
      $region99: #{_lambda_.11} parent=5 // pred_check
        %p741 = pneg %p740
      $region100: #{_lambda_.11} parent=5 // pred_check_branch
        %743 = sbr.rel (%p741) target = $region102
      $region101: #{_lambda_.11} parent=5 // pred_region
        %s744 = ssub.s32 %s14, 2
        // Predicated region
        $region103: #{_lambda_.11} parent=101 // pred_check
          %p745 = pneg %p187
        $region104: #{_lambda_.11} parent=101 // pred_check_branch
          %747 = sbr.rel (%p745) target = $region106
        $region105: #{_lambda_.11} parent=101 // pred_region
          %s748 = smul.u32 4, %s26
          %p749 = scmp.lt.s32.totalorder %s25, 1
          %s750 = scalar_select %p749, %s25, 1
          %p751 = scmp.lt.s32.totalorder %s748, 3
          %s752 = scalar_select %p751, %s748, 3
          %s753 = smul.addr %s750, 4
          %s754 = sadd.s32 %s752, %s753
          %s755 = smul.addr %s754, 4
          %s756 = scalar_lea.vmem %s5, %s755
        $region106: #{_lambda_.11} parent=101 // pred_fallthru
          _
      $region102: #{_lambda_.11} parent=5 // pred_fallthru
        _
    $region6: #{_lambda_.11} parent=1 // loop_footer
      %s18 = sadd.s32 1, %s14
    $region7: #{_lambda_.11} parent=1 // loop_footer_branch
      %13 = sbr.rel target = $region3
    $region8: #{_lambda_.11} parent=1 // loop_exit
      _
    %757 = vsyncpa [#allocation4], 1
    %s758 = scalar_lea.sflag [#allocation4], 1
    %759 = vsyncpa %s758, 1
    %760 = vsyncpa [#allocation6], 1
    %761 = vsyncpa [#allocation9], 1

// kernel: _lambda_.12
$region0: #{_lambda_.12}
  #allocation0 [shape = 'u32[]', space=smem, size = 0x4, offset = 0x4, fixed_abs, tag = 'smem constant byte address 0x4 - core index']
  #allocation1 [shape = 'u32[72,128]{1,0:T(1,128)}', space=vmem, size = 0x9000, scoped, tag = 'internal scratch']
  #allocation2 [shape = 'bf16[32,18]{1,0:T(8,128)(2,1)}', space=vmem, size = 0x2000, scoped, tag = 'scratch operand']
  %s0 = inlined_call_operand.vmem [shape: bf16[2,32,16], index: 0, kind: input, shape index: {}]
  %s1 = inlined_call_operand.hbm [shape: bf16[3,32,32], index: 1, kind: input, shape index: {}]
  %s2 = inlined_call_operand.hbm [shape: f32[32,1], index: 2, kind: input, shape index: {}]
  %s3 = inlined_call_operand.hbm [shape: f32[32,1], index: 3, kind: input, shape index: {}]
  %s4 = inlined_call_operand.hbm [shape: f32[32,1], index: 4, kind: input, shape index: {}]
  %s5 = inlined_call_operand.vmem [shape: bf16[2,32,16], index: 5, kind: output, shape index: {}]
  %s6 = sld [smem:[#allocation0]]
  $region69: #{_lambda_.12} parent=0
    _
  %s8 = ssub.s32 1, %s6
  %s9 = scalar_select 0, %s8, %s6
  $region1: #{_lambda_.12} parent=0
    #allocation3 [shape = 'u8[24576]{0}', space=vmem, size = 0x6000, scoped, tag = 'input window, operand 1, single buffered']
    #allocation4 [shape = 's32[2]{0}', space=sflag, size = 0x8, scoped, tag = 'scoped memory for _lambda_.12']
    #allocation5 [shape = 'u8[16384]{0}', space=vmem, size = 0x4000, scoped, tag = 'input window, operand 2, single buffered']
    #allocation6 [shape = 's32[1]{0}', space=sflag, size = 0x4, scoped, tag = 'scoped memory for _lambda_.12']
    #allocation7 [shape = 'u8[16384]{0}', space=vmem, size = 0x4000, scoped, tag = 'input window, operand 3, single buffered']
    #allocation8 [shape = 'u8[16384]{0}', space=vmem, size = 0x4000, scoped, tag = 'input window, operand 4, single buffered']
    #allocation9 [shape = 's32[1]{0}', space=sflag, size = 0x4, scoped, tag = 'scoped memory for _lambda_.12']
    %10 = vsyncpa [#allocation4], 0
    %11 = vsyncpa [#allocation6], 0
    %12 = vsyncpa [#allocation9], 0
    loop: start=0, step=1, limit=4
    $region2: #{_lambda_.12} parent=1 // loop_pre_header
      _
    $region3: #{_lambda_.12} parent=1 // loop_header
      %s14 = sphi 0, %s18
      %p15 = scmp.ge.s32.totalorder %s14, 4
      %s21 = sphi 0, %s33
      %s22 = sphi 0, %s29
      %s23 = sphi 0, %s21
      %s24 = sphi 0, %s22
      %s25 = sphi 0, %s23
      %s26 = sphi 0, %s24
      %s36 = sphi 0, %s38
      %s39 = sphi 0, %s36
      %s40 = sphi 0, %s39
      %s56 = sphi 0, %s40
      %s62 = sphi 0, %s64
      %s65 = sphi 0, %s62
      %s66 = sphi 0, %s65
      %s82 = sphi 0, %s66
      %s88 = sphi 0, %s90
      %s91 = sphi 0, %s88
      %s92 = sphi 0, %s91
      %s108 = sphi 0, %s92
      %s114 = sphi 0, %s116
      %s117 = sphi 0, %s114
      %s118 = sphi 0, %s117
      %s134 = sphi 0, %s118
      %s140 = sphi 0, %s142
      %s143 = sphi 0, %s140
      %s144 = sphi 0, %s143
      %s160 = sphi 0, %s144
      %s168 = sphi 0, %s170
      %s171 = sphi 0, %s168
      %s172 = sphi 0, %s171
      %s188 = sphi 0, %s172
    $region4: #{_lambda_.12} parent=1 // loop_header_branch
      %17 = sbr.rel (%p15) target = $region8
    $region5: #{_lambda_.12} parent=1 // loop_body
      %s19 = ssub.s32 %s14, 1
      %s20 = ssub.s32 %s14, 2
      %s27 = sadd.s32 1, %s22
      %p28 = scmp.ge.s32.totalorder %s27, 1
      %s29 = scalar_select %p28, 0, %s27
      %s30 = sadd.s32 1, %s21
      %s31 = scalar_select %p28, %s30, %s21
      %p32 = scmp.ge.s32.totalorder %s31, 2
      %s33 = scalar_select %p32, 0, %s31
      %s34 = ssub.s32 %s21, %s33
      %p35 = scmp.eq.s32.totalorder %s34, 0
      %s37 = sadd.s32 %s36, 1
      %s38 = scalar_select %p35, %s36, %s37
      %p41 = pneg %p35
      %p42 = scmp.eq.s32.totalorder %s14, 1
      %p43 = por %p41, %p42
      %p44 = scmp.ne.s32.totalorder %s36, %s39
      %p45 = scmp.eq.s32.totalorder %s14, 0
      %p46 = por %p44, %p45
      %p47 = scmp.ne.s32.totalorder %s36, %s39
      %p48 = scmp.eq.s32.totalorder %s19, 1
      %p49 = por %p47, %p48
      %p50 = scmp.ne.s32.totalorder %s39, %s40
      %p51 = scmp.eq.s32.totalorder %s19, 0
      %p52 = por %p50, %p51
      %p53 = scmp.ne.s32.totalorder %s39, %s40
      %p54 = scmp.eq.s32.totalorder %s20, 1
      %p55 = por %p53, %p54
      %p57 = scmp.ne.s32.totalorder %s40, %s56
      %p58 = scmp.eq.s32.totalorder %s20, 0
      %p59 = por %p57, %p58
      %s60 = ssub.s32 %s22, %s29
      %p61 = scmp.eq.s32.totalorder %s60, 0
      %s63 = sadd.s32 %s62, 1
      %s64 = scalar_select %p61, %s62, %s63
      %p67 = pneg %p61
      %p68 = scmp.eq.s32.totalorder %s14, 1
      %p69 = por %p67, %p68
      %p70 = scmp.ne.s32.totalorder %s62, %s65
      %p71 = scmp.eq.s32.totalorder %s14, 0
      %p72 = por %p70, %p71
      %p73 = scmp.ne.s32.totalorder %s62, %s65
      %p74 = scmp.eq.s32.totalorder %s19, 1
      %p75 = por %p73, %p74
      %p76 = scmp.ne.s32.totalorder %s65, %s66
      %p77 = scmp.eq.s32.totalorder %s19, 0
      %p78 = por %p76, %p77
      %p79 = scmp.ne.s32.totalorder %s65, %s66
      %p80 = scmp.eq.s32.totalorder %s20, 1
      %p81 = por %p79, %p80
      %p83 = scmp.ne.s32.totalorder %s66, %s82
      %p84 = scmp.eq.s32.totalorder %s20, 0
      %p85 = por %p83, %p84
      %s86 = ssub.s32 %s22, %s29
      %p87 = scmp.eq.s32.totalorder %s86, 0
      %s89 = sadd.s32 %s88, 1
      %s90 = scalar_select %p87, %s88, %s89
      %p93 = pneg %p87
      %p94 = scmp.eq.s32.totalorder %s14, 1
      %p95 = por %p93, %p94
      %p96 = scmp.ne.s32.totalorder %s88, %s91
      %p97 = scmp.eq.s32.totalorder %s14, 0
      %p98 = por %p96, %p97
      %p99 = scmp.ne.s32.totalorder %s88, %s91
      %p100 = scmp.eq.s32.totalorder %s19, 1
      %p101 = por %p99, %p100
      %p102 = scmp.ne.s32.totalorder %s91, %s92
      %p103 = scmp.eq.s32.totalorder %s19, 0
      %p104 = por %p102, %p103
      %p105 = scmp.ne.s32.totalorder %s91, %s92
      %p106 = scmp.eq.s32.totalorder %s20, 1
      %p107 = por %p105, %p106
      %p109 = scmp.ne.s32.totalorder %s92, %s108
      %p110 = scmp.eq.s32.totalorder %s20, 0
      %p111 = por %p109, %p110
      %s112 = ssub.s32 %s22, %s29
      %p113 = scmp.eq.s32.totalorder %s112, 0
      %s115 = sadd.s32 %s114, 1
      %s116 = scalar_select %p113, %s114, %s115
      %p119 = pneg %p113
      %p120 = scmp.eq.s32.totalorder %s14, 1
      %p121 = por %p119, %p120
      %p122 = scmp.ne.s32.totalorder %s114, %s117
      %p123 = scmp.eq.s32.totalorder %s14, 0
      %p124 = por %p122, %p123
      %p125 = scmp.ne.s32.totalorder %s114, %s117
      %p126 = scmp.eq.s32.totalorder %s19, 1
      %p127 = por %p125, %p126
      %p128 = scmp.ne.s32.totalorder %s117, %s118
      %p129 = scmp.eq.s32.totalorder %s19, 0
      %p130 = por %p128, %p129
      %p131 = scmp.ne.s32.totalorder %s117, %s118
      %p132 = scmp.eq.s32.totalorder %s20, 1
      %p133 = por %p131, %p132
      %p135 = scmp.ne.s32.totalorder %s118, %s134
      %p136 = scmp.eq.s32.totalorder %s20, 0
      %p137 = por %p135, %p136
      %s138 = ssub.s32 %s22, %s29
      %p139 = scmp.eq.s32.totalorder %s138, 0
      %s141 = sadd.s32 %s140, 1
      %s142 = scalar_select %p139, %s140, %s141
      %p145 = pneg %p139
      %p146 = scmp.eq.s32.totalorder %s14, 1
      %p147 = por %p145, %p146
      %p148 = scmp.ne.s32.totalorder %s140, %s143
      %p149 = scmp.eq.s32.totalorder %s14, 0
      %p150 = por %p148, %p149
      %p151 = scmp.ne.s32.totalorder %s140, %s143
      %p152 = scmp.eq.s32.totalorder %s19, 1
      %p153 = por %p151, %p152
      %p154 = scmp.ne.s32.totalorder %s143, %s144
      %p155 = scmp.eq.s32.totalorder %s19, 0
      %p156 = por %p154, %p155
      %p157 = scmp.ne.s32.totalorder %s143, %s144
      %p158 = scmp.eq.s32.totalorder %s20, 1
      %p159 = por %p157, %p158
      %p161 = scmp.ne.s32.totalorder %s144, %s160
      %p162 = scmp.eq.s32.totalorder %s20, 0
      %p163 = por %p161, %p162
      %s164 = ssub.s32 %s21, %s33
      %s165 = ssub.s32 %s22, %s29
      %s166 = sor.u32 %s164, %s165
      %p167 = scmp.eq.s32.totalorder %s166, 0
      %s169 = sadd.s32 %s168, 1
      %s170 = scalar_select %p167, %s168, %s169
      %p173 = pneg %p167
      %p174 = scmp.eq.s32.totalorder %s14, 1
      %p175 = por %p173, %p174
      %p176 = scmp.ne.s32.totalorder %s168, %s171
      %p177 = scmp.eq.s32.totalorder %s14, 0
      %p178 = por %p176, %p177
      %p179 = scmp.ne.s32.totalorder %s168, %s171
      %p180 = scmp.eq.s32.totalorder %s19, 1
      %p181 = por %p179, %p180
      %p182 = scmp.ne.s32.totalorder %s171, %s172
      %p183 = scmp.eq.s32.totalorder %s19, 0
      %p184 = por %p182, %p183
      %p185 = scmp.ne.s32.totalorder %s171, %s172
      %p186 = scmp.eq.s32.totalorder %s20, 1
      %p187 = por %p185, %p186
      %p189 = scmp.ne.s32.totalorder %s172, %s188
      %p190 = scmp.eq.s32.totalorder %s20, 0
      %p191 = por %p189, %p190
      %p192 = scmp.le.s32.totalorder 1, %s14
      %p193 = scmp.lt.s32.totalorder %s14, 3
      %p194 = pnand %p192, %p193
      %p195 = pneg %p194
      // Predicated region
      $region9: #{_lambda_.12} parent=5 // pred_check
        _
      $region10: #{_lambda_.12} parent=5 // pred_check_branch
        %197 = sbr.rel (%p194) target = $region12
      $region11: #{_lambda_.12} parent=5 // pred_region
        %s198 = ssub.s32 %s14, 1
        // Predicated region
        $region13: #{_lambda_.12} parent=11 // pred_check
          %p199 = pneg %p78
        $region14: #{_lambda_.12} parent=11 // pred_check_branch
          %201 = sbr.rel (%p199) target = $region16
        $region15: #{_lambda_.12} parent=11 // pred_region
          %s202 = smul.u32 4, %s24
          %204 = vsyncadd [#allocation4], 0
          %s205 = smul.addr %s202, 4
          %s206 = scalar_lea.hbm %s1, %s205
          %s207 = sshll.u32 %s206, 4
          %s208 = int_to_ptr.hbm [resolvable:$true] %s207
          %s209 = sshll.u32 [#allocation3], 4
          %s210 = int_to_ptr.vmem [resolvable:$true] %s209
          %215 = dma.hbm_to_vmem [thread:$0]  %s208, 768, %s210, [#allocation4], 64, 64, 4
        $region16: #{_lambda_.12} parent=11 // pred_fallthru
          _
        // Predicated region
        $region17: #{_lambda_.12} parent=11 // pred_check
          %p216 = pneg %p104
        $region18: #{_lambda_.12} parent=11 // pred_check_branch
          %218 = sbr.rel (%p216) target = $region20
        $region19: #{_lambda_.12} parent=11 // pred_region
          %s219 = smul.u32 4, %s24
          %221 = vsyncadd [#allocation6], 0
          %s222 = smul.addr %s219, 8
          %s223 = scalar_lea.hbm %s2, %s222
          %s224 = sshll.u32 %s223, 4
          %s225 = int_to_ptr.hbm [resolvable:$true] %s224
          %s226 = sshll.u32 [#allocation5], 4
          %s227 = int_to_ptr.vmem [resolvable:$true] %s226
          %232 = dma.hbm_to_vmem [thread:$0]  %s225, 512, %s227, [#allocation6], 128, 128, 8
        $region20: #{_lambda_.12} parent=11 // pred_fallthru
          _
        // Predicated region
        $region21: #{_lambda_.12} parent=11 // pred_check
          %p233 = pneg %p130
        $region22: #{_lambda_.12} parent=11 // pred_check_branch
          %235 = sbr.rel (%p233) target = $region24
        $region23: #{_lambda_.12} parent=11 // pred_region
          %s236 = smul.u32 4, %s24
          %238 = vsyncadd [#allocation6], 0
          %s239 = smul.addr %s236, 8
          %s240 = scalar_lea.hbm %s3, %s239
          %s241 = sshll.u32 %s240, 4
          %s242 = int_to_ptr.hbm [resolvable:$true] %s241
          %s243 = sshll.u32 [#allocation7], 4
          %s244 = int_to_ptr.vmem [resolvable:$true] %s243
          %249 = dma.hbm_to_vmem [thread:$0]  %s242, 512, %s244, [#allocation6], 128, 128, 8
        $region24: #{_lambda_.12} parent=11 // pred_fallthru
          _
        // Predicated region
        $region25: #{_lambda_.12} parent=11 // pred_check
          %p250 = pneg %p156
        $region26: #{_lambda_.12} parent=11 // pred_check_branch
          %252 = sbr.rel (%p250) target = $region28
        $region27: #{_lambda_.12} parent=11 // pred_region
          %s253 = smul.u32 4, %s24
          %255 = vsyncadd [#allocation9], 0
          %s256 = smul.addr %s253, 8
          %s257 = scalar_lea.hbm %s4, %s256
          %s258 = sshll.u32 %s257, 4
          %s259 = int_to_ptr.hbm [resolvable:$true] %s258
          %s260 = sshll.u32 [#allocation8], 4
          %s261 = int_to_ptr.vmem [resolvable:$true] %s260
          %266 = dma.hbm_to_vmem [thread:$0]  %s259, 512, %s261, [#allocation9], 128, 128, 8
        $region28: #{_lambda_.12} parent=11 // pred_fallthru
          _
      $region12: #{_lambda_.12} parent=5 // pred_fallthru
        _
      %p267 = scmp.lt.s32.totalorder %s14, 2
      // Predicated region
      $region29: #{_lambda_.12} parent=5 // pred_check
        %p268 = pneg %p267
      $region30: #{_lambda_.12} parent=5 // pred_check_branch
        %270 = sbr.rel (%p268) target = $region32
      $region31: #{_lambda_.12} parent=5 // pred_region
        // Predicated region
        $region33: #{_lambda_.12} parent=31 // pred_check
          %p271 = pneg %p46
        $region34: #{_lambda_.12} parent=31 // pred_check_branch
          %273 = sbr.rel (%p271) target = $region36
        $region35: #{_lambda_.12} parent=31 // pred_region
          %p274 = scmp.lt.s32.totalorder %s21, 1
          %s275 = scalar_select %p274, %s21, 1
          %s276 = smul.addr %s275, 4
          %s277 = smul.addr %s276, 4
          %s278 = scalar_lea.vmem %s0, %s277
        $region36: #{_lambda_.12} parent=31 // pred_fallthru
          _
      $region32: #{_lambda_.12} parent=5 // pred_fallthru
        _
      %p279 = scmp.le.s32.totalorder 1, %s14
      %p280 = scmp.lt.s32.totalorder %s14, 3
      %p281 = pnand %p279, %p280
      %p282 = pneg %p281
      // Predicated region
      $region37: #{_lambda_.12} parent=5 // pred_check
        _
      $region38: #{_lambda_.12} parent=5 // pred_check_branch
        %284 = sbr.rel (%p281) target = $region40
      $region39: #{_lambda_.12} parent=5 // pred_region
        %s285 = ssub.s32 %s14, 1
        // Predicated region
        $region41: #{_lambda_.12} parent=39 // pred_check
          %p286 = pneg %p78
        $region42: #{_lambda_.12} parent=39 // pred_check_branch
          %288 = sbr.rel (%p286) target = $region44
        $region43: #{_lambda_.12} parent=39 // pred_region
          %290 = dma.done [#allocation4], 768
        $region44: #{_lambda_.12} parent=39 // pred_fallthru
          _
        // Predicated region
        $region45: #{_lambda_.12} parent=39 // pred_check
          %p291 = pneg %p104
        $region46: #{_lambda_.12} parent=39 // pred_check_branch
          %293 = sbr.rel (%p291) target = $region48
        $region47: #{_lambda_.12} parent=39 // pred_region
          %295 = dma.done [#allocation6], 512
        $region48: #{_lambda_.12} parent=39 // pred_fallthru
          _
        // Predicated region
        $region49: #{_lambda_.12} parent=39 // pred_check
          %p296 = pneg %p130
        $region50: #{_lambda_.12} parent=39 // pred_check_branch
          %298 = sbr.rel (%p296) target = $region52
        $region51: #{_lambda_.12} parent=39 // pred_region
          %300 = dma.done [#allocation6], 512
        $region52: #{_lambda_.12} parent=39 // pred_fallthru
          _
        // Predicated region
        $region53: #{_lambda_.12} parent=39 // pred_check
          %p301 = pneg %p156
        $region54: #{_lambda_.12} parent=39 // pred_check_branch
          %303 = sbr.rel (%p301) target = $region56
        $region55: #{_lambda_.12} parent=39 // pred_region
          %305 = dma.done [#allocation9], 512
        $region56: #{_lambda_.12} parent=39 // pred_fallthru
          _
        %p306 = scmp.lt.s32.totalorder %s23, 1
        %s307 = scalar_select %p306, %s23, 1
        %s308 = smul.addr %s307, 4
        %s309 = smul.addr %s308, 4
        %s310 = scalar_lea.vmem %s0, %s309
        %p311 = pneg %p52
        %p312 = pneg %p49
        %p313 = pneg %p78
        %p314 = pneg %p75
        %p315 = pneg %p104
        %p316 = pneg %p101
        %p317 = pneg %p130
        %p318 = pneg %p127
        %p319 = pneg %p156
        %p320 = pneg %p153
        %p321 = pneg %p184
        %p322 = pneg %p181
        %s323 = smul.u32 4, %s24
        %p324 = scmp.lt.s32.totalorder %s23, 1
        %s325 = scalar_select %p324, %s23, 1
        %p326 = scmp.lt.s32.totalorder %s323, 3
        %s327 = scalar_select %p326, %s323, 3
        %s328 = smul.addr %s325, 4
        %s329 = sadd.s32 %s327, %s328
        %s330 = smul.addr %s329, 4
        %s331 = scalar_lea.vmem %s5, %s330
        %p332 = scmp.lt.s32.totalorder %s23, 1
        %s333 = scalar_select %p332, %s23, 1
        %s334 = smul.addr %s333, 4
        %s335 = smul.addr %s334, 4
        %s336 = scalar_lea.vmem %s0, %s335
        %s337 = smul.u32 4, %s24
        %s338 = smul.u32 4, %s24
        %s339 = smul.u32 4, %s24
        %s340 = smul.u32 4, %s24
        %s341 = smul.u32 4, %s24
        %p342 = scmp.lt.s32.totalorder %s23, 1
        %s343 = scalar_select %p342, %s23, 1
        %p344 = scmp.lt.s32.totalorder %s341, 3
        %s345 = scalar_select %p344, %s341, 3
        %s346 = smul.addr %s343, 4
        %s347 = sadd.s32 %s345, %s346
        %s348 = smul.addr %s347, 4
        %s349 = scalar_lea.vmem %s5, %s348
        %s350 = smul.u32 4, %s24
        %v352 = vld [vmem:[%s336] sm:$0xf]
        %v353 = vld [vmem:[%s336 + $0x4] sm:$0xf]
        %v354 = vld [vmem:[%s336 + $0x8] sm:$0xf]
        %v355 = vld [vmem:[%s336 + $0xc] sm:$0xf]
        %vm356 = vcmask 3072
        %357 = vst.msk [vmem:[#allocation2] sm:$0xf] %vm356, 0
        %358 = vst.msk [vmem:[#allocation2 + $0x4] sm:$0xf] %vm356, 0
        %359 = vst.msk [vmem:[#allocation2 + $0x8] sm:$0xf] %vm356, 0
        %360 = vst.msk [vmem:[#allocation2 + $0xc] sm:$0xf] %vm356, 0
        %vm361 = vcmask 142472
        %362 = vst.msk [vmem:[#allocation2] sm:$0xf] %vm361, 0
        %363 = vst.msk [vmem:[#allocation2 + $0x4] sm:$0xf] %vm361, 0
        %364 = vst.msk [vmem:[#allocation2 + $0x8] sm:$0xf] %vm361, 0
        %365 = vst.msk [vmem:[#allocation2 + $0xc] sm:$0xf] %vm361, 0
        %370 = vrot.lane.b32.xlu0 %v352, 1
        %v371 = vpop.permute.xlu0 %370
        %372 = vrot.lane.b32.xlu0 %v353, 1
        %v373 = vpop.permute.xlu0 %372
        %374 = vrot.lane.b32.xlu0 %v354, 1
        %v375 = vpop.permute.xlu0 %374
        %376 = vrot.lane.b32.xlu0 %v355, 1
        %v377 = vpop.permute.xlu0 %376
        %vm382 = vcmask 134152
        %383 = vst.msk [vmem:[#allocation2] sm:$0xf] %vm382, %v371
        %384 = vst.msk [vmem:[#allocation2 + $0x4] sm:$0xf] %vm382, %v373
        %385 = vst.msk [vmem:[#allocation2 + $0x8] sm:$0xf] %vm382, %v375
        %386 = vst.msk [vmem:[#allocation2 + $0xc] sm:$0xf] %vm382, %v377
        %v387 = vld [vmem:[#allocation3] sm:$0xf]
        %v388 = vld [vmem:[#allocation3 + $0x4] sm:$0xf]
        %v389 = vld [vmem:[#allocation3 + $0x8] sm:$0xf]
        %v390 = vld [vmem:[#allocation3 + $0xc] sm:$0xf]
        %v391 = vld [vmem:[#allocation2] sm:$0xf]
        %v392 = vld [vmem:[#allocation2 + $0x4] sm:$0xf]
        %v393 = vld [vmem:[#allocation2 + $0x8] sm:$0xf]
        %v394 = vld [vmem:[#allocation2 + $0xc] sm:$0xf]
        %s395 = scalar_lea.vmem [#allocation3], 16
        %v396 = vld [vmem:[%s395] sm:$0xf]
        %v397 = vld [vmem:[%s395 + $0x4] sm:$0xf]
        %v398 = vld [vmem:[%s395 + $0x8] sm:$0xf]
        %v399 = vld [vmem:[%s395 + $0xc] sm:$0xf]
        %v404 = vunpack.c.l.b16 %v396
        %v405 = vunpack.c.l.b16 %v397
        %v406 = vunpack.c.l.b16 %v398
        %v407 = vunpack.c.l.b16 %v399
        %v408 = vpack.c.b16 %v405, %v404
        %v409 = vpack.c.b16 %v407, %v406
        %v414 = vunpack.c.l.b16 %v391
        %v415 = vunpack.c.l.b16 %v392
        %v416 = vunpack.c.l.b16 %v393
        %v417 = vunpack.c.l.b16 %v394
        %v418 = vpack.c.b16 %v415, %v414
        %v419 = vpack.c.b16 %v417, %v416
        %420 = vrot.lane.b32.xlu0 %v418, 127
        %v421 = vpop.permute.xlu0 %420
        %422 = vrot.lane.b32.xlu0 %v419, 127
        %v423 = vpop.permute.xlu0 %422
        %vm426 = vcmask 261120
        %v428 = vsel %vm426, %v408, 0
        %v431 = vsel %vm426, %v409, 0
        %433 = vmatpush.bf16.msra.mxu0 0
        %434 = vmatpush.bf16.msra.mxu0 0
        %435 = vmatpush.bf16.msra.mxu0 0
        %436 = vmatpush.bf16.msra.mxu0 0
        %437 = vmatpush.bf16.msra.mxu0 0
        %438 = vmatpush.bf16.msra.mxu0 0
        %439 = vmatpush.bf16.msra.mxu0 %v423
        %440 = vmatpush.bf16.msra.mxu0 %v421
        %441 = vmatmul.bf16.gmra.mxu0 %v428
        %v442 = vpop.f32.mrf.mxu0
        %v443 = vadd.f32 0.0, %v442
        %v444 = vpop.f32.mrf.mxu0
        %v445 = vadd.f32 0.0, %v444
        %446 = vmatmul.bf16.gmra.mxu0 %v431
        %v447 = vpop.f32.mrf.mxu0
        %v448 = vadd.f32 0.0, %v447
        %v449 = vpop.f32.mrf.mxu0
        %v450 = vadd.f32 0.0, %v449
        %451 = vdwg.mxu0
        %v456 = vunpack.c.l.b16 %v387
        %v457 = vunpack.c.l.b16 %v388
        %v458 = vunpack.c.l.b16 %v389
        %v459 = vunpack.c.l.b16 %v390
        %v460 = vpack.c.b16 %v457, %v456
        %v461 = vpack.c.b16 %v459, %v458
        %v465 = vsel %vm426, %v460, 0
        %v468 = vsel %vm426, %v461, 0
        %470 = vmatpush.bf16.msra.mxu0 0
        %471 = vmatpush.bf16.msra.mxu0 0
        %472 = vmatpush.bf16.msra.mxu0 0
        %473 = vmatpush.bf16.msra.mxu0 0
        %474 = vmatpush.bf16.msra.mxu0 0
        %475 = vmatpush.bf16.msra.mxu0 0
        %476 = vmatpush.bf16.msra.mxu0 %v419
        %477 = vmatpush.bf16.msra.mxu0 %v418
        %478 = vmatmul.bf16.gmra.mxu0 %v465
        %v479 = vpop.f32.mrf.mxu0
        %v480 = vadd.f32 %v443, %v479
        %v481 = vpop.f32.mrf.mxu0
        %v482 = vadd.f32 %v445, %v481
        %483 = vmatmul.bf16.gmra.mxu0 %v468
        %v484 = vpop.f32.mrf.mxu0
        %v485 = vadd.f32 %v448, %v484
        %v486 = vpop.f32.mrf.mxu0
        %v487 = vadd.f32 %v450, %v486
        %488 = vdwg.mxu0
        %s489 = scalar_lea.vmem [#allocation3], 32
        %v490 = vld [vmem:[%s489] sm:$0xf]
        %v491 = vld [vmem:[%s489 + $0x4] sm:$0xf]
        %v492 = vld [vmem:[%s489 + $0x8] sm:$0xf]
        %v493 = vld [vmem:[%s489 + $0xc] sm:$0xf]
        %v498 = vunpack.c.l.b16 %v490
        %v499 = vunpack.c.l.b16 %v491
        %v500 = vunpack.c.l.b16 %v492
        %v501 = vunpack.c.l.b16 %v493
        %v502 = vpack.c.b16 %v499, %v498
        %v503 = vpack.c.b16 %v501, %v500
        %504 = vrot.lane.b32.xlu0 %v418, 126
        %v505 = vpop.permute.xlu0 %504
        %506 = vrot.lane.b32.xlu0 %v419, 126
        %v507 = vpop.permute.xlu0 %506
        %v511 = vsel %vm426, %v502, 0
        %v514 = vsel %vm426, %v503, 0
        %516 = vmatpush.bf16.msra.mxu0 0
        %517 = vmatpush.bf16.msra.mxu0 0
        %518 = vmatpush.bf16.msra.mxu0 0
        %519 = vmatpush.bf16.msra.mxu0 0
        %520 = vmatpush.bf16.msra.mxu0 0
        %521 = vmatpush.bf16.msra.mxu0 0
        %522 = vmatpush.bf16.msra.mxu0 %v507
        %523 = vmatpush.bf16.msra.mxu0 %v505
        %524 = vmatmul.bf16.gmra.mxu0 %v511
        %v525 = vpop.f32.mrf.mxu0
        %v526 = vadd.f32 0.0, %v525
        %v527 = vpop.f32.mrf.mxu0
        %v528 = vadd.f32 0.0, %v527
        %529 = vmatmul.bf16.gmra.mxu0 %v514
        %v530 = vpop.f32.mrf.mxu0
        %v531 = vadd.f32 0.0, %v530
        %v532 = vpop.f32.mrf.mxu0
        %v533 = vadd.f32 0.0, %v532
        %534 = vdwg.mxu0
        %v535 = vadd.f32 %v480, %v526
        %v536 = vadd.f32 %v482, %v528
        %v537 = vadd.f32 %v485, %v531
        %v538 = vadd.f32 %v487, %v533
        %v539 = vld [vmem:[#allocation5] sm:$0xff]
        %v540 = vld [vmem:[#allocation5 + $0x8] sm:$0xff]
        %v541 = vld [vmem:[#allocation5 + $0x10] sm:$0xff]
        %v542 = vld [vmem:[#allocation5 + $0x18] sm:$0xff]
        %544 = vset.pattern.permute.xlu0 0
        %545 = vperm.xlu0 %544, %v539
        %v546 = vpop.permute.xlu0 %545
        %549 = vset.pattern.permute.xlu0 0
        %550 = vperm.xlu0 %549, %v540
        %v551 = vpop.permute.xlu0 %550
        %554 = vset.pattern.permute.xlu0 0
        %555 = vperm.xlu0 %554, %v541
        %v556 = vpop.permute.xlu0 %555
        %559 = vset.pattern.permute.xlu0 0
        %560 = vperm.xlu0 %559, %v542
        %v561 = vpop.permute.xlu0 %560
        %v563 = vadd.f32 %v535, %v546
        %v564 = vadd.f32 %v536, %v551
        %v565 = vadd.f32 %v537, %v556
        %v566 = vadd.f32 %v538, %v561
        %v567 = vmax.f32 %v563, 0.0
        %v568 = vmax.f32 %v564, 0.0
        %v569 = vmax.f32 %v565, 0.0
        %v570 = vmax.f32 %v566, 0.0
        %s571 = smul.u32 %s24, 32
        %s572 = sshra.s32 %s571, 3
        %s573 = sand.u32 %s571, 7
        %s574 = smul.addr %s572, 4
        %s575 = scalar_lea.vmem %s336, %s574
        %v576 = vld [vmem:[%s575] sm:$0xf]
        %v577 = vld [vmem:[%s575 + $0x4] sm:$0xf]
        %v578 = vld [vmem:[%s575 + $0x8] sm:$0xf]
        %v579 = vld [vmem:[%s575 + $0xc] sm:$0xf]
        %v580 = vunpack.c.l.bf16 %v576
        %v581 = vunpack.c.l.bf16 %v577
        %v582 = vunpack.c.l.bf16 %v578
        %v583 = vunpack.c.l.bf16 %v579
        %v584 = vadd.f32 %v567, %v580
        %v585 = vadd.f32 %v568, %v581
        %v586 = vadd.f32 %v569, %v582
        %v587 = vadd.f32 %v570, %v583
        %vm588 = vcmask 130048
        %v589 = vsel %vm588, %v584, 0.0
        %590 = vadd.xlane.f32.xlu0 %v589
        %v591 = vpop.xlane.xlu0 %590
        %v592 = vsel %vm588, %v585, 0.0
        %593 = vadd.xlane.f32.xlu0 %v592
        %v594 = vpop.xlane.xlu0 %593
        %v595 = vsel %vm588, %v586, 0.0
        %596 = vadd.xlane.f32.xlu0 %v595
        %v597 = vpop.xlane.xlu0 %596
        %v598 = vsel %vm588, %v587, 0.0
        %599 = vadd.xlane.f32.xlu0 %v598
        %v600 = vpop.xlane.xlu0 %599
        %v601 = vrcp.pop 16.0
        %v602 = vmul.f32 16.0, %v601
        %v603 = vsub.f32 1.0, %v602
        %v604 = vmul.f32 %v601, %v603
        %v605 = vadd.f32 %v601, %v604
        %vm606 = vweird.f32 %v601
        %v607 = vsel %vm606, %v601, %v605
        %v608 = vmul.f32 %v591, %v607
        %v609 = vmul.f32 %v594, %v607
        %v610 = vmul.f32 %v597, %v607
        %v611 = vmul.f32 %v600, %v607
        %v612 = vsub.f32 %v584, %v608
        %v613 = vsub.f32 %v585, %v609
        %v614 = vsub.f32 %v586, %v610
        %v615 = vsub.f32 %v587, %v611
        %v616 = vmul.f32 %v612, %v612
        %v617 = vmul.f32 %v613, %v613
        %v618 = vmul.f32 %v614, %v614
        %v619 = vmul.f32 %v615, %v615
        %v620 = vsel %vm588, %v616, 0.0
        %621 = vadd.xlane.f32.xlu0 %v620
        %v622 = vpop.xlane.xlu0 %621
        %v623 = vsel %vm588, %v617, 0.0
        %624 = vadd.xlane.f32.xlu0 %v623
        %v625 = vpop.xlane.xlu0 %624
        %v626 = vsel %vm588, %v618, 0.0
        %627 = vadd.xlane.f32.xlu0 %v626
        %v628 = vpop.xlane.xlu0 %627
        %v629 = vsel %vm588, %v619, 0.0
        %630 = vadd.xlane.f32.xlu0 %v629
        %v631 = vpop.xlane.xlu0 %630
        %v632 = vmul.f32 %v622, %v607
        %v633 = vmul.f32 %v625, %v607
        %v634 = vmul.f32 %v628, %v607
        %v635 = vmul.f32 %v631, %v607
        %v636 = vadd.f32 %v632, 1e-05
        %v637 = vadd.f32 %v633, 1e-05
        %v638 = vadd.f32 %v634, 1e-05
        %v639 = vadd.f32 %v635, 1e-05
        %v640 = vrsqrt.pop %v636
        %v641 = vmul.f32 %v640, %v636
        %v642 = vmul.f32 %v641, %v640
        %v643 = vmul.f32 0.5, %v642
        %v644 = vsub.f32 1.5, %v643
        %v645 = vmul.f32 %v640, %v644
        %vm646 = vweird.f32 %v636
        %vm647 = vweird.f32 %v640
        %vm648 = vmor %vm646, %vm647
        %v649 = vsel %vm648, %v640, %v645
        %v650 = vrsqrt.pop %v637
        %v651 = vmul.f32 %v650, %v637
        %v652 = vmul.f32 %v651, %v650
        %v653 = vmul.f32 0.5, %v652
        %v654 = vsub.f32 1.5, %v653
        %v655 = vmul.f32 %v650, %v654
        %vm656 = vweird.f32 %v637
        %vm657 = vweird.f32 %v650
        %vm658 = vmor %vm656, %vm657
        %v659 = vsel %vm658, %v650, %v655
        %v660 = vrsqrt.pop %v638
        %v661 = vmul.f32 %v660, %v638
        %v662 = vmul.f32 %v661, %v660
        %v663 = vmul.f32 0.5, %v662
        %v664 = vsub.f32 1.5, %v663
        %v665 = vmul.f32 %v660, %v664
        %vm666 = vweird.f32 %v638
        %vm667 = vweird.f32 %v660
        %vm668 = vmor %vm666, %vm667
        %v669 = vsel %vm668, %v660, %v665
        %v670 = vrsqrt.pop %v639
        %v671 = vmul.f32 %v670, %v639
        %v672 = vmul.f32 %v671, %v670
        %v673 = vmul.f32 0.5, %v672
        %v674 = vsub.f32 1.5, %v673
        %v675 = vmul.f32 %v670, %v674
        %vm676 = vweird.f32 %v639
        %vm677 = vweird.f32 %v670
        %vm678 = vmor %vm676, %vm677
        %v679 = vsel %vm678, %v670, %v675
        %v680 = vmul.f32 %v612, %v649
        %v681 = vmul.f32 %v613, %v659
        %v682 = vmul.f32 %v614, %v669
        %v683 = vmul.f32 %v615, %v679
        %v684 = vld [vmem:[#allocation7] sm:$0xff]
        %v685 = vld [vmem:[#allocation7 + $0x8] sm:$0xff]
        %v686 = vld [vmem:[#allocation7 + $0x10] sm:$0xff]
        %v687 = vld [vmem:[#allocation7 + $0x18] sm:$0xff]
        %689 = vset.pattern.permute.xlu0 0
        %690 = vperm.xlu0 %689, %v684
        %v691 = vpop.permute.xlu0 %690
        %694 = vset.pattern.permute.xlu0 0
        %695 = vperm.xlu0 %694, %v685
        %v696 = vpop.permute.xlu0 %695
        %699 = vset.pattern.permute.xlu0 0
        %700 = vperm.xlu0 %699, %v686
        %v701 = vpop.permute.xlu0 %700
        %704 = vset.pattern.permute.xlu0 0
        %705 = vperm.xlu0 %704, %v687
        %v706 = vpop.permute.xlu0 %705
        %v708 = vmul.f32 %v680, %v691
        %v709 = vmul.f32 %v681, %v696
        %v710 = vmul.f32 %v682, %v701
        %v711 = vmul.f32 %v683, %v706
        %v712 = vld [vmem:[#allocation8] sm:$0xff]
        %v713 = vld [vmem:[#allocation8 + $0x8] sm:$0xff]
        %v714 = vld [vmem:[#allocation8 + $0x10] sm:$0xff]
        %v715 = vld [vmem:[#allocation8 + $0x18] sm:$0xff]
        %717 = vset.pattern.permute.xlu0 0
        %718 = vperm.xlu0 %717, %v712
        %v719 = vpop.permute.xlu0 %718
        %722 = vset.pattern.permute.xlu0 0
        %723 = vperm.xlu0 %722, %v713
        %v724 = vpop.permute.xlu0 %723
        %727 = vset.pattern.permute.xlu0 0
        %728 = vperm.xlu0 %727, %v714
        %v729 = vpop.permute.xlu0 %728
        %732 = vset.pattern.permute.xlu0 0
        %733 = vperm.xlu0 %732, %v715
        %v734 = vpop.permute.xlu0 %733
        %v736 = vadd.f32 %v708, %v719
        %v737 = vadd.f32 %v709, %v724
        %v738 = vadd.f32 %v710, %v729
        %v739 = vadd.f32 %v711, %v734
        %v740 = vpack.c.bf16 %v736, %v736
        %v741 = vpack.c.bf16 %v737, %v737
        %v742 = vpack.c.bf16 %v738, %v738
        %v743 = vpack.c.bf16 %v739, %v739
        %vm744 = vcmask 125952
        %745 = vst.msk [vmem:[%s349] sm:$0xf] %vm744, %v740
        %746 = vst.msk [vmem:[%s349 + $0x4] sm:$0xf] %vm744, %v741
        %747 = vst.msk [vmem:[%s349 + $0x8] sm:$0xf] %vm744, %v742
        %748 = vst.msk [vmem:[%s349 + $0xc] sm:$0xf] %vm744, %v743
        %s749 = smul.u32 4, %s24
        %p750 = scmp.lt.s32.totalorder %s23, 1
        %s751 = scalar_select %p750, %s23, 1
        %p752 = scmp.lt.s32.totalorder %s749, 3
        %s753 = scalar_select %p752, %s749, 3
        %s754 = smul.addr %s751, 4
        %s755 = sadd.s32 %s753, %s754
        %s756 = smul.addr %s755, 4
        %s757 = scalar_lea.vmem %s5, %s756
        // Predicated region
        $region57: #{_lambda_.12} parent=39 // pred_check
          %p758 = pneg %p181
        $region58: #{_lambda_.12} parent=39 // pred_check_branch
          %760 = sbr.rel (%p758) target = $region60
        $region59: #{_lambda_.12} parent=39 // pred_region
          %s761 = smul.u32 4, %s24
        $region60: #{_lambda_.12} parent=39 // pred_fallthru
          _
      $region40: #{_lambda_.12} parent=5 // pred_fallthru
        _
      %p762 = scmp.le.s32.totalorder 2, %s14
      // Predicated region
      $region61: #{_lambda_.12} parent=5 // pred_check
        %p763 = pneg %p762
      $region62: #{_lambda_.12} parent=5 // pred_check_branch
        %765 = sbr.rel (%p763) target = $region64
      $region63: #{_lambda_.12} parent=5 // pred_region
        %s766 = ssub.s32 %s14, 2
        // Predicated region
        $region65: #{_lambda_.12} parent=63 // pred_check
          %p767 = pneg %p187
        $region66: #{_lambda_.12} parent=63 // pred_check_branch
          %769 = sbr.rel (%p767) target = $region68
        $region67: #{_lambda_.12} parent=63 // pred_region
          %s770 = smul.u32 4, %s26
          %p771 = scmp.lt.s32.totalorder %s25, 1
          %s772 = scalar_select %p771, %s25, 1
          %p773 = scmp.lt.s32.totalorder %s770, 3
          %s774 = scalar_select %p773, %s770, 3
          %s775 = smul.addr %s772, 4
          %s776 = sadd.s32 %s774, %s775
          %s777 = smul.addr %s776, 4
          %s778 = scalar_lea.vmem %s5, %s777
        $region68: #{_lambda_.12} parent=63 // pred_fallthru
          _
      $region64: #{_lambda_.12} parent=5 // pred_fallthru
        _
    $region6: #{_lambda_.12} parent=1 // loop_footer
      %s18 = sadd.s32 1, %s14
    $region7: #{_lambda_.12} parent=1 // loop_footer_branch
      %13 = sbr.rel target = $region3
    $region8: #{_lambda_.12} parent=1 // loop_exit
      _
    %779 = vsyncpa [#allocation4], 1
    %s780 = scalar_lea.sflag [#allocation4], 1
    %781 = vsyncpa %s780, 1
    %782 = vsyncpa [#allocation6], 1
    %783 = vsyncpa [#allocation9], 1

// kernel: _lambda_.15
$region0: #{_lambda_.15}
  #allocation0 [shape = 'u32[]', space=smem, size = 0x4, offset = 0x4, fixed_abs, tag = 'smem constant byte address 0x4 - core index']
  #allocation1 [shape = 'u32[72,128]{1,0:T(1,128)}', space=vmem, size = 0x9000, scoped, tag = 'internal scratch']
  %s0 = inlined_call_operand.vmem [shape: bf16[2,32,16], index: 0, kind: input, shape index: {}]
  %s1 = inlined_call_operand.hbm [shape: bf16[32,32], index: 1, kind: input, shape index: {}]
  %s2 = inlined_call_operand.hbm [shape: f32[32,1], index: 2, kind: input, shape index: {}]
  %s3 = inlined_call_operand.hbm [shape: bf16[32,32], index: 3, kind: input, shape index: {}]
  %s4 = inlined_call_operand.hbm [shape: f32[32,1], index: 4, kind: input, shape index: {}]
  %s5 = inlined_call_operand.hbm [shape: f32[32,1], index: 5, kind: input, shape index: {}]
  %s6 = inlined_call_operand.hbm [shape: f32[32,1], index: 6, kind: input, shape index: {}]
  %s7 = inlined_call_operand.vmem [shape: bf16[2,32,16], index: 7, kind: output, shape index: {}]
  %s8 = sld [smem:[#allocation0]]
  $region85: #{_lambda_.15} parent=0
    _
  %s10 = ssub.s32 1, %s8
  %s11 = scalar_select 0, %s10, %s8
  $region1: #{_lambda_.15} parent=0
    #allocation2 [shape = 'u8[8192]{0}', space=vmem, size = 0x2000, scoped, tag = 'input window, operand 1, single buffered']
    #allocation3 [shape = 's32[2]{0}', space=sflag, size = 0x8, scoped, tag = 'scoped memory for _lambda_.15']
    #allocation4 [shape = 'u8[16384]{0}', space=vmem, size = 0x4000, scoped, tag = 'input window, operand 2, single buffered']
    #allocation5 [shape = 's32[1]{0}', space=sflag, size = 0x4, scoped, tag = 'scoped memory for _lambda_.15']
    #allocation6 [shape = 'u8[8192]{0}', space=vmem, size = 0x2000, scoped, tag = 'input window, operand 3, single buffered']
    #allocation7 [shape = 'u8[16384]{0}', space=vmem, size = 0x4000, scoped, tag = 'input window, operand 4, single buffered']
    #allocation8 [shape = 's32[1]{0}', space=sflag, size = 0x4, scoped, tag = 'scoped memory for _lambda_.15']
    #allocation9 [shape = 'u8[16384]{0}', space=vmem, size = 0x4000, scoped, tag = 'input window, operand 5, single buffered']
    #allocation10 [shape = 'u8[16384]{0}', space=vmem, size = 0x4000, scoped, tag = 'input window, operand 6, single buffered']
    #allocation11 [shape = 's32[1]{0}', space=sflag, size = 0x4, scoped, tag = 'scoped memory for _lambda_.15']
    %12 = vsyncpa [#allocation3], 0
    %13 = vsyncpa [#allocation5], 0
    %14 = vsyncpa [#allocation8], 0
    %15 = vsyncpa [#allocation11], 0
    loop: start=0, step=1, limit=4
    $region2: #{_lambda_.15} parent=1 // loop_pre_header
      _
    $region3: #{_lambda_.15} parent=1 // loop_header
      %s17 = sphi 0, %s21
      %p18 = scmp.ge.s32.totalorder %s17, 4
      %s24 = sphi 0, %s36
      %s25 = sphi 0, %s32
      %s26 = sphi 0, %s24
      %s27 = sphi 0, %s25
      %s28 = sphi 0, %s26
      %s29 = sphi 0, %s27
      %s41 = sphi 0, %s43
      %s44 = sphi 0, %s41
      %s45 = sphi 0, %s44
      %s61 = sphi 0, %s45
      %s65 = sphi 0, %s65
      %s67 = sphi 0, %s65
      %s68 = sphi 0, %s67
      %s82 = sphi 0, %s68
      %s86 = sphi 0, %s86
      %s88 = sphi 0, %s86
      %s89 = sphi 0, %s88
      %s103 = sphi 0, %s89
      %s107 = sphi 0, %s107
      %s109 = sphi 0, %s107
      %s110 = sphi 0, %s109
      %s124 = sphi 0, %s110
      %s128 = sphi 0, %s128
      %s130 = sphi 0, %s128
      %s131 = sphi 0, %s130
      %s145 = sphi 0, %s131
      %s149 = sphi 0, %s149
      %s151 = sphi 0, %s149
      %s152 = sphi 0, %s151
      %s166 = sphi 0, %s152
      %s170 = sphi 0, %s170
      %s172 = sphi 0, %s170
      %s173 = sphi 0, %s172
      %s187 = sphi 0, %s173
      %s195 = sphi 0, %s197
      %s198 = sphi 0, %s195
      %s199 = sphi 0, %s198
      %s215 = sphi 0, %s199
    $region4: #{_lambda_.15} parent=1 // loop_header_branch
      %20 = sbr.rel (%p18) target = $region8
    $region5: #{_lambda_.15} parent=1 // loop_body
      %s22 = ssub.s32 %s17, 1
      %s23 = ssub.s32 %s17, 2
      %s30 = sadd.s32 1, %s25
      %p31 = scmp.ge.s32.totalorder %s30, 1
      %s32 = scalar_select %p31, 0, %s30
      %s33 = sadd.s32 1, %s24
      %s34 = scalar_select %p31, %s33, %s24
      %p35 = scmp.ge.s32.totalorder %s34, 2
      %s36 = scalar_select %p35, 0, %s34
      %s37 = ssub.s32 %s24, %s36
      %s38 = ssub.s32 %s25, %s32
      %s39 = sor.u32 %s37, %s38
      %p40 = scmp.eq.s32.totalorder %s39, 0
      %s42 = sadd.s32 %s41, 1
      %s43 = scalar_select %p40, %s41, %s42
      %p46 = pneg %p40
      %p47 = scmp.eq.s32.totalorder %s17, 1
      %p48 = por %p46, %p47
      %p49 = scmp.ne.s32.totalorder %s41, %s44
      %p50 = scmp.eq.s32.totalorder %s17, 0
      %p51 = por %p49, %p50
      %p52 = scmp.ne.s32.totalorder %s41, %s44
      %p53 = scmp.eq.s32.totalorder %s22, 1
      %p54 = por %p52, %p53
      %p55 = scmp.ne.s32.totalorder %s44, %s45
      %p56 = scmp.eq.s32.totalorder %s22, 0
      %p57 = por %p55, %p56
      %p58 = scmp.ne.s32.totalorder %s44, %s45
      %p59 = scmp.eq.s32.totalorder %s23, 1
      %p60 = por %p58, %p59
      %p62 = scmp.ne.s32.totalorder %s45, %s61
      %p63 = scmp.eq.s32.totalorder %s23, 0
      %p64 = por %p62, %p63
      %s66 = sadd.s32 %s65, 1
      %p69 = scmp.eq.s32.totalorder %s17, 1
      %p70 = scmp.ne.s32.totalorder %s65, %s67
      %p71 = scmp.eq.s32.totalorder %s17, 0
      %p72 = por %p70, %p71
      %p73 = scmp.ne.s32.totalorder %s65, %s67
      %p74 = scmp.eq.s32.totalorder %s22, 1
      %p75 = por %p73, %p74
      %p76 = scmp.ne.s32.totalorder %s67, %s68
      %p77 = scmp.eq.s32.totalorder %s22, 0
      %p78 = por %p76, %p77
      %p79 = scmp.ne.s32.totalorder %s67, %s68
      %p80 = scmp.eq.s32.totalorder %s23, 1
      %p81 = por %p79, %p80
      %p83 = scmp.ne.s32.totalorder %s68, %s82
      %p84 = scmp.eq.s32.totalorder %s23, 0
      %p85 = por %p83, %p84
      %s87 = sadd.s32 %s86, 1
      %p90 = scmp.eq.s32.totalorder %s17, 1
      %p91 = scmp.ne.s32.totalorder %s86, %s88
      %p92 = scmp.eq.s32.totalorder %s17, 0
      %p93 = por %p91, %p92
      %p94 = scmp.ne.s32.totalorder %s86, %s88
      %p95 = scmp.eq.s32.totalorder %s22, 1
      %p96 = por %p94, %p95
      %p97 = scmp.ne.s32.totalorder %s88, %s89
      %p98 = scmp.eq.s32.totalorder %s22, 0
      %p99 = por %p97, %p98
      %p100 = scmp.ne.s32.totalorder %s88, %s89
      %p101 = scmp.eq.s32.totalorder %s23, 1
      %p102 = por %p100, %p101
      %p104 = scmp.ne.s32.totalorder %s89, %s103
      %p105 = scmp.eq.s32.totalorder %s23, 0
      %p106 = por %p104, %p105
      %s108 = sadd.s32 %s107, 1
      %p111 = scmp.eq.s32.totalorder %s17, 1
      %p112 = scmp.ne.s32.totalorder %s107, %s109
      %p113 = scmp.eq.s32.totalorder %s17, 0
      %p114 = por %p112, %p113
      %p115 = scmp.ne.s32.totalorder %s107, %s109
      %p116 = scmp.eq.s32.totalorder %s22, 1
      %p117 = por %p115, %p116
      %p118 = scmp.ne.s32.totalorder %s109, %s110
      %p119 = scmp.eq.s32.totalorder %s22, 0
      %p120 = por %p118, %p119
      %p121 = scmp.ne.s32.totalorder %s109, %s110
      %p122 = scmp.eq.s32.totalorder %s23, 1
      %p123 = por %p121, %p122
      %p125 = scmp.ne.s32.totalorder %s110, %s124
      %p126 = scmp.eq.s32.totalorder %s23, 0
      %p127 = por %p125, %p126
      %s129 = sadd.s32 %s128, 1
      %p132 = scmp.eq.s32.totalorder %s17, 1
      %p133 = scmp.ne.s32.totalorder %s128, %s130
      %p134 = scmp.eq.s32.totalorder %s17, 0
      %p135 = por %p133, %p134
      %p136 = scmp.ne.s32.totalorder %s128, %s130
      %p137 = scmp.eq.s32.totalorder %s22, 1
      %p138 = por %p136, %p137
      %p139 = scmp.ne.s32.totalorder %s130, %s131
      %p140 = scmp.eq.s32.totalorder %s22, 0
      %p141 = por %p139, %p140
      %p142 = scmp.ne.s32.totalorder %s130, %s131
      %p143 = scmp.eq.s32.totalorder %s23, 1
      %p144 = por %p142, %p143
      %p146 = scmp.ne.s32.totalorder %s131, %s145
      %p147 = scmp.eq.s32.totalorder %s23, 0
      %p148 = por %p146, %p147
      %s150 = sadd.s32 %s149, 1
      %p153 = scmp.eq.s32.totalorder %s17, 1
      %p154 = scmp.ne.s32.totalorder %s149, %s151
      %p155 = scmp.eq.s32.totalorder %s17, 0
      %p156 = por %p154, %p155
      %p157 = scmp.ne.s32.totalorder %s149, %s151
      %p158 = scmp.eq.s32.totalorder %s22, 1
      %p159 = por %p157, %p158
      %p160 = scmp.ne.s32.totalorder %s151, %s152
      %p161 = scmp.eq.s32.totalorder %s22, 0
      %p162 = por %p160, %p161
      %p163 = scmp.ne.s32.totalorder %s151, %s152
      %p164 = scmp.eq.s32.totalorder %s23, 1
      %p165 = por %p163, %p164
      %p167 = scmp.ne.s32.totalorder %s152, %s166
      %p168 = scmp.eq.s32.totalorder %s23, 0
      %p169 = por %p167, %p168
      %s171 = sadd.s32 %s170, 1
      %p174 = scmp.eq.s32.totalorder %s17, 1
      %p175 = scmp.ne.s32.totalorder %s170, %s172
      %p176 = scmp.eq.s32.totalorder %s17, 0
      %p177 = por %p175, %p176
      %p178 = scmp.ne.s32.totalorder %s170, %s172
      %p179 = scmp.eq.s32.totalorder %s22, 1
      %p180 = por %p178, %p179
      %p181 = scmp.ne.s32.totalorder %s172, %s173
      %p182 = scmp.eq.s32.totalorder %s22, 0
      %p183 = por %p181, %p182
      %p184 = scmp.ne.s32.totalorder %s172, %s173
      %p185 = scmp.eq.s32.totalorder %s23, 1
      %p186 = por %p184, %p185
      %p188 = scmp.ne.s32.totalorder %s173, %s187
      %p189 = scmp.eq.s32.totalorder %s23, 0
      %p190 = por %p188, %p189
      %s191 = ssub.s32 %s24, %s36
      %s192 = ssub.s32 %s25, %s32
      %s193 = sor.u32 %s191, %s192
      %p194 = scmp.eq.s32.totalorder %s193, 0
      %s196 = sadd.s32 %s195, 1
      %s197 = scalar_select %p194, %s195, %s196
      %p200 = pneg %p194
      %p201 = scmp.eq.s32.totalorder %s17, 1
      %p202 = por %p200, %p201
      %p203 = scmp.ne.s32.totalorder %s195, %s198
      %p204 = scmp.eq.s32.totalorder %s17, 0
      %p205 = por %p203, %p204
      %p206 = scmp.ne.s32.totalorder %s195, %s198
      %p207 = scmp.eq.s32.totalorder %s22, 1
      %p208 = por %p206, %p207
      %p209 = scmp.ne.s32.totalorder %s198, %s199
      %p210 = scmp.eq.s32.totalorder %s22, 0
      %p211 = por %p209, %p210
      %p212 = scmp.ne.s32.totalorder %s198, %s199
      %p213 = scmp.eq.s32.totalorder %s23, 1
      %p214 = por %p212, %p213
      %p216 = scmp.ne.s32.totalorder %s199, %s215
      %p217 = scmp.eq.s32.totalorder %s23, 0
      %p218 = por %p216, %p217
      %p219 = scmp.le.s32.totalorder 1, %s17
      %p220 = scmp.lt.s32.totalorder %s17, 3
      %p221 = pnand %p219, %p220
      %p222 = pneg %p221
      // Predicated region
      $region9: #{_lambda_.15} parent=5 // pred_check
        _
      $region10: #{_lambda_.15} parent=5 // pred_check_branch
        %224 = sbr.rel (%p221) target = $region12
      $region11: #{_lambda_.15} parent=5 // pred_region
        %s225 = ssub.s32 %s17, 1
        // Predicated region
        $region13: #{_lambda_.15} parent=11 // pred_check
          %p226 = pneg %p78
        $region14: #{_lambda_.15} parent=11 // pred_check_branch
          %228 = sbr.rel (%p226) target = $region16
        $region15: #{_lambda_.15} parent=11 // pred_region
          %230 = vsyncadd [#allocation3], 0
          %s231 = sshll.u32 %s1, 4
          %s232 = int_to_ptr.hbm [resolvable:$true] %s231
          %s233 = sshll.u32 [#allocation2], 4
          %s234 = int_to_ptr.vmem [resolvable:$true] %s233
          %239 = dma.hbm_to_vmem [thread:$0]  %s232, 256, %s234, [#allocation3], 64, 64, 4
        $region16: #{_lambda_.15} parent=11 // pred_fallthru
          _
        // Predicated region
        $region17: #{_lambda_.15} parent=11 // pred_check
          %p240 = pneg %p99
        $region18: #{_lambda_.15} parent=11 // pred_check_branch
          %242 = sbr.rel (%p240) target = $region20
        $region19: #{_lambda_.15} parent=11 // pred_region
          %244 = vsyncadd [#allocation5], 0
          %s245 = sshll.u32 %s2, 4
          %s246 = int_to_ptr.hbm [resolvable:$true] %s245
          %s247 = sshll.u32 [#allocation4], 4
          %s248 = int_to_ptr.vmem [resolvable:$true] %s247
          %253 = dma.hbm_to_vmem [thread:$0]  %s246, 512, %s248, [#allocation5], 128, 128, 8
        $region20: #{_lambda_.15} parent=11 // pred_fallthru
          _
        // Predicated region
        $region21: #{_lambda_.15} parent=11 // pred_check
          %p254 = pneg %p120
        $region22: #{_lambda_.15} parent=11 // pred_check_branch
          %256 = sbr.rel (%p254) target = $region24
        $region23: #{_lambda_.15} parent=11 // pred_region
          %258 = vsyncadd [#allocation5], 0
          %s259 = sshll.u32 %s3, 4
          %s260 = int_to_ptr.hbm [resolvable:$true] %s259
          %s261 = sshll.u32 [#allocation6], 4
          %s262 = int_to_ptr.vmem [resolvable:$true] %s261
          %267 = dma.hbm_to_vmem [thread:$0]  %s260, 256, %s262, [#allocation5], 64, 64, 4
        $region24: #{_lambda_.15} parent=11 // pred_fallthru
          _
        // Predicated region
        $region25: #{_lambda_.15} parent=11 // pred_check
          %p268 = pneg %p141
        $region26: #{_lambda_.15} parent=11 // pred_check_branch
          %270 = sbr.rel (%p268) target = $region28
        $region27: #{_lambda_.15} parent=11 // pred_region
          %272 = vsyncadd [#allocation8], 0
          %s273 = sshll.u32 %s4, 4
          %s274 = int_to_ptr.hbm [resolvable:$true] %s273
          %s275 = sshll.u32 [#allocation7], 4
          %s276 = int_to_ptr.vmem [resolvable:$true] %s275
          %281 = dma.hbm_to_vmem [thread:$0]  %s274, 512, %s276, [#allocation8], 128, 128, 8
        $region28: #{_lambda_.15} parent=11 // pred_fallthru
          _
        // Predicated region
        $region29: #{_lambda_.15} parent=11 // pred_check
          %p282 = pneg %p162
        $region30: #{_lambda_.15} parent=11 // pred_check_branch
          %284 = sbr.rel (%p282) target = $region32
        $region31: #{_lambda_.15} parent=11 // pred_region
          %286 = vsyncadd [#allocation8], 0
          %s287 = sshll.u32 %s5, 4
          %s288 = int_to_ptr.hbm [resolvable:$true] %s287
          %s289 = sshll.u32 [#allocation9], 4
          %s290 = int_to_ptr.vmem [resolvable:$true] %s289
          %295 = dma.hbm_to_vmem [thread:$0]  %s288, 512, %s290, [#allocation8], 128, 128, 8
        $region32: #{_lambda_.15} parent=11 // pred_fallthru
          _
        // Predicated region
        $region33: #{_lambda_.15} parent=11 // pred_check
          %p296 = pneg %p183
        $region34: #{_lambda_.15} parent=11 // pred_check_branch
          %298 = sbr.rel (%p296) target = $region36
        $region35: #{_lambda_.15} parent=11 // pred_region
          %300 = vsyncadd [#allocation11], 0
          %s301 = sshll.u32 %s6, 4
          %s302 = int_to_ptr.hbm [resolvable:$true] %s301
          %s303 = sshll.u32 [#allocation10], 4
          %s304 = int_to_ptr.vmem [resolvable:$true] %s303
          %309 = dma.hbm_to_vmem [thread:$0]  %s302, 512, %s304, [#allocation11], 128, 128, 8
        $region36: #{_lambda_.15} parent=11 // pred_fallthru
          _
      $region12: #{_lambda_.15} parent=5 // pred_fallthru
        _
      %p310 = scmp.lt.s32.totalorder %s17, 2
      // Predicated region
      $region37: #{_lambda_.15} parent=5 // pred_check
        %p311 = pneg %p310
      $region38: #{_lambda_.15} parent=5 // pred_check_branch
        %313 = sbr.rel (%p311) target = $region40
      $region39: #{_lambda_.15} parent=5 // pred_region
        // Predicated region
        $region41: #{_lambda_.15} parent=39 // pred_check
          %p314 = pneg %p51
        $region42: #{_lambda_.15} parent=39 // pred_check_branch
          %316 = sbr.rel (%p314) target = $region44
        $region43: #{_lambda_.15} parent=39 // pred_region
          %p317 = scmp.lt.s32.totalorder %s24, 1
          %s318 = scalar_select %p317, %s24, 1
          %p319 = scmp.lt.s32.totalorder %s25, 0
          %s320 = scalar_select %p319, %s25, 0
          %s321 = smul.addr %s318, 4
          %s322 = sadd.s32 %s320, %s321
          %s323 = smul.addr %s322, 4
          %s324 = scalar_lea.vmem %s0, %s323
        $region44: #{_lambda_.15} parent=39 // pred_fallthru
          _
      $region40: #{_lambda_.15} parent=5 // pred_fallthru
        _
      %p325 = scmp.le.s32.totalorder 1, %s17
      %p326 = scmp.lt.s32.totalorder %s17, 3
      %p327 = pnand %p325, %p326
      %p328 = pneg %p327
      // Predicated region
      $region45: #{_lambda_.15} parent=5 // pred_check
        _
      $region46: #{_lambda_.15} parent=5 // pred_check_branch
        %330 = sbr.rel (%p327) target = $region48
      $region47: #{_lambda_.15} parent=5 // pred_region
        %s331 = ssub.s32 %s17, 1
        // Predicated region
        $region49: #{_lambda_.15} parent=47 // pred_check
          %p332 = pneg %p78
        $region50: #{_lambda_.15} parent=47 // pred_check_branch
          %334 = sbr.rel (%p332) target = $region52
        $region51: #{_lambda_.15} parent=47 // pred_region
          %336 = dma.done [#allocation3], 256
        $region52: #{_lambda_.15} parent=47 // pred_fallthru
          _
        // Predicated region
        $region53: #{_lambda_.15} parent=47 // pred_check
          %p337 = pneg %p99
        $region54: #{_lambda_.15} parent=47 // pred_check_branch
          %339 = sbr.rel (%p337) target = $region56
        $region55: #{_lambda_.15} parent=47 // pred_region
          %341 = dma.done [#allocation5], 512
        $region56: #{_lambda_.15} parent=47 // pred_fallthru
          _
        // Predicated region
        $region57: #{_lambda_.15} parent=47 // pred_check
          %p342 = pneg %p120
        $region58: #{_lambda_.15} parent=47 // pred_check_branch
          %344 = sbr.rel (%p342) target = $region60
        $region59: #{_lambda_.15} parent=47 // pred_region
          %346 = dma.done [#allocation5], 256
        $region60: #{_lambda_.15} parent=47 // pred_fallthru
          _
        // Predicated region
        $region61: #{_lambda_.15} parent=47 // pred_check
          %p347 = pneg %p141
        $region62: #{_lambda_.15} parent=47 // pred_check_branch
          %349 = sbr.rel (%p347) target = $region64
        $region63: #{_lambda_.15} parent=47 // pred_region
          %351 = dma.done [#allocation8], 512
        $region64: #{_lambda_.15} parent=47 // pred_fallthru
          _
        // Predicated region
        $region65: #{_lambda_.15} parent=47 // pred_check
          %p352 = pneg %p162
        $region66: #{_lambda_.15} parent=47 // pred_check_branch
          %354 = sbr.rel (%p352) target = $region68
        $region67: #{_lambda_.15} parent=47 // pred_region
          %356 = dma.done [#allocation8], 512
        $region68: #{_lambda_.15} parent=47 // pred_fallthru
          _
        // Predicated region
        $region69: #{_lambda_.15} parent=47 // pred_check
          %p357 = pneg %p183
        $region70: #{_lambda_.15} parent=47 // pred_check_branch
          %359 = sbr.rel (%p357) target = $region72
        $region71: #{_lambda_.15} parent=47 // pred_region
          %361 = dma.done [#allocation11], 512
        $region72: #{_lambda_.15} parent=47 // pred_fallthru
          _
        %p362 = scmp.lt.s32.totalorder %s26, 1
        %s363 = scalar_select %p362, %s26, 1
        %p364 = scmp.lt.s32.totalorder %s27, 0
        %s365 = scalar_select %p364, %s27, 0
        %s366 = smul.addr %s363, 4
        %s367 = sadd.s32 %s365, %s366
        %s368 = smul.addr %s367, 4
        %s369 = scalar_lea.vmem %s0, %s368
        %p370 = pneg %p57
        %p371 = pneg %p54
        %p372 = pneg %p78
        %p373 = pneg %p75
        %p374 = pneg %p99
        %p375 = pneg %p96
        %p376 = pneg %p120
        %p377 = pneg %p117
        %p378 = pneg %p141
        %p379 = pneg %p138
        %p380 = pneg %p162
        %p381 = pneg %p159
        %p382 = pneg %p183
        %p383 = pneg %p180
        %p384 = pneg %p211
        %p385 = pneg %p208
        %p386 = scmp.lt.s32.totalorder %s26, 1
        %s387 = scalar_select %p386, %s26, 1
        %p388 = scmp.lt.s32.totalorder %s27, 0
        %s389 = scalar_select %p388, %s27, 0
        %s390 = smul.addr %s387, 4
        %s391 = sadd.s32 %s389, %s390
        %s392 = smul.addr %s391, 4
        %s393 = scalar_lea.vmem %s7, %s392
        %p394 = scmp.lt.s32.totalorder %s26, 1
        %s395 = scalar_select %p394, %s26, 1
        %p396 = scmp.lt.s32.totalorder %s27, 0
        %s397 = scalar_select %p396, %s27, 0
        %s398 = smul.addr %s395, 4
        %s399 = sadd.s32 %s397, %s398
        %s400 = smul.addr %s399, 4
        %s401 = scalar_lea.vmem %s0, %s400
        %p402 = scmp.lt.s32.totalorder %s26, 1
        %s403 = scalar_select %p402, %s26, 1
        %p404 = scmp.lt.s32.totalorder %s27, 0
        %s405 = scalar_select %p404, %s27, 0
        %s406 = smul.addr %s403, 4
        %s407 = sadd.s32 %s405, %s406
        %s408 = smul.addr %s407, 4
        %s409 = scalar_lea.vmem %s7, %s408
        %v411 = vld [vmem:[%s401] sm:$0xf]
        %v412 = vld [vmem:[%s401 + $0x4] sm:$0xf]
        %v413 = vld [vmem:[%s401 + $0x8] sm:$0xf]
        %v414 = vld [vmem:[%s401 + $0xc] sm:$0xf]
        %v415 = vld [vmem:[#allocation2] sm:$0xf]
        %v416 = vld [vmem:[#allocation2 + $0x4] sm:$0xf]
        %v417 = vld [vmem:[#allocation2 + $0x8] sm:$0xf]
        %v418 = vld [vmem:[#allocation2 + $0xc] sm:$0xf]
        %v419 = vld [vmem:[#allocation4] sm:$0xff]
        %v420 = vld [vmem:[#allocation4 + $0x8] sm:$0xff]
        %v421 = vld [vmem:[#allocation4 + $0x10] sm:$0xff]
        %v422 = vld [vmem:[#allocation4 + $0x18] sm:$0xff]
        %424 = vset.pattern.permute.xlu0 0
        %425 = vperm.xlu0 %424, %v419
        %v426 = vpop.permute.xlu0 %425
        %429 = vset.pattern.permute.xlu0 0
        %430 = vperm.xlu0 %429, %v420
        %v431 = vpop.permute.xlu0 %430
        %434 = vset.pattern.permute.xlu0 0
        %435 = vperm.xlu0 %434, %v421
        %v436 = vpop.permute.xlu0 %435
        %439 = vset.pattern.permute.xlu0 0
        %440 = vperm.xlu0 %439, %v422
        %v441 = vpop.permute.xlu0 %440
        %v447 = vunpack.c.l.b16 %v415
        %v448 = vunpack.c.l.b16 %v416
        %v449 = vunpack.c.l.b16 %v417
        %v450 = vunpack.c.l.b16 %v418
        %v451 = vpack.c.b16 %v448, %v447
        %v452 = vpack.c.b16 %v450, %v449
        %v457 = vunpack.c.l.b16 %v411
        %v458 = vunpack.c.l.b16 %v412
        %v459 = vunpack.c.l.b16 %v413
        %v460 = vunpack.c.l.b16 %v414
        %v461 = vpack.c.b16 %v458, %v457
        %v462 = vpack.c.b16 %v460, %v459
        %vm465 = vcmask 261120
        %v467 = vsel %vm465, %v451, 0
        %v470 = vsel %vm465, %v452, 0
        %472 = vmatpush.bf16.msra.mxu0 0
        %473 = vmatpush.bf16.msra.mxu0 0
        %474 = vmatpush.bf16.msra.mxu0 0
        %475 = vmatpush.bf16.msra.mxu0 0
        %476 = vmatpush.bf16.msra.mxu0 0
        %477 = vmatpush.bf16.msra.mxu0 0
        %478 = vmatpush.bf16.msra.mxu0 %v462
        %479 = vmatpush.bf16.msra.mxu0 %v461
        %480 = vmatmul.bf16.gmra.mxu0 %v467
        %v481 = vpop.f32.mrf.mxu0
        %v482 = vadd.f32 %v426, %v481
        %v483 = vpop.f32.mrf.mxu0
        %v484 = vadd.f32 %v431, %v483
        %485 = vmatmul.bf16.gmra.mxu0 %v470
        %v486 = vpop.f32.mrf.mxu0
        %v487 = vadd.f32 %v436, %v486
        %v488 = vpop.f32.mrf.mxu0
        %v489 = vadd.f32 %v441, %v488
        %490 = vdwg.mxu0
        %v491 = vmax.f32 %v482, 0.0
        %v492 = vmax.f32 %v484, 0.0
        %v493 = vmax.f32 %v487, 0.0
        %v494 = vmax.f32 %v489, 0.0
        %v495 = vpack.c.bf16 %v492, %v491
        %v496 = vpack.c.bf16 %v494, %v493
        %v497 = vld [vmem:[#allocation6] sm:$0xf]
        %v498 = vld [vmem:[#allocation6 + $0x4] sm:$0xf]
        %v499 = vld [vmem:[#allocation6 + $0x8] sm:$0xf]
        %v500 = vld [vmem:[#allocation6 + $0xc] sm:$0xf]
        %v501 = vld [vmem:[#allocation7] sm:$0xff]
        %v502 = vld [vmem:[#allocation7 + $0x8] sm:$0xff]
        %v503 = vld [vmem:[#allocation7 + $0x10] sm:$0xff]
        %v504 = vld [vmem:[#allocation7 + $0x18] sm:$0xff]
        %506 = vset.pattern.permute.xlu0 0
        %507 = vperm.xlu0 %506, %v501
        %v508 = vpop.permute.xlu0 %507
        %511 = vset.pattern.permute.xlu0 0
        %512 = vperm.xlu0 %511, %v502
        %v513 = vpop.permute.xlu0 %512
        %516 = vset.pattern.permute.xlu0 0
        %517 = vperm.xlu0 %516, %v503
        %v518 = vpop.permute.xlu0 %517
        %521 = vset.pattern.permute.xlu0 0
        %522 = vperm.xlu0 %521, %v504
        %v523 = vpop.permute.xlu0 %522
        %v529 = vunpack.c.l.b16 %v497
        %v530 = vunpack.c.l.b16 %v498
        %v531 = vunpack.c.l.b16 %v499
        %v532 = vunpack.c.l.b16 %v500
        %v533 = vpack.c.b16 %v530, %v529
        %v534 = vpack.c.b16 %v532, %v531
        %v536 = vsel %vm465, %v533, 0
        %v539 = vsel %vm465, %v534, 0
        %541 = vmatpush.bf16.msra.mxu0 0
        %542 = vmatpush.bf16.msra.mxu0 0
        %543 = vmatpush.bf16.msra.mxu0 0
        %544 = vmatpush.bf16.msra.mxu0 0
        %545 = vmatpush.bf16.msra.mxu0 0
        %546 = vmatpush.bf16.msra.mxu0 0
        %547 = vmatpush.bf16.msra.mxu0 %v496
        %548 = vmatpush.bf16.msra.mxu0 %v495
        %549 = vmatmul.bf16.gmra.mxu0 %v536
        %v550 = vpop.f32.mrf.mxu0
        %v551 = vadd.f32 %v508, %v550
        %v552 = vpop.f32.mrf.mxu0
        %v553 = vadd.f32 %v513, %v552
        %554 = vmatmul.bf16.gmra.mxu0 %v539
        %v555 = vpop.f32.mrf.mxu0
        %v556 = vadd.f32 %v518, %v555
        %v557 = vpop.f32.mrf.mxu0
        %v558 = vadd.f32 %v523, %v557
        %559 = vdwg.mxu0
        %v560 = vunpack.c.l.bf16 %v411
        %v561 = vunpack.c.l.bf16 %v412
        %v562 = vunpack.c.l.bf16 %v413
        %v563 = vunpack.c.l.bf16 %v414
        %v564 = vadd.f32 %v551, %v560
        %v565 = vadd.f32 %v553, %v561
        %v566 = vadd.f32 %v556, %v562
        %v567 = vadd.f32 %v558, %v563
        %vm568 = vcmask 130048
        %v569 = vsel %vm568, %v564, 0.0
        %570 = vadd.xlane.f32.xlu0 %v569
        %v571 = vpop.xlane.xlu0 %570
        %v572 = vsel %vm568, %v565, 0.0
        %573 = vadd.xlane.f32.xlu0 %v572
        %v574 = vpop.xlane.xlu0 %573
        %v575 = vsel %vm568, %v566, 0.0
        %576 = vadd.xlane.f32.xlu0 %v575
        %v577 = vpop.xlane.xlu0 %576
        %v578 = vsel %vm568, %v567, 0.0
        %579 = vadd.xlane.f32.xlu0 %v578
        %v580 = vpop.xlane.xlu0 %579
        %v581 = vrcp.pop 16.0
        %v582 = vmul.f32 16.0, %v581
        %v583 = vsub.f32 1.0, %v582
        %v584 = vmul.f32 %v581, %v583
        %v585 = vadd.f32 %v581, %v584
        %vm586 = vweird.f32 %v581
        %v587 = vsel %vm586, %v581, %v585
        %v588 = vmul.f32 %v571, %v587
        %v589 = vmul.f32 %v574, %v587
        %v590 = vmul.f32 %v577, %v587
        %v591 = vmul.f32 %v580, %v587
        %v592 = vsub.f32 %v564, %v588
        %v593 = vsub.f32 %v565, %v589
        %v594 = vsub.f32 %v566, %v590
        %v595 = vsub.f32 %v567, %v591
        %v596 = vmul.f32 %v592, %v592
        %v597 = vmul.f32 %v593, %v593
        %v598 = vmul.f32 %v594, %v594
        %v599 = vmul.f32 %v595, %v595
        %v600 = vsel %vm568, %v596, 0.0
        %601 = vadd.xlane.f32.xlu0 %v600
        %v602 = vpop.xlane.xlu0 %601
        %v603 = vsel %vm568, %v597, 0.0
        %604 = vadd.xlane.f32.xlu0 %v603
        %v605 = vpop.xlane.xlu0 %604
        %v606 = vsel %vm568, %v598, 0.0
        %607 = vadd.xlane.f32.xlu0 %v606
        %v608 = vpop.xlane.xlu0 %607
        %v609 = vsel %vm568, %v599, 0.0
        %610 = vadd.xlane.f32.xlu0 %v609
        %v611 = vpop.xlane.xlu0 %610
        %v612 = vmul.f32 %v602, %v587
        %v613 = vmul.f32 %v605, %v587
        %v614 = vmul.f32 %v608, %v587
        %v615 = vmul.f32 %v611, %v587
        %v616 = vadd.f32 %v612, 1e-05
        %v617 = vadd.f32 %v613, 1e-05
        %v618 = vadd.f32 %v614, 1e-05
        %v619 = vadd.f32 %v615, 1e-05
        %v620 = vrsqrt.pop %v616
        %v621 = vmul.f32 %v620, %v616
        %v622 = vmul.f32 %v621, %v620
        %v623 = vmul.f32 0.5, %v622
        %v624 = vsub.f32 1.5, %v623
        %v625 = vmul.f32 %v620, %v624
        %vm626 = vweird.f32 %v616
        %vm627 = vweird.f32 %v620
        %vm628 = vmor %vm626, %vm627
        %v629 = vsel %vm628, %v620, %v625
        %v630 = vrsqrt.pop %v617
        %v631 = vmul.f32 %v630, %v617
        %v632 = vmul.f32 %v631, %v630
        %v633 = vmul.f32 0.5, %v632
        %v634 = vsub.f32 1.5, %v633
        %v635 = vmul.f32 %v630, %v634
        %vm636 = vweird.f32 %v617
        %vm637 = vweird.f32 %v630
        %vm638 = vmor %vm636, %vm637
        %v639 = vsel %vm638, %v630, %v635
        %v640 = vrsqrt.pop %v618
        %v641 = vmul.f32 %v640, %v618
        %v642 = vmul.f32 %v641, %v640
        %v643 = vmul.f32 0.5, %v642
        %v644 = vsub.f32 1.5, %v643
        %v645 = vmul.f32 %v640, %v644
        %vm646 = vweird.f32 %v618
        %vm647 = vweird.f32 %v640
        %vm648 = vmor %vm646, %vm647
        %v649 = vsel %vm648, %v640, %v645
        %v650 = vrsqrt.pop %v619
        %v651 = vmul.f32 %v650, %v619
        %v652 = vmul.f32 %v651, %v650
        %v653 = vmul.f32 0.5, %v652
        %v654 = vsub.f32 1.5, %v653
        %v655 = vmul.f32 %v650, %v654
        %vm656 = vweird.f32 %v619
        %vm657 = vweird.f32 %v650
        %vm658 = vmor %vm656, %vm657
        %v659 = vsel %vm658, %v650, %v655
        %v660 = vmul.f32 %v592, %v629
        %v661 = vmul.f32 %v593, %v639
        %v662 = vmul.f32 %v594, %v649
        %v663 = vmul.f32 %v595, %v659
        %v664 = vld [vmem:[#allocation9] sm:$0xff]
        %v665 = vld [vmem:[#allocation9 + $0x8] sm:$0xff]
        %v666 = vld [vmem:[#allocation9 + $0x10] sm:$0xff]
        %v667 = vld [vmem:[#allocation9 + $0x18] sm:$0xff]
        %669 = vset.pattern.permute.xlu0 0
        %670 = vperm.xlu0 %669, %v664
        %v671 = vpop.permute.xlu0 %670
        %674 = vset.pattern.permute.xlu0 0
        %675 = vperm.xlu0 %674, %v665
        %v676 = vpop.permute.xlu0 %675
        %679 = vset.pattern.permute.xlu0 0
        %680 = vperm.xlu0 %679, %v666
        %v681 = vpop.permute.xlu0 %680
        %684 = vset.pattern.permute.xlu0 0
        %685 = vperm.xlu0 %684, %v667
        %v686 = vpop.permute.xlu0 %685
        %v688 = vmul.f32 %v660, %v671
        %v689 = vmul.f32 %v661, %v676
        %v690 = vmul.f32 %v662, %v681
        %v691 = vmul.f32 %v663, %v686
        %v692 = vld [vmem:[#allocation10] sm:$0xff]
        %v693 = vld [vmem:[#allocation10 + $0x8] sm:$0xff]
        %v694 = vld [vmem:[#allocation10 + $0x10] sm:$0xff]
        %v695 = vld [vmem:[#allocation10 + $0x18] sm:$0xff]
        %697 = vset.pattern.permute.xlu0 0
        %698 = vperm.xlu0 %697, %v692
        %v699 = vpop.permute.xlu0 %698
        %702 = vset.pattern.permute.xlu0 0
        %703 = vperm.xlu0 %702, %v693
        %v704 = vpop.permute.xlu0 %703
        %707 = vset.pattern.permute.xlu0 0
        %708 = vperm.xlu0 %707, %v694
        %v709 = vpop.permute.xlu0 %708
        %712 = vset.pattern.permute.xlu0 0
        %713 = vperm.xlu0 %712, %v695
        %v714 = vpop.permute.xlu0 %713
        %v716 = vadd.f32 %v688, %v699
        %v717 = vadd.f32 %v689, %v704
        %v718 = vadd.f32 %v690, %v709
        %v719 = vadd.f32 %v691, %v714
        %v720 = vpack.c.bf16 %v716, %v716
        %v721 = vpack.c.bf16 %v717, %v717
        %v722 = vpack.c.bf16 %v718, %v718
        %v723 = vpack.c.bf16 %v719, %v719
        %vm724 = vcmask 125952
        %725 = vst.msk [vmem:[%s409] sm:$0xf] %vm724, %v720
        %726 = vst.msk [vmem:[%s409 + $0x4] sm:$0xf] %vm724, %v721
        %727 = vst.msk [vmem:[%s409 + $0x8] sm:$0xf] %vm724, %v722
        %728 = vst.msk [vmem:[%s409 + $0xc] sm:$0xf] %vm724, %v723
        %p729 = scmp.lt.s32.totalorder %s26, 1
        %s730 = scalar_select %p729, %s26, 1
        %p731 = scmp.lt.s32.totalorder %s27, 0
        %s732 = scalar_select %p731, %s27, 0
        %s733 = smul.addr %s730, 4
        %s734 = sadd.s32 %s732, %s733
        %s735 = smul.addr %s734, 4
        %s736 = scalar_lea.vmem %s7, %s735
        // Predicated region
        $region73: #{_lambda_.15} parent=47 // pred_check
          %p737 = pneg %p208
        $region74: #{_lambda_.15} parent=47 // pred_check_branch
          %739 = sbr.rel (%p737) target = $region76
        $region75: #{_lambda_.15} parent=47 // pred_region
          _
        $region76: #{_lambda_.15} parent=47 // pred_fallthru
          _
      $region48: #{_lambda_.15} parent=5 // pred_fallthru
        _
      %p740 = scmp.le.s32.totalorder 2, %s17
      // Predicated region
      $region77: #{_lambda_.15} parent=5 // pred_check
        %p741 = pneg %p740
      $region78: #{_lambda_.15} parent=5 // pred_check_branch
        %743 = sbr.rel (%p741) target = $region80
      $region79: #{_lambda_.15} parent=5 // pred_region
        %s744 = ssub.s32 %s17, 2
        // Predicated region
        $region81: #{_lambda_.15} parent=79 // pred_check
          %p745 = pneg %p214
        $region82: #{_lambda_.15} parent=79 // pred_check_branch
          %747 = sbr.rel (%p745) target = $region84
        $region83: #{_lambda_.15} parent=79 // pred_region
          %p748 = scmp.lt.s32.totalorder %s28, 1
          %s749 = scalar_select %p748, %s28, 1
          %p750 = scmp.lt.s32.totalorder %s29, 0
          %s751 = scalar_select %p750, %s29, 0
          %s752 = smul.addr %s749, 4
          %s753 = sadd.s32 %s751, %s752
          %s754 = smul.addr %s753, 4
          %s755 = scalar_lea.vmem %s7, %s754
        $region84: #{_lambda_.15} parent=79 // pred_fallthru
          _
      $region80: #{_lambda_.15} parent=5 // pred_fallthru
        _
    $region6: #{_lambda_.15} parent=1 // loop_footer
      %s21 = sadd.s32 1, %s17
    $region7: #{_lambda_.15} parent=1 // loop_footer_branch
      %16 = sbr.rel target = $region3
    $region8: #{_lambda_.15} parent=1 // loop_exit
      _
    %756 = vsyncpa [#allocation3], 1
    %s757 = scalar_lea.sflag [#allocation3], 1
    %758 = vsyncpa %s757, 1
    %759 = vsyncpa [#allocation5], 1
    %760 = vsyncpa [#allocation8], 1
    %761 = vsyncpa [#allocation11], 1

// kernel: _lambda_.13
$region0: #{_lambda_.13}
  #allocation0 [shape = 'u32[]', space=smem, size = 0x4, offset = 0x4, fixed_abs, tag = 'smem constant byte address 0x4 - core index']
  #allocation1 [shape = 'u32[72,128]{1,0:T(1,128)}', space=vmem, size = 0x9000, scoped, tag = 'internal scratch']
  %s0 = inlined_call_operand.vmem [shape: bf16[2,32,16], index: 0, kind: input, shape index: {}]
  %s1 = inlined_call_operand.hbm [shape: bf16[32,32], index: 1, kind: input, shape index: {}]
  %s2 = inlined_call_operand.hbm [shape: f32[32,1], index: 2, kind: input, shape index: {}]
  %s3 = inlined_call_operand.vmem [shape: bf16[32,32], index: 3, kind: input, shape index: {}]
  %s4 = inlined_call_operand.hbm [shape: f32[32,1], index: 4, kind: input, shape index: {}]
  %s5 = inlined_call_operand.hbm [shape: f32[32,1], index: 5, kind: input, shape index: {}]
  %s6 = inlined_call_operand.hbm [shape: f32[32,1], index: 6, kind: input, shape index: {}]
  %s7 = inlined_call_operand.vmem [shape: bf16[2,32,16], index: 7, kind: output, shape index: {}]
  %s8 = sld [smem:[#allocation0]]
  $region81: #{_lambda_.13} parent=0
    _
  %s10 = ssub.s32 1, %s8
  %s11 = scalar_select 0, %s10, %s8
  $region1: #{_lambda_.13} parent=0
    #allocation2 [shape = 'u8[8192]{0}', space=vmem, size = 0x2000, scoped, tag = 'input window, operand 1, single buffered']
    #allocation3 [shape = 's32[2]{0}', space=sflag, size = 0x8, scoped, tag = 'scoped memory for _lambda_.13']
    #allocation4 [shape = 'u8[16384]{0}', space=vmem, size = 0x4000, scoped, tag = 'input window, operand 2, single buffered']
    #allocation5 [shape = 's32[1]{0}', space=sflag, size = 0x4, scoped, tag = 'scoped memory for _lambda_.13']
    #allocation6 [shape = 'u8[16384]{0}', space=vmem, size = 0x4000, scoped, tag = 'input window, operand 4, single buffered']
    #allocation7 [shape = 'u8[16384]{0}', space=vmem, size = 0x4000, scoped, tag = 'input window, operand 5, single buffered']
    #allocation8 [shape = 's32[1]{0}', space=sflag, size = 0x4, scoped, tag = 'scoped memory for _lambda_.13']
    #allocation9 [shape = 'u8[16384]{0}', space=vmem, size = 0x4000, scoped, tag = 'input window, operand 6, single buffered']
    %12 = vsyncpa [#allocation3], 0
    %13 = vsyncpa [#allocation5], 0
    %14 = vsyncpa [#allocation8], 0
    loop: start=0, step=1, limit=4
    $region2: #{_lambda_.13} parent=1 // loop_pre_header
      _
    $region3: #{_lambda_.13} parent=1 // loop_header
      %s16 = sphi 0, %s20
      %p17 = scmp.ge.s32.totalorder %s16, 4
      %s23 = sphi 0, %s35
      %s24 = sphi 0, %s31
      %s25 = sphi 0, %s23
      %s26 = sphi 0, %s24
      %s27 = sphi 0, %s25
      %s28 = sphi 0, %s26
      %s40 = sphi 0, %s42
      %s43 = sphi 0, %s40
      %s44 = sphi 0, %s43
      %s60 = sphi 0, %s44
      %s64 = sphi 0, %s64
      %s66 = sphi 0, %s64
      %s67 = sphi 0, %s66
      %s81 = sphi 0, %s67
      %s85 = sphi 0, %s85
      %s87 = sphi 0, %s85
      %s88 = sphi 0, %s87
      %s102 = sphi 0, %s88
      %s106 = sphi 0, %s106
      %s108 = sphi 0, %s106
      %s109 = sphi 0, %s108
      %s123 = sphi 0, %s109
      %s127 = sphi 0, %s127
      %s129 = sphi 0, %s127
      %s130 = sphi 0, %s129
      %s144 = sphi 0, %s130
      %s148 = sphi 0, %s148
      %s150 = sphi 0, %s148
      %s151 = sphi 0, %s150
      %s165 = sphi 0, %s151
      %s169 = sphi 0, %s169
      %s171 = sphi 0, %s169
      %s172 = sphi 0, %s171
      %s186 = sphi 0, %s172
      %s194 = sphi 0, %s196
      %s197 = sphi 0, %s194
      %s198 = sphi 0, %s197
      %s214 = sphi 0, %s198
    $region4: #{_lambda_.13} parent=1 // loop_header_branch
      %19 = sbr.rel (%p17) target = $region8
    $region5: #{_lambda_.13} parent=1 // loop_body
      %s21 = ssub.s32 %s16, 1
      %s22 = ssub.s32 %s16, 2
      %s29 = sadd.s32 1, %s24
      %p30 = scmp.ge.s32.totalorder %s29, 1
      %s31 = scalar_select %p30, 0, %s29
      %s32 = sadd.s32 1, %s23
      %s33 = scalar_select %p30, %s32, %s23
      %p34 = scmp.ge.s32.totalorder %s33, 2
      %s35 = scalar_select %p34, 0, %s33
      %s36 = ssub.s32 %s23, %s35
      %s37 = ssub.s32 %s24, %s31
      %s38 = sor.u32 %s36, %s37
      %p39 = scmp.eq.s32.totalorder %s38, 0
      %s41 = sadd.s32 %s40, 1
      %s42 = scalar_select %p39, %s40, %s41
      %p45 = pneg %p39
      %p46 = scmp.eq.s32.totalorder %s16, 1
      %p47 = por %p45, %p46
      %p48 = scmp.ne.s32.totalorder %s40, %s43
      %p49 = scmp.eq.s32.totalorder %s16, 0
      %p50 = por %p48, %p49
      %p51 = scmp.ne.s32.totalorder %s40, %s43
      %p52 = scmp.eq.s32.totalorder %s21, 1
      %p53 = por %p51, %p52
      %p54 = scmp.ne.s32.totalorder %s43, %s44
      %p55 = scmp.eq.s32.totalorder %s21, 0
      %p56 = por %p54, %p55
      %p57 = scmp.ne.s32.totalorder %s43, %s44
      %p58 = scmp.eq.s32.totalorder %s22, 1
      %p59 = por %p57, %p58
      %p61 = scmp.ne.s32.totalorder %s44, %s60
      %p62 = scmp.eq.s32.totalorder %s22, 0
      %p63 = por %p61, %p62
      %s65 = sadd.s32 %s64, 1
      %p68 = scmp.eq.s32.totalorder %s16, 1
      %p69 = scmp.ne.s32.totalorder %s64, %s66
      %p70 = scmp.eq.s32.totalorder %s16, 0
      %p71 = por %p69, %p70
      %p72 = scmp.ne.s32.totalorder %s64, %s66
      %p73 = scmp.eq.s32.totalorder %s21, 1
      %p74 = por %p72, %p73
      %p75 = scmp.ne.s32.totalorder %s66, %s67
      %p76 = scmp.eq.s32.totalorder %s21, 0
      %p77 = por %p75, %p76
      %p78 = scmp.ne.s32.totalorder %s66, %s67
      %p79 = scmp.eq.s32.totalorder %s22, 1
      %p80 = por %p78, %p79
      %p82 = scmp.ne.s32.totalorder %s67, %s81
      %p83 = scmp.eq.s32.totalorder %s22, 0
      %p84 = por %p82, %p83
      %s86 = sadd.s32 %s85, 1
      %p89 = scmp.eq.s32.totalorder %s16, 1
      %p90 = scmp.ne.s32.totalorder %s85, %s87
      %p91 = scmp.eq.s32.totalorder %s16, 0
      %p92 = por %p90, %p91
      %p93 = scmp.ne.s32.totalorder %s85, %s87
      %p94 = scmp.eq.s32.totalorder %s21, 1
      %p95 = por %p93, %p94
      %p96 = scmp.ne.s32.totalorder %s87, %s88
      %p97 = scmp.eq.s32.totalorder %s21, 0
      %p98 = por %p96, %p97
      %p99 = scmp.ne.s32.totalorder %s87, %s88
      %p100 = scmp.eq.s32.totalorder %s22, 1
      %p101 = por %p99, %p100
      %p103 = scmp.ne.s32.totalorder %s88, %s102
      %p104 = scmp.eq.s32.totalorder %s22, 0
      %p105 = por %p103, %p104
      %s107 = sadd.s32 %s106, 1
      %p110 = scmp.eq.s32.totalorder %s16, 1
      %p111 = scmp.ne.s32.totalorder %s106, %s108
      %p112 = scmp.eq.s32.totalorder %s16, 0
      %p113 = por %p111, %p112
      %p114 = scmp.ne.s32.totalorder %s106, %s108
      %p115 = scmp.eq.s32.totalorder %s21, 1
      %p116 = por %p114, %p115
      %p117 = scmp.ne.s32.totalorder %s108, %s109
      %p118 = scmp.eq.s32.totalorder %s21, 0
      %p119 = por %p117, %p118
      %p120 = scmp.ne.s32.totalorder %s108, %s109
      %p121 = scmp.eq.s32.totalorder %s22, 1
      %p122 = por %p120, %p121
      %p124 = scmp.ne.s32.totalorder %s109, %s123
      %p125 = scmp.eq.s32.totalorder %s22, 0
      %p126 = por %p124, %p125
      %s128 = sadd.s32 %s127, 1
      %p131 = scmp.eq.s32.totalorder %s16, 1
      %p132 = scmp.ne.s32.totalorder %s127, %s129
      %p133 = scmp.eq.s32.totalorder %s16, 0
      %p134 = por %p132, %p133
      %p135 = scmp.ne.s32.totalorder %s127, %s129
      %p136 = scmp.eq.s32.totalorder %s21, 1
      %p137 = por %p135, %p136
      %p138 = scmp.ne.s32.totalorder %s129, %s130
      %p139 = scmp.eq.s32.totalorder %s21, 0
      %p140 = por %p138, %p139
      %p141 = scmp.ne.s32.totalorder %s129, %s130
      %p142 = scmp.eq.s32.totalorder %s22, 1
      %p143 = por %p141, %p142
      %p145 = scmp.ne.s32.totalorder %s130, %s144
      %p146 = scmp.eq.s32.totalorder %s22, 0
      %p147 = por %p145, %p146
      %s149 = sadd.s32 %s148, 1
      %p152 = scmp.eq.s32.totalorder %s16, 1
      %p153 = scmp.ne.s32.totalorder %s148, %s150
      %p154 = scmp.eq.s32.totalorder %s16, 0
      %p155 = por %p153, %p154
      %p156 = scmp.ne.s32.totalorder %s148, %s150
      %p157 = scmp.eq.s32.totalorder %s21, 1
      %p158 = por %p156, %p157
      %p159 = scmp.ne.s32.totalorder %s150, %s151
      %p160 = scmp.eq.s32.totalorder %s21, 0
      %p161 = por %p159, %p160
      %p162 = scmp.ne.s32.totalorder %s150, %s151
      %p163 = scmp.eq.s32.totalorder %s22, 1
      %p164 = por %p162, %p163
      %p166 = scmp.ne.s32.totalorder %s151, %s165
      %p167 = scmp.eq.s32.totalorder %s22, 0
      %p168 = por %p166, %p167
      %s170 = sadd.s32 %s169, 1
      %p173 = scmp.eq.s32.totalorder %s16, 1
      %p174 = scmp.ne.s32.totalorder %s169, %s171
      %p175 = scmp.eq.s32.totalorder %s16, 0
      %p176 = por %p174, %p175
      %p177 = scmp.ne.s32.totalorder %s169, %s171
      %p178 = scmp.eq.s32.totalorder %s21, 1
      %p179 = por %p177, %p178
      %p180 = scmp.ne.s32.totalorder %s171, %s172
      %p181 = scmp.eq.s32.totalorder %s21, 0
      %p182 = por %p180, %p181
      %p183 = scmp.ne.s32.totalorder %s171, %s172
      %p184 = scmp.eq.s32.totalorder %s22, 1
      %p185 = por %p183, %p184
      %p187 = scmp.ne.s32.totalorder %s172, %s186
      %p188 = scmp.eq.s32.totalorder %s22, 0
      %p189 = por %p187, %p188
      %s190 = ssub.s32 %s23, %s35
      %s191 = ssub.s32 %s24, %s31
      %s192 = sor.u32 %s190, %s191
      %p193 = scmp.eq.s32.totalorder %s192, 0
      %s195 = sadd.s32 %s194, 1
      %s196 = scalar_select %p193, %s194, %s195
      %p199 = pneg %p193
      %p200 = scmp.eq.s32.totalorder %s16, 1
      %p201 = por %p199, %p200
      %p202 = scmp.ne.s32.totalorder %s194, %s197
      %p203 = scmp.eq.s32.totalorder %s16, 0
      %p204 = por %p202, %p203
      %p205 = scmp.ne.s32.totalorder %s194, %s197
      %p206 = scmp.eq.s32.totalorder %s21, 1
      %p207 = por %p205, %p206
      %p208 = scmp.ne.s32.totalorder %s197, %s198
      %p209 = scmp.eq.s32.totalorder %s21, 0
      %p210 = por %p208, %p209
      %p211 = scmp.ne.s32.totalorder %s197, %s198
      %p212 = scmp.eq.s32.totalorder %s22, 1
      %p213 = por %p211, %p212
      %p215 = scmp.ne.s32.totalorder %s198, %s214
      %p216 = scmp.eq.s32.totalorder %s22, 0
      %p217 = por %p215, %p216
      %p218 = scmp.le.s32.totalorder 1, %s16
      %p219 = scmp.lt.s32.totalorder %s16, 3
      %p220 = pnand %p218, %p219
      %p221 = pneg %p220
      // Predicated region
      $region9: #{_lambda_.13} parent=5 // pred_check
        _
      $region10: #{_lambda_.13} parent=5 // pred_check_branch
        %223 = sbr.rel (%p220) target = $region12
      $region11: #{_lambda_.13} parent=5 // pred_region
        %s224 = ssub.s32 %s16, 1
        // Predicated region
        $region13: #{_lambda_.13} parent=11 // pred_check
          %p225 = pneg %p77
        $region14: #{_lambda_.13} parent=11 // pred_check_branch
          %227 = sbr.rel (%p225) target = $region16
        $region15: #{_lambda_.13} parent=11 // pred_region
          %229 = vsyncadd [#allocation3], 0
          %s230 = sshll.u32 %s1, 4
          %s231 = int_to_ptr.hbm [resolvable:$true] %s230
          %s232 = sshll.u32 [#allocation2], 4
          %s233 = int_to_ptr.vmem [resolvable:$true] %s232
          %238 = dma.hbm_to_vmem [thread:$0]  %s231, 256, %s233, [#allocation3], 64, 64, 4
        $region16: #{_lambda_.13} parent=11 // pred_fallthru
          _
        // Predicated region
        $region17: #{_lambda_.13} parent=11 // pred_check
          %p239 = pneg %p98
        $region18: #{_lambda_.13} parent=11 // pred_check_branch
          %241 = sbr.rel (%p239) target = $region20
        $region19: #{_lambda_.13} parent=11 // pred_region
          %243 = vsyncadd [#allocation5], 0
          %s244 = sshll.u32 %s2, 4
          %s245 = int_to_ptr.hbm [resolvable:$true] %s244
          %s246 = sshll.u32 [#allocation4], 4
          %s247 = int_to_ptr.vmem [resolvable:$true] %s246
          %252 = dma.hbm_to_vmem [thread:$0]  %s245, 512, %s247, [#allocation5], 128, 128, 8
        $region20: #{_lambda_.13} parent=11 // pred_fallthru
          _
        // Predicated region
        $region21: #{_lambda_.13} parent=11 // pred_check
          %p253 = pneg %p119
        $region22: #{_lambda_.13} parent=11 // pred_check_branch
          %255 = sbr.rel (%p253) target = $region24
        $region23: #{_lambda_.13} parent=11 // pred_region
          _
        $region24: #{_lambda_.13} parent=11 // pred_fallthru
          _
        // Predicated region
        $region25: #{_lambda_.13} parent=11 // pred_check
          %p256 = pneg %p140
        $region26: #{_lambda_.13} parent=11 // pred_check_branch
          %258 = sbr.rel (%p256) target = $region28
        $region27: #{_lambda_.13} parent=11 // pred_region
          %260 = vsyncadd [#allocation5], 0
          %s261 = sshll.u32 %s4, 4
          %s262 = int_to_ptr.hbm [resolvable:$true] %s261
          %s263 = sshll.u32 [#allocation6], 4
          %s264 = int_to_ptr.vmem [resolvable:$true] %s263
          %269 = dma.hbm_to_vmem [thread:$0]  %s262, 512, %s264, [#allocation5], 128, 128, 8
        $region28: #{_lambda_.13} parent=11 // pred_fallthru
          _
        // Predicated region
        $region29: #{_lambda_.13} parent=11 // pred_check
          %p270 = pneg %p161
        $region30: #{_lambda_.13} parent=11 // pred_check_branch
          %272 = sbr.rel (%p270) target = $region32
        $region31: #{_lambda_.13} parent=11 // pred_region
          %274 = vsyncadd [#allocation8], 0
          %s275 = sshll.u32 %s5, 4
          %s276 = int_to_ptr.hbm [resolvable:$true] %s275
          %s277 = sshll.u32 [#allocation7], 4
          %s278 = int_to_ptr.vmem [resolvable:$true] %s277
          %283 = dma.hbm_to_vmem [thread:$0]  %s276, 512, %s278, [#allocation8], 128, 128, 8
        $region32: #{_lambda_.13} parent=11 // pred_fallthru
          _
        // Predicated region
        $region33: #{_lambda_.13} parent=11 // pred_check
          %p284 = pneg %p182
        $region34: #{_lambda_.13} parent=11 // pred_check_branch
          %286 = sbr.rel (%p284) target = $region36
        $region35: #{_lambda_.13} parent=11 // pred_region
          %288 = vsyncadd [#allocation8], 0
          %s289 = sshll.u32 %s6, 4
          %s290 = int_to_ptr.hbm [resolvable:$true] %s289
          %s291 = sshll.u32 [#allocation9], 4
          %s292 = int_to_ptr.vmem [resolvable:$true] %s291
          %297 = dma.hbm_to_vmem [thread:$0]  %s290, 512, %s292, [#allocation8], 128, 128, 8
        $region36: #{_lambda_.13} parent=11 // pred_fallthru
          _
      $region12: #{_lambda_.13} parent=5 // pred_fallthru
        _
      %p298 = scmp.lt.s32.totalorder %s16, 2
      // Predicated region
      $region37: #{_lambda_.13} parent=5 // pred_check
        %p299 = pneg %p298
      $region38: #{_lambda_.13} parent=5 // pred_check_branch
        %301 = sbr.rel (%p299) target = $region40
      $region39: #{_lambda_.13} parent=5 // pred_region
        // Predicated region
        $region41: #{_lambda_.13} parent=39 // pred_check
          %p302 = pneg %p50
        $region42: #{_lambda_.13} parent=39 // pred_check_branch
          %304 = sbr.rel (%p302) target = $region44
        $region43: #{_lambda_.13} parent=39 // pred_region
          %p305 = scmp.lt.s32.totalorder %s23, 1
          %s306 = scalar_select %p305, %s23, 1
          %p307 = scmp.lt.s32.totalorder %s24, 0
          %s308 = scalar_select %p307, %s24, 0
          %s309 = smul.addr %s306, 4
          %s310 = sadd.s32 %s308, %s309
          %s311 = smul.addr %s310, 4
          %s312 = scalar_lea.vmem %s0, %s311
        $region44: #{_lambda_.13} parent=39 // pred_fallthru
          _
      $region40: #{_lambda_.13} parent=5 // pred_fallthru
        _
      %p313 = scmp.le.s32.totalorder 1, %s16
      %p314 = scmp.lt.s32.totalorder %s16, 3
      %p315 = pnand %p313, %p314
      %p316 = pneg %p315
      // Predicated region
      $region45: #{_lambda_.13} parent=5 // pred_check
        _
      $region46: #{_lambda_.13} parent=5 // pred_check_branch
        %318 = sbr.rel (%p315) target = $region48
      $region47: #{_lambda_.13} parent=5 // pred_region
        %s319 = ssub.s32 %s16, 1
        // Predicated region
        $region49: #{_lambda_.13} parent=47 // pred_check
          %p320 = pneg %p77
        $region50: #{_lambda_.13} parent=47 // pred_check_branch
          %322 = sbr.rel (%p320) target = $region52
        $region51: #{_lambda_.13} parent=47 // pred_region
          %324 = dma.done [#allocation3], 256
        $region52: #{_lambda_.13} parent=47 // pred_fallthru
          _
        // Predicated region
        $region53: #{_lambda_.13} parent=47 // pred_check
          %p325 = pneg %p98
        $region54: #{_lambda_.13} parent=47 // pred_check_branch
          %327 = sbr.rel (%p325) target = $region56
        $region55: #{_lambda_.13} parent=47 // pred_region
          %329 = dma.done [#allocation5], 512
        $region56: #{_lambda_.13} parent=47 // pred_fallthru
          _
        // Predicated region
        $region57: #{_lambda_.13} parent=47 // pred_check
          %p330 = pneg %p140
        $region58: #{_lambda_.13} parent=47 // pred_check_branch
          %332 = sbr.rel (%p330) target = $region60
        $region59: #{_lambda_.13} parent=47 // pred_region
          %334 = dma.done [#allocation5], 512
        $region60: #{_lambda_.13} parent=47 // pred_fallthru
          _
        // Predicated region
        $region61: #{_lambda_.13} parent=47 // pred_check
          %p335 = pneg %p161
        $region62: #{_lambda_.13} parent=47 // pred_check_branch
          %337 = sbr.rel (%p335) target = $region64
        $region63: #{_lambda_.13} parent=47 // pred_region
          %339 = dma.done [#allocation8], 512
        $region64: #{_lambda_.13} parent=47 // pred_fallthru
          _
        // Predicated region
        $region65: #{_lambda_.13} parent=47 // pred_check
          %p340 = pneg %p182
        $region66: #{_lambda_.13} parent=47 // pred_check_branch
          %342 = sbr.rel (%p340) target = $region68
        $region67: #{_lambda_.13} parent=47 // pred_region
          %344 = dma.done [#allocation8], 512
        $region68: #{_lambda_.13} parent=47 // pred_fallthru
          _
        %p345 = scmp.lt.s32.totalorder %s25, 1
        %s346 = scalar_select %p345, %s25, 1
        %p347 = scmp.lt.s32.totalorder %s26, 0
        %s348 = scalar_select %p347, %s26, 0
        %s349 = smul.addr %s346, 4
        %s350 = sadd.s32 %s348, %s349
        %s351 = smul.addr %s350, 4
        %s352 = scalar_lea.vmem %s0, %s351
        %p353 = pneg %p56
        %p354 = pneg %p53
        %p355 = pneg %p77
        %p356 = pneg %p74
        %p357 = pneg %p98
        %p358 = pneg %p95
        %p359 = pneg %p119
        %p360 = pneg %p116
        %p361 = pneg %p140
        %p362 = pneg %p137
        %p363 = pneg %p161
        %p364 = pneg %p158
        %p365 = pneg %p182
        %p366 = pneg %p179
        %p367 = pneg %p210
        %p368 = pneg %p207
        %p369 = scmp.lt.s32.totalorder %s25, 1
        %s370 = scalar_select %p369, %s25, 1
        %p371 = scmp.lt.s32.totalorder %s26, 0
        %s372 = scalar_select %p371, %s26, 0
        %s373 = smul.addr %s370, 4
        %s374 = sadd.s32 %s372, %s373
        %s375 = smul.addr %s374, 4
        %s376 = scalar_lea.vmem %s7, %s375
        %p377 = scmp.lt.s32.totalorder %s25, 1
        %s378 = scalar_select %p377, %s25, 1
        %p379 = scmp.lt.s32.totalorder %s26, 0
        %s380 = scalar_select %p379, %s26, 0
        %s381 = smul.addr %s378, 4
        %s382 = sadd.s32 %s380, %s381
        %s383 = smul.addr %s382, 4
        %s384 = scalar_lea.vmem %s0, %s383
        %p385 = scmp.lt.s32.totalorder %s25, 1
        %s386 = scalar_select %p385, %s25, 1
        %p387 = scmp.lt.s32.totalorder %s26, 0
        %s388 = scalar_select %p387, %s26, 0
        %s389 = smul.addr %s386, 4
        %s390 = sadd.s32 %s388, %s389
        %s391 = smul.addr %s390, 4
        %s392 = scalar_lea.vmem %s7, %s391
        %v394 = vld [vmem:[%s384] sm:$0xf]
        %v395 = vld [vmem:[%s384 + $0x4] sm:$0xf]
        %v396 = vld [vmem:[%s384 + $0x8] sm:$0xf]
        %v397 = vld [vmem:[%s384 + $0xc] sm:$0xf]
        %v398 = vld [vmem:[#allocation2] sm:$0xf]
        %v399 = vld [vmem:[#allocation2 + $0x4] sm:$0xf]
        %v400 = vld [vmem:[#allocation2 + $0x8] sm:$0xf]
        %v401 = vld [vmem:[#allocation2 + $0xc] sm:$0xf]
        %v402 = vld [vmem:[#allocation4] sm:$0xff]
        %v403 = vld [vmem:[#allocation4 + $0x8] sm:$0xff]
        %v404 = vld [vmem:[#allocation4 + $0x10] sm:$0xff]
        %v405 = vld [vmem:[#allocation4 + $0x18] sm:$0xff]
        %407 = vset.pattern.permute.xlu0 0
        %408 = vperm.xlu0 %407, %v402
        %v409 = vpop.permute.xlu0 %408
        %412 = vset.pattern.permute.xlu0 0
        %413 = vperm.xlu0 %412, %v403
        %v414 = vpop.permute.xlu0 %413
        %417 = vset.pattern.permute.xlu0 0
        %418 = vperm.xlu0 %417, %v404
        %v419 = vpop.permute.xlu0 %418
        %422 = vset.pattern.permute.xlu0 0
        %423 = vperm.xlu0 %422, %v405
        %v424 = vpop.permute.xlu0 %423
        %v430 = vunpack.c.l.b16 %v398
        %v431 = vunpack.c.l.b16 %v399
        %v432 = vunpack.c.l.b16 %v400
        %v433 = vunpack.c.l.b16 %v401
        %v434 = vpack.c.b16 %v431, %v430
        %v435 = vpack.c.b16 %v433, %v432
        %v440 = vunpack.c.l.b16 %v394
        %v441 = vunpack.c.l.b16 %v395
        %v442 = vunpack.c.l.b16 %v396
        %v443 = vunpack.c.l.b16 %v397
        %v444 = vpack.c.b16 %v441, %v440
        %v445 = vpack.c.b16 %v443, %v442
        %vm448 = vcmask 261120
        %v450 = vsel %vm448, %v434, 0
        %v453 = vsel %vm448, %v435, 0
        %455 = vmatpush.bf16.msra.mxu0 0
        %456 = vmatpush.bf16.msra.mxu0 0
        %457 = vmatpush.bf16.msra.mxu0 0
        %458 = vmatpush.bf16.msra.mxu0 0
        %459 = vmatpush.bf16.msra.mxu0 0
        %460 = vmatpush.bf16.msra.mxu0 0
        %461 = vmatpush.bf16.msra.mxu0 %v445
        %462 = vmatpush.bf16.msra.mxu0 %v444
        %463 = vmatmul.bf16.gmra.mxu0 %v450
        %v464 = vpop.f32.mrf.mxu0
        %v465 = vadd.f32 %v409, %v464
        %v466 = vpop.f32.mrf.mxu0
        %v467 = vadd.f32 %v414, %v466
        %468 = vmatmul.bf16.gmra.mxu0 %v453
        %v469 = vpop.f32.mrf.mxu0
        %v470 = vadd.f32 %v419, %v469
        %v471 = vpop.f32.mrf.mxu0
        %v472 = vadd.f32 %v424, %v471
        %473 = vdwg.mxu0
        %v474 = vmax.f32 %v465, 0.0
        %v475 = vmax.f32 %v467, 0.0
        %v476 = vmax.f32 %v470, 0.0
        %v477 = vmax.f32 %v472, 0.0
        %v478 = vpack.c.bf16 %v475, %v474
        %v479 = vpack.c.bf16 %v477, %v476
        %v480 = vld [vmem:[%s3] sm:$0xf]
        %v481 = vld [vmem:[%s3 + $0x4] sm:$0xf]
        %v482 = vld [vmem:[%s3 + $0x8] sm:$0xf]
        %v483 = vld [vmem:[%s3 + $0xc] sm:$0xf]
        %v484 = vld [vmem:[#allocation6] sm:$0xff]
        %v485 = vld [vmem:[#allocation6 + $0x8] sm:$0xff]
        %v486 = vld [vmem:[#allocation6 + $0x10] sm:$0xff]
        %v487 = vld [vmem:[#allocation6 + $0x18] sm:$0xff]
        %489 = vset.pattern.permute.xlu0 0
        %490 = vperm.xlu0 %489, %v484
        %v491 = vpop.permute.xlu0 %490
        %494 = vset.pattern.permute.xlu0 0
        %495 = vperm.xlu0 %494, %v485
        %v496 = vpop.permute.xlu0 %495
        %499 = vset.pattern.permute.xlu0 0
        %500 = vperm.xlu0 %499, %v486
        %v501 = vpop.permute.xlu0 %500
        %504 = vset.pattern.permute.xlu0 0
        %505 = vperm.xlu0 %504, %v487
        %v506 = vpop.permute.xlu0 %505
        %v512 = vunpack.c.l.b16 %v480
        %v513 = vunpack.c.l.b16 %v481
        %v514 = vunpack.c.l.b16 %v482
        %v515 = vunpack.c.l.b16 %v483
        %v516 = vpack.c.b16 %v513, %v512
        %v517 = vpack.c.b16 %v515, %v514
        %v519 = vsel %vm448, %v516, 0
        %v522 = vsel %vm448, %v517, 0
        %524 = vmatpush.bf16.msra.mxu0 0
        %525 = vmatpush.bf16.msra.mxu0 0
        %526 = vmatpush.bf16.msra.mxu0 0
        %527 = vmatpush.bf16.msra.mxu0 0
        %528 = vmatpush.bf16.msra.mxu0 0
        %529 = vmatpush.bf16.msra.mxu0 0
        %530 = vmatpush.bf16.msra.mxu0 %v479
        %531 = vmatpush.bf16.msra.mxu0 %v478
        %532 = vmatmul.bf16.gmra.mxu0 %v519
        %v533 = vpop.f32.mrf.mxu0
        %v534 = vadd.f32 %v491, %v533
        %v535 = vpop.f32.mrf.mxu0
        %v536 = vadd.f32 %v496, %v535
        %537 = vmatmul.bf16.gmra.mxu0 %v522
        %v538 = vpop.f32.mrf.mxu0
        %v539 = vadd.f32 %v501, %v538
        %v540 = vpop.f32.mrf.mxu0
        %v541 = vadd.f32 %v506, %v540
        %542 = vdwg.mxu0
        %v543 = vunpack.c.l.bf16 %v394
        %v544 = vunpack.c.l.bf16 %v395
        %v545 = vunpack.c.l.bf16 %v396
        %v546 = vunpack.c.l.bf16 %v397
        %v547 = vadd.f32 %v534, %v543
        %v548 = vadd.f32 %v536, %v544
        %v549 = vadd.f32 %v539, %v545
        %v550 = vadd.f32 %v541, %v546
        %vm551 = vcmask 130048
        %v552 = vsel %vm551, %v547, 0.0
        %553 = vadd.xlane.f32.xlu0 %v552
        %v554 = vpop.xlane.xlu0 %553
        %v555 = vsel %vm551, %v548, 0.0
        %556 = vadd.xlane.f32.xlu0 %v555
        %v557 = vpop.xlane.xlu0 %556
        %v558 = vsel %vm551, %v549, 0.0
        %559 = vadd.xlane.f32.xlu0 %v558
        %v560 = vpop.xlane.xlu0 %559
        %v561 = vsel %vm551, %v550, 0.0
        %562 = vadd.xlane.f32.xlu0 %v561
        %v563 = vpop.xlane.xlu0 %562
        %v564 = vrcp.pop 16.0
        %v565 = vmul.f32 16.0, %v564
        %v566 = vsub.f32 1.0, %v565
        %v567 = vmul.f32 %v564, %v566
        %v568 = vadd.f32 %v564, %v567
        %vm569 = vweird.f32 %v564
        %v570 = vsel %vm569, %v564, %v568
        %v571 = vmul.f32 %v554, %v570
        %v572 = vmul.f32 %v557, %v570
        %v573 = vmul.f32 %v560, %v570
        %v574 = vmul.f32 %v563, %v570
        %v575 = vsub.f32 %v547, %v571
        %v576 = vsub.f32 %v548, %v572
        %v577 = vsub.f32 %v549, %v573
        %v578 = vsub.f32 %v550, %v574
        %v579 = vmul.f32 %v575, %v575
        %v580 = vmul.f32 %v576, %v576
        %v581 = vmul.f32 %v577, %v577
        %v582 = vmul.f32 %v578, %v578
        %v583 = vsel %vm551, %v579, 0.0
        %584 = vadd.xlane.f32.xlu0 %v583
        %v585 = vpop.xlane.xlu0 %584
        %v586 = vsel %vm551, %v580, 0.0
        %587 = vadd.xlane.f32.xlu0 %v586
        %v588 = vpop.xlane.xlu0 %587
        %v589 = vsel %vm551, %v581, 0.0
        %590 = vadd.xlane.f32.xlu0 %v589
        %v591 = vpop.xlane.xlu0 %590
        %v592 = vsel %vm551, %v582, 0.0
        %593 = vadd.xlane.f32.xlu0 %v592
        %v594 = vpop.xlane.xlu0 %593
        %v595 = vmul.f32 %v585, %v570
        %v596 = vmul.f32 %v588, %v570
        %v597 = vmul.f32 %v591, %v570
        %v598 = vmul.f32 %v594, %v570
        %v599 = vadd.f32 %v595, 1e-05
        %v600 = vadd.f32 %v596, 1e-05
        %v601 = vadd.f32 %v597, 1e-05
        %v602 = vadd.f32 %v598, 1e-05
        %v603 = vrsqrt.pop %v599
        %v604 = vmul.f32 %v603, %v599
        %v605 = vmul.f32 %v604, %v603
        %v606 = vmul.f32 0.5, %v605
        %v607 = vsub.f32 1.5, %v606
        %v608 = vmul.f32 %v603, %v607
        %vm609 = vweird.f32 %v599
        %vm610 = vweird.f32 %v603
        %vm611 = vmor %vm609, %vm610
        %v612 = vsel %vm611, %v603, %v608
        %v613 = vrsqrt.pop %v600
        %v614 = vmul.f32 %v613, %v600
        %v615 = vmul.f32 %v614, %v613
        %v616 = vmul.f32 0.5, %v615
        %v617 = vsub.f32 1.5, %v616
        %v618 = vmul.f32 %v613, %v617
        %vm619 = vweird.f32 %v600
        %vm620 = vweird.f32 %v613
        %vm621 = vmor %vm619, %vm620
        %v622 = vsel %vm621, %v613, %v618
        %v623 = vrsqrt.pop %v601
        %v624 = vmul.f32 %v623, %v601
        %v625 = vmul.f32 %v624, %v623
        %v626 = vmul.f32 0.5, %v625
        %v627 = vsub.f32 1.5, %v626
        %v628 = vmul.f32 %v623, %v627
        %vm629 = vweird.f32 %v601
        %vm630 = vweird.f32 %v623
        %vm631 = vmor %vm629, %vm630
        %v632 = vsel %vm631, %v623, %v628
        %v633 = vrsqrt.pop %v602
        %v634 = vmul.f32 %v633, %v602
        %v635 = vmul.f32 %v634, %v633
        %v636 = vmul.f32 0.5, %v635
        %v637 = vsub.f32 1.5, %v636
        %v638 = vmul.f32 %v633, %v637
        %vm639 = vweird.f32 %v602
        %vm640 = vweird.f32 %v633
        %vm641 = vmor %vm639, %vm640
        %v642 = vsel %vm641, %v633, %v638
        %v643 = vmul.f32 %v575, %v612
        %v644 = vmul.f32 %v576, %v622
        %v645 = vmul.f32 %v577, %v632
        %v646 = vmul.f32 %v578, %v642
        %v647 = vld [vmem:[#allocation7] sm:$0xff]
        %v648 = vld [vmem:[#allocation7 + $0x8] sm:$0xff]
        %v649 = vld [vmem:[#allocation7 + $0x10] sm:$0xff]
        %v650 = vld [vmem:[#allocation7 + $0x18] sm:$0xff]
        %652 = vset.pattern.permute.xlu0 0
        %653 = vperm.xlu0 %652, %v647
        %v654 = vpop.permute.xlu0 %653
        %657 = vset.pattern.permute.xlu0 0
        %658 = vperm.xlu0 %657, %v648
        %v659 = vpop.permute.xlu0 %658
        %662 = vset.pattern.permute.xlu0 0
        %663 = vperm.xlu0 %662, %v649
        %v664 = vpop.permute.xlu0 %663
        %667 = vset.pattern.permute.xlu0 0
        %668 = vperm.xlu0 %667, %v650
        %v669 = vpop.permute.xlu0 %668
        %v671 = vmul.f32 %v643, %v654
        %v672 = vmul.f32 %v644, %v659
        %v673 = vmul.f32 %v645, %v664
        %v674 = vmul.f32 %v646, %v669
        %v675 = vld [vmem:[#allocation9] sm:$0xff]
        %v676 = vld [vmem:[#allocation9 + $0x8] sm:$0xff]
        %v677 = vld [vmem:[#allocation9 + $0x10] sm:$0xff]
        %v678 = vld [vmem:[#allocation9 + $0x18] sm:$0xff]
        %680 = vset.pattern.permute.xlu0 0
        %681 = vperm.xlu0 %680, %v675
        %v682 = vpop.permute.xlu0 %681
        %685 = vset.pattern.permute.xlu0 0
        %686 = vperm.xlu0 %685, %v676
        %v687 = vpop.permute.xlu0 %686
        %690 = vset.pattern.permute.xlu0 0
        %691 = vperm.xlu0 %690, %v677
        %v692 = vpop.permute.xlu0 %691
        %695 = vset.pattern.permute.xlu0 0
        %696 = vperm.xlu0 %695, %v678
        %v697 = vpop.permute.xlu0 %696
        %v699 = vadd.f32 %v671, %v682
        %v700 = vadd.f32 %v672, %v687
        %v701 = vadd.f32 %v673, %v692
        %v702 = vadd.f32 %v674, %v697
        %v703 = vpack.c.bf16 %v699, %v699
        %v704 = vpack.c.bf16 %v700, %v700
        %v705 = vpack.c.bf16 %v701, %v701
        %v706 = vpack.c.bf16 %v702, %v702
        %vm707 = vcmask 125952
        %708 = vst.msk [vmem:[%s392] sm:$0xf] %vm707, %v703
        %709 = vst.msk [vmem:[%s392 + $0x4] sm:$0xf] %vm707, %v704
        %710 = vst.msk [vmem:[%s392 + $0x8] sm:$0xf] %vm707, %v705
        %711 = vst.msk [vmem:[%s392 + $0xc] sm:$0xf] %vm707, %v706
        %p712 = scmp.lt.s32.totalorder %s25, 1
        %s713 = scalar_select %p712, %s25, 1
        %p714 = scmp.lt.s32.totalorder %s26, 0
        %s715 = scalar_select %p714, %s26, 0
        %s716 = smul.addr %s713, 4
        %s717 = sadd.s32 %s715, %s716
        %s718 = smul.addr %s717, 4
        %s719 = scalar_lea.vmem %s7, %s718
        // Predicated region
        $region69: #{_lambda_.13} parent=47 // pred_check
          %p720 = pneg %p207
        $region70: #{_lambda_.13} parent=47 // pred_check_branch
          %722 = sbr.rel (%p720) target = $region72
        $region71: #{_lambda_.13} parent=47 // pred_region
          _
        $region72: #{_lambda_.13} parent=47 // pred_fallthru
          _
      $region48: #{_lambda_.13} parent=5 // pred_fallthru
        _
      %p723 = scmp.le.s32.totalorder 2, %s16
      // Predicated region
      $region73: #{_lambda_.13} parent=5 // pred_check
        %p724 = pneg %p723
      $region74: #{_lambda_.13} parent=5 // pred_check_branch
        %726 = sbr.rel (%p724) target = $region76
      $region75: #{_lambda_.13} parent=5 // pred_region
        %s727 = ssub.s32 %s16, 2
        // Predicated region
        $region77: #{_lambda_.13} parent=75 // pred_check
          %p728 = pneg %p213
        $region78: #{_lambda_.13} parent=75 // pred_check_branch
          %730 = sbr.rel (%p728) target = $region80
        $region79: #{_lambda_.13} parent=75 // pred_region
          %p731 = scmp.lt.s32.totalorder %s27, 1
          %s732 = scalar_select %p731, %s27, 1
          %p733 = scmp.lt.s32.totalorder %s28, 0
          %s734 = scalar_select %p733, %s28, 0
          %s735 = smul.addr %s732, 4
          %s736 = sadd.s32 %s734, %s735
          %s737 = smul.addr %s736, 4
          %s738 = scalar_lea.vmem %s7, %s737
        $region80: #{_lambda_.13} parent=75 // pred_fallthru
          _
      $region76: #{_lambda_.13} parent=5 // pred_fallthru
        _
    $region6: #{_lambda_.13} parent=1 // loop_footer
      %s20 = sadd.s32 1, %s16
    $region7: #{_lambda_.13} parent=1 // loop_footer_branch
      %15 = sbr.rel target = $region3
    $region8: #{_lambda_.13} parent=1 // loop_exit
      _
    %739 = vsyncpa [#allocation3], 1
    %s740 = scalar_lea.sflag [#allocation3], 1
    %741 = vsyncpa %s740, 1
    %742 = vsyncpa [#allocation5], 1
    %743 = vsyncpa [#allocation8], 1

// kernel: _lambda_.16
$region0: #{_lambda_.16}
  #allocation0 [shape = 'u32[]', space=smem, size = 0x4, offset = 0x4, fixed_abs, tag = 'smem constant byte address 0x4 - core index']
  #allocation1 [shape = 'u32[72,128]{1,0:T(1,128)}', space=vmem, size = 0x9000, scoped, tag = 'internal scratch']
  %s0 = inlined_call_operand.vmem [shape: bf16[2,2,32,9], index: 0, kind: input, shape index: {}]
  %s1 = inlined_call_operand.vmem [shape: bf16[3,48,32], index: 1, kind: input, shape index: {}]
  %s2 = inlined_call_operand.vmem [shape: f32[48,1], index: 2, kind: input, shape index: {}]
  %s3 = inlined_call_operand.hbm [shape: f32[48,1], index: 3, kind: input, shape index: {}]
  %s4 = inlined_call_operand.hbm [shape: f32[48,1], index: 4, kind: input, shape index: {}]
  %s5 = inlined_call_operand.vmem [shape: bf16[2,48,8], index: 5, kind: output, shape index: {}]
  %s6 = sld [smem:[#allocation0]]
  $region102: #{_lambda_.16} parent=0
    _
  %s8 = ssub.s32 1, %s6
  %s9 = scalar_select 0, %s8, %s6
  $region1: #{_lambda_.16} parent=0
    #allocation2 [shape = 'u8[32768]{0}', space=vmem, size = 0x8000, scoped, tag = 'input window, operand 0']
    #allocation3 [shape = 'u8[24576]{0}', space=vmem, size = 0x6000, scoped, tag = 'input window, operand 3, single buffered']
    #allocation4 [shape = 's32[2]{0}', space=sflag, size = 0x8, scoped, tag = 'scoped memory for _lambda_.16']
    #allocation5 [shape = 'u8[24576]{0}', space=vmem, size = 0x6000, scoped, tag = 'input window, operand 4, single buffered']
    #allocation6 [shape = 's32[1]{0}', space=sflag, size = 0x4, scoped, tag = 'scoped memory for _lambda_.16']
    %10 = vsyncpa [#allocation4], 0
    %11 = vsyncpa [#allocation6], 0
    loop: start=0, step=1, limit=4
    $region2: #{_lambda_.16} parent=1 // loop_pre_header
      _
    $region3: #{_lambda_.16} parent=1 // loop_header
      %s13 = sphi 0, %s17
      %p14 = scmp.ge.s32.totalorder %s13, 4
      %s20 = sphi 0, %s32
      %s21 = sphi 0, %s28
      %s22 = sphi 0, %s20
      %s23 = sphi 0, %s21
      %s24 = sphi 0, %s22
      %s25 = sphi 0, %s23
      %s35 = sphi 0, %s37
      %s38 = sphi 0, %s35
      %s39 = sphi 0, %s38
      %s55 = sphi 0, %s39
      %s61 = sphi 0, %s63
      %s64 = sphi 0, %s61
      %s65 = sphi 0, %s64
      %s81 = sphi 0, %s65
      %s87 = sphi 0, %s89
      %s90 = sphi 0, %s87
      %s91 = sphi 0, %s90
      %s107 = sphi 0, %s91
      %s113 = sphi 0, %s115
      %s116 = sphi 0, %s113
      %s117 = sphi 0, %s116
      %s133 = sphi 0, %s117
      %s139 = sphi 0, %s141
      %s142 = sphi 0, %s139
      %s143 = sphi 0, %s142
      %s159 = sphi 0, %s143
      %s167 = sphi 0, %s169
      %s170 = sphi 0, %s167
      %s171 = sphi 0, %s170
      %s187 = sphi 0, %s171
    $region4: #{_lambda_.16} parent=1 // loop_header_branch
      %16 = sbr.rel (%p14) target = $region8
    $region5: #{_lambda_.16} parent=1 // loop_body
      %s18 = ssub.s32 %s13, 1
      %s19 = ssub.s32 %s13, 2
      %s26 = sadd.s32 1, %s21
      %p27 = scmp.ge.s32.totalorder %s26, 1
      %s28 = scalar_select %p27, 0, %s26
      %s29 = sadd.s32 1, %s20
      %s30 = scalar_select %p27, %s29, %s20
      %p31 = scmp.ge.s32.totalorder %s30, 2
      %s32 = scalar_select %p31, 0, %s30
      %s33 = ssub.s32 %s20, %s32
      %p34 = scmp.eq.s32.totalorder %s33, 0
      %s36 = sadd.s32 %s35, 1
      %s37 = scalar_select %p34, %s35, %s36
      %p40 = pneg %p34
      %p41 = scmp.eq.s32.totalorder %s13, 1
      %p42 = por %p40, %p41
      %p43 = scmp.ne.s32.totalorder %s35, %s38
      %p44 = scmp.eq.s32.totalorder %s13, 0
      %p45 = por %p43, %p44
      %p46 = scmp.ne.s32.totalorder %s35, %s38
      %p47 = scmp.eq.s32.totalorder %s18, 1
      %p48 = por %p46, %p47
      %p49 = scmp.ne.s32.totalorder %s38, %s39
      %p50 = scmp.eq.s32.totalorder %s18, 0
      %p51 = por %p49, %p50
      %p52 = scmp.ne.s32.totalorder %s38, %s39
      %p53 = scmp.eq.s32.totalorder %s19, 1
      %p54 = por %p52, %p53
      %p56 = scmp.ne.s32.totalorder %s39, %s55
      %p57 = scmp.eq.s32.totalorder %s19, 0
      %p58 = por %p56, %p57
      %s59 = ssub.s32 %s21, %s28
      %p60 = scmp.eq.s32.totalorder %s59, 0
      %s62 = sadd.s32 %s61, 1
      %s63 = scalar_select %p60, %s61, %s62
      %p66 = pneg %p60
      %p67 = scmp.eq.s32.totalorder %s13, 1
      %p68 = por %p66, %p67
      %p69 = scmp.ne.s32.totalorder %s61, %s64
      %p70 = scmp.eq.s32.totalorder %s13, 0
      %p71 = por %p69, %p70
      %p72 = scmp.ne.s32.totalorder %s61, %s64
      %p73 = scmp.eq.s32.totalorder %s18, 1
      %p74 = por %p72, %p73
      %p75 = scmp.ne.s32.totalorder %s64, %s65
      %p76 = scmp.eq.s32.totalorder %s18, 0
      %p77 = por %p75, %p76
      %p78 = scmp.ne.s32.totalorder %s64, %s65
      %p79 = scmp.eq.s32.totalorder %s19, 1
      %p80 = por %p78, %p79
      %p82 = scmp.ne.s32.totalorder %s65, %s81
      %p83 = scmp.eq.s32.totalorder %s19, 0
      %p84 = por %p82, %p83
      %s85 = ssub.s32 %s21, %s28
      %p86 = scmp.eq.s32.totalorder %s85, 0
      %s88 = sadd.s32 %s87, 1
      %s89 = scalar_select %p86, %s87, %s88
      %p92 = pneg %p86
      %p93 = scmp.eq.s32.totalorder %s13, 1
      %p94 = por %p92, %p93
      %p95 = scmp.ne.s32.totalorder %s87, %s90
      %p96 = scmp.eq.s32.totalorder %s13, 0
      %p97 = por %p95, %p96
      %p98 = scmp.ne.s32.totalorder %s87, %s90
      %p99 = scmp.eq.s32.totalorder %s18, 1
      %p100 = por %p98, %p99
      %p101 = scmp.ne.s32.totalorder %s90, %s91
      %p102 = scmp.eq.s32.totalorder %s18, 0
      %p103 = por %p101, %p102
      %p104 = scmp.ne.s32.totalorder %s90, %s91
      %p105 = scmp.eq.s32.totalorder %s19, 1
      %p106 = por %p104, %p105
      %p108 = scmp.ne.s32.totalorder %s91, %s107
      %p109 = scmp.eq.s32.totalorder %s19, 0
      %p110 = por %p108, %p109
      %s111 = ssub.s32 %s21, %s28
      %p112 = scmp.eq.s32.totalorder %s111, 0
      %s114 = sadd.s32 %s113, 1
      %s115 = scalar_select %p112, %s113, %s114
      %p118 = pneg %p112
      %p119 = scmp.eq.s32.totalorder %s13, 1
      %p120 = por %p118, %p119
      %p121 = scmp.ne.s32.totalorder %s113, %s116
      %p122 = scmp.eq.s32.totalorder %s13, 0
      %p123 = por %p121, %p122
      %p124 = scmp.ne.s32.totalorder %s113, %s116
      %p125 = scmp.eq.s32.totalorder %s18, 1
      %p126 = por %p124, %p125
      %p127 = scmp.ne.s32.totalorder %s116, %s117
      %p128 = scmp.eq.s32.totalorder %s18, 0
      %p129 = por %p127, %p128
      %p130 = scmp.ne.s32.totalorder %s116, %s117
      %p131 = scmp.eq.s32.totalorder %s19, 1
      %p132 = por %p130, %p131
      %p134 = scmp.ne.s32.totalorder %s117, %s133
      %p135 = scmp.eq.s32.totalorder %s19, 0
      %p136 = por %p134, %p135
      %s137 = ssub.s32 %s21, %s28
      %p138 = scmp.eq.s32.totalorder %s137, 0
      %s140 = sadd.s32 %s139, 1
      %s141 = scalar_select %p138, %s139, %s140
      %p144 = pneg %p138
      %p145 = scmp.eq.s32.totalorder %s13, 1
      %p146 = por %p144, %p145
      %p147 = scmp.ne.s32.totalorder %s139, %s142
      %p148 = scmp.eq.s32.totalorder %s13, 0
      %p149 = por %p147, %p148
      %p150 = scmp.ne.s32.totalorder %s139, %s142
      %p151 = scmp.eq.s32.totalorder %s18, 1
      %p152 = por %p150, %p151
      %p153 = scmp.ne.s32.totalorder %s142, %s143
      %p154 = scmp.eq.s32.totalorder %s18, 0
      %p155 = por %p153, %p154
      %p156 = scmp.ne.s32.totalorder %s142, %s143
      %p157 = scmp.eq.s32.totalorder %s19, 1
      %p158 = por %p156, %p157
      %p160 = scmp.ne.s32.totalorder %s143, %s159
      %p161 = scmp.eq.s32.totalorder %s19, 0
      %p162 = por %p160, %p161
      %s163 = ssub.s32 %s20, %s32
      %s164 = ssub.s32 %s21, %s28
      %s165 = sor.u32 %s163, %s164
      %p166 = scmp.eq.s32.totalorder %s165, 0
      %s168 = sadd.s32 %s167, 1
      %s169 = scalar_select %p166, %s167, %s168
      %p172 = pneg %p166
      %p173 = scmp.eq.s32.totalorder %s13, 1
      %p174 = por %p172, %p173
      %p175 = scmp.ne.s32.totalorder %s167, %s170
      %p176 = scmp.eq.s32.totalorder %s13, 0
      %p177 = por %p175, %p176
      %p178 = scmp.ne.s32.totalorder %s167, %s170
      %p179 = scmp.eq.s32.totalorder %s18, 1
      %p180 = por %p178, %p179
      %p181 = scmp.ne.s32.totalorder %s170, %s171
      %p182 = scmp.eq.s32.totalorder %s18, 0
      %p183 = por %p181, %p182
      %p184 = scmp.ne.s32.totalorder %s170, %s171
      %p185 = scmp.eq.s32.totalorder %s19, 1
      %p186 = por %p184, %p185
      %p188 = scmp.ne.s32.totalorder %s171, %s187
      %p189 = scmp.eq.s32.totalorder %s19, 0
      %p190 = por %p188, %p189
      %p191 = scmp.le.s32.totalorder 1, %s13
      %p192 = scmp.lt.s32.totalorder %s13, 3
      %p193 = pnand %p191, %p192
      %p194 = pneg %p193
      // Predicated region
      $region9: #{_lambda_.16} parent=5 // pred_check
        _
      $region10: #{_lambda_.16} parent=5 // pred_check_branch
        %196 = sbr.rel (%p193) target = $region12
      $region11: #{_lambda_.16} parent=5 // pred_region
        %s197 = ssub.s32 %s13, 1
        // Predicated region
        $region13: #{_lambda_.16} parent=11 // pred_check
          %p198 = pneg %p77
        $region14: #{_lambda_.16} parent=11 // pred_check_branch
          %200 = sbr.rel (%p198) target = $region16
        $region15: #{_lambda_.16} parent=11 // pred_region
          %s201 = smul.u32 6, %s23
          %p202 = scmp.lt.s32.totalorder %s201, 5
          %s203 = scalar_select %p202, %s201, 5
          %s204 = smul.addr %s203, 4
          %s205 = scalar_lea.vmem %s1, %s204
          %s206 = smul.u32 6, %s23
        $region16: #{_lambda_.16} parent=11 // pred_fallthru
          _
        // Predicated region
        $region17: #{_lambda_.16} parent=11 // pred_check
          %p207 = pneg %p103
        $region18: #{_lambda_.16} parent=11 // pred_check_branch
          %209 = sbr.rel (%p207) target = $region20
        $region19: #{_lambda_.16} parent=11 // pred_region
          %s210 = smul.u32 6, %s23
          %p211 = scmp.lt.s32.totalorder %s210, 5
          %s212 = scalar_select %p211, %s210, 5
          %s213 = smul.addr %s212, 8
          %s214 = scalar_lea.vmem %s2, %s213
          %s215 = smul.u32 6, %s23
        $region20: #{_lambda_.16} parent=11 // pred_fallthru
          _
        // Predicated region
        $region21: #{_lambda_.16} parent=11 // pred_check
          %p216 = pneg %p129
        $region22: #{_lambda_.16} parent=11 // pred_check_branch
          %218 = sbr.rel (%p216) target = $region24
        $region23: #{_lambda_.16} parent=11 // pred_region
          %s219 = smul.u32 6, %s23
          %221 = vsyncadd [#allocation4], 0
          %s222 = smul.addr %s219, 8
          %s223 = scalar_lea.hbm %s3, %s222
          %s224 = sshll.u32 %s223, 4
          %s225 = int_to_ptr.hbm [resolvable:$true] %s224
          %s226 = sshll.u32 [#allocation3], 4
          %s227 = int_to_ptr.vmem [resolvable:$true] %s226
          %232 = dma.hbm_to_vmem [thread:$0]  %s225, 768, %s227, [#allocation4], 128, 128, 8
        $region24: #{_lambda_.16} parent=11 // pred_fallthru
          _
        // Predicated region
        $region25: #{_lambda_.16} parent=11 // pred_check
          %p233 = pneg %p155
        $region26: #{_lambda_.16} parent=11 // pred_check_branch
          %235 = sbr.rel (%p233) target = $region28
        $region27: #{_lambda_.16} parent=11 // pred_region
          %s236 = smul.u32 6, %s23
          %238 = vsyncadd [#allocation6], 0
          %s239 = smul.addr %s236, 8
          %s240 = scalar_lea.hbm %s4, %s239
          %s241 = sshll.u32 %s240, 4
          %s242 = int_to_ptr.hbm [resolvable:$true] %s241
          %s243 = sshll.u32 [#allocation5], 4
          %s244 = int_to_ptr.vmem [resolvable:$true] %s243
          %249 = dma.hbm_to_vmem [thread:$0]  %s242, 768, %s244, [#allocation6], 128, 128, 8
        $region28: #{_lambda_.16} parent=11 // pred_fallthru
          _
      $region12: #{_lambda_.16} parent=5 // pred_fallthru
        _
      %p250 = scmp.lt.s32.totalorder %s13, 2
      // Predicated region
      $region29: #{_lambda_.16} parent=5 // pred_check
        %p251 = pneg %p250
      $region30: #{_lambda_.16} parent=5 // pred_check_branch
        %253 = sbr.rel (%p251) target = $region32
      $region31: #{_lambda_.16} parent=5 // pred_region
        // Predicated region
        $region33: #{_lambda_.16} parent=31 // pred_check
          %p254 = pneg %p45
        $region34: #{_lambda_.16} parent=31 // pred_check_branch
          %256 = sbr.rel (%p254) target = $region36
        $region35: #{_lambda_.16} parent=31 // pred_region
          %s257 = sand.u32 %s35, 1
          %s258 = sand.u32 %s35, 1
          %s259 = smul.addr %s258, 32
          %s260 = scalar_lea.vmem [#allocation2], %s259
          %s261 = smul.addr %s20, 4
          %s262 = smul.addr %s261, 4
          %s263 = scalar_lea.vmem %s0, %s262
          // Predicated region
          $region37: #{_lambda_.16} parent=35 // pred_check
            _
          $region38: #{_lambda_.16} parent=35 // pred_check_branch
            %265 = sbr.rel (0) target = $region40
          $region39: #{_lambda_.16} parent=35 // pred_region
            // Predicated region
            $region41: #{_lambda_.16} parent=39 // pred_check
              _
            $region42: #{_lambda_.16} parent=39 // pred_check_branch
              %267 = sbr.rel target = $region44
            $region43: #{_lambda_.16} parent=39 // pred_region
              // Predicated region
              $region56: #{_lambda_.16} parent=43 // pred_check
                _
              $region57: #{_lambda_.16} parent=43 // pred_check_branch
                %297 = sbr.rel (0) target = $region59
              $region58: #{_lambda_.16} parent=43 // pred_region
                loop: start=0, step=1, limit=1
                $region60: #{_lambda_.16} parent=58 // loop_pre_header
                  _
                $region61: #{_lambda_.16} parent=58 // loop_header
                  %s299 = sphi 0, %s303
                  %p300 = scmp.ge.s32.totalorder %s299, 1
                  %s304 = sphi %s263, %s263
                  %s305 = sphi %s260, %s260
                $region62: #{_lambda_.16} parent=58 // loop_header_branch
                  %302 = sbr.rel (%p300) target = $region66
                $region63: #{_lambda_.16} parent=58 // loop_body
                  _
                $region64: #{_lambda_.16} parent=58 // loop_footer
                  %s303 = sadd.s32 1, %s299
                $region65: #{_lambda_.16} parent=58 // loop_footer_branch
                  %298 = sbr.rel target = $region61
                $region66: #{_lambda_.16} parent=58 // loop_exit
                  _
                %s307 = ssub.s32 16, 1
                loop: start=0, step=1, limit=1
                $region67: #{_lambda_.16} parent=58 // loop_pre_header
                  _
                $region68: #{_lambda_.16} parent=58 // loop_header
                  %s309 = sphi 0, %s313
                  %p310 = scmp.ge.s32.totalorder %s309, 1
                  %s314 = sphi %s263, %s263
                  %s315 = sphi %s260, %s260
                $region69: #{_lambda_.16} parent=58 // loop_header_branch
                  %312 = sbr.rel (%p310) target = $region73
                $region70: #{_lambda_.16} parent=58 // loop_body
                  %v316 = vld [vmem:[%s314] sm:%s307]
                  %317 = vst [vmem:[%s315] sm:%s307] %v316
                  %v318 = vld [vmem:[%s314 + $0x4] sm:%s307]
                  %319 = vst [vmem:[%s315 + $0x4] sm:%s307] %v318
                  %v320 = vld [vmem:[%s314 + $0x8] sm:%s307]
                  %321 = vst [vmem:[%s315 + $0x8] sm:%s307] %v320
                  %v322 = vld [vmem:[%s314 + $0xc] sm:%s307]
                  %323 = vst [vmem:[%s315 + $0xc] sm:%s307] %v322
                  %v324 = vld [vmem:[%s314 + $0x20] sm:%s307]
                  %325 = vst [vmem:[%s315 + $0x10] sm:%s307] %v324
                  %v326 = vld [vmem:[%s314 + $0x24] sm:%s307]
                  %327 = vst [vmem:[%s315 + $0x14] sm:%s307] %v326
                  %v328 = vld [vmem:[%s314 + $0x28] sm:%s307]
                  %329 = vst [vmem:[%s315 + $0x18] sm:%s307] %v328
                  %v330 = vld [vmem:[%s314 + $0x2c] sm:%s307]
                  %331 = vst [vmem:[%s315 + $0x1c] sm:%s307] %v330
                $region71: #{_lambda_.16} parent=58 // loop_footer
                  %s313 = sadd.s32 1, %s309
                $region72: #{_lambda_.16} parent=58 // loop_footer_branch
                  %308 = sbr.rel target = $region68
                $region73: #{_lambda_.16} parent=58 // loop_exit
                  _
              $region59: #{_lambda_.16} parent=43 // pred_fallthru
                _
            $region44: #{_lambda_.16} parent=39 // pred_fallthru
              _
            // Predicated region
            $region45: #{_lambda_.16} parent=39 // pred_check
              _
            $region46: #{_lambda_.16} parent=39 // pred_check_branch
              %269 = sbr.rel (0) target = $region48
            $region47: #{_lambda_.16} parent=39 // pred_region
              %s271 = ssub.s32 16, 1
              loop: start=0, step=1, limit=1
              $region49: #{_lambda_.16} parent=47 // loop_pre_header
                _
              $region50: #{_lambda_.16} parent=47 // loop_header
                %s273 = sphi 0, %s277
                %p274 = scmp.ge.s32.totalorder %s273, 1
                %s278 = sphi %s263, %s263
                %s279 = sphi %s260, %s260
              $region51: #{_lambda_.16} parent=47 // loop_header_branch
                %276 = sbr.rel (%p274) target = $region55
              $region52: #{_lambda_.16} parent=47 // loop_body
                %v280 = vld [vmem:[%s278] sm:%s271]
                %281 = vst [vmem:[%s279] sm:%s271] %v280
                %v282 = vld [vmem:[%s278 + $0x4] sm:%s271]
                %283 = vst [vmem:[%s279 + $0x4] sm:%s271] %v282
                %v284 = vld [vmem:[%s278 + $0x8] sm:%s271]
                %285 = vst [vmem:[%s279 + $0x8] sm:%s271] %v284
                %v286 = vld [vmem:[%s278 + $0xc] sm:%s271]
                %287 = vst [vmem:[%s279 + $0xc] sm:%s271] %v286
                %v288 = vld [vmem:[%s278 + $0x20] sm:%s271]
                %289 = vst [vmem:[%s279 + $0x10] sm:%s271] %v288
                %v290 = vld [vmem:[%s278 + $0x24] sm:%s271]
                %291 = vst [vmem:[%s279 + $0x14] sm:%s271] %v290
                %v292 = vld [vmem:[%s278 + $0x28] sm:%s271]
                %293 = vst [vmem:[%s279 + $0x18] sm:%s271] %v292
                %v294 = vld [vmem:[%s278 + $0x2c] sm:%s271]
                %295 = vst [vmem:[%s279 + $0x1c] sm:%s271] %v294
              $region53: #{_lambda_.16} parent=47 // loop_footer
                %s277 = sadd.s32 1, %s273
              $region54: #{_lambda_.16} parent=47 // loop_footer_branch
                %272 = sbr.rel target = $region50
              $region55: #{_lambda_.16} parent=47 // loop_exit
                _
            $region48: #{_lambda_.16} parent=39 // pred_fallthru
              _
          $region40: #{_lambda_.16} parent=35 // pred_fallthru
            _
          %332 = vnop
        $region36: #{_lambda_.16} parent=31 // pred_fallthru
          _
      $region32: #{_lambda_.16} parent=5 // pred_fallthru
        _
      %p333 = scmp.le.s32.totalorder 1, %s13
      %p334 = scmp.lt.s32.totalorder %s13, 3
      %p335 = pnand %p333, %p334
      %p336 = pneg %p335
      // Predicated region
      $region74: #{_lambda_.16} parent=5 // pred_check
        _
      $region75: #{_lambda_.16} parent=5 // pred_check_branch
        %338 = sbr.rel (%p335) target = $region77
      $region76: #{_lambda_.16} parent=5 // pred_region
        %s339 = ssub.s32 %s13, 1
        %s340 = sand.u32 %s38, 1
        %s341 = sand.u32 %s38, 1
        %s342 = smul.addr %s341, 32
        %s343 = scalar_lea.vmem [#allocation2], %s342
        // Predicated region
        $region78: #{_lambda_.16} parent=76 // pred_check
          %p344 = pneg %p51
        $region79: #{_lambda_.16} parent=76 // pred_check_branch
          %346 = sbr.rel (%p344) target = $region81
        $region80: #{_lambda_.16} parent=76 // pred_region
          _
        $region81: #{_lambda_.16} parent=76 // pred_fallthru
          _
        // Predicated region
        $region82: #{_lambda_.16} parent=76 // pred_check
          %p347 = pneg %p129
        $region83: #{_lambda_.16} parent=76 // pred_check_branch
          %349 = sbr.rel (%p347) target = $region85
        $region84: #{_lambda_.16} parent=76 // pred_region
          %351 = dma.done [#allocation4], 768
        $region85: #{_lambda_.16} parent=76 // pred_fallthru
          _
        // Predicated region
        $region86: #{_lambda_.16} parent=76 // pred_check
          %p352 = pneg %p155
        $region87: #{_lambda_.16} parent=76 // pred_check_branch
          %354 = sbr.rel (%p352) target = $region89
        $region88: #{_lambda_.16} parent=76 // pred_region
          %356 = dma.done [#allocation6], 768
        $region89: #{_lambda_.16} parent=76 // pred_fallthru
          _
        %s357 = sand.u32 %s38, 1
        %s358 = sand.u32 %s38, 1
        %s359 = smul.addr %s358, 32
        %s360 = scalar_lea.vmem [#allocation2], %s359
        %p361 = pneg %p51
        %p362 = pneg %p48
        %s363 = smul.u32 6, %s23
        %p364 = scmp.lt.s32.totalorder %s363, 5
        %s365 = scalar_select %p364, %s363, 5
        %s366 = smul.addr %s365, 4
        %s367 = scalar_lea.vmem %s1, %s366
        %p368 = pneg %p77
        %p369 = pneg %p74
        %s370 = smul.u32 6, %s23
        %p371 = scmp.lt.s32.totalorder %s370, 5
        %s372 = scalar_select %p371, %s370, 5
        %s373 = smul.addr %s372, 8
        %s374 = scalar_lea.vmem %s2, %s373
        %p375 = pneg %p103
        %p376 = pneg %p100
        %p377 = pneg %p129
        %p378 = pneg %p126
        %p379 = pneg %p155
        %p380 = pneg %p152
        %p381 = pneg %p183
        %p382 = pneg %p180
        %s383 = smul.u32 6, %s23
        %p384 = scmp.lt.s32.totalorder %s22, 1
        %s385 = scalar_select %p384, %s22, 1
        %p386 = scmp.lt.s32.totalorder %s383, 5
        %s387 = scalar_select %p386, %s383, 5
        %s388 = smul.addr %s385, 6
        %s389 = sadd.s32 %s387, %s388
        %s390 = smul.addr %s389, 4
        %s391 = scalar_lea.vmem %s5, %s390
        %s392 = smul.u32 6, %s23
        %p393 = scmp.lt.s32.totalorder %s392, 5
        %s394 = scalar_select %p393, %s392, 5
        %s395 = smul.addr %s394, 4
        %s396 = scalar_lea.vmem %s1, %s395
        %s397 = smul.u32 6, %s23
        %s398 = smul.u32 6, %s23
        %p399 = scmp.lt.s32.totalorder %s398, 5
        %s400 = scalar_select %p399, %s398, 5
        %s401 = smul.addr %s400, 8
        %s402 = scalar_lea.vmem %s2, %s401
        %s403 = smul.u32 6, %s23
        %s404 = smul.u32 6, %s23
        %s405 = smul.u32 6, %s23
        %s406 = smul.u32 6, %s23
        %p407 = scmp.lt.s32.totalorder %s22, 1
        %s408 = scalar_select %p407, %s22, 1
        %p409 = scmp.lt.s32.totalorder %s406, 5
        %s410 = scalar_select %p409, %s406, 5
        %s411 = smul.addr %s408, 6
        %s412 = sadd.s32 %s410, %s411
        %s413 = smul.addr %s412, 4
        %s414 = scalar_lea.vmem %s5, %s413
        %s415 = smul.u32 6, %s23
        %v417 = vld [vmem:[%s396] sm:$0xf]
        %v418 = vld [vmem:[%s396 + $0x4] sm:$0xf]
        %v419 = vld [vmem:[%s396 + $0x8] sm:$0xf]
        %v420 = vld [vmem:[%s396 + $0xc] sm:$0xf]
        %v421 = vld [vmem:[%s396 + $0x10] sm:$0xf]
        %v422 = vld [vmem:[%s396 + $0x14] sm:$0xf]
        %v423 = vld [vmem:[%s343] sm:$0xf]
        %v424 = vld [vmem:[%s343 + $0x4] sm:$0xf]
        %v425 = vld [vmem:[%s343 + $0x8] sm:$0xf]
        %v426 = vld [vmem:[%s343 + $0xc] sm:$0xf]
        %s427 = scalar_lea.vmem %s396, 24
        %v428 = vld [vmem:[%s427] sm:$0xf]
        %v429 = vld [vmem:[%s427 + $0x4] sm:$0xf]
        %v430 = vld [vmem:[%s427 + $0x8] sm:$0xf]
        %v431 = vld [vmem:[%s427 + $0xc] sm:$0xf]
        %v432 = vld [vmem:[%s427 + $0x10] sm:$0xf]
        %v433 = vld [vmem:[%s427 + $0x14] sm:$0xf]
        %s434 = scalar_lea.vmem %s343, 16 [#allocation2]
        %v435 = vld [vmem:[%s434] sm:$0xf]
        %v436 = vld [vmem:[%s434 + $0x4] sm:$0xf]
        %v437 = vld [vmem:[%s434 + $0x8] sm:$0xf]
        %v438 = vld [vmem:[%s434 + $0xc] sm:$0xf]
        %v445 = vunpack.c.l.b16 %v428
        %v446 = vunpack.c.l.b16 %v429
        %v447 = vunpack.c.l.b16 %v430
        %v448 = vunpack.c.l.b16 %v431
        %v449 = vunpack.c.l.b16 %v432
        %v450 = vunpack.c.l.b16 %v433
        %v451 = vpack.c.b16 %v446, %v445
        %v452 = vpack.c.b16 %v448, %v447
        %v453 = vpack.c.b16 %v450, %v449
        %v458 = vunpack.c.l.b16 %v435
        %v459 = vunpack.c.l.b16 %v436
        %v460 = vunpack.c.l.b16 %v437
        %v461 = vunpack.c.l.b16 %v438
        %v462 = vpack.c.b16 %v459, %v458
        %v463 = vpack.c.b16 %v461, %v460
        %vm466 = vcmask 261120
        %v468 = vsel %vm466, %v451, 0
        %v471 = vsel %vm466, %v452, 0
        %v474 = vsel %vm466, %v453, 0
        %476 = vmatpush.bf16.msra.mxu0 0
        %477 = vmatpush.bf16.msra.mxu0 0
        %478 = vmatpush.bf16.msra.mxu0 0
        %479 = vmatpush.bf16.msra.mxu0 0
        %480 = vmatpush.bf16.msra.mxu0 0
        %481 = vmatpush.bf16.msra.mxu0 0
        %482 = vmatpush.bf16.msra.mxu0 %v463
        %483 = vmatpush.bf16.msra.mxu0 %v462
        %484 = vmatmul.bf16.gmra.mxu0 %v468
        %v485 = vpop.f32.mrf.mxu0
        %v486 = vadd.f32 0.0, %v485
        %v487 = vpop.f32.mrf.mxu0
        %v488 = vadd.f32 0.0, %v487
        %489 = vmatmul.bf16.gmra.mxu0 %v471
        %v490 = vpop.f32.mrf.mxu0
        %v491 = vadd.f32 0.0, %v490
        %v492 = vpop.f32.mrf.mxu0
        %v493 = vadd.f32 0.0, %v492
        %494 = vmatmul.bf16.gmra.mxu0 %v474
        %v495 = vpop.f32.mrf.mxu0
        %v496 = vadd.f32 0.0, %v495
        %v497 = vpop.f32.mrf.mxu0
        %v498 = vadd.f32 0.0, %v497
        %499 = vdwg.mxu0
        %v506 = vunpack.c.l.b16 %v417
        %v507 = vunpack.c.l.b16 %v418
        %v508 = vunpack.c.l.b16 %v419
        %v509 = vunpack.c.l.b16 %v420
        %v510 = vunpack.c.l.b16 %v421
        %v511 = vunpack.c.l.b16 %v422
        %v512 = vpack.c.b16 %v507, %v506
        %v513 = vpack.c.b16 %v509, %v508
        %v514 = vpack.c.b16 %v511, %v510
        %v519 = vunpack.c.l.b16 %v423
        %v520 = vunpack.c.l.b16 %v424
        %v521 = vunpack.c.l.b16 %v425
        %v522 = vunpack.c.l.b16 %v426
        %v523 = vpack.c.b16 %v520, %v519
        %v524 = vpack.c.b16 %v522, %v521
        %v528 = vsel %vm466, %v512, 0
        %v531 = vsel %vm466, %v513, 0
        %v534 = vsel %vm466, %v514, 0
        %536 = vmatpush.bf16.msra.mxu0 0
        %537 = vmatpush.bf16.msra.mxu0 0
        %538 = vmatpush.bf16.msra.mxu0 0
        %539 = vmatpush.bf16.msra.mxu0 0
        %540 = vmatpush.bf16.msra.mxu0 0
        %541 = vmatpush.bf16.msra.mxu0 0
        %542 = vmatpush.bf16.msra.mxu0 %v524
        %543 = vmatpush.bf16.msra.mxu0 %v523
        %544 = vmatmul.bf16.gmra.mxu0 %v528
        %v545 = vpop.f32.mrf.mxu0
        %v546 = vadd.f32 %v486, %v545
        %v547 = vpop.f32.mrf.mxu0
        %v548 = vadd.f32 %v488, %v547
        %549 = vmatmul.bf16.gmra.mxu0 %v531
        %v550 = vpop.f32.mrf.mxu0
        %v551 = vadd.f32 %v491, %v550
        %v552 = vpop.f32.mrf.mxu0
        %v553 = vadd.f32 %v493, %v552
        %554 = vmatmul.bf16.gmra.mxu0 %v534
        %v555 = vpop.f32.mrf.mxu0
        %v556 = vadd.f32 %v496, %v555
        %v557 = vpop.f32.mrf.mxu0
        %v558 = vadd.f32 %v498, %v557
        %559 = vdwg.mxu0
        %s560 = scalar_lea.vmem %s396, 48
        %v561 = vld [vmem:[%s560] sm:$0xf]
        %v562 = vld [vmem:[%s560 + $0x4] sm:$0xf]
        %v563 = vld [vmem:[%s560 + $0x8] sm:$0xf]
        %v564 = vld [vmem:[%s560 + $0xc] sm:$0xf]
        %v565 = vld [vmem:[%s560 + $0x10] sm:$0xf]
        %v566 = vld [vmem:[%s560 + $0x14] sm:$0xf]
        %v573 = vunpack.c.l.b16 %v561
        %v574 = vunpack.c.l.b16 %v562
        %v575 = vunpack.c.l.b16 %v563
        %v576 = vunpack.c.l.b16 %v564
        %v577 = vunpack.c.l.b16 %v565
        %v578 = vunpack.c.l.b16 %v566
        %v579 = vpack.c.b16 %v574, %v573
        %v580 = vpack.c.b16 %v576, %v575
        %v581 = vpack.c.b16 %v578, %v577
        %582 = vrot.lane.b32.xlu0 %v523, 127
        %v583 = vpop.permute.xlu0 %582
        %584 = vrot.lane.b32.xlu0 %v524, 127
        %v585 = vpop.permute.xlu0 %584
        %v589 = vsel %vm466, %v579, 0
        %v592 = vsel %vm466, %v580, 0
        %v595 = vsel %vm466, %v581, 0
        %597 = vmatpush.bf16.msra.mxu0 0
        %598 = vmatpush.bf16.msra.mxu0 0
        %599 = vmatpush.bf16.msra.mxu0 0
        %600 = vmatpush.bf16.msra.mxu0 0
        %601 = vmatpush.bf16.msra.mxu0 0
        %602 = vmatpush.bf16.msra.mxu0 0
        %603 = vmatpush.bf16.msra.mxu0 %v585
        %604 = vmatpush.bf16.msra.mxu0 %v583
        %605 = vmatmul.bf16.gmra.mxu0 %v589
        %v606 = vpop.f32.mrf.mxu0
        %v607 = vadd.f32 0.0, %v606
        %v608 = vpop.f32.mrf.mxu0
        %v609 = vadd.f32 0.0, %v608
        %610 = vmatmul.bf16.gmra.mxu0 %v592
        %v611 = vpop.f32.mrf.mxu0
        %v612 = vadd.f32 0.0, %v611
        %v613 = vpop.f32.mrf.mxu0
        %v614 = vadd.f32 0.0, %v613
        %615 = vmatmul.bf16.gmra.mxu0 %v595
        %v616 = vpop.f32.mrf.mxu0
        %v617 = vadd.f32 0.0, %v616
        %v618 = vpop.f32.mrf.mxu0
        %v619 = vadd.f32 0.0, %v618
        %620 = vdwg.mxu0
        %v621 = vadd.f32 %v546, %v607
        %v622 = vadd.f32 %v548, %v609
        %v623 = vadd.f32 %v551, %v612
        %v624 = vadd.f32 %v553, %v614
        %v625 = vadd.f32 %v556, %v617
        %v626 = vadd.f32 %v558, %v619
        %v627 = vld [vmem:[%s402] sm:$0xff]
        %v628 = vld [vmem:[%s402 + $0x8] sm:$0xff]
        %v629 = vld [vmem:[%s402 + $0x10] sm:$0xff]
        %v630 = vld [vmem:[%s402 + $0x18] sm:$0xff]
        %v631 = vld [vmem:[%s402 + $0x20] sm:$0xff]
        %v632 = vld [vmem:[%s402 + $0x28] sm:$0xff]
        %634 = vset.pattern.permute.xlu0 0
        %635 = vperm.xlu0 %634, %v627
        %v636 = vpop.permute.xlu0 %635
        %639 = vset.pattern.permute.xlu0 0
        %640 = vperm.xlu0 %639, %v628
        %v641 = vpop.permute.xlu0 %640
        %644 = vset.pattern.permute.xlu0 0
        %645 = vperm.xlu0 %644, %v629
        %v646 = vpop.permute.xlu0 %645
        %649 = vset.pattern.permute.xlu0 0
        %650 = vperm.xlu0 %649, %v630
        %v651 = vpop.permute.xlu0 %650
        %654 = vset.pattern.permute.xlu0 0
        %655 = vperm.xlu0 %654, %v631
        %v656 = vpop.permute.xlu0 %655
        %659 = vset.pattern.permute.xlu0 0
        %660 = vperm.xlu0 %659, %v632
        %v661 = vpop.permute.xlu0 %660
        %v663 = vadd.f32 %v621, %v636
        %v664 = vadd.f32 %v622, %v641
        %v665 = vadd.f32 %v623, %v646
        %v666 = vadd.f32 %v624, %v651
        %v667 = vadd.f32 %v625, %v656
        %v668 = vadd.f32 %v626, %v661
        %v669 = vmax.f32 %v663, 0.0
        %v670 = vmax.f32 %v664, 0.0
        %v671 = vmax.f32 %v665, 0.0
        %v672 = vmax.f32 %v666, 0.0
        %v673 = vmax.f32 %v667, 0.0
        %v674 = vmax.f32 %v668, 0.0
        %vm675 = vcmask 64512
        %v676 = vsel %vm675, %v669, 0.0
        %677 = vadd.xlane.f32.xlu0 %v676
        %v678 = vpop.xlane.xlu0 %677
        %v679 = vsel %vm675, %v670, 0.0
        %680 = vadd.xlane.f32.xlu0 %v679
        %v681 = vpop.xlane.xlu0 %680
        %v682 = vsel %vm675, %v671, 0.0
        %683 = vadd.xlane.f32.xlu0 %v682
        %v684 = vpop.xlane.xlu0 %683
        %v685 = vsel %vm675, %v672, 0.0
        %686 = vadd.xlane.f32.xlu0 %v685
        %v687 = vpop.xlane.xlu0 %686
        %v688 = vsel %vm675, %v673, 0.0
        %689 = vadd.xlane.f32.xlu0 %v688
        %v690 = vpop.xlane.xlu0 %689
        %v691 = vsel %vm675, %v674, 0.0
        %692 = vadd.xlane.f32.xlu0 %v691
        %v693 = vpop.xlane.xlu0 %692
        %v694 = vrcp.pop 8.0
        %v695 = vmul.f32 8.0, %v694
        %v696 = vsub.f32 1.0, %v695
        %v697 = vmul.f32 %v694, %v696
        %v698 = vadd.f32 %v694, %v697
        %vm699 = vweird.f32 %v694
        %v700 = vsel %vm699, %v694, %v698
        %v701 = vmul.f32 %v678, %v700
        %v702 = vmul.f32 %v681, %v700
        %v703 = vmul.f32 %v684, %v700
        %v704 = vmul.f32 %v687, %v700
        %v705 = vmul.f32 %v690, %v700
        %v706 = vmul.f32 %v693, %v700
        %v707 = vsub.f32 %v669, %v701
        %v708 = vsub.f32 %v670, %v702
        %v709 = vsub.f32 %v671, %v703
        %v710 = vsub.f32 %v672, %v704
        %v711 = vsub.f32 %v673, %v705
        %v712 = vsub.f32 %v674, %v706
        %v713 = vmul.f32 %v707, %v707
        %v714 = vmul.f32 %v708, %v708
        %v715 = vmul.f32 %v709, %v709
        %v716 = vmul.f32 %v710, %v710
        %v717 = vmul.f32 %v711, %v711
        %v718 = vmul.f32 %v712, %v712
        %v719 = vsel %vm675, %v713, 0.0
        %720 = vadd.xlane.f32.xlu0 %v719
        %v721 = vpop.xlane.xlu0 %720
        %v722 = vsel %vm675, %v714, 0.0
        %723 = vadd.xlane.f32.xlu0 %v722
        %v724 = vpop.xlane.xlu0 %723
        %v725 = vsel %vm675, %v715, 0.0
        %726 = vadd.xlane.f32.xlu0 %v725
        %v727 = vpop.xlane.xlu0 %726
        %v728 = vsel %vm675, %v716, 0.0
        %729 = vadd.xlane.f32.xlu0 %v728
        %v730 = vpop.xlane.xlu0 %729
        %v731 = vsel %vm675, %v717, 0.0
        %732 = vadd.xlane.f32.xlu0 %v731
        %v733 = vpop.xlane.xlu0 %732
        %v734 = vsel %vm675, %v718, 0.0
        %735 = vadd.xlane.f32.xlu0 %v734
        %v736 = vpop.xlane.xlu0 %735
        %v737 = vmul.f32 %v721, %v700
        %v738 = vmul.f32 %v724, %v700
        %v739 = vmul.f32 %v727, %v700
        %v740 = vmul.f32 %v730, %v700
        %v741 = vmul.f32 %v733, %v700
        %v742 = vmul.f32 %v736, %v700
        %v743 = vadd.f32 %v737, 1e-05
        %v744 = vadd.f32 %v738, 1e-05
        %v745 = vadd.f32 %v739, 1e-05
        %v746 = vadd.f32 %v740, 1e-05
        %v747 = vadd.f32 %v741, 1e-05
        %v748 = vadd.f32 %v742, 1e-05
        %v749 = vrsqrt.pop %v743
        %v750 = vmul.f32 %v749, %v743
        %v751 = vmul.f32 %v750, %v749
        %v752 = vmul.f32 0.5, %v751
        %v753 = vsub.f32 1.5, %v752
        %v754 = vmul.f32 %v749, %v753
        %vm755 = vweird.f32 %v743
        %vm756 = vweird.f32 %v749
        %vm757 = vmor %vm755, %vm756
        %v758 = vsel %vm757, %v749, %v754
        %v759 = vrsqrt.pop %v744
        %v760 = vmul.f32 %v759, %v744
        %v761 = vmul.f32 %v760, %v759
        %v762 = vmul.f32 0.5, %v761
        %v763 = vsub.f32 1.5, %v762
        %v764 = vmul.f32 %v759, %v763
        %vm765 = vweird.f32 %v744
        %vm766 = vweird.f32 %v759
        %vm767 = vmor %vm765, %vm766
        %v768 = vsel %vm767, %v759, %v764
        %v769 = vrsqrt.pop %v745
        %v770 = vmul.f32 %v769, %v745
        %v771 = vmul.f32 %v770, %v769
        %v772 = vmul.f32 0.5, %v771
        %v773 = vsub.f32 1.5, %v772
        %v774 = vmul.f32 %v769, %v773
        %vm775 = vweird.f32 %v745
        %vm776 = vweird.f32 %v769
        %vm777 = vmor %vm775, %vm776
        %v778 = vsel %vm777, %v769, %v774
        %v779 = vrsqrt.pop %v746
        %v780 = vmul.f32 %v779, %v746
        %v781 = vmul.f32 %v780, %v779
        %v782 = vmul.f32 0.5, %v781
        %v783 = vsub.f32 1.5, %v782
        %v784 = vmul.f32 %v779, %v783
        %vm785 = vweird.f32 %v746
        %vm786 = vweird.f32 %v779
        %vm787 = vmor %vm785, %vm786
        %v788 = vsel %vm787, %v779, %v784
        %v789 = vrsqrt.pop %v747
        %v790 = vmul.f32 %v789, %v747
        %v791 = vmul.f32 %v790, %v789
        %v792 = vmul.f32 0.5, %v791
        %v793 = vsub.f32 1.5, %v792
        %v794 = vmul.f32 %v789, %v793
        %vm795 = vweird.f32 %v747
        %vm796 = vweird.f32 %v789
        %vm797 = vmor %vm795, %vm796
        %v798 = vsel %vm797, %v789, %v794
        %v799 = vrsqrt.pop %v748
        %v800 = vmul.f32 %v799, %v748
        %v801 = vmul.f32 %v800, %v799
        %v802 = vmul.f32 0.5, %v801
        %v803 = vsub.f32 1.5, %v802
        %v804 = vmul.f32 %v799, %v803
        %vm805 = vweird.f32 %v748
        %vm806 = vweird.f32 %v799
        %vm807 = vmor %vm805, %vm806
        %v808 = vsel %vm807, %v799, %v804
        %v809 = vmul.f32 %v707, %v758
        %v810 = vmul.f32 %v708, %v768
        %v811 = vmul.f32 %v709, %v778
        %v812 = vmul.f32 %v710, %v788
        %v813 = vmul.f32 %v711, %v798
        %v814 = vmul.f32 %v712, %v808
        %v815 = vld [vmem:[#allocation3] sm:$0xff]
        %v816 = vld [vmem:[#allocation3 + $0x8] sm:$0xff]
        %v817 = vld [vmem:[#allocation3 + $0x10] sm:$0xff]
        %v818 = vld [vmem:[#allocation3 + $0x18] sm:$0xff]
        %v819 = vld [vmem:[#allocation3 + $0x20] sm:$0xff]
        %v820 = vld [vmem:[#allocation3 + $0x28] sm:$0xff]
        %822 = vset.pattern.permute.xlu0 0
        %823 = vperm.xlu0 %822, %v815
        %v824 = vpop.permute.xlu0 %823
        %827 = vset.pattern.permute.xlu0 0
        %828 = vperm.xlu0 %827, %v816
        %v829 = vpop.permute.xlu0 %828
        %832 = vset.pattern.permute.xlu0 0
        %833 = vperm.xlu0 %832, %v817
        %v834 = vpop.permute.xlu0 %833
        %837 = vset.pattern.permute.xlu0 0
        %838 = vperm.xlu0 %837, %v818
        %v839 = vpop.permute.xlu0 %838
        %842 = vset.pattern.permute.xlu0 0
        %843 = vperm.xlu0 %842, %v819
        %v844 = vpop.permute.xlu0 %843
        %847 = vset.pattern.permute.xlu0 0
        %848 = vperm.xlu0 %847, %v820
        %v849 = vpop.permute.xlu0 %848
        %v851 = vmul.f32 %v809, %v824
        %v852 = vmul.f32 %v810, %v829
        %v853 = vmul.f32 %v811, %v834
        %v854 = vmul.f32 %v812, %v839
        %v855 = vmul.f32 %v813, %v844
        %v856 = vmul.f32 %v814, %v849
        %v857 = vld [vmem:[#allocation5] sm:$0xff]
        %v858 = vld [vmem:[#allocation5 + $0x8] sm:$0xff]
        %v859 = vld [vmem:[#allocation5 + $0x10] sm:$0xff]
        %v860 = vld [vmem:[#allocation5 + $0x18] sm:$0xff]
        %v861 = vld [vmem:[#allocation5 + $0x20] sm:$0xff]
        %v862 = vld [vmem:[#allocation5 + $0x28] sm:$0xff]
        %864 = vset.pattern.permute.xlu0 0
        %865 = vperm.xlu0 %864, %v857
        %v866 = vpop.permute.xlu0 %865
        %869 = vset.pattern.permute.xlu0 0
        %870 = vperm.xlu0 %869, %v858
        %v871 = vpop.permute.xlu0 %870
        %874 = vset.pattern.permute.xlu0 0
        %875 = vperm.xlu0 %874, %v859
        %v876 = vpop.permute.xlu0 %875
        %879 = vset.pattern.permute.xlu0 0
        %880 = vperm.xlu0 %879, %v860
        %v881 = vpop.permute.xlu0 %880
        %884 = vset.pattern.permute.xlu0 0
        %885 = vperm.xlu0 %884, %v861
        %v886 = vpop.permute.xlu0 %885
        %889 = vset.pattern.permute.xlu0 0
        %890 = vperm.xlu0 %889, %v862
        %v891 = vpop.permute.xlu0 %890
        %v893 = vadd.f32 %v851, %v866
        %v894 = vadd.f32 %v852, %v871
        %v895 = vadd.f32 %v853, %v876
        %v896 = vadd.f32 %v854, %v881
        %v897 = vadd.f32 %v855, %v886
        %v898 = vadd.f32 %v856, %v891
        %v899 = vpack.c.bf16 %v893, %v893
        %v900 = vpack.c.bf16 %v894, %v894
        %v901 = vpack.c.bf16 %v895, %v895
        %v902 = vpack.c.bf16 %v896, %v896
        %v903 = vpack.c.bf16 %v897, %v897
        %v904 = vpack.c.bf16 %v898, %v898
        %vm905 = vcmask 60416
        %906 = vst.msk [vmem:[%s414] sm:$0xf] %vm905, %v899
        %907 = vst.msk [vmem:[%s414 + $0x4] sm:$0xf] %vm905, %v900
        %908 = vst.msk [vmem:[%s414 + $0x8] sm:$0xf] %vm905, %v901
        %909 = vst.msk [vmem:[%s414 + $0xc] sm:$0xf] %vm905, %v902
        %910 = vst.msk [vmem:[%s414 + $0x10] sm:$0xf] %vm905, %v903
        %911 = vst.msk [vmem:[%s414 + $0x14] sm:$0xf] %vm905, %v904
        %s912 = smul.u32 6, %s23
        %p913 = scmp.lt.s32.totalorder %s22, 1
        %s914 = scalar_select %p913, %s22, 1
        %p915 = scmp.lt.s32.totalorder %s912, 5
        %s916 = scalar_select %p915, %s912, 5
        %s917 = smul.addr %s914, 6
        %s918 = sadd.s32 %s916, %s917
        %s919 = smul.addr %s918, 4
        %s920 = scalar_lea.vmem %s5, %s919
        // Predicated region
        $region90: #{_lambda_.16} parent=76 // pred_check
          %p921 = pneg %p180
        $region91: #{_lambda_.16} parent=76 // pred_check_branch
          %923 = sbr.rel (%p921) target = $region93
        $region92: #{_lambda_.16} parent=76 // pred_region
          %s924 = smul.u32 6, %s23
        $region93: #{_lambda_.16} parent=76 // pred_fallthru
          _
      $region77: #{_lambda_.16} parent=5 // pred_fallthru
        _
      %p925 = scmp.le.s32.totalorder 2, %s13
      // Predicated region
      $region94: #{_lambda_.16} parent=5 // pred_check
        %p926 = pneg %p925
      $region95: #{_lambda_.16} parent=5 // pred_check_branch
        %928 = sbr.rel (%p926) target = $region97
      $region96: #{_lambda_.16} parent=5 // pred_region
        %s929 = ssub.s32 %s13, 2
        // Predicated region
        $region98: #{_lambda_.16} parent=96 // pred_check
          %p930 = pneg %p186
        $region99: #{_lambda_.16} parent=96 // pred_check_branch
          %932 = sbr.rel (%p930) target = $region101
        $region100: #{_lambda_.16} parent=96 // pred_region
          %s933 = smul.u32 6, %s25
          %p934 = scmp.lt.s32.totalorder %s24, 1
          %s935 = scalar_select %p934, %s24, 1
          %p936 = scmp.lt.s32.totalorder %s933, 5
          %s937 = scalar_select %p936, %s933, 5
          %s938 = smul.addr %s935, 6
          %s939 = sadd.s32 %s937, %s938
          %s940 = smul.addr %s939, 4
          %s941 = scalar_lea.vmem %s5, %s940
        $region101: #{_lambda_.16} parent=96 // pred_fallthru
          _
      $region97: #{_lambda_.16} parent=5 // pred_fallthru
        _
    $region6: #{_lambda_.16} parent=1 // loop_footer
      %s17 = sadd.s32 1, %s13
    $region7: #{_lambda_.16} parent=1 // loop_footer_branch
      %12 = sbr.rel target = $region3
    $region8: #{_lambda_.16} parent=1 // loop_exit
      _
    %942 = vsyncpa [#allocation4], 1
    %s943 = scalar_lea.sflag [#allocation4], 1
    %944 = vsyncpa %s943, 1
    %945 = vsyncpa [#allocation6], 1

// kernel: _lambda_.17
$region0: #{_lambda_.17}
  #allocation0 [shape = 'u32[]', space=smem, size = 0x4, offset = 0x4, fixed_abs, tag = 'smem constant byte address 0x4 - core index']
  #allocation1 [shape = 'u32[72,128]{1,0:T(1,128)}', space=vmem, size = 0x9000, scoped, tag = 'internal scratch']
  #allocation2 [shape = 'bf16[48,10]{1,0:T(8,128)(2,1)}', space=vmem, size = 0x3000, scoped, tag = 'scratch operand']
  %s0 = inlined_call_operand.vmem [shape: bf16[2,48,8], index: 0, kind: input, shape index: {}]
  %s1 = inlined_call_operand.vmem [shape: bf16[3,48,48], index: 1, kind: input, shape index: {}]
  %s2 = inlined_call_operand.vmem [shape: f32[48,1], index: 2, kind: input, shape index: {}]
  %s3 = inlined_call_operand.hbm [shape: f32[48,1], index: 3, kind: input, shape index: {}]
  %s4 = inlined_call_operand.hbm [shape: f32[48,1], index: 4, kind: input, shape index: {}]
  %s5 = inlined_call_operand.vmem [shape: bf16[2,48,8], index: 5, kind: output, shape index: {}]
  %s6 = sld [smem:[#allocation0]]
  $region61: #{_lambda_.17} parent=0
    _
  %s8 = ssub.s32 1, %s6
  %s9 = scalar_select 0, %s8, %s6
  $region1: #{_lambda_.17} parent=0
    #allocation3 [shape = 'u8[24576]{0}', space=vmem, size = 0x6000, scoped, tag = 'input window, operand 3, single buffered']
    #allocation4 [shape = 's32[2]{0}', space=sflag, size = 0x8, scoped, tag = 'scoped memory for _lambda_.17']
    #allocation5 [shape = 'u8[24576]{0}', space=vmem, size = 0x6000, scoped, tag = 'input window, operand 4, single buffered']
    #allocation6 [shape = 's32[1]{0}', space=sflag, size = 0x4, scoped, tag = 'scoped memory for _lambda_.17']
    %10 = vsyncpa [#allocation4], 0
    %11 = vsyncpa [#allocation6], 0
    loop: start=0, step=1, limit=4
    $region2: #{_lambda_.17} parent=1 // loop_pre_header
      _
    $region3: #{_lambda_.17} parent=1 // loop_header
      %s13 = sphi 0, %s17
      %p14 = scmp.ge.s32.totalorder %s13, 4
      %s20 = sphi 0, %s32
      %s21 = sphi 0, %s28
      %s22 = sphi 0, %s20
      %s23 = sphi 0, %s21
      %s24 = sphi 0, %s22
      %s25 = sphi 0, %s23
      %s35 = sphi 0, %s37
      %s38 = sphi 0, %s35
      %s39 = sphi 0, %s38
      %s55 = sphi 0, %s39
      %s61 = sphi 0, %s63
      %s64 = sphi 0, %s61
      %s65 = sphi 0, %s64
      %s81 = sphi 0, %s65
      %s87 = sphi 0, %s89
      %s90 = sphi 0, %s87
      %s91 = sphi 0, %s90
      %s107 = sphi 0, %s91
      %s113 = sphi 0, %s115
      %s116 = sphi 0, %s113
      %s117 = sphi 0, %s116
      %s133 = sphi 0, %s117
      %s139 = sphi 0, %s141
      %s142 = sphi 0, %s139
      %s143 = sphi 0, %s142
      %s159 = sphi 0, %s143
      %s167 = sphi 0, %s169
      %s170 = sphi 0, %s167
      %s171 = sphi 0, %s170
      %s187 = sphi 0, %s171
    $region4: #{_lambda_.17} parent=1 // loop_header_branch
      %16 = sbr.rel (%p14) target = $region8
    $region5: #{_lambda_.17} parent=1 // loop_body
      %s18 = ssub.s32 %s13, 1
      %s19 = ssub.s32 %s13, 2
      %s26 = sadd.s32 1, %s21
      %p27 = scmp.ge.s32.totalorder %s26, 1
      %s28 = scalar_select %p27, 0, %s26
      %s29 = sadd.s32 1, %s20
      %s30 = scalar_select %p27, %s29, %s20
      %p31 = scmp.ge.s32.totalorder %s30, 2
      %s32 = scalar_select %p31, 0, %s30
      %s33 = ssub.s32 %s20, %s32
      %p34 = scmp.eq.s32.totalorder %s33, 0
      %s36 = sadd.s32 %s35, 1
      %s37 = scalar_select %p34, %s35, %s36
      %p40 = pneg %p34
      %p41 = scmp.eq.s32.totalorder %s13, 1
      %p42 = por %p40, %p41
      %p43 = scmp.ne.s32.totalorder %s35, %s38
      %p44 = scmp.eq.s32.totalorder %s13, 0
      %p45 = por %p43, %p44
      %p46 = scmp.ne.s32.totalorder %s35, %s38
      %p47 = scmp.eq.s32.totalorder %s18, 1
      %p48 = por %p46, %p47
      %p49 = scmp.ne.s32.totalorder %s38, %s39
      %p50 = scmp.eq.s32.totalorder %s18, 0
      %p51 = por %p49, %p50
      %p52 = scmp.ne.s32.totalorder %s38, %s39
      %p53 = scmp.eq.s32.totalorder %s19, 1
      %p54 = por %p52, %p53
      %p56 = scmp.ne.s32.totalorder %s39, %s55
      %p57 = scmp.eq.s32.totalorder %s19, 0
      %p58 = por %p56, %p57
      %s59 = ssub.s32 %s21, %s28
      %p60 = scmp.eq.s32.totalorder %s59, 0
      %s62 = sadd.s32 %s61, 1
      %s63 = scalar_select %p60, %s61, %s62
      %p66 = pneg %p60
      %p67 = scmp.eq.s32.totalorder %s13, 1
      %p68 = por %p66, %p67
      %p69 = scmp.ne.s32.totalorder %s61, %s64
      %p70 = scmp.eq.s32.totalorder %s13, 0
      %p71 = por %p69, %p70
      %p72 = scmp.ne.s32.totalorder %s61, %s64
      %p73 = scmp.eq.s32.totalorder %s18, 1
      %p74 = por %p72, %p73
      %p75 = scmp.ne.s32.totalorder %s64, %s65
      %p76 = scmp.eq.s32.totalorder %s18, 0
      %p77 = por %p75, %p76
      %p78 = scmp.ne.s32.totalorder %s64, %s65
      %p79 = scmp.eq.s32.totalorder %s19, 1
      %p80 = por %p78, %p79
      %p82 = scmp.ne.s32.totalorder %s65, %s81
      %p83 = scmp.eq.s32.totalorder %s19, 0
      %p84 = por %p82, %p83
      %s85 = ssub.s32 %s21, %s28
      %p86 = scmp.eq.s32.totalorder %s85, 0
      %s88 = sadd.s32 %s87, 1
      %s89 = scalar_select %p86, %s87, %s88
      %p92 = pneg %p86
      %p93 = scmp.eq.s32.totalorder %s13, 1
      %p94 = por %p92, %p93
      %p95 = scmp.ne.s32.totalorder %s87, %s90
      %p96 = scmp.eq.s32.totalorder %s13, 0
      %p97 = por %p95, %p96
      %p98 = scmp.ne.s32.totalorder %s87, %s90
      %p99 = scmp.eq.s32.totalorder %s18, 1
      %p100 = por %p98, %p99
      %p101 = scmp.ne.s32.totalorder %s90, %s91
      %p102 = scmp.eq.s32.totalorder %s18, 0
      %p103 = por %p101, %p102
      %p104 = scmp.ne.s32.totalorder %s90, %s91
      %p105 = scmp.eq.s32.totalorder %s19, 1
      %p106 = por %p104, %p105
      %p108 = scmp.ne.s32.totalorder %s91, %s107
      %p109 = scmp.eq.s32.totalorder %s19, 0
      %p110 = por %p108, %p109
      %s111 = ssub.s32 %s21, %s28
      %p112 = scmp.eq.s32.totalorder %s111, 0
      %s114 = sadd.s32 %s113, 1
      %s115 = scalar_select %p112, %s113, %s114
      %p118 = pneg %p112
      %p119 = scmp.eq.s32.totalorder %s13, 1
      %p120 = por %p118, %p119
      %p121 = scmp.ne.s32.totalorder %s113, %s116
      %p122 = scmp.eq.s32.totalorder %s13, 0
      %p123 = por %p121, %p122
      %p124 = scmp.ne.s32.totalorder %s113, %s116
      %p125 = scmp.eq.s32.totalorder %s18, 1
      %p126 = por %p124, %p125
      %p127 = scmp.ne.s32.totalorder %s116, %s117
      %p128 = scmp.eq.s32.totalorder %s18, 0
      %p129 = por %p127, %p128
      %p130 = scmp.ne.s32.totalorder %s116, %s117
      %p131 = scmp.eq.s32.totalorder %s19, 1
      %p132 = por %p130, %p131
      %p134 = scmp.ne.s32.totalorder %s117, %s133
      %p135 = scmp.eq.s32.totalorder %s19, 0
      %p136 = por %p134, %p135
      %s137 = ssub.s32 %s21, %s28
      %p138 = scmp.eq.s32.totalorder %s137, 0
      %s140 = sadd.s32 %s139, 1
      %s141 = scalar_select %p138, %s139, %s140
      %p144 = pneg %p138
      %p145 = scmp.eq.s32.totalorder %s13, 1
      %p146 = por %p144, %p145
      %p147 = scmp.ne.s32.totalorder %s139, %s142
      %p148 = scmp.eq.s32.totalorder %s13, 0
      %p149 = por %p147, %p148
      %p150 = scmp.ne.s32.totalorder %s139, %s142
      %p151 = scmp.eq.s32.totalorder %s18, 1
      %p152 = por %p150, %p151
      %p153 = scmp.ne.s32.totalorder %s142, %s143
      %p154 = scmp.eq.s32.totalorder %s18, 0
      %p155 = por %p153, %p154
      %p156 = scmp.ne.s32.totalorder %s142, %s143
      %p157 = scmp.eq.s32.totalorder %s19, 1
      %p158 = por %p156, %p157
      %p160 = scmp.ne.s32.totalorder %s143, %s159
      %p161 = scmp.eq.s32.totalorder %s19, 0
      %p162 = por %p160, %p161
      %s163 = ssub.s32 %s20, %s32
      %s164 = ssub.s32 %s21, %s28
      %s165 = sor.u32 %s163, %s164
      %p166 = scmp.eq.s32.totalorder %s165, 0
      %s168 = sadd.s32 %s167, 1
      %s169 = scalar_select %p166, %s167, %s168
      %p172 = pneg %p166
      %p173 = scmp.eq.s32.totalorder %s13, 1
      %p174 = por %p172, %p173
      %p175 = scmp.ne.s32.totalorder %s167, %s170
      %p176 = scmp.eq.s32.totalorder %s13, 0
      %p177 = por %p175, %p176
      %p178 = scmp.ne.s32.totalorder %s167, %s170
      %p179 = scmp.eq.s32.totalorder %s18, 1
      %p180 = por %p178, %p179
      %p181 = scmp.ne.s32.totalorder %s170, %s171
      %p182 = scmp.eq.s32.totalorder %s18, 0
      %p183 = por %p181, %p182
      %p184 = scmp.ne.s32.totalorder %s170, %s171
      %p185 = scmp.eq.s32.totalorder %s19, 1
      %p186 = por %p184, %p185
      %p188 = scmp.ne.s32.totalorder %s171, %s187
      %p189 = scmp.eq.s32.totalorder %s19, 0
      %p190 = por %p188, %p189
      %p191 = scmp.le.s32.totalorder 1, %s13
      %p192 = scmp.lt.s32.totalorder %s13, 3
      %p193 = pnand %p191, %p192
      %p194 = pneg %p193
      // Predicated region
      $region9: #{_lambda_.17} parent=5 // pred_check
        _
      $region10: #{_lambda_.17} parent=5 // pred_check_branch
        %196 = sbr.rel (%p193) target = $region12
      $region11: #{_lambda_.17} parent=5 // pred_region
        %s197 = ssub.s32 %s13, 1
        // Predicated region
        $region13: #{_lambda_.17} parent=11 // pred_check
          %p198 = pneg %p77
        $region14: #{_lambda_.17} parent=11 // pred_check_branch
          %200 = sbr.rel (%p198) target = $region16
        $region15: #{_lambda_.17} parent=11 // pred_region
          %s201 = smul.u32 6, %s23
          %p202 = scmp.lt.s32.totalorder %s201, 5
          %s203 = scalar_select %p202, %s201, 5
          %s204 = smul.addr %s203, 4
          %s205 = scalar_lea.vmem %s1, %s204
          %s206 = smul.u32 6, %s23
        $region16: #{_lambda_.17} parent=11 // pred_fallthru
          _
        // Predicated region
        $region17: #{_lambda_.17} parent=11 // pred_check
          %p207 = pneg %p103
        $region18: #{_lambda_.17} parent=11 // pred_check_branch
          %209 = sbr.rel (%p207) target = $region20
        $region19: #{_lambda_.17} parent=11 // pred_region
          %s210 = smul.u32 6, %s23
          %p211 = scmp.lt.s32.totalorder %s210, 5
          %s212 = scalar_select %p211, %s210, 5
          %s213 = smul.addr %s212, 8
          %s214 = scalar_lea.vmem %s2, %s213
          %s215 = smul.u32 6, %s23
        $region20: #{_lambda_.17} parent=11 // pred_fallthru
          _
        // Predicated region
        $region21: #{_lambda_.17} parent=11 // pred_check
          %p216 = pneg %p129
        $region22: #{_lambda_.17} parent=11 // pred_check_branch
          %218 = sbr.rel (%p216) target = $region24
        $region23: #{_lambda_.17} parent=11 // pred_region
          %s219 = smul.u32 6, %s23
          %221 = vsyncadd [#allocation4], 0
          %s222 = smul.addr %s219, 8
          %s223 = scalar_lea.hbm %s3, %s222
          %s224 = sshll.u32 %s223, 4
          %s225 = int_to_ptr.hbm [resolvable:$true] %s224
          %s226 = sshll.u32 [#allocation3], 4
          %s227 = int_to_ptr.vmem [resolvable:$true] %s226
          %232 = dma.hbm_to_vmem [thread:$0]  %s225, 768, %s227, [#allocation4], 128, 128, 8
        $region24: #{_lambda_.17} parent=11 // pred_fallthru
          _
        // Predicated region
        $region25: #{_lambda_.17} parent=11 // pred_check
          %p233 = pneg %p155
        $region26: #{_lambda_.17} parent=11 // pred_check_branch
          %235 = sbr.rel (%p233) target = $region28
        $region27: #{_lambda_.17} parent=11 // pred_region
          %s236 = smul.u32 6, %s23
          %238 = vsyncadd [#allocation6], 0
          %s239 = smul.addr %s236, 8
          %s240 = scalar_lea.hbm %s4, %s239
          %s241 = sshll.u32 %s240, 4
          %s242 = int_to_ptr.hbm [resolvable:$true] %s241
          %s243 = sshll.u32 [#allocation5], 4
          %s244 = int_to_ptr.vmem [resolvable:$true] %s243
          %249 = dma.hbm_to_vmem [thread:$0]  %s242, 768, %s244, [#allocation6], 128, 128, 8
        $region28: #{_lambda_.17} parent=11 // pred_fallthru
          _
      $region12: #{_lambda_.17} parent=5 // pred_fallthru
        _
      %p250 = scmp.lt.s32.totalorder %s13, 2
      // Predicated region
      $region29: #{_lambda_.17} parent=5 // pred_check
        %p251 = pneg %p250
      $region30: #{_lambda_.17} parent=5 // pred_check_branch
        %253 = sbr.rel (%p251) target = $region32
      $region31: #{_lambda_.17} parent=5 // pred_region
        // Predicated region
        $region33: #{_lambda_.17} parent=31 // pred_check
          %p254 = pneg %p45
        $region34: #{_lambda_.17} parent=31 // pred_check_branch
          %256 = sbr.rel (%p254) target = $region36
        $region35: #{_lambda_.17} parent=31 // pred_region
          %p257 = scmp.lt.s32.totalorder %s20, 1
          %s258 = scalar_select %p257, %s20, 1
          %s259 = smul.addr %s258, 6
          %s260 = smul.addr %s259, 4
          %s261 = scalar_lea.vmem %s0, %s260
        $region36: #{_lambda_.17} parent=31 // pred_fallthru
          _
      $region32: #{_lambda_.17} parent=5 // pred_fallthru
        _
      %p262 = scmp.le.s32.totalorder 1, %s13
      %p263 = scmp.lt.s32.totalorder %s13, 3
      %p264 = pnand %p262, %p263
      %p265 = pneg %p264
      // Predicated region
      $region37: #{_lambda_.17} parent=5 // pred_check
        _
      $region38: #{_lambda_.17} parent=5 // pred_check_branch
        %267 = sbr.rel (%p264) target = $region40
      $region39: #{_lambda_.17} parent=5 // pred_region
        %s268 = ssub.s32 %s13, 1
        // Predicated region
        $region41: #{_lambda_.17} parent=39 // pred_check
          %p269 = pneg %p129
        $region42: #{_lambda_.17} parent=39 // pred_check_branch
          %271 = sbr.rel (%p269) target = $region44
        $region43: #{_lambda_.17} parent=39 // pred_region
          %273 = dma.done [#allocation4], 768
        $region44: #{_lambda_.17} parent=39 // pred_fallthru
          _
        // Predicated region
        $region45: #{_lambda_.17} parent=39 // pred_check
          %p274 = pneg %p155
        $region46: #{_lambda_.17} parent=39 // pred_check_branch
          %276 = sbr.rel (%p274) target = $region48
        $region47: #{_lambda_.17} parent=39 // pred_region
          %278 = dma.done [#allocation6], 768
        $region48: #{_lambda_.17} parent=39 // pred_fallthru
          _
        %p279 = scmp.lt.s32.totalorder %s22, 1
        %s280 = scalar_select %p279, %s22, 1
        %s281 = smul.addr %s280, 6
        %s282 = smul.addr %s281, 4
        %s283 = scalar_lea.vmem %s0, %s282
        %p284 = pneg %p51
        %p285 = pneg %p48
        %s286 = smul.u32 6, %s23
        %p287 = scmp.lt.s32.totalorder %s286, 5
        %s288 = scalar_select %p287, %s286, 5
        %s289 = smul.addr %s288, 4
        %s290 = scalar_lea.vmem %s1, %s289
        %p291 = pneg %p77
        %p292 = pneg %p74
        %s293 = smul.u32 6, %s23
        %p294 = scmp.lt.s32.totalorder %s293, 5
        %s295 = scalar_select %p294, %s293, 5
        %s296 = smul.addr %s295, 8
        %s297 = scalar_lea.vmem %s2, %s296
        %p298 = pneg %p103
        %p299 = pneg %p100
        %p300 = pneg %p129
        %p301 = pneg %p126
        %p302 = pneg %p155
        %p303 = pneg %p152
        %p304 = pneg %p183
        %p305 = pneg %p180
        %s306 = smul.u32 6, %s23
        %p307 = scmp.lt.s32.totalorder %s22, 1
        %s308 = scalar_select %p307, %s22, 1
        %p309 = scmp.lt.s32.totalorder %s306, 5
        %s310 = scalar_select %p309, %s306, 5
        %s311 = smul.addr %s308, 6
        %s312 = sadd.s32 %s310, %s311
        %s313 = smul.addr %s312, 4
        %s314 = scalar_lea.vmem %s5, %s313
        %p315 = scmp.lt.s32.totalorder %s22, 1
        %s316 = scalar_select %p315, %s22, 1
        %s317 = smul.addr %s316, 6
        %s318 = smul.addr %s317, 4
        %s319 = scalar_lea.vmem %s0, %s318
        %s320 = smul.u32 6, %s23
        %p321 = scmp.lt.s32.totalorder %s320, 5
        %s322 = scalar_select %p321, %s320, 5
        %s323 = smul.addr %s322, 4
        %s324 = scalar_lea.vmem %s1, %s323
        %s325 = smul.u32 6, %s23
        %s326 = smul.u32 6, %s23
        %p327 = scmp.lt.s32.totalorder %s326, 5
        %s328 = scalar_select %p327, %s326, 5
        %s329 = smul.addr %s328, 8
        %s330 = scalar_lea.vmem %s2, %s329
        %s331 = smul.u32 6, %s23
        %s332 = smul.u32 6, %s23
        %s333 = smul.u32 6, %s23
        %s334 = smul.u32 6, %s23
        %p335 = scmp.lt.s32.totalorder %s22, 1
        %s336 = scalar_select %p335, %s22, 1
        %p337 = scmp.lt.s32.totalorder %s334, 5
        %s338 = scalar_select %p337, %s334, 5
        %s339 = smul.addr %s336, 6
        %s340 = sadd.s32 %s338, %s339
        %s341 = smul.addr %s340, 4
        %s342 = scalar_lea.vmem %s5, %s341
        %s343 = smul.u32 6, %s23
        %v345 = vld [vmem:[%s319] sm:$0xf]
        %v346 = vld [vmem:[%s319 + $0x4] sm:$0xf]
        %v347 = vld [vmem:[%s319 + $0x8] sm:$0xf]
        %v348 = vld [vmem:[%s319 + $0xc] sm:$0xf]
        %v349 = vld [vmem:[%s319 + $0x10] sm:$0xf]
        %v350 = vld [vmem:[%s319 + $0x14] sm:$0xf]
        %vm351 = vcmask 3072
        %352 = vst.msk [vmem:[#allocation2] sm:$0xf] %vm351, 0
        %353 = vst.msk [vmem:[#allocation2 + $0x4] sm:$0xf] %vm351, 0
        %354 = vst.msk [vmem:[#allocation2 + $0x8] sm:$0xf] %vm351, 0
        %355 = vst.msk [vmem:[#allocation2 + $0xc] sm:$0xf] %vm351, 0
        %356 = vst.msk [vmem:[#allocation2 + $0x10] sm:$0xf] %vm351, 0
        %357 = vst.msk [vmem:[#allocation2 + $0x14] sm:$0xf] %vm351, 0
        %vm358 = vcmask 76872
        %359 = vst.msk [vmem:[#allocation2] sm:$0xf] %vm358, 0
        %360 = vst.msk [vmem:[#allocation2 + $0x4] sm:$0xf] %vm358, 0
        %361 = vst.msk [vmem:[#allocation2 + $0x8] sm:$0xf] %vm358, 0
        %362 = vst.msk [vmem:[#allocation2 + $0xc] sm:$0xf] %vm358, 0
        %363 = vst.msk [vmem:[#allocation2 + $0x10] sm:$0xf] %vm358, 0
        %364 = vst.msk [vmem:[#allocation2 + $0x14] sm:$0xf] %vm358, 0
        %371 = vrot.lane.b32.xlu0 %v345, 1
        %v372 = vpop.permute.xlu0 %371
        %373 = vrot.lane.b32.xlu0 %v346, 1
        %v374 = vpop.permute.xlu0 %373
        %375 = vrot.lane.b32.xlu0 %v347, 1
        %v376 = vpop.permute.xlu0 %375
        %377 = vrot.lane.b32.xlu0 %v348, 1
        %v378 = vpop.permute.xlu0 %377
        %379 = vrot.lane.b32.xlu0 %v349, 1
        %v380 = vpop.permute.xlu0 %379
        %381 = vrot.lane.b32.xlu0 %v350, 1
        %v382 = vpop.permute.xlu0 %381
        %vm389 = vcmask 68616
        %390 = vst.msk [vmem:[#allocation2] sm:$0xf] %vm389, %v372
        %391 = vst.msk [vmem:[#allocation2 + $0x4] sm:$0xf] %vm389, %v374
        %392 = vst.msk [vmem:[#allocation2 + $0x8] sm:$0xf] %vm389, %v376
        %393 = vst.msk [vmem:[#allocation2 + $0xc] sm:$0xf] %vm389, %v378
        %394 = vst.msk [vmem:[#allocation2 + $0x10] sm:$0xf] %vm389, %v380
        %395 = vst.msk [vmem:[#allocation2 + $0x14] sm:$0xf] %vm389, %v382
        %v396 = vld [vmem:[%s324] sm:$0xf]
        %v397 = vld [vmem:[%s324 + $0x4] sm:$0xf]
        %v398 = vld [vmem:[%s324 + $0x8] sm:$0xf]
        %v399 = vld [vmem:[%s324 + $0xc] sm:$0xf]
        %v400 = vld [vmem:[%s324 + $0x10] sm:$0xf]
        %v401 = vld [vmem:[%s324 + $0x14] sm:$0xf]
        %v402 = vld [vmem:[#allocation2] sm:$0xf]
        %v403 = vld [vmem:[#allocation2 + $0x4] sm:$0xf]
        %v404 = vld [vmem:[#allocation2 + $0x8] sm:$0xf]
        %v405 = vld [vmem:[#allocation2 + $0xc] sm:$0xf]
        %v406 = vld [vmem:[#allocation2 + $0x10] sm:$0xf]
        %v407 = vld [vmem:[#allocation2 + $0x14] sm:$0xf]
        %s408 = scalar_lea.vmem %s324, 24
        %v409 = vld [vmem:[%s408] sm:$0xf]
        %v410 = vld [vmem:[%s408 + $0x4] sm:$0xf]
        %v411 = vld [vmem:[%s408 + $0x8] sm:$0xf]
        %v412 = vld [vmem:[%s408 + $0xc] sm:$0xf]
        %v413 = vld [vmem:[%s408 + $0x10] sm:$0xf]
        %v414 = vld [vmem:[%s408 + $0x14] sm:$0xf]
        %v421 = vunpack.c.l.b16 %v409
        %v422 = vunpack.c.l.b16 %v410
        %v423 = vunpack.c.l.b16 %v411
        %v424 = vunpack.c.l.b16 %v412
        %v425 = vunpack.c.l.b16 %v413
        %v426 = vunpack.c.l.b16 %v414
        %v427 = vpack.c.b16 %v422, %v421
        %v428 = vpack.c.b16 %v424, %v423
        %v429 = vpack.c.b16 %v426, %v425
        %v436 = vunpack.c.l.b16 %v402
        %v437 = vunpack.c.l.b16 %v403
        %v438 = vunpack.c.l.b16 %v404
        %v439 = vunpack.c.l.b16 %v405
        %v440 = vunpack.c.l.b16 %v406
        %v441 = vunpack.c.l.b16 %v407
        %v442 = vpack.c.b16 %v437, %v436
        %v443 = vpack.c.b16 %v439, %v438
        %v444 = vpack.c.b16 %v441, %v440
        %445 = vrot.lane.b32.xlu0 %v442, 127
        %v446 = vpop.permute.xlu0 %445
        %447 = vrot.lane.b32.xlu0 %v443, 127
        %v448 = vpop.permute.xlu0 %447
        %449 = vrot.lane.b32.xlu0 %v444, 127
        %v450 = vpop.permute.xlu0 %449
        %vm454 = vcmask 392192
        %v456 = vsel %vm454, %v427, 0
        %v459 = vsel %vm454, %v428, 0
        %v462 = vsel %vm454, %v429, 0
        %464 = vmatpush.bf16.msra.mxu0 0
        %465 = vmatpush.bf16.msra.mxu0 0
        %466 = vmatpush.bf16.msra.mxu0 0
        %467 = vmatpush.bf16.msra.mxu0 0
        %468 = vmatpush.bf16.msra.mxu0 0
        %469 = vmatpush.bf16.msra.mxu0 %v450
        %470 = vmatpush.bf16.msra.mxu0 %v448
        %471 = vmatpush.bf16.msra.mxu0 %v446
        %472 = vmatmul.bf16.gmra.mxu0 %v456
        %v473 = vpop.f32.mrf.mxu0
        %v474 = vadd.f32 0.0, %v473
        %v475 = vpop.f32.mrf.mxu0
        %v476 = vadd.f32 0.0, %v475
        %477 = vmatmul.bf16.gmra.mxu0 %v459
        %v478 = vpop.f32.mrf.mxu0
        %v479 = vadd.f32 0.0, %v478
        %v480 = vpop.f32.mrf.mxu0
        %v481 = vadd.f32 0.0, %v480
        %482 = vmatmul.bf16.gmra.mxu0 %v462
        %v483 = vpop.f32.mrf.mxu0
        %v484 = vadd.f32 0.0, %v483
        %v485 = vpop.f32.mrf.mxu0
        %v486 = vadd.f32 0.0, %v485
        %487 = vdwg.mxu0
        %v494 = vunpack.c.l.b16 %v396
        %v495 = vunpack.c.l.b16 %v397
        %v496 = vunpack.c.l.b16 %v398
        %v497 = vunpack.c.l.b16 %v399
        %v498 = vunpack.c.l.b16 %v400
        %v499 = vunpack.c.l.b16 %v401
        %v500 = vpack.c.b16 %v495, %v494
        %v501 = vpack.c.b16 %v497, %v496
        %v502 = vpack.c.b16 %v499, %v498
        %v507 = vsel %vm454, %v500, 0
        %v510 = vsel %vm454, %v501, 0
        %v513 = vsel %vm454, %v502, 0
        %515 = vmatpush.bf16.msra.mxu0 0
        %516 = vmatpush.bf16.msra.mxu0 0
        %517 = vmatpush.bf16.msra.mxu0 0
        %518 = vmatpush.bf16.msra.mxu0 0
        %519 = vmatpush.bf16.msra.mxu0 0
        %520 = vmatpush.bf16.msra.mxu0 %v444
        %521 = vmatpush.bf16.msra.mxu0 %v443
        %522 = vmatpush.bf16.msra.mxu0 %v442
        %523 = vmatmul.bf16.gmra.mxu0 %v507
        %v524 = vpop.f32.mrf.mxu0
        %v525 = vadd.f32 %v474, %v524
        %v526 = vpop.f32.mrf.mxu0
        %v527 = vadd.f32 %v476, %v526
        %528 = vmatmul.bf16.gmra.mxu0 %v510
        %v529 = vpop.f32.mrf.mxu0
        %v530 = vadd.f32 %v479, %v529
        %v531 = vpop.f32.mrf.mxu0
        %v532 = vadd.f32 %v481, %v531
        %533 = vmatmul.bf16.gmra.mxu0 %v513
        %v534 = vpop.f32.mrf.mxu0
        %v535 = vadd.f32 %v484, %v534
        %v536 = vpop.f32.mrf.mxu0
        %v537 = vadd.f32 %v486, %v536
        %538 = vdwg.mxu0
        %s539 = scalar_lea.vmem %s324, 48
        %v540 = vld [vmem:[%s539] sm:$0xf]
        %v541 = vld [vmem:[%s539 + $0x4] sm:$0xf]
        %v542 = vld [vmem:[%s539 + $0x8] sm:$0xf]
        %v543 = vld [vmem:[%s539 + $0xc] sm:$0xf]
        %v544 = vld [vmem:[%s539 + $0x10] sm:$0xf]
        %v545 = vld [vmem:[%s539 + $0x14] sm:$0xf]
        %v552 = vunpack.c.l.b16 %v540
        %v553 = vunpack.c.l.b16 %v541
        %v554 = vunpack.c.l.b16 %v542
        %v555 = vunpack.c.l.b16 %v543
        %v556 = vunpack.c.l.b16 %v544
        %v557 = vunpack.c.l.b16 %v545
        %v558 = vpack.c.b16 %v553, %v552
        %v559 = vpack.c.b16 %v555, %v554
        %v560 = vpack.c.b16 %v557, %v556
        %561 = vrot.lane.b32.xlu0 %v442, 126
        %v562 = vpop.permute.xlu0 %561
        %563 = vrot.lane.b32.xlu0 %v443, 126
        %v564 = vpop.permute.xlu0 %563
        %565 = vrot.lane.b32.xlu0 %v444, 126
        %v566 = vpop.permute.xlu0 %565
        %v571 = vsel %vm454, %v558, 0
        %v574 = vsel %vm454, %v559, 0
        %v577 = vsel %vm454, %v560, 0
        %579 = vmatpush.bf16.msra.mxu0 0
        %580 = vmatpush.bf16.msra.mxu0 0
        %581 = vmatpush.bf16.msra.mxu0 0
        %582 = vmatpush.bf16.msra.mxu0 0
        %583 = vmatpush.bf16.msra.mxu0 0
        %584 = vmatpush.bf16.msra.mxu0 %v566
        %585 = vmatpush.bf16.msra.mxu0 %v564
        %586 = vmatpush.bf16.msra.mxu0 %v562
        %587 = vmatmul.bf16.gmra.mxu0 %v571
        %v588 = vpop.f32.mrf.mxu0
        %v589 = vadd.f32 0.0, %v588
        %v590 = vpop.f32.mrf.mxu0
        %v591 = vadd.f32 0.0, %v590
        %592 = vmatmul.bf16.gmra.mxu0 %v574
        %v593 = vpop.f32.mrf.mxu0
        %v594 = vadd.f32 0.0, %v593
        %v595 = vpop.f32.mrf.mxu0
        %v596 = vadd.f32 0.0, %v595
        %597 = vmatmul.bf16.gmra.mxu0 %v577
        %v598 = vpop.f32.mrf.mxu0
        %v599 = vadd.f32 0.0, %v598
        %v600 = vpop.f32.mrf.mxu0
        %v601 = vadd.f32 0.0, %v600
        %602 = vdwg.mxu0
        %v603 = vadd.f32 %v525, %v589
        %v604 = vadd.f32 %v527, %v591
        %v605 = vadd.f32 %v530, %v594
        %v606 = vadd.f32 %v532, %v596
        %v607 = vadd.f32 %v535, %v599
        %v608 = vadd.f32 %v537, %v601
        %v609 = vld [vmem:[%s330] sm:$0xff]
        %v610 = vld [vmem:[%s330 + $0x8] sm:$0xff]
        %v611 = vld [vmem:[%s330 + $0x10] sm:$0xff]
        %v612 = vld [vmem:[%s330 + $0x18] sm:$0xff]
        %v613 = vld [vmem:[%s330 + $0x20] sm:$0xff]
        %v614 = vld [vmem:[%s330 + $0x28] sm:$0xff]
        %616 = vset.pattern.permute.xlu0 0
        %617 = vperm.xlu0 %616, %v609
        %v618 = vpop.permute.xlu0 %617
        %621 = vset.pattern.permute.xlu0 0
        %622 = vperm.xlu0 %621, %v610
        %v623 = vpop.permute.xlu0 %622
        %626 = vset.pattern.permute.xlu0 0
        %627 = vperm.xlu0 %626, %v611
        %v628 = vpop.permute.xlu0 %627
        %631 = vset.pattern.permute.xlu0 0
        %632 = vperm.xlu0 %631, %v612
        %v633 = vpop.permute.xlu0 %632
        %636 = vset.pattern.permute.xlu0 0
        %637 = vperm.xlu0 %636, %v613
        %v638 = vpop.permute.xlu0 %637
        %641 = vset.pattern.permute.xlu0 0
        %642 = vperm.xlu0 %641, %v614
        %v643 = vpop.permute.xlu0 %642
        %v645 = vadd.f32 %v603, %v618
        %v646 = vadd.f32 %v604, %v623
        %v647 = vadd.f32 %v605, %v628
        %v648 = vadd.f32 %v606, %v633
        %v649 = vadd.f32 %v607, %v638
        %v650 = vadd.f32 %v608, %v643
        %v651 = vmax.f32 %v645, 0.0
        %v652 = vmax.f32 %v646, 0.0
        %v653 = vmax.f32 %v647, 0.0
        %v654 = vmax.f32 %v648, 0.0
        %v655 = vmax.f32 %v649, 0.0
        %v656 = vmax.f32 %v650, 0.0
        %s657 = smul.u32 %s23, 48
        %s658 = sshra.s32 %s657, 3
        %s659 = sand.u32 %s657, 7
        %s660 = smul.addr %s658, 4
        %s661 = scalar_lea.vmem %s319, %s660
        %v662 = vld [vmem:[%s661] sm:$0xf]
        %v663 = vld [vmem:[%s661 + $0x4] sm:$0xf]
        %v664 = vld [vmem:[%s661 + $0x8] sm:$0xf]
        %v665 = vld [vmem:[%s661 + $0xc] sm:$0xf]
        %v666 = vld [vmem:[%s661 + $0x10] sm:$0xf]
        %v667 = vld [vmem:[%s661 + $0x14] sm:$0xf]
        %v668 = vunpack.c.l.bf16 %v662
        %v669 = vunpack.c.l.bf16 %v663
        %v670 = vunpack.c.l.bf16 %v664
        %v671 = vunpack.c.l.bf16 %v665
        %v672 = vunpack.c.l.bf16 %v666
        %v673 = vunpack.c.l.bf16 %v667
        %v674 = vadd.f32 %v651, %v668
        %v675 = vadd.f32 %v652, %v669
        %v676 = vadd.f32 %v653, %v670
        %v677 = vadd.f32 %v654, %v671
        %v678 = vadd.f32 %v655, %v672
        %v679 = vadd.f32 %v656, %v673
        %vm680 = vcmask 64512
        %v681 = vsel %vm680, %v674, 0.0
        %682 = vadd.xlane.f32.xlu0 %v681
        %v683 = vpop.xlane.xlu0 %682
        %v684 = vsel %vm680, %v675, 0.0
        %685 = vadd.xlane.f32.xlu0 %v684
        %v686 = vpop.xlane.xlu0 %685
        %v687 = vsel %vm680, %v676, 0.0
        %688 = vadd.xlane.f32.xlu0 %v687
        %v689 = vpop.xlane.xlu0 %688
        %v690 = vsel %vm680, %v677, 0.0
        %691 = vadd.xlane.f32.xlu0 %v690
        %v692 = vpop.xlane.xlu0 %691
        %v693 = vsel %vm680, %v678, 0.0
        %694 = vadd.xlane.f32.xlu0 %v693
        %v695 = vpop.xlane.xlu0 %694
        %v696 = vsel %vm680, %v679, 0.0
        %697 = vadd.xlane.f32.xlu0 %v696
        %v698 = vpop.xlane.xlu0 %697
        %v699 = vrcp.pop 8.0
        %v700 = vmul.f32 8.0, %v699
        %v701 = vsub.f32 1.0, %v700
        %v702 = vmul.f32 %v699, %v701
        %v703 = vadd.f32 %v699, %v702
        %vm704 = vweird.f32 %v699
        %v705 = vsel %vm704, %v699, %v703
        %v706 = vmul.f32 %v683, %v705
        %v707 = vmul.f32 %v686, %v705
        %v708 = vmul.f32 %v689, %v705
        %v709 = vmul.f32 %v692, %v705
        %v710 = vmul.f32 %v695, %v705
        %v711 = vmul.f32 %v698, %v705
        %v712 = vsub.f32 %v674, %v706
        %v713 = vsub.f32 %v675, %v707
        %v714 = vsub.f32 %v676, %v708
        %v715 = vsub.f32 %v677, %v709
        %v716 = vsub.f32 %v678, %v710
        %v717 = vsub.f32 %v679, %v711
        %v718 = vmul.f32 %v712, %v712
        %v719 = vmul.f32 %v713, %v713
        %v720 = vmul.f32 %v714, %v714
        %v721 = vmul.f32 %v715, %v715
        %v722 = vmul.f32 %v716, %v716
        %v723 = vmul.f32 %v717, %v717
        %v724 = vsel %vm680, %v718, 0.0
        %725 = vadd.xlane.f32.xlu0 %v724
        %v726 = vpop.xlane.xlu0 %725
        %v727 = vsel %vm680, %v719, 0.0
        %728 = vadd.xlane.f32.xlu0 %v727
        %v729 = vpop.xlane.xlu0 %728
        %v730 = vsel %vm680, %v720, 0.0
        %731 = vadd.xlane.f32.xlu0 %v730
        %v732 = vpop.xlane.xlu0 %731
        %v733 = vsel %vm680, %v721, 0.0
        %734 = vadd.xlane.f32.xlu0 %v733
        %v735 = vpop.xlane.xlu0 %734
        %v736 = vsel %vm680, %v722, 0.0
        %737 = vadd.xlane.f32.xlu0 %v736
        %v738 = vpop.xlane.xlu0 %737
        %v739 = vsel %vm680, %v723, 0.0
        %740 = vadd.xlane.f32.xlu0 %v739
        %v741 = vpop.xlane.xlu0 %740
        %v742 = vmul.f32 %v726, %v705
        %v743 = vmul.f32 %v729, %v705
        %v744 = vmul.f32 %v732, %v705
        %v745 = vmul.f32 %v735, %v705
        %v746 = vmul.f32 %v738, %v705
        %v747 = vmul.f32 %v741, %v705
        %v748 = vadd.f32 %v742, 1e-05
        %v749 = vadd.f32 %v743, 1e-05
        %v750 = vadd.f32 %v744, 1e-05
        %v751 = vadd.f32 %v745, 1e-05
        %v752 = vadd.f32 %v746, 1e-05
        %v753 = vadd.f32 %v747, 1e-05
        %v754 = vrsqrt.pop %v748
        %v755 = vmul.f32 %v754, %v748
        %v756 = vmul.f32 %v755, %v754
        %v757 = vmul.f32 0.5, %v756
        %v758 = vsub.f32 1.5, %v757
        %v759 = vmul.f32 %v754, %v758
        %vm760 = vweird.f32 %v748
        %vm761 = vweird.f32 %v754
        %vm762 = vmor %vm760, %vm761
        %v763 = vsel %vm762, %v754, %v759
        %v764 = vrsqrt.pop %v749
        %v765 = vmul.f32 %v764, %v749
        %v766 = vmul.f32 %v765, %v764
        %v767 = vmul.f32 0.5, %v766
        %v768 = vsub.f32 1.5, %v767
        %v769 = vmul.f32 %v764, %v768
        %vm770 = vweird.f32 %v749
        %vm771 = vweird.f32 %v764
        %vm772 = vmor %vm770, %vm771
        %v773 = vsel %vm772, %v764, %v769
        %v774 = vrsqrt.pop %v750
        %v775 = vmul.f32 %v774, %v750
        %v776 = vmul.f32 %v775, %v774
        %v777 = vmul.f32 0.5, %v776
        %v778 = vsub.f32 1.5, %v777
        %v779 = vmul.f32 %v774, %v778
        %vm780 = vweird.f32 %v750
        %vm781 = vweird.f32 %v774
        %vm782 = vmor %vm780, %vm781
        %v783 = vsel %vm782, %v774, %v779
        %v784 = vrsqrt.pop %v751
        %v785 = vmul.f32 %v784, %v751
        %v786 = vmul.f32 %v785, %v784
        %v787 = vmul.f32 0.5, %v786
        %v788 = vsub.f32 1.5, %v787
        %v789 = vmul.f32 %v784, %v788
        %vm790 = vweird.f32 %v751
        %vm791 = vweird.f32 %v784
        %vm792 = vmor %vm790, %vm791
        %v793 = vsel %vm792, %v784, %v789
        %v794 = vrsqrt.pop %v752
        %v795 = vmul.f32 %v794, %v752
        %v796 = vmul.f32 %v795, %v794
        %v797 = vmul.f32 0.5, %v796
        %v798 = vsub.f32 1.5, %v797
        %v799 = vmul.f32 %v794, %v798
        %vm800 = vweird.f32 %v752
        %vm801 = vweird.f32 %v794
        %vm802 = vmor %vm800, %vm801
        %v803 = vsel %vm802, %v794, %v799
        %v804 = vrsqrt.pop %v753
        %v805 = vmul.f32 %v804, %v753
        %v806 = vmul.f32 %v805, %v804
        %v807 = vmul.f32 0.5, %v806
        %v808 = vsub.f32 1.5, %v807
        %v809 = vmul.f32 %v804, %v808
        %vm810 = vweird.f32 %v753
        %vm811 = vweird.f32 %v804
        %vm812 = vmor %vm810, %vm811
        %v813 = vsel %vm812, %v804, %v809
        %v814 = vmul.f32 %v712, %v763
        %v815 = vmul.f32 %v713, %v773
        %v816 = vmul.f32 %v714, %v783
        %v817 = vmul.f32 %v715, %v793
        %v818 = vmul.f32 %v716, %v803
        %v819 = vmul.f32 %v717, %v813
        %v820 = vld [vmem:[#allocation3] sm:$0xff]
        %v821 = vld [vmem:[#allocation3 + $0x8] sm:$0xff]
        %v822 = vld [vmem:[#allocation3 + $0x10] sm:$0xff]
        %v823 = vld [vmem:[#allocation3 + $0x18] sm:$0xff]
        %v824 = vld [vmem:[#allocation3 + $0x20] sm:$0xff]
        %v825 = vld [vmem:[#allocation3 + $0x28] sm:$0xff]
        %827 = vset.pattern.permute.xlu0 0
        %828 = vperm.xlu0 %827, %v820
        %v829 = vpop.permute.xlu0 %828
        %832 = vset.pattern.permute.xlu0 0
        %833 = vperm.xlu0 %832, %v821
        %v834 = vpop.permute.xlu0 %833
        %837 = vset.pattern.permute.xlu0 0
        %838 = vperm.xlu0 %837, %v822
        %v839 = vpop.permute.xlu0 %838
        %842 = vset.pattern.permute.xlu0 0
        %843 = vperm.xlu0 %842, %v823
        %v844 = vpop.permute.xlu0 %843
        %847 = vset.pattern.permute.xlu0 0
        %848 = vperm.xlu0 %847, %v824
        %v849 = vpop.permute.xlu0 %848
        %852 = vset.pattern.permute.xlu0 0
        %853 = vperm.xlu0 %852, %v825
        %v854 = vpop.permute.xlu0 %853
        %v856 = vmul.f32 %v814, %v829
        %v857 = vmul.f32 %v815, %v834
        %v858 = vmul.f32 %v816, %v839
        %v859 = vmul.f32 %v817, %v844
        %v860 = vmul.f32 %v818, %v849
        %v861 = vmul.f32 %v819, %v854
        %v862 = vld [vmem:[#allocation5] sm:$0xff]
        %v863 = vld [vmem:[#allocation5 + $0x8] sm:$0xff]
        %v864 = vld [vmem:[#allocation5 + $0x10] sm:$0xff]
        %v865 = vld [vmem:[#allocation5 + $0x18] sm:$0xff]
        %v866 = vld [vmem:[#allocation5 + $0x20] sm:$0xff]
        %v867 = vld [vmem:[#allocation5 + $0x28] sm:$0xff]
        %869 = vset.pattern.permute.xlu0 0
        %870 = vperm.xlu0 %869, %v862
        %v871 = vpop.permute.xlu0 %870
        %874 = vset.pattern.permute.xlu0 0
        %875 = vperm.xlu0 %874, %v863
        %v876 = vpop.permute.xlu0 %875
        %879 = vset.pattern.permute.xlu0 0
        %880 = vperm.xlu0 %879, %v864
        %v881 = vpop.permute.xlu0 %880
        %884 = vset.pattern.permute.xlu0 0
        %885 = vperm.xlu0 %884, %v865
        %v886 = vpop.permute.xlu0 %885
        %889 = vset.pattern.permute.xlu0 0
        %890 = vperm.xlu0 %889, %v866
        %v891 = vpop.permute.xlu0 %890
        %894 = vset.pattern.permute.xlu0 0
        %895 = vperm.xlu0 %894, %v867
        %v896 = vpop.permute.xlu0 %895
        %v898 = vadd.f32 %v856, %v871
        %v899 = vadd.f32 %v857, %v876
        %v900 = vadd.f32 %v858, %v881
        %v901 = vadd.f32 %v859, %v886
        %v902 = vadd.f32 %v860, %v891
        %v903 = vadd.f32 %v861, %v896
        %v904 = vpack.c.bf16 %v898, %v898
        %v905 = vpack.c.bf16 %v899, %v899
        %v906 = vpack.c.bf16 %v900, %v900
        %v907 = vpack.c.bf16 %v901, %v901
        %v908 = vpack.c.bf16 %v902, %v902
        %v909 = vpack.c.bf16 %v903, %v903
        %vm910 = vcmask 60416
        %911 = vst.msk [vmem:[%s342] sm:$0xf] %vm910, %v904
        %912 = vst.msk [vmem:[%s342 + $0x4] sm:$0xf] %vm910, %v905
        %913 = vst.msk [vmem:[%s342 + $0x8] sm:$0xf] %vm910, %v906
        %914 = vst.msk [vmem:[%s342 + $0xc] sm:$0xf] %vm910, %v907
        %915 = vst.msk [vmem:[%s342 + $0x10] sm:$0xf] %vm910, %v908
        %916 = vst.msk [vmem:[%s342 + $0x14] sm:$0xf] %vm910, %v909
        %s917 = smul.u32 6, %s23
        %p918 = scmp.lt.s32.totalorder %s22, 1
        %s919 = scalar_select %p918, %s22, 1
        %p920 = scmp.lt.s32.totalorder %s917, 5
        %s921 = scalar_select %p920, %s917, 5
        %s922 = smul.addr %s919, 6
        %s923 = sadd.s32 %s921, %s922
        %s924 = smul.addr %s923, 4
        %s925 = scalar_lea.vmem %s5, %s924
        // Predicated region
        $region49: #{_lambda_.17} parent=39 // pred_check
          %p926 = pneg %p180
        $region50: #{_lambda_.17} parent=39 // pred_check_branch
          %928 = sbr.rel (%p926) target = $region52
        $region51: #{_lambda_.17} parent=39 // pred_region
          %s929 = smul.u32 6, %s23
        $region52: #{_lambda_.17} parent=39 // pred_fallthru
          _
      $region40: #{_lambda_.17} parent=5 // pred_fallthru
        _
      %p930 = scmp.le.s32.totalorder 2, %s13
      // Predicated region
      $region53: #{_lambda_.17} parent=5 // pred_check
        %p931 = pneg %p930
      $region54: #{_lambda_.17} parent=5 // pred_check_branch
        %933 = sbr.rel (%p931) target = $region56
      $region55: #{_lambda_.17} parent=5 // pred_region
        %s934 = ssub.s32 %s13, 2
        // Predicated region
        $region57: #{_lambda_.17} parent=55 // pred_check
          %p935 = pneg %p186
        $region58: #{_lambda_.17} parent=55 // pred_check_branch
          %937 = sbr.rel (%p935) target = $region60
        $region59: #{_lambda_.17} parent=55 // pred_region
          %s938 = smul.u32 6, %s25
          %p939 = scmp.lt.s32.totalorder %s24, 1
          %s940 = scalar_select %p939, %s24, 1
          %p941 = scmp.lt.s32.totalorder %s938, 5
          %s942 = scalar_select %p941, %s938, 5
          %s943 = smul.addr %s940, 6
          %s944 = sadd.s32 %s942, %s943
          %s945 = smul.addr %s944, 4
          %s946 = scalar_lea.vmem %s5, %s945
        $region60: #{_lambda_.17} parent=55 // pred_fallthru
          _
      $region56: #{_lambda_.17} parent=5 // pred_fallthru
        _
    $region6: #{_lambda_.17} parent=1 // loop_footer
      %s17 = sadd.s32 1, %s13
    $region7: #{_lambda_.17} parent=1 // loop_footer_branch
      %12 = sbr.rel target = $region3
    $region8: #{_lambda_.17} parent=1 // loop_exit
      _
    %947 = vsyncpa [#allocation4], 1
    %s948 = scalar_lea.sflag [#allocation4], 1
    %949 = vsyncpa %s948, 1
    %950 = vsyncpa [#allocation6], 1

// kernel: _lambda_.18
$region0: #{_lambda_.18}
  #allocation0 [shape = 'u32[]', space=smem, size = 0x4, offset = 0x4, fixed_abs, tag = 'smem constant byte address 0x4 - core index']
  #allocation1 [shape = 'u32[72,128]{1,0:T(1,128)}', space=vmem, size = 0x9000, scoped, tag = 'internal scratch']
  %s0 = inlined_call_operand.vmem [shape: bf16[2,48,8], index: 0, kind: input, shape index: {}]
  %s1 = inlined_call_operand.hbm [shape: bf16[48,48], index: 1, kind: input, shape index: {}]
  %s2 = inlined_call_operand.vmem [shape: f32[48,1], index: 2, kind: input, shape index: {}]
  %s3 = inlined_call_operand.hbm [shape: bf16[48,48], index: 3, kind: input, shape index: {}]
  %s4 = inlined_call_operand.vmem [shape: f32[48,1], index: 4, kind: input, shape index: {}]
  %s5 = inlined_call_operand.vmem [shape: f32[48,1], index: 5, kind: input, shape index: {}]
  %s6 = inlined_call_operand.vmem [shape: f32[48,1], index: 6, kind: input, shape index: {}]
  %s7 = inlined_call_operand.vmem [shape: bf16[2,48,8], index: 7, kind: output, shape index: {}]
  %s8 = sld [smem:[#allocation0]]
  $region69: #{_lambda_.18} parent=0
    _
  %s10 = ssub.s32 1, %s8
  %s11 = scalar_select 0, %s10, %s8
  $region1: #{_lambda_.18} parent=0
    #allocation2 [shape = 'u8[12288]{0}', space=vmem, size = 0x3000, scoped, tag = 'input window, operand 1, single buffered']
    #allocation3 [shape = 's32[2]{0}', space=sflag, size = 0x8, scoped, tag = 'scoped memory for _lambda_.18']
    #allocation4 [shape = 'u8[12288]{0}', space=vmem, size = 0x3000, scoped, tag = 'input window, operand 3, single buffered']
    #allocation5 [shape = 's32[1]{0}', space=sflag, size = 0x4, scoped, tag = 'scoped memory for _lambda_.18']
    %12 = vsyncpa [#allocation3], 0
    %13 = vsyncpa [#allocation5], 0
    loop: start=0, step=1, limit=4
    $region2: #{_lambda_.18} parent=1 // loop_pre_header
      _
    $region3: #{_lambda_.18} parent=1 // loop_header
      %s15 = sphi 0, %s19
      %p16 = scmp.ge.s32.totalorder %s15, 4
      %s22 = sphi 0, %s34
      %s23 = sphi 0, %s30
      %s24 = sphi 0, %s22
      %s25 = sphi 0, %s23
      %s26 = sphi 0, %s24
      %s27 = sphi 0, %s25
      %s39 = sphi 0, %s41
      %s42 = sphi 0, %s39
      %s43 = sphi 0, %s42
      %s59 = sphi 0, %s43
      %s63 = sphi 0, %s63
      %s65 = sphi 0, %s63
      %s66 = sphi 0, %s65
      %s80 = sphi 0, %s66
      %s84 = sphi 0, %s84
      %s86 = sphi 0, %s84
      %s87 = sphi 0, %s86
      %s101 = sphi 0, %s87
      %s105 = sphi 0, %s105
      %s107 = sphi 0, %s105
      %s108 = sphi 0, %s107
      %s122 = sphi 0, %s108
      %s126 = sphi 0, %s126
      %s128 = sphi 0, %s126
      %s129 = sphi 0, %s128
      %s143 = sphi 0, %s129
      %s147 = sphi 0, %s147
      %s149 = sphi 0, %s147
      %s150 = sphi 0, %s149
      %s164 = sphi 0, %s150
      %s168 = sphi 0, %s168
      %s170 = sphi 0, %s168
      %s171 = sphi 0, %s170
      %s185 = sphi 0, %s171
      %s193 = sphi 0, %s195
      %s196 = sphi 0, %s193
      %s197 = sphi 0, %s196
      %s213 = sphi 0, %s197
    $region4: #{_lambda_.18} parent=1 // loop_header_branch
      %18 = sbr.rel (%p16) target = $region8
    $region5: #{_lambda_.18} parent=1 // loop_body
      %s20 = ssub.s32 %s15, 1
      %s21 = ssub.s32 %s15, 2
      %s28 = sadd.s32 1, %s23
      %p29 = scmp.ge.s32.totalorder %s28, 1
      %s30 = scalar_select %p29, 0, %s28
      %s31 = sadd.s32 1, %s22
      %s32 = scalar_select %p29, %s31, %s22
      %p33 = scmp.ge.s32.totalorder %s32, 2
      %s34 = scalar_select %p33, 0, %s32
      %s35 = ssub.s32 %s22, %s34
      %s36 = ssub.s32 %s23, %s30
      %s37 = sor.u32 %s35, %s36
      %p38 = scmp.eq.s32.totalorder %s37, 0
      %s40 = sadd.s32 %s39, 1
      %s41 = scalar_select %p38, %s39, %s40
      %p44 = pneg %p38
      %p45 = scmp.eq.s32.totalorder %s15, 1
      %p46 = por %p44, %p45
      %p47 = scmp.ne.s32.totalorder %s39, %s42
      %p48 = scmp.eq.s32.totalorder %s15, 0
      %p49 = por %p47, %p48
      %p50 = scmp.ne.s32.totalorder %s39, %s42
      %p51 = scmp.eq.s32.totalorder %s20, 1
      %p52 = por %p50, %p51
      %p53 = scmp.ne.s32.totalorder %s42, %s43
      %p54 = scmp.eq.s32.totalorder %s20, 0
      %p55 = por %p53, %p54
      %p56 = scmp.ne.s32.totalorder %s42, %s43
      %p57 = scmp.eq.s32.totalorder %s21, 1
      %p58 = por %p56, %p57
      %p60 = scmp.ne.s32.totalorder %s43, %s59
      %p61 = scmp.eq.s32.totalorder %s21, 0
      %p62 = por %p60, %p61
      %s64 = sadd.s32 %s63, 1
      %p67 = scmp.eq.s32.totalorder %s15, 1
      %p68 = scmp.ne.s32.totalorder %s63, %s65
      %p69 = scmp.eq.s32.totalorder %s15, 0
      %p70 = por %p68, %p69
      %p71 = scmp.ne.s32.totalorder %s63, %s65
      %p72 = scmp.eq.s32.totalorder %s20, 1
      %p73 = por %p71, %p72
      %p74 = scmp.ne.s32.totalorder %s65, %s66
      %p75 = scmp.eq.s32.totalorder %s20, 0
      %p76 = por %p74, %p75
      %p77 = scmp.ne.s32.totalorder %s65, %s66
      %p78 = scmp.eq.s32.totalorder %s21, 1
      %p79 = por %p77, %p78
      %p81 = scmp.ne.s32.totalorder %s66, %s80
      %p82 = scmp.eq.s32.totalorder %s21, 0
      %p83 = por %p81, %p82
      %s85 = sadd.s32 %s84, 1
      %p88 = scmp.eq.s32.totalorder %s15, 1
      %p89 = scmp.ne.s32.totalorder %s84, %s86
      %p90 = scmp.eq.s32.totalorder %s15, 0
      %p91 = por %p89, %p90
      %p92 = scmp.ne.s32.totalorder %s84, %s86
      %p93 = scmp.eq.s32.totalorder %s20, 1
      %p94 = por %p92, %p93
      %p95 = scmp.ne.s32.totalorder %s86, %s87
      %p96 = scmp.eq.s32.totalorder %s20, 0
      %p97 = por %p95, %p96
      %p98 = scmp.ne.s32.totalorder %s86, %s87
      %p99 = scmp.eq.s32.totalorder %s21, 1
      %p100 = por %p98, %p99
      %p102 = scmp.ne.s32.totalorder %s87, %s101
      %p103 = scmp.eq.s32.totalorder %s21, 0
      %p104 = por %p102, %p103
      %s106 = sadd.s32 %s105, 1
      %p109 = scmp.eq.s32.totalorder %s15, 1
      %p110 = scmp.ne.s32.totalorder %s105, %s107
      %p111 = scmp.eq.s32.totalorder %s15, 0
      %p112 = por %p110, %p111
      %p113 = scmp.ne.s32.totalorder %s105, %s107
      %p114 = scmp.eq.s32.totalorder %s20, 1
      %p115 = por %p113, %p114
      %p116 = scmp.ne.s32.totalorder %s107, %s108
      %p117 = scmp.eq.s32.totalorder %s20, 0
      %p118 = por %p116, %p117
      %p119 = scmp.ne.s32.totalorder %s107, %s108
      %p120 = scmp.eq.s32.totalorder %s21, 1
      %p121 = por %p119, %p120
      %p123 = scmp.ne.s32.totalorder %s108, %s122
      %p124 = scmp.eq.s32.totalorder %s21, 0
      %p125 = por %p123, %p124
      %s127 = sadd.s32 %s126, 1
      %p130 = scmp.eq.s32.totalorder %s15, 1
      %p131 = scmp.ne.s32.totalorder %s126, %s128
      %p132 = scmp.eq.s32.totalorder %s15, 0
      %p133 = por %p131, %p132
      %p134 = scmp.ne.s32.totalorder %s126, %s128
      %p135 = scmp.eq.s32.totalorder %s20, 1
      %p136 = por %p134, %p135
      %p137 = scmp.ne.s32.totalorder %s128, %s129
      %p138 = scmp.eq.s32.totalorder %s20, 0
      %p139 = por %p137, %p138
      %p140 = scmp.ne.s32.totalorder %s128, %s129
      %p141 = scmp.eq.s32.totalorder %s21, 1
      %p142 = por %p140, %p141
      %p144 = scmp.ne.s32.totalorder %s129, %s143
      %p145 = scmp.eq.s32.totalorder %s21, 0
      %p146 = por %p144, %p145
      %s148 = sadd.s32 %s147, 1
      %p151 = scmp.eq.s32.totalorder %s15, 1
      %p152 = scmp.ne.s32.totalorder %s147, %s149
      %p153 = scmp.eq.s32.totalorder %s15, 0
      %p154 = por %p152, %p153
      %p155 = scmp.ne.s32.totalorder %s147, %s149
      %p156 = scmp.eq.s32.totalorder %s20, 1
      %p157 = por %p155, %p156
      %p158 = scmp.ne.s32.totalorder %s149, %s150
      %p159 = scmp.eq.s32.totalorder %s20, 0
      %p160 = por %p158, %p159
      %p161 = scmp.ne.s32.totalorder %s149, %s150
      %p162 = scmp.eq.s32.totalorder %s21, 1
      %p163 = por %p161, %p162
      %p165 = scmp.ne.s32.totalorder %s150, %s164
      %p166 = scmp.eq.s32.totalorder %s21, 0
      %p167 = por %p165, %p166
      %s169 = sadd.s32 %s168, 1
      %p172 = scmp.eq.s32.totalorder %s15, 1
      %p173 = scmp.ne.s32.totalorder %s168, %s170
      %p174 = scmp.eq.s32.totalorder %s15, 0
      %p175 = por %p173, %p174
      %p176 = scmp.ne.s32.totalorder %s168, %s170
      %p177 = scmp.eq.s32.totalorder %s20, 1
      %p178 = por %p176, %p177
      %p179 = scmp.ne.s32.totalorder %s170, %s171
      %p180 = scmp.eq.s32.totalorder %s20, 0
      %p181 = por %p179, %p180
      %p182 = scmp.ne.s32.totalorder %s170, %s171
      %p183 = scmp.eq.s32.totalorder %s21, 1
      %p184 = por %p182, %p183
      %p186 = scmp.ne.s32.totalorder %s171, %s185
      %p187 = scmp.eq.s32.totalorder %s21, 0
      %p188 = por %p186, %p187
      %s189 = ssub.s32 %s22, %s34
      %s190 = ssub.s32 %s23, %s30
      %s191 = sor.u32 %s189, %s190
      %p192 = scmp.eq.s32.totalorder %s191, 0
      %s194 = sadd.s32 %s193, 1
      %s195 = scalar_select %p192, %s193, %s194
      %p198 = pneg %p192
      %p199 = scmp.eq.s32.totalorder %s15, 1
      %p200 = por %p198, %p199
      %p201 = scmp.ne.s32.totalorder %s193, %s196
      %p202 = scmp.eq.s32.totalorder %s15, 0
      %p203 = por %p201, %p202
      %p204 = scmp.ne.s32.totalorder %s193, %s196
      %p205 = scmp.eq.s32.totalorder %s20, 1
      %p206 = por %p204, %p205
      %p207 = scmp.ne.s32.totalorder %s196, %s197
      %p208 = scmp.eq.s32.totalorder %s20, 0
      %p209 = por %p207, %p208
      %p210 = scmp.ne.s32.totalorder %s196, %s197
      %p211 = scmp.eq.s32.totalorder %s21, 1
      %p212 = por %p210, %p211
      %p214 = scmp.ne.s32.totalorder %s197, %s213
      %p215 = scmp.eq.s32.totalorder %s21, 0
      %p216 = por %p214, %p215
      %p217 = scmp.le.s32.totalorder 1, %s15
      %p218 = scmp.lt.s32.totalorder %s15, 3
      %p219 = pnand %p217, %p218
      %p220 = pneg %p219
      // Predicated region
      $region9: #{_lambda_.18} parent=5 // pred_check
        _
      $region10: #{_lambda_.18} parent=5 // pred_check_branch
        %222 = sbr.rel (%p219) target = $region12
      $region11: #{_lambda_.18} parent=5 // pred_region
        %s223 = ssub.s32 %s15, 1
        // Predicated region
        $region13: #{_lambda_.18} parent=11 // pred_check
          %p224 = pneg %p76
        $region14: #{_lambda_.18} parent=11 // pred_check_branch
          %226 = sbr.rel (%p224) target = $region16
        $region15: #{_lambda_.18} parent=11 // pred_region
          %228 = vsyncadd [#allocation3], 0
          %s229 = sshll.u32 %s1, 4
          %s230 = int_to_ptr.hbm [resolvable:$true] %s229
          %s231 = sshll.u32 [#allocation2], 4
          %s232 = int_to_ptr.vmem [resolvable:$true] %s231
          %237 = dma.hbm_to_vmem [thread:$0]  %s230, 384, %s232, [#allocation3], 64, 64, 4
        $region16: #{_lambda_.18} parent=11 // pred_fallthru
          _
        // Predicated region
        $region17: #{_lambda_.18} parent=11 // pred_check
          %p238 = pneg %p97
        $region18: #{_lambda_.18} parent=11 // pred_check_branch
          %240 = sbr.rel (%p238) target = $region20
        $region19: #{_lambda_.18} parent=11 // pred_region
          _
        $region20: #{_lambda_.18} parent=11 // pred_fallthru
          _
        // Predicated region
        $region21: #{_lambda_.18} parent=11 // pred_check
          %p241 = pneg %p118
        $region22: #{_lambda_.18} parent=11 // pred_check_branch
          %243 = sbr.rel (%p241) target = $region24
        $region23: #{_lambda_.18} parent=11 // pred_region
          %245 = vsyncadd [#allocation5], 0
          %s246 = sshll.u32 %s3, 4
          %s247 = int_to_ptr.hbm [resolvable:$true] %s246
          %s248 = sshll.u32 [#allocation4], 4
          %s249 = int_to_ptr.vmem [resolvable:$true] %s248
          %254 = dma.hbm_to_vmem [thread:$0]  %s247, 384, %s249, [#allocation5], 64, 64, 4
        $region24: #{_lambda_.18} parent=11 // pred_fallthru
          _
        // Predicated region
        $region25: #{_lambda_.18} parent=11 // pred_check
          %p255 = pneg %p139
        $region26: #{_lambda_.18} parent=11 // pred_check_branch
          %257 = sbr.rel (%p255) target = $region28
        $region27: #{_lambda_.18} parent=11 // pred_region
          _
        $region28: #{_lambda_.18} parent=11 // pred_fallthru
          _
        // Predicated region
        $region29: #{_lambda_.18} parent=11 // pred_check
          %p258 = pneg %p160
        $region30: #{_lambda_.18} parent=11 // pred_check_branch
          %260 = sbr.rel (%p258) target = $region32
        $region31: #{_lambda_.18} parent=11 // pred_region
          _
        $region32: #{_lambda_.18} parent=11 // pred_fallthru
          _
        // Predicated region
        $region33: #{_lambda_.18} parent=11 // pred_check
          %p261 = pneg %p181
        $region34: #{_lambda_.18} parent=11 // pred_check_branch
          %263 = sbr.rel (%p261) target = $region36
        $region35: #{_lambda_.18} parent=11 // pred_region
          _
        $region36: #{_lambda_.18} parent=11 // pred_fallthru
          _
      $region12: #{_lambda_.18} parent=5 // pred_fallthru
        _
      %p264 = scmp.lt.s32.totalorder %s15, 2
      // Predicated region
      $region37: #{_lambda_.18} parent=5 // pred_check
        %p265 = pneg %p264
      $region38: #{_lambda_.18} parent=5 // pred_check_branch
        %267 = sbr.rel (%p265) target = $region40
      $region39: #{_lambda_.18} parent=5 // pred_region
        // Predicated region
        $region41: #{_lambda_.18} parent=39 // pred_check
          %p268 = pneg %p49
        $region42: #{_lambda_.18} parent=39 // pred_check_branch
          %270 = sbr.rel (%p268) target = $region44
        $region43: #{_lambda_.18} parent=39 // pred_region
          %p271 = scmp.lt.s32.totalorder %s22, 1
          %s272 = scalar_select %p271, %s22, 1
          %p273 = scmp.lt.s32.totalorder %s23, 0
          %s274 = scalar_select %p273, %s23, 0
          %s275 = smul.addr %s272, 6
          %s276 = sadd.s32 %s274, %s275
          %s277 = smul.addr %s276, 4
          %s278 = scalar_lea.vmem %s0, %s277
        $region44: #{_lambda_.18} parent=39 // pred_fallthru
          _
      $region40: #{_lambda_.18} parent=5 // pred_fallthru
        _
      %p279 = scmp.le.s32.totalorder 1, %s15
      %p280 = scmp.lt.s32.totalorder %s15, 3
      %p281 = pnand %p279, %p280
      %p282 = pneg %p281
      // Predicated region
      $region45: #{_lambda_.18} parent=5 // pred_check
        _
      $region46: #{_lambda_.18} parent=5 // pred_check_branch
        %284 = sbr.rel (%p281) target = $region48
      $region47: #{_lambda_.18} parent=5 // pred_region
        %s285 = ssub.s32 %s15, 1
        // Predicated region
        $region49: #{_lambda_.18} parent=47 // pred_check
          %p286 = pneg %p76
        $region50: #{_lambda_.18} parent=47 // pred_check_branch
          %288 = sbr.rel (%p286) target = $region52
        $region51: #{_lambda_.18} parent=47 // pred_region
          %290 = dma.done [#allocation3], 384
        $region52: #{_lambda_.18} parent=47 // pred_fallthru
          _
        // Predicated region
        $region53: #{_lambda_.18} parent=47 // pred_check
          %p291 = pneg %p118
        $region54: #{_lambda_.18} parent=47 // pred_check_branch
          %293 = sbr.rel (%p291) target = $region56
        $region55: #{_lambda_.18} parent=47 // pred_region
          %295 = dma.done [#allocation5], 384
        $region56: #{_lambda_.18} parent=47 // pred_fallthru
          _
        %p296 = scmp.lt.s32.totalorder %s24, 1
        %s297 = scalar_select %p296, %s24, 1
        %p298 = scmp.lt.s32.totalorder %s25, 0
        %s299 = scalar_select %p298, %s25, 0
        %s300 = smul.addr %s297, 6
        %s301 = sadd.s32 %s299, %s300
        %s302 = smul.addr %s301, 4
        %s303 = scalar_lea.vmem %s0, %s302
        %p304 = pneg %p55
        %p305 = pneg %p52
        %p306 = pneg %p76
        %p307 = pneg %p73
        %p308 = pneg %p97
        %p309 = pneg %p94
        %p310 = pneg %p118
        %p311 = pneg %p115
        %p312 = pneg %p139
        %p313 = pneg %p136
        %p314 = pneg %p160
        %p315 = pneg %p157
        %p316 = pneg %p181
        %p317 = pneg %p178
        %p318 = pneg %p209
        %p319 = pneg %p206
        %p320 = scmp.lt.s32.totalorder %s24, 1
        %s321 = scalar_select %p320, %s24, 1
        %p322 = scmp.lt.s32.totalorder %s25, 0
        %s323 = scalar_select %p322, %s25, 0
        %s324 = smul.addr %s321, 6
        %s325 = sadd.s32 %s323, %s324
        %s326 = smul.addr %s325, 4
        %s327 = scalar_lea.vmem %s7, %s326
        %p328 = scmp.lt.s32.totalorder %s24, 1
        %s329 = scalar_select %p328, %s24, 1
        %p330 = scmp.lt.s32.totalorder %s25, 0
        %s331 = scalar_select %p330, %s25, 0
        %s332 = smul.addr %s329, 6
        %s333 = sadd.s32 %s331, %s332
        %s334 = smul.addr %s333, 4
        %s335 = scalar_lea.vmem %s0, %s334
        %p336 = scmp.lt.s32.totalorder %s24, 1
        %s337 = scalar_select %p336, %s24, 1
        %p338 = scmp.lt.s32.totalorder %s25, 0
        %s339 = scalar_select %p338, %s25, 0
        %s340 = smul.addr %s337, 6
        %s341 = sadd.s32 %s339, %s340
        %s342 = smul.addr %s341, 4
        %s343 = scalar_lea.vmem %s7, %s342
        %v345 = vld [vmem:[%s335] sm:$0xf]
        %v346 = vld [vmem:[%s335 + $0x4] sm:$0xf]
        %v347 = vld [vmem:[%s335 + $0x8] sm:$0xf]
        %v348 = vld [vmem:[%s335 + $0xc] sm:$0xf]
        %v349 = vld [vmem:[%s335 + $0x10] sm:$0xf]
        %v350 = vld [vmem:[%s335 + $0x14] sm:$0xf]
        %v351 = vld [vmem:[#allocation2] sm:$0xf]
        %v352 = vld [vmem:[#allocation2 + $0x4] sm:$0xf]
        %v353 = vld [vmem:[#allocation2 + $0x8] sm:$0xf]
        %v354 = vld [vmem:[#allocation2 + $0xc] sm:$0xf]
        %v355 = vld [vmem:[#allocation2 + $0x10] sm:$0xf]
        %v356 = vld [vmem:[#allocation2 + $0x14] sm:$0xf]
        %v357 = vld [vmem:[%s2] sm:$0xff]
        %v358 = vld [vmem:[%s2 + $0x8] sm:$0xff]
        %v359 = vld [vmem:[%s2 + $0x10] sm:$0xff]
        %v360 = vld [vmem:[%s2 + $0x18] sm:$0xff]
        %v361 = vld [vmem:[%s2 + $0x20] sm:$0xff]
        %v362 = vld [vmem:[%s2 + $0x28] sm:$0xff]
        %364 = vset.pattern.permute.xlu0 0
        %365 = vperm.xlu0 %364, %v357
        %v366 = vpop.permute.xlu0 %365
        %369 = vset.pattern.permute.xlu0 0
        %370 = vperm.xlu0 %369, %v358
        %v371 = vpop.permute.xlu0 %370
        %374 = vset.pattern.permute.xlu0 0
        %375 = vperm.xlu0 %374, %v359
        %v376 = vpop.permute.xlu0 %375
        %379 = vset.pattern.permute.xlu0 0
        %380 = vperm.xlu0 %379, %v360
        %v381 = vpop.permute.xlu0 %380
        %384 = vset.pattern.permute.xlu0 0
        %385 = vperm.xlu0 %384, %v361
        %v386 = vpop.permute.xlu0 %385
        %389 = vset.pattern.permute.xlu0 0
        %390 = vperm.xlu0 %389, %v362
        %v391 = vpop.permute.xlu0 %390
        %v399 = vunpack.c.l.b16 %v351
        %v400 = vunpack.c.l.b16 %v352
        %v401 = vunpack.c.l.b16 %v353
        %v402 = vunpack.c.l.b16 %v354
        %v403 = vunpack.c.l.b16 %v355
        %v404 = vunpack.c.l.b16 %v356
        %v405 = vpack.c.b16 %v400, %v399
        %v406 = vpack.c.b16 %v402, %v401
        %v407 = vpack.c.b16 %v404, %v403
        %v414 = vunpack.c.l.b16 %v345
        %v415 = vunpack.c.l.b16 %v346
        %v416 = vunpack.c.l.b16 %v347
        %v417 = vunpack.c.l.b16 %v348
        %v418 = vunpack.c.l.b16 %v349
        %v419 = vunpack.c.l.b16 %v350
        %v420 = vpack.c.b16 %v415, %v414
        %v421 = vpack.c.b16 %v417, %v416
        %v422 = vpack.c.b16 %v419, %v418
        %vm426 = vcmask 392192
        %v428 = vsel %vm426, %v405, 0
        %v431 = vsel %vm426, %v406, 0
        %v434 = vsel %vm426, %v407, 0
        %436 = vmatpush.bf16.msra.mxu0 0
        %437 = vmatpush.bf16.msra.mxu0 0
        %438 = vmatpush.bf16.msra.mxu0 0
        %439 = vmatpush.bf16.msra.mxu0 0
        %440 = vmatpush.bf16.msra.mxu0 0
        %441 = vmatpush.bf16.msra.mxu0 %v422
        %442 = vmatpush.bf16.msra.mxu0 %v421
        %443 = vmatpush.bf16.msra.mxu0 %v420
        %444 = vmatmul.bf16.gmra.mxu0 %v428
        %v445 = vpop.f32.mrf.mxu0
        %v446 = vadd.f32 %v366, %v445
        %v447 = vpop.f32.mrf.mxu0
        %v448 = vadd.f32 %v371, %v447
        %449 = vmatmul.bf16.gmra.mxu0 %v431
        %v450 = vpop.f32.mrf.mxu0
        %v451 = vadd.f32 %v376, %v450
        %v452 = vpop.f32.mrf.mxu0
        %v453 = vadd.f32 %v381, %v452
        %454 = vmatmul.bf16.gmra.mxu0 %v434
        %v455 = vpop.f32.mrf.mxu0
        %v456 = vadd.f32 %v386, %v455
        %v457 = vpop.f32.mrf.mxu0
        %v458 = vadd.f32 %v391, %v457
        %459 = vdwg.mxu0
        %v460 = vmax.f32 %v446, 0.0
        %v461 = vmax.f32 %v448, 0.0
        %v462 = vmax.f32 %v451, 0.0
        %v463 = vmax.f32 %v453, 0.0
        %v464 = vmax.f32 %v456, 0.0
        %v465 = vmax.f32 %v458, 0.0
        %v466 = vpack.c.bf16 %v461, %v460
        %v467 = vpack.c.bf16 %v463, %v462
        %v468 = vpack.c.bf16 %v465, %v464
        %v469 = vld [vmem:[#allocation4] sm:$0xf]
        %v470 = vld [vmem:[#allocation4 + $0x4] sm:$0xf]
        %v471 = vld [vmem:[#allocation4 + $0x8] sm:$0xf]
        %v472 = vld [vmem:[#allocation4 + $0xc] sm:$0xf]
        %v473 = vld [vmem:[#allocation4 + $0x10] sm:$0xf]
        %v474 = vld [vmem:[#allocation4 + $0x14] sm:$0xf]
        %v475 = vld [vmem:[%s4] sm:$0xff]
        %v476 = vld [vmem:[%s4 + $0x8] sm:$0xff]
        %v477 = vld [vmem:[%s4 + $0x10] sm:$0xff]
        %v478 = vld [vmem:[%s4 + $0x18] sm:$0xff]
        %v479 = vld [vmem:[%s4 + $0x20] sm:$0xff]
        %v480 = vld [vmem:[%s4 + $0x28] sm:$0xff]
        %482 = vset.pattern.permute.xlu0 0
        %483 = vperm.xlu0 %482, %v475
        %v484 = vpop.permute.xlu0 %483
        %487 = vset.pattern.permute.xlu0 0
        %488 = vperm.xlu0 %487, %v476
        %v489 = vpop.permute.xlu0 %488
        %492 = vset.pattern.permute.xlu0 0
        %493 = vperm.xlu0 %492, %v477
        %v494 = vpop.permute.xlu0 %493
        %497 = vset.pattern.permute.xlu0 0
        %498 = vperm.xlu0 %497, %v478
        %v499 = vpop.permute.xlu0 %498
        %502 = vset.pattern.permute.xlu0 0
        %503 = vperm.xlu0 %502, %v479
        %v504 = vpop.permute.xlu0 %503
        %507 = vset.pattern.permute.xlu0 0
        %508 = vperm.xlu0 %507, %v480
        %v509 = vpop.permute.xlu0 %508
        %v517 = vunpack.c.l.b16 %v469
        %v518 = vunpack.c.l.b16 %v470
        %v519 = vunpack.c.l.b16 %v471
        %v520 = vunpack.c.l.b16 %v472
        %v521 = vunpack.c.l.b16 %v473
        %v522 = vunpack.c.l.b16 %v474
        %v523 = vpack.c.b16 %v518, %v517
        %v524 = vpack.c.b16 %v520, %v519
        %v525 = vpack.c.b16 %v522, %v521
        %v527 = vsel %vm426, %v523, 0
        %v530 = vsel %vm426, %v524, 0
        %v533 = vsel %vm426, %v525, 0
        %535 = vmatpush.bf16.msra.mxu0 0
        %536 = vmatpush.bf16.msra.mxu0 0
        %537 = vmatpush.bf16.msra.mxu0 0
        %538 = vmatpush.bf16.msra.mxu0 0
        %539 = vmatpush.bf16.msra.mxu0 0
        %540 = vmatpush.bf16.msra.mxu0 %v468
        %541 = vmatpush.bf16.msra.mxu0 %v467
        %542 = vmatpush.bf16.msra.mxu0 %v466
        %543 = vmatmul.bf16.gmra.mxu0 %v527
        %v544 = vpop.f32.mrf.mxu0
        %v545 = vadd.f32 %v484, %v544
        %v546 = vpop.f32.mrf.mxu0
        %v547 = vadd.f32 %v489, %v546
        %548 = vmatmul.bf16.gmra.mxu0 %v530
        %v549 = vpop.f32.mrf.mxu0
        %v550 = vadd.f32 %v494, %v549
        %v551 = vpop.f32.mrf.mxu0
        %v552 = vadd.f32 %v499, %v551
        %553 = vmatmul.bf16.gmra.mxu0 %v533
        %v554 = vpop.f32.mrf.mxu0
        %v555 = vadd.f32 %v504, %v554
        %v556 = vpop.f32.mrf.mxu0
        %v557 = vadd.f32 %v509, %v556
        %558 = vdwg.mxu0
        %v559 = vunpack.c.l.bf16 %v345
        %v560 = vunpack.c.l.bf16 %v346
        %v561 = vunpack.c.l.bf16 %v347
        %v562 = vunpack.c.l.bf16 %v348
        %v563 = vunpack.c.l.bf16 %v349
        %v564 = vunpack.c.l.bf16 %v350
        %v565 = vadd.f32 %v545, %v559
        %v566 = vadd.f32 %v547, %v560
        %v567 = vadd.f32 %v550, %v561
        %v568 = vadd.f32 %v552, %v562
        %v569 = vadd.f32 %v555, %v563
        %v570 = vadd.f32 %v557, %v564
        %vm571 = vcmask 64512
        %v572 = vsel %vm571, %v565, 0.0
        %573 = vadd.xlane.f32.xlu0 %v572
        %v574 = vpop.xlane.xlu0 %573
        %v575 = vsel %vm571, %v566, 0.0
        %576 = vadd.xlane.f32.xlu0 %v575
        %v577 = vpop.xlane.xlu0 %576
        %v578 = vsel %vm571, %v567, 0.0
        %579 = vadd.xlane.f32.xlu0 %v578
        %v580 = vpop.xlane.xlu0 %579
        %v581 = vsel %vm571, %v568, 0.0
        %582 = vadd.xlane.f32.xlu0 %v581
        %v583 = vpop.xlane.xlu0 %582
        %v584 = vsel %vm571, %v569, 0.0
        %585 = vadd.xlane.f32.xlu0 %v584
        %v586 = vpop.xlane.xlu0 %585
        %v587 = vsel %vm571, %v570, 0.0
        %588 = vadd.xlane.f32.xlu0 %v587
        %v589 = vpop.xlane.xlu0 %588
        %v590 = vrcp.pop 8.0
        %v591 = vmul.f32 8.0, %v590
        %v592 = vsub.f32 1.0, %v591
        %v593 = vmul.f32 %v590, %v592
        %v594 = vadd.f32 %v590, %v593
        %vm595 = vweird.f32 %v590
        %v596 = vsel %vm595, %v590, %v594
        %v597 = vmul.f32 %v574, %v596
        %v598 = vmul.f32 %v577, %v596
        %v599 = vmul.f32 %v580, %v596
        %v600 = vmul.f32 %v583, %v596
        %v601 = vmul.f32 %v586, %v596
        %v602 = vmul.f32 %v589, %v596
        %v603 = vsub.f32 %v565, %v597
        %v604 = vsub.f32 %v566, %v598
        %v605 = vsub.f32 %v567, %v599
        %v606 = vsub.f32 %v568, %v600
        %v607 = vsub.f32 %v569, %v601
        %v608 = vsub.f32 %v570, %v602
        %v609 = vmul.f32 %v603, %v603
        %v610 = vmul.f32 %v604, %v604
        %v611 = vmul.f32 %v605, %v605
        %v612 = vmul.f32 %v606, %v606
        %v613 = vmul.f32 %v607, %v607
        %v614 = vmul.f32 %v608, %v608
        %v615 = vsel %vm571, %v609, 0.0
        %616 = vadd.xlane.f32.xlu0 %v615
        %v617 = vpop.xlane.xlu0 %616
        %v618 = vsel %vm571, %v610, 0.0
        %619 = vadd.xlane.f32.xlu0 %v618
        %v620 = vpop.xlane.xlu0 %619
        %v621 = vsel %vm571, %v611, 0.0
        %622 = vadd.xlane.f32.xlu0 %v621
        %v623 = vpop.xlane.xlu0 %622
        %v624 = vsel %vm571, %v612, 0.0
        %625 = vadd.xlane.f32.xlu0 %v624
        %v626 = vpop.xlane.xlu0 %625
        %v627 = vsel %vm571, %v613, 0.0
        %628 = vadd.xlane.f32.xlu0 %v627
        %v629 = vpop.xlane.xlu0 %628
        %v630 = vsel %vm571, %v614, 0.0
        %631 = vadd.xlane.f32.xlu0 %v630
        %v632 = vpop.xlane.xlu0 %631
        %v633 = vmul.f32 %v617, %v596
        %v634 = vmul.f32 %v620, %v596
        %v635 = vmul.f32 %v623, %v596
        %v636 = vmul.f32 %v626, %v596
        %v637 = vmul.f32 %v629, %v596
        %v638 = vmul.f32 %v632, %v596
        %v639 = vadd.f32 %v633, 1e-05
        %v640 = vadd.f32 %v634, 1e-05
        %v641 = vadd.f32 %v635, 1e-05
        %v642 = vadd.f32 %v636, 1e-05
        %v643 = vadd.f32 %v637, 1e-05
        %v644 = vadd.f32 %v638, 1e-05
        %v645 = vrsqrt.pop %v639
        %v646 = vmul.f32 %v645, %v639
        %v647 = vmul.f32 %v646, %v645
        %v648 = vmul.f32 0.5, %v647
        %v649 = vsub.f32 1.5, %v648
        %v650 = vmul.f32 %v645, %v649
        %vm651 = vweird.f32 %v639
        %vm652 = vweird.f32 %v645
        %vm653 = vmor %vm651, %vm652
        %v654 = vsel %vm653, %v645, %v650
        %v655 = vrsqrt.pop %v640
        %v656 = vmul.f32 %v655, %v640
        %v657 = vmul.f32 %v656, %v655
        %v658 = vmul.f32 0.5, %v657
        %v659 = vsub.f32 1.5, %v658
        %v660 = vmul.f32 %v655, %v659
        %vm661 = vweird.f32 %v640
        %vm662 = vweird.f32 %v655
        %vm663 = vmor %vm661, %vm662
        %v664 = vsel %vm663, %v655, %v660
        %v665 = vrsqrt.pop %v641
        %v666 = vmul.f32 %v665, %v641
        %v667 = vmul.f32 %v666, %v665
        %v668 = vmul.f32 0.5, %v667
        %v669 = vsub.f32 1.5, %v668
        %v670 = vmul.f32 %v665, %v669
        %vm671 = vweird.f32 %v641
        %vm672 = vweird.f32 %v665
        %vm673 = vmor %vm671, %vm672
        %v674 = vsel %vm673, %v665, %v670
        %v675 = vrsqrt.pop %v642
        %v676 = vmul.f32 %v675, %v642
        %v677 = vmul.f32 %v676, %v675
        %v678 = vmul.f32 0.5, %v677
        %v679 = vsub.f32 1.5, %v678
        %v680 = vmul.f32 %v675, %v679
        %vm681 = vweird.f32 %v642
        %vm682 = vweird.f32 %v675
        %vm683 = vmor %vm681, %vm682
        %v684 = vsel %vm683, %v675, %v680
        %v685 = vrsqrt.pop %v643
        %v686 = vmul.f32 %v685, %v643
        %v687 = vmul.f32 %v686, %v685
        %v688 = vmul.f32 0.5, %v687
        %v689 = vsub.f32 1.5, %v688
        %v690 = vmul.f32 %v685, %v689
        %vm691 = vweird.f32 %v643
        %vm692 = vweird.f32 %v685
        %vm693 = vmor %vm691, %vm692
        %v694 = vsel %vm693, %v685, %v690
        %v695 = vrsqrt.pop %v644
        %v696 = vmul.f32 %v695, %v644
        %v697 = vmul.f32 %v696, %v695
        %v698 = vmul.f32 0.5, %v697
        %v699 = vsub.f32 1.5, %v698
        %v700 = vmul.f32 %v695, %v699
        %vm701 = vweird.f32 %v644
        %vm702 = vweird.f32 %v695
        %vm703 = vmor %vm701, %vm702
        %v704 = vsel %vm703, %v695, %v700
        %v705 = vmul.f32 %v603, %v654
        %v706 = vmul.f32 %v604, %v664
        %v707 = vmul.f32 %v605, %v674
        %v708 = vmul.f32 %v606, %v684
        %v709 = vmul.f32 %v607, %v694
        %v710 = vmul.f32 %v608, %v704
        %v711 = vld [vmem:[%s5] sm:$0xff]
        %v712 = vld [vmem:[%s5 + $0x8] sm:$0xff]
        %v713 = vld [vmem:[%s5 + $0x10] sm:$0xff]
        %v714 = vld [vmem:[%s5 + $0x18] sm:$0xff]
        %v715 = vld [vmem:[%s5 + $0x20] sm:$0xff]
        %v716 = vld [vmem:[%s5 + $0x28] sm:$0xff]
        %718 = vset.pattern.permute.xlu0 0
        %719 = vperm.xlu0 %718, %v711
        %v720 = vpop.permute.xlu0 %719
        %723 = vset.pattern.permute.xlu0 0
        %724 = vperm.xlu0 %723, %v712
        %v725 = vpop.permute.xlu0 %724
        %728 = vset.pattern.permute.xlu0 0
        %729 = vperm.xlu0 %728, %v713
        %v730 = vpop.permute.xlu0 %729
        %733 = vset.pattern.permute.xlu0 0
        %734 = vperm.xlu0 %733, %v714
        %v735 = vpop.permute.xlu0 %734
        %738 = vset.pattern.permute.xlu0 0
        %739 = vperm.xlu0 %738, %v715
        %v740 = vpop.permute.xlu0 %739
        %743 = vset.pattern.permute.xlu0 0
        %744 = vperm.xlu0 %743, %v716
        %v745 = vpop.permute.xlu0 %744
        %v747 = vmul.f32 %v705, %v720
        %v748 = vmul.f32 %v706, %v725
        %v749 = vmul.f32 %v707, %v730
        %v750 = vmul.f32 %v708, %v735
        %v751 = vmul.f32 %v709, %v740
        %v752 = vmul.f32 %v710, %v745
        %v753 = vld [vmem:[%s6] sm:$0xff]
        %v754 = vld [vmem:[%s6 + $0x8] sm:$0xff]
        %v755 = vld [vmem:[%s6 + $0x10] sm:$0xff]
        %v756 = vld [vmem:[%s6 + $0x18] sm:$0xff]
        %v757 = vld [vmem:[%s6 + $0x20] sm:$0xff]
        %v758 = vld [vmem:[%s6 + $0x28] sm:$0xff]
        %760 = vset.pattern.permute.xlu0 0
        %761 = vperm.xlu0 %760, %v753
        %v762 = vpop.permute.xlu0 %761
        %765 = vset.pattern.permute.xlu0 0
        %766 = vperm.xlu0 %765, %v754
        %v767 = vpop.permute.xlu0 %766
        %770 = vset.pattern.permute.xlu0 0
        %771 = vperm.xlu0 %770, %v755
        %v772 = vpop.permute.xlu0 %771
        %775 = vset.pattern.permute.xlu0 0
        %776 = vperm.xlu0 %775, %v756
        %v777 = vpop.permute.xlu0 %776
        %780 = vset.pattern.permute.xlu0 0
        %781 = vperm.xlu0 %780, %v757
        %v782 = vpop.permute.xlu0 %781
        %785 = vset.pattern.permute.xlu0 0
        %786 = vperm.xlu0 %785, %v758
        %v787 = vpop.permute.xlu0 %786
        %v789 = vadd.f32 %v747, %v762
        %v790 = vadd.f32 %v748, %v767
        %v791 = vadd.f32 %v749, %v772
        %v792 = vadd.f32 %v750, %v777
        %v793 = vadd.f32 %v751, %v782
        %v794 = vadd.f32 %v752, %v787
        %v795 = vpack.c.bf16 %v789, %v789
        %v796 = vpack.c.bf16 %v790, %v790
        %v797 = vpack.c.bf16 %v791, %v791
        %v798 = vpack.c.bf16 %v792, %v792
        %v799 = vpack.c.bf16 %v793, %v793
        %v800 = vpack.c.bf16 %v794, %v794
        %vm801 = vcmask 60416
        %802 = vst.msk [vmem:[%s343] sm:$0xf] %vm801, %v795
        %803 = vst.msk [vmem:[%s343 + $0x4] sm:$0xf] %vm801, %v796
        %804 = vst.msk [vmem:[%s343 + $0x8] sm:$0xf] %vm801, %v797
        %805 = vst.msk [vmem:[%s343 + $0xc] sm:$0xf] %vm801, %v798
        %806 = vst.msk [vmem:[%s343 + $0x10] sm:$0xf] %vm801, %v799
        %807 = vst.msk [vmem:[%s343 + $0x14] sm:$0xf] %vm801, %v800
        %p808 = scmp.lt.s32.totalorder %s24, 1
        %s809 = scalar_select %p808, %s24, 1
        %p810 = scmp.lt.s32.totalorder %s25, 0
        %s811 = scalar_select %p810, %s25, 0
        %s812 = smul.addr %s809, 6
        %s813 = sadd.s32 %s811, %s812
        %s814 = smul.addr %s813, 4
        %s815 = scalar_lea.vmem %s7, %s814
        // Predicated region
        $region57: #{_lambda_.18} parent=47 // pred_check
          %p816 = pneg %p206
        $region58: #{_lambda_.18} parent=47 // pred_check_branch
          %818 = sbr.rel (%p816) target = $region60
        $region59: #{_lambda_.18} parent=47 // pred_region
          _
        $region60: #{_lambda_.18} parent=47 // pred_fallthru
          _
      $region48: #{_lambda_.18} parent=5 // pred_fallthru
        _
      %p819 = scmp.le.s32.totalorder 2, %s15
      // Predicated region
      $region61: #{_lambda_.18} parent=5 // pred_check
        %p820 = pneg %p819
      $region62: #{_lambda_.18} parent=5 // pred_check_branch
        %822 = sbr.rel (%p820) target = $region64
      $region63: #{_lambda_.18} parent=5 // pred_region
        %s823 = ssub.s32 %s15, 2
        // Predicated region
        $region65: #{_lambda_.18} parent=63 // pred_check
          %p824 = pneg %p212
        $region66: #{_lambda_.18} parent=63 // pred_check_branch
          %826 = sbr.rel (%p824) target = $region68
        $region67: #{_lambda_.18} parent=63 // pred_region
          %p827 = scmp.lt.s32.totalorder %s26, 1
          %s828 = scalar_select %p827, %s26, 1
          %p829 = scmp.lt.s32.totalorder %s27, 0
          %s830 = scalar_select %p829, %s27, 0
          %s831 = smul.addr %s828, 6
          %s832 = sadd.s32 %s830, %s831
          %s833 = smul.addr %s832, 4
          %s834 = scalar_lea.vmem %s7, %s833
        $region68: #{_lambda_.18} parent=63 // pred_fallthru
          _
      $region64: #{_lambda_.18} parent=5 // pred_fallthru
        _
    $region6: #{_lambda_.18} parent=1 // loop_footer
      %s19 = sadd.s32 1, %s15
    $region7: #{_lambda_.18} parent=1 // loop_footer_branch
      %14 = sbr.rel target = $region3
    $region8: #{_lambda_.18} parent=1 // loop_exit
      _
    %835 = vsyncpa [#allocation3], 1
    %s836 = scalar_lea.sflag [#allocation3], 1
    %837 = vsyncpa %s836, 1
    %838 = vsyncpa [#allocation5], 1

// kernel: _lambda_.19
$region0: #{_lambda_.19}
  #allocation0 [shape = 'u32[]', space=smem, size = 0x4, offset = 0x4, fixed_abs, tag = 'smem constant byte address 0x4 - core index']
  #allocation1 [shape = 'u32[72,128]{1,0:T(1,128)}', space=vmem, size = 0x9000, scoped, tag = 'internal scratch']
  #allocation2 [shape = 'bf16[48,10]{1,0:T(8,128)(2,1)}', space=vmem, size = 0x3000, scoped, tag = 'scratch operand']
  %s0 = inlined_call_operand.vmem [shape: bf16[2,48,8], index: 0, kind: input, shape index: {}]
  %s1 = inlined_call_operand.vmem [shape: bf16[3,48,48], index: 1, kind: input, shape index: {}]
  %s2 = inlined_call_operand.vmem [shape: f32[48,1], index: 2, kind: input, shape index: {}]
  %s3 = inlined_call_operand.vmem [shape: f32[48,1], index: 3, kind: input, shape index: {}]
  %s4 = inlined_call_operand.vmem [shape: f32[48,1], index: 4, kind: input, shape index: {}]
  %s5 = inlined_call_operand.vmem [shape: bf16[2,48,8], index: 5, kind: output, shape index: {}]
  %s6 = sld [smem:[#allocation0]]
  $region53: #{_lambda_.19} parent=0
    _
  %s8 = ssub.s32 1, %s6
  %s9 = scalar_select 0, %s8, %s6
  loop: start=0, step=1, limit=4
  $region2: #{_lambda_.19} parent=0 // loop_pre_header
    _
  $region3: #{_lambda_.19} parent=0 // loop_header
    %s11 = sphi 0, %s15
    %p12 = scmp.ge.s32.totalorder %s11, 4
    %s18 = sphi 0, %s30
    %s19 = sphi 0, %s26
    %s20 = sphi 0, %s18
    %s21 = sphi 0, %s19
    %s22 = sphi 0, %s20
    %s23 = sphi 0, %s21
    %s33 = sphi 0, %s35
    %s36 = sphi 0, %s33
    %s37 = sphi 0, %s36
    %s53 = sphi 0, %s37
    %s59 = sphi 0, %s61
    %s62 = sphi 0, %s59
    %s63 = sphi 0, %s62
    %s79 = sphi 0, %s63
    %s85 = sphi 0, %s87
    %s88 = sphi 0, %s85
    %s89 = sphi 0, %s88
    %s105 = sphi 0, %s89
    %s111 = sphi 0, %s113
    %s114 = sphi 0, %s111
    %s115 = sphi 0, %s114
    %s131 = sphi 0, %s115
    %s137 = sphi 0, %s139
    %s140 = sphi 0, %s137
    %s141 = sphi 0, %s140
    %s157 = sphi 0, %s141
    %s165 = sphi 0, %s167
    %s168 = sphi 0, %s165
    %s169 = sphi 0, %s168
    %s185 = sphi 0, %s169
  $region4: #{_lambda_.19} parent=0 // loop_header_branch
    %14 = sbr.rel (%p12) target = $region8
  $region5: #{_lambda_.19} parent=0 // loop_body
    %s16 = ssub.s32 %s11, 1
    %s17 = ssub.s32 %s11, 2
    %s24 = sadd.s32 1, %s19
    %p25 = scmp.ge.s32.totalorder %s24, 1
    %s26 = scalar_select %p25, 0, %s24
    %s27 = sadd.s32 1, %s18
    %s28 = scalar_select %p25, %s27, %s18
    %p29 = scmp.ge.s32.totalorder %s28, 2
    %s30 = scalar_select %p29, 0, %s28
    %s31 = ssub.s32 %s18, %s30
    %p32 = scmp.eq.s32.totalorder %s31, 0
    %s34 = sadd.s32 %s33, 1
    %s35 = scalar_select %p32, %s33, %s34
    %p38 = pneg %p32
    %p39 = scmp.eq.s32.totalorder %s11, 1
    %p40 = por %p38, %p39
    %p41 = scmp.ne.s32.totalorder %s33, %s36
    %p42 = scmp.eq.s32.totalorder %s11, 0
    %p43 = por %p41, %p42
    %p44 = scmp.ne.s32.totalorder %s33, %s36
    %p45 = scmp.eq.s32.totalorder %s16, 1
    %p46 = por %p44, %p45
    %p47 = scmp.ne.s32.totalorder %s36, %s37
    %p48 = scmp.eq.s32.totalorder %s16, 0
    %p49 = por %p47, %p48
    %p50 = scmp.ne.s32.totalorder %s36, %s37
    %p51 = scmp.eq.s32.totalorder %s17, 1
    %p52 = por %p50, %p51
    %p54 = scmp.ne.s32.totalorder %s37, %s53
    %p55 = scmp.eq.s32.totalorder %s17, 0
    %p56 = por %p54, %p55
    %s57 = ssub.s32 %s19, %s26
    %p58 = scmp.eq.s32.totalorder %s57, 0
    %s60 = sadd.s32 %s59, 1
    %s61 = scalar_select %p58, %s59, %s60
    %p64 = pneg %p58
    %p65 = scmp.eq.s32.totalorder %s11, 1
    %p66 = por %p64, %p65
    %p67 = scmp.ne.s32.totalorder %s59, %s62
    %p68 = scmp.eq.s32.totalorder %s11, 0
    %p69 = por %p67, %p68
    %p70 = scmp.ne.s32.totalorder %s59, %s62
    %p71 = scmp.eq.s32.totalorder %s16, 1
    %p72 = por %p70, %p71
    %p73 = scmp.ne.s32.totalorder %s62, %s63
    %p74 = scmp.eq.s32.totalorder %s16, 0
    %p75 = por %p73, %p74
    %p76 = scmp.ne.s32.totalorder %s62, %s63
    %p77 = scmp.eq.s32.totalorder %s17, 1
    %p78 = por %p76, %p77
    %p80 = scmp.ne.s32.totalorder %s63, %s79
    %p81 = scmp.eq.s32.totalorder %s17, 0
    %p82 = por %p80, %p81
    %s83 = ssub.s32 %s19, %s26
    %p84 = scmp.eq.s32.totalorder %s83, 0
    %s86 = sadd.s32 %s85, 1
    %s87 = scalar_select %p84, %s85, %s86
    %p90 = pneg %p84
    %p91 = scmp.eq.s32.totalorder %s11, 1
    %p92 = por %p90, %p91
    %p93 = scmp.ne.s32.totalorder %s85, %s88
    %p94 = scmp.eq.s32.totalorder %s11, 0
    %p95 = por %p93, %p94
    %p96 = scmp.ne.s32.totalorder %s85, %s88
    %p97 = scmp.eq.s32.totalorder %s16, 1
    %p98 = por %p96, %p97
    %p99 = scmp.ne.s32.totalorder %s88, %s89
    %p100 = scmp.eq.s32.totalorder %s16, 0
    %p101 = por %p99, %p100
    %p102 = scmp.ne.s32.totalorder %s88, %s89
    %p103 = scmp.eq.s32.totalorder %s17, 1
    %p104 = por %p102, %p103
    %p106 = scmp.ne.s32.totalorder %s89, %s105
    %p107 = scmp.eq.s32.totalorder %s17, 0
    %p108 = por %p106, %p107
    %s109 = ssub.s32 %s19, %s26
    %p110 = scmp.eq.s32.totalorder %s109, 0
    %s112 = sadd.s32 %s111, 1
    %s113 = scalar_select %p110, %s111, %s112
    %p116 = pneg %p110
    %p117 = scmp.eq.s32.totalorder %s11, 1
    %p118 = por %p116, %p117
    %p119 = scmp.ne.s32.totalorder %s111, %s114
    %p120 = scmp.eq.s32.totalorder %s11, 0
    %p121 = por %p119, %p120
    %p122 = scmp.ne.s32.totalorder %s111, %s114
    %p123 = scmp.eq.s32.totalorder %s16, 1
    %p124 = por %p122, %p123
    %p125 = scmp.ne.s32.totalorder %s114, %s115
    %p126 = scmp.eq.s32.totalorder %s16, 0
    %p127 = por %p125, %p126
    %p128 = scmp.ne.s32.totalorder %s114, %s115
    %p129 = scmp.eq.s32.totalorder %s17, 1
    %p130 = por %p128, %p129
    %p132 = scmp.ne.s32.totalorder %s115, %s131
    %p133 = scmp.eq.s32.totalorder %s17, 0
    %p134 = por %p132, %p133
    %s135 = ssub.s32 %s19, %s26
    %p136 = scmp.eq.s32.totalorder %s135, 0
    %s138 = sadd.s32 %s137, 1
    %s139 = scalar_select %p136, %s137, %s138
    %p142 = pneg %p136
    %p143 = scmp.eq.s32.totalorder %s11, 1
    %p144 = por %p142, %p143
    %p145 = scmp.ne.s32.totalorder %s137, %s140
    %p146 = scmp.eq.s32.totalorder %s11, 0
    %p147 = por %p145, %p146
    %p148 = scmp.ne.s32.totalorder %s137, %s140
    %p149 = scmp.eq.s32.totalorder %s16, 1
    %p150 = por %p148, %p149
    %p151 = scmp.ne.s32.totalorder %s140, %s141
    %p152 = scmp.eq.s32.totalorder %s16, 0
    %p153 = por %p151, %p152
    %p154 = scmp.ne.s32.totalorder %s140, %s141
    %p155 = scmp.eq.s32.totalorder %s17, 1
    %p156 = por %p154, %p155
    %p158 = scmp.ne.s32.totalorder %s141, %s157
    %p159 = scmp.eq.s32.totalorder %s17, 0
    %p160 = por %p158, %p159
    %s161 = ssub.s32 %s18, %s30
    %s162 = ssub.s32 %s19, %s26
    %s163 = sor.u32 %s161, %s162
    %p164 = scmp.eq.s32.totalorder %s163, 0
    %s166 = sadd.s32 %s165, 1
    %s167 = scalar_select %p164, %s165, %s166
    %p170 = pneg %p164
    %p171 = scmp.eq.s32.totalorder %s11, 1
    %p172 = por %p170, %p171
    %p173 = scmp.ne.s32.totalorder %s165, %s168
    %p174 = scmp.eq.s32.totalorder %s11, 0
    %p175 = por %p173, %p174
    %p176 = scmp.ne.s32.totalorder %s165, %s168
    %p177 = scmp.eq.s32.totalorder %s16, 1
    %p178 = por %p176, %p177
    %p179 = scmp.ne.s32.totalorder %s168, %s169
    %p180 = scmp.eq.s32.totalorder %s16, 0
    %p181 = por %p179, %p180
    %p182 = scmp.ne.s32.totalorder %s168, %s169
    %p183 = scmp.eq.s32.totalorder %s17, 1
    %p184 = por %p182, %p183
    %p186 = scmp.ne.s32.totalorder %s169, %s185
    %p187 = scmp.eq.s32.totalorder %s17, 0
    %p188 = por %p186, %p187
    %p189 = scmp.le.s32.totalorder 1, %s11
    %p190 = scmp.lt.s32.totalorder %s11, 3
    %p191 = pnand %p189, %p190
    %p192 = pneg %p191
    // Predicated region
    $region9: #{_lambda_.19} parent=5 // pred_check
      _
    $region10: #{_lambda_.19} parent=5 // pred_check_branch
      %194 = sbr.rel (%p191) target = $region12
    $region11: #{_lambda_.19} parent=5 // pred_region
      %s195 = ssub.s32 %s11, 1
      // Predicated region
      $region13: #{_lambda_.19} parent=11 // pred_check
        %p196 = pneg %p75
      $region14: #{_lambda_.19} parent=11 // pred_check_branch
        %198 = sbr.rel (%p196) target = $region16
      $region15: #{_lambda_.19} parent=11 // pred_region
        %s199 = smul.u32 6, %s21
        %p200 = scmp.lt.s32.totalorder %s199, 5
        %s201 = scalar_select %p200, %s199, 5
        %s202 = smul.addr %s201, 4
        %s203 = scalar_lea.vmem %s1, %s202
        %s204 = smul.u32 6, %s21
      $region16: #{_lambda_.19} parent=11 // pred_fallthru
        _
      // Predicated region
      $region17: #{_lambda_.19} parent=11 // pred_check
        %p205 = pneg %p101
      $region18: #{_lambda_.19} parent=11 // pred_check_branch
        %207 = sbr.rel (%p205) target = $region20
      $region19: #{_lambda_.19} parent=11 // pred_region
        %s208 = smul.u32 6, %s21
        %p209 = scmp.lt.s32.totalorder %s208, 5
        %s210 = scalar_select %p209, %s208, 5
        %s211 = smul.addr %s210, 8
        %s212 = scalar_lea.vmem %s2, %s211
        %s213 = smul.u32 6, %s21
      $region20: #{_lambda_.19} parent=11 // pred_fallthru
        _
      // Predicated region
      $region21: #{_lambda_.19} parent=11 // pred_check
        %p214 = pneg %p127
      $region22: #{_lambda_.19} parent=11 // pred_check_branch
        %216 = sbr.rel (%p214) target = $region24
      $region23: #{_lambda_.19} parent=11 // pred_region
        %s217 = smul.u32 6, %s21
        %p218 = scmp.lt.s32.totalorder %s217, 5
        %s219 = scalar_select %p218, %s217, 5
        %s220 = smul.addr %s219, 8
        %s221 = scalar_lea.vmem %s3, %s220
        %s222 = smul.u32 6, %s21
      $region24: #{_lambda_.19} parent=11 // pred_fallthru
        _
      // Predicated region
      $region25: #{_lambda_.19} parent=11 // pred_check
        %p223 = pneg %p153
      $region26: #{_lambda_.19} parent=11 // pred_check_branch
        %225 = sbr.rel (%p223) target = $region28
      $region27: #{_lambda_.19} parent=11 // pred_region
        %s226 = smul.u32 6, %s21
        %p227 = scmp.lt.s32.totalorder %s226, 5
        %s228 = scalar_select %p227, %s226, 5
        %s229 = smul.addr %s228, 8
        %s230 = scalar_lea.vmem %s4, %s229
        %s231 = smul.u32 6, %s21
      $region28: #{_lambda_.19} parent=11 // pred_fallthru
        _
    $region12: #{_lambda_.19} parent=5 // pred_fallthru
      _
    %p232 = scmp.lt.s32.totalorder %s11, 2
    // Predicated region
    $region29: #{_lambda_.19} parent=5 // pred_check
      %p233 = pneg %p232
    $region30: #{_lambda_.19} parent=5 // pred_check_branch
      %235 = sbr.rel (%p233) target = $region32
    $region31: #{_lambda_.19} parent=5 // pred_region
      // Predicated region
      $region33: #{_lambda_.19} parent=31 // pred_check
        %p236 = pneg %p43
      $region34: #{_lambda_.19} parent=31 // pred_check_branch
        %238 = sbr.rel (%p236) target = $region36
      $region35: #{_lambda_.19} parent=31 // pred_region
        %p239 = scmp.lt.s32.totalorder %s18, 1
        %s240 = scalar_select %p239, %s18, 1
        %s241 = smul.addr %s240, 6
        %s242 = smul.addr %s241, 4
        %s243 = scalar_lea.vmem %s0, %s242
      $region36: #{_lambda_.19} parent=31 // pred_fallthru
        _
    $region32: #{_lambda_.19} parent=5 // pred_fallthru
      _
    %p244 = scmp.le.s32.totalorder 1, %s11
    %p245 = scmp.lt.s32.totalorder %s11, 3
    %p246 = pnand %p244, %p245
    %p247 = pneg %p246
    // Predicated region
    $region37: #{_lambda_.19} parent=5 // pred_check
      _
    $region38: #{_lambda_.19} parent=5 // pred_check_branch
      %249 = sbr.rel (%p246) target = $region40
    $region39: #{_lambda_.19} parent=5 // pred_region
      %s250 = ssub.s32 %s11, 1
      %p251 = scmp.lt.s32.totalorder %s20, 1
      %s252 = scalar_select %p251, %s20, 1
      %s253 = smul.addr %s252, 6
      %s254 = smul.addr %s253, 4
      %s255 = scalar_lea.vmem %s0, %s254
      %p256 = pneg %p49
      %p257 = pneg %p46
      %s258 = smul.u32 6, %s21
      %p259 = scmp.lt.s32.totalorder %s258, 5
      %s260 = scalar_select %p259, %s258, 5
      %s261 = smul.addr %s260, 4
      %s262 = scalar_lea.vmem %s1, %s261
      %p263 = pneg %p75
      %p264 = pneg %p72
      %s265 = smul.u32 6, %s21
      %p266 = scmp.lt.s32.totalorder %s265, 5
      %s267 = scalar_select %p266, %s265, 5
      %s268 = smul.addr %s267, 8
      %s269 = scalar_lea.vmem %s2, %s268
      %p270 = pneg %p101
      %p271 = pneg %p98
      %s272 = smul.u32 6, %s21
      %p273 = scmp.lt.s32.totalorder %s272, 5
      %s274 = scalar_select %p273, %s272, 5
      %s275 = smul.addr %s274, 8
      %s276 = scalar_lea.vmem %s3, %s275
      %p277 = pneg %p127
      %p278 = pneg %p124
      %s279 = smul.u32 6, %s21
      %p280 = scmp.lt.s32.totalorder %s279, 5
      %s281 = scalar_select %p280, %s279, 5
      %s282 = smul.addr %s281, 8
      %s283 = scalar_lea.vmem %s4, %s282
      %p284 = pneg %p153
      %p285 = pneg %p150
      %p286 = pneg %p181
      %p287 = pneg %p178
      %s288 = smul.u32 6, %s21
      %p289 = scmp.lt.s32.totalorder %s20, 1
      %s290 = scalar_select %p289, %s20, 1
      %p291 = scmp.lt.s32.totalorder %s288, 5
      %s292 = scalar_select %p291, %s288, 5
      %s293 = smul.addr %s290, 6
      %s294 = sadd.s32 %s292, %s293
      %s295 = smul.addr %s294, 4
      %s296 = scalar_lea.vmem %s5, %s295
      %p297 = scmp.lt.s32.totalorder %s20, 1
      %s298 = scalar_select %p297, %s20, 1
      %s299 = smul.addr %s298, 6
      %s300 = smul.addr %s299, 4
      %s301 = scalar_lea.vmem %s0, %s300
      %s302 = smul.u32 6, %s21
      %p303 = scmp.lt.s32.totalorder %s302, 5
      %s304 = scalar_select %p303, %s302, 5
      %s305 = smul.addr %s304, 4
      %s306 = scalar_lea.vmem %s1, %s305
      %s307 = smul.u32 6, %s21
      %s308 = smul.u32 6, %s21
      %p309 = scmp.lt.s32.totalorder %s308, 5
      %s310 = scalar_select %p309, %s308, 5
      %s311 = smul.addr %s310, 8
      %s312 = scalar_lea.vmem %s2, %s311
      %s313 = smul.u32 6, %s21
      %s314 = smul.u32 6, %s21
      %p315 = scmp.lt.s32.totalorder %s314, 5
      %s316 = scalar_select %p315, %s314, 5
      %s317 = smul.addr %s316, 8
      %s318 = scalar_lea.vmem %s3, %s317
      %s319 = smul.u32 6, %s21
      %s320 = smul.u32 6, %s21
      %p321 = scmp.lt.s32.totalorder %s320, 5
      %s322 = scalar_select %p321, %s320, 5
      %s323 = smul.addr %s322, 8
      %s324 = scalar_lea.vmem %s4, %s323
      %s325 = smul.u32 6, %s21
      %s326 = smul.u32 6, %s21
      %p327 = scmp.lt.s32.totalorder %s20, 1
      %s328 = scalar_select %p327, %s20, 1
      %p329 = scmp.lt.s32.totalorder %s326, 5
      %s330 = scalar_select %p329, %s326, 5
      %s331 = smul.addr %s328, 6
      %s332 = sadd.s32 %s330, %s331
      %s333 = smul.addr %s332, 4
      %s334 = scalar_lea.vmem %s5, %s333
      %s335 = smul.u32 6, %s21
      %v337 = vld [vmem:[%s301] sm:$0xf]
      %v338 = vld [vmem:[%s301 + $0x4] sm:$0xf]
      %v339 = vld [vmem:[%s301 + $0x8] sm:$0xf]
      %v340 = vld [vmem:[%s301 + $0xc] sm:$0xf]
      %v341 = vld [vmem:[%s301 + $0x10] sm:$0xf]
      %v342 = vld [vmem:[%s301 + $0x14] sm:$0xf]
      %vm343 = vcmask 3072
      %344 = vst.msk [vmem:[#allocation2] sm:$0xf] %vm343, 0
      %345 = vst.msk [vmem:[#allocation2 + $0x4] sm:$0xf] %vm343, 0
      %346 = vst.msk [vmem:[#allocation2 + $0x8] sm:$0xf] %vm343, 0
      %347 = vst.msk [vmem:[#allocation2 + $0xc] sm:$0xf] %vm343, 0
      %348 = vst.msk [vmem:[#allocation2 + $0x10] sm:$0xf] %vm343, 0
      %349 = vst.msk [vmem:[#allocation2 + $0x14] sm:$0xf] %vm343, 0
      %vm350 = vcmask 76872
      %351 = vst.msk [vmem:[#allocation2] sm:$0xf] %vm350, 0
      %352 = vst.msk [vmem:[#allocation2 + $0x4] sm:$0xf] %vm350, 0
      %353 = vst.msk [vmem:[#allocation2 + $0x8] sm:$0xf] %vm350, 0
      %354 = vst.msk [vmem:[#allocation2 + $0xc] sm:$0xf] %vm350, 0
      %355 = vst.msk [vmem:[#allocation2 + $0x10] sm:$0xf] %vm350, 0
      %356 = vst.msk [vmem:[#allocation2 + $0x14] sm:$0xf] %vm350, 0
      %363 = vrot.lane.b32.xlu0 %v337, 1
      %v364 = vpop.permute.xlu0 %363
      %365 = vrot.lane.b32.xlu0 %v338, 1
      %v366 = vpop.permute.xlu0 %365
      %367 = vrot.lane.b32.xlu0 %v339, 1
      %v368 = vpop.permute.xlu0 %367
      %369 = vrot.lane.b32.xlu0 %v340, 1
      %v370 = vpop.permute.xlu0 %369
      %371 = vrot.lane.b32.xlu0 %v341, 1
      %v372 = vpop.permute.xlu0 %371
      %373 = vrot.lane.b32.xlu0 %v342, 1
      %v374 = vpop.permute.xlu0 %373
      %vm381 = vcmask 68616
      %382 = vst.msk [vmem:[#allocation2] sm:$0xf] %vm381, %v364
      %383 = vst.msk [vmem:[#allocation2 + $0x4] sm:$0xf] %vm381, %v366
      %384 = vst.msk [vmem:[#allocation2 + $0x8] sm:$0xf] %vm381, %v368
      %385 = vst.msk [vmem:[#allocation2 + $0xc] sm:$0xf] %vm381, %v370
      %386 = vst.msk [vmem:[#allocation2 + $0x10] sm:$0xf] %vm381, %v372
      %387 = vst.msk [vmem:[#allocation2 + $0x14] sm:$0xf] %vm381, %v374
      %v388 = vld [vmem:[%s306] sm:$0xf]
      %v389 = vld [vmem:[%s306 + $0x4] sm:$0xf]
      %v390 = vld [vmem:[%s306 + $0x8] sm:$0xf]
      %v391 = vld [vmem:[%s306 + $0xc] sm:$0xf]
      %v392 = vld [vmem:[%s306 + $0x10] sm:$0xf]
      %v393 = vld [vmem:[%s306 + $0x14] sm:$0xf]
      %v394 = vld [vmem:[#allocation2] sm:$0xf]
      %v395 = vld [vmem:[#allocation2 + $0x4] sm:$0xf]
      %v396 = vld [vmem:[#allocation2 + $0x8] sm:$0xf]
      %v397 = vld [vmem:[#allocation2 + $0xc] sm:$0xf]
      %v398 = vld [vmem:[#allocation2 + $0x10] sm:$0xf]
      %v399 = vld [vmem:[#allocation2 + $0x14] sm:$0xf]
      %s400 = scalar_lea.vmem %s306, 24
      %v401 = vld [vmem:[%s400] sm:$0xf]
      %v402 = vld [vmem:[%s400 + $0x4] sm:$0xf]
      %v403 = vld [vmem:[%s400 + $0x8] sm:$0xf]
      %v404 = vld [vmem:[%s400 + $0xc] sm:$0xf]
      %v405 = vld [vmem:[%s400 + $0x10] sm:$0xf]
      %v406 = vld [vmem:[%s400 + $0x14] sm:$0xf]
      %v413 = vunpack.c.l.b16 %v401
      %v414 = vunpack.c.l.b16 %v402
      %v415 = vunpack.c.l.b16 %v403
      %v416 = vunpack.c.l.b16 %v404
      %v417 = vunpack.c.l.b16 %v405
      %v418 = vunpack.c.l.b16 %v406
      %v419 = vpack.c.b16 %v414, %v413
      %v420 = vpack.c.b16 %v416, %v415
      %v421 = vpack.c.b16 %v418, %v417
      %v428 = vunpack.c.l.b16 %v394
      %v429 = vunpack.c.l.b16 %v395
      %v430 = vunpack.c.l.b16 %v396
      %v431 = vunpack.c.l.b16 %v397
      %v432 = vunpack.c.l.b16 %v398
      %v433 = vunpack.c.l.b16 %v399
      %v434 = vpack.c.b16 %v429, %v428
      %v435 = vpack.c.b16 %v431, %v430
      %v436 = vpack.c.b16 %v433, %v432
      %437 = vrot.lane.b32.xlu0 %v434, 127
      %v438 = vpop.permute.xlu0 %437
      %439 = vrot.lane.b32.xlu0 %v435, 127
      %v440 = vpop.permute.xlu0 %439
      %441 = vrot.lane.b32.xlu0 %v436, 127
      %v442 = vpop.permute.xlu0 %441
      %vm446 = vcmask 392192
      %v448 = vsel %vm446, %v419, 0
      %v451 = vsel %vm446, %v420, 0
      %v454 = vsel %vm446, %v421, 0
      %456 = vmatpush.bf16.msra.mxu0 0
      %457 = vmatpush.bf16.msra.mxu0 0
      %458 = vmatpush.bf16.msra.mxu0 0
      %459 = vmatpush.bf16.msra.mxu0 0
      %460 = vmatpush.bf16.msra.mxu0 0
      %461 = vmatpush.bf16.msra.mxu0 %v442
      %462 = vmatpush.bf16.msra.mxu0 %v440
      %463 = vmatpush.bf16.msra.mxu0 %v438
      %464 = vmatmul.bf16.gmra.mxu0 %v448
      %v465 = vpop.f32.mrf.mxu0
      %v466 = vadd.f32 0.0, %v465
      %v467 = vpop.f32.mrf.mxu0
      %v468 = vadd.f32 0.0, %v467
      %469 = vmatmul.bf16.gmra.mxu0 %v451
      %v470 = vpop.f32.mrf.mxu0
      %v471 = vadd.f32 0.0, %v470
      %v472 = vpop.f32.mrf.mxu0
      %v473 = vadd.f32 0.0, %v472
      %474 = vmatmul.bf16.gmra.mxu0 %v454
      %v475 = vpop.f32.mrf.mxu0
      %v476 = vadd.f32 0.0, %v475
      %v477 = vpop.f32.mrf.mxu0
      %v478 = vadd.f32 0.0, %v477
      %479 = vdwg.mxu0
      %v486 = vunpack.c.l.b16 %v388
      %v487 = vunpack.c.l.b16 %v389
      %v488 = vunpack.c.l.b16 %v390
      %v489 = vunpack.c.l.b16 %v391
      %v490 = vunpack.c.l.b16 %v392
      %v491 = vunpack.c.l.b16 %v393
      %v492 = vpack.c.b16 %v487, %v486
      %v493 = vpack.c.b16 %v489, %v488
      %v494 = vpack.c.b16 %v491, %v490
      %v499 = vsel %vm446, %v492, 0
      %v502 = vsel %vm446, %v493, 0
      %v505 = vsel %vm446, %v494, 0
      %507 = vmatpush.bf16.msra.mxu0 0
      %508 = vmatpush.bf16.msra.mxu0 0
      %509 = vmatpush.bf16.msra.mxu0 0
      %510 = vmatpush.bf16.msra.mxu0 0
      %511 = vmatpush.bf16.msra.mxu0 0
      %512 = vmatpush.bf16.msra.mxu0 %v436
      %513 = vmatpush.bf16.msra.mxu0 %v435
      %514 = vmatpush.bf16.msra.mxu0 %v434
      %515 = vmatmul.bf16.gmra.mxu0 %v499
      %v516 = vpop.f32.mrf.mxu0
      %v517 = vadd.f32 %v466, %v516
      %v518 = vpop.f32.mrf.mxu0
      %v519 = vadd.f32 %v468, %v518
      %520 = vmatmul.bf16.gmra.mxu0 %v502
      %v521 = vpop.f32.mrf.mxu0
      %v522 = vadd.f32 %v471, %v521
      %v523 = vpop.f32.mrf.mxu0
      %v524 = vadd.f32 %v473, %v523
      %525 = vmatmul.bf16.gmra.mxu0 %v505
      %v526 = vpop.f32.mrf.mxu0
      %v527 = vadd.f32 %v476, %v526
      %v528 = vpop.f32.mrf.mxu0
      %v529 = vadd.f32 %v478, %v528
      %530 = vdwg.mxu0
      %s531 = scalar_lea.vmem %s306, 48
      %v532 = vld [vmem:[%s531] sm:$0xf]
      %v533 = vld [vmem:[%s531 + $0x4] sm:$0xf]
      %v534 = vld [vmem:[%s531 + $0x8] sm:$0xf]
      %v535 = vld [vmem:[%s531 + $0xc] sm:$0xf]
      %v536 = vld [vmem:[%s531 + $0x10] sm:$0xf]
      %v537 = vld [vmem:[%s531 + $0x14] sm:$0xf]
      %v544 = vunpack.c.l.b16 %v532
      %v545 = vunpack.c.l.b16 %v533
      %v546 = vunpack.c.l.b16 %v534
      %v547 = vunpack.c.l.b16 %v535
      %v548 = vunpack.c.l.b16 %v536
      %v549 = vunpack.c.l.b16 %v537
      %v550 = vpack.c.b16 %v545, %v544
      %v551 = vpack.c.b16 %v547, %v546
      %v552 = vpack.c.b16 %v549, %v548
      %553 = vrot.lane.b32.xlu0 %v434, 126
      %v554 = vpop.permute.xlu0 %553
      %555 = vrot.lane.b32.xlu0 %v435, 126
      %v556 = vpop.permute.xlu0 %555
      %557 = vrot.lane.b32.xlu0 %v436, 126
      %v558 = vpop.permute.xlu0 %557
      %v563 = vsel %vm446, %v550, 0
      %v566 = vsel %vm446, %v551, 0
      %v569 = vsel %vm446, %v552, 0
      %571 = vmatpush.bf16.msra.mxu0 0
      %572 = vmatpush.bf16.msra.mxu0 0
      %573 = vmatpush.bf16.msra.mxu0 0
      %574 = vmatpush.bf16.msra.mxu0 0
      %575 = vmatpush.bf16.msra.mxu0 0
      %576 = vmatpush.bf16.msra.mxu0 %v558
      %577 = vmatpush.bf16.msra.mxu0 %v556
      %578 = vmatpush.bf16.msra.mxu0 %v554
      %579 = vmatmul.bf16.gmra.mxu0 %v563
      %v580 = vpop.f32.mrf.mxu0
      %v581 = vadd.f32 0.0, %v580
      %v582 = vpop.f32.mrf.mxu0
      %v583 = vadd.f32 0.0, %v582
      %584 = vmatmul.bf16.gmra.mxu0 %v566
      %v585 = vpop.f32.mrf.mxu0
      %v586 = vadd.f32 0.0, %v585
      %v587 = vpop.f32.mrf.mxu0
      %v588 = vadd.f32 0.0, %v587
      %589 = vmatmul.bf16.gmra.mxu0 %v569
      %v590 = vpop.f32.mrf.mxu0
      %v591 = vadd.f32 0.0, %v590
      %v592 = vpop.f32.mrf.mxu0
      %v593 = vadd.f32 0.0, %v592
      %594 = vdwg.mxu0
      %v595 = vadd.f32 %v517, %v581
      %v596 = vadd.f32 %v519, %v583
      %v597 = vadd.f32 %v522, %v586
      %v598 = vadd.f32 %v524, %v588
      %v599 = vadd.f32 %v527, %v591
      %v600 = vadd.f32 %v529, %v593
      %v601 = vld [vmem:[%s312] sm:$0xff]
      %v602 = vld [vmem:[%s312 + $0x8] sm:$0xff]
      %v603 = vld [vmem:[%s312 + $0x10] sm:$0xff]
      %v604 = vld [vmem:[%s312 + $0x18] sm:$0xff]
      %v605 = vld [vmem:[%s312 + $0x20] sm:$0xff]
      %v606 = vld [vmem:[%s312 + $0x28] sm:$0xff]
      %608 = vset.pattern.permute.xlu0 0
      %609 = vperm.xlu0 %608, %v601
      %v610 = vpop.permute.xlu0 %609
      %613 = vset.pattern.permute.xlu0 0
      %614 = vperm.xlu0 %613, %v602
      %v615 = vpop.permute.xlu0 %614
      %618 = vset.pattern.permute.xlu0 0
      %619 = vperm.xlu0 %618, %v603
      %v620 = vpop.permute.xlu0 %619
      %623 = vset.pattern.permute.xlu0 0
      %624 = vperm.xlu0 %623, %v604
      %v625 = vpop.permute.xlu0 %624
      %628 = vset.pattern.permute.xlu0 0
      %629 = vperm.xlu0 %628, %v605
      %v630 = vpop.permute.xlu0 %629
      %633 = vset.pattern.permute.xlu0 0
      %634 = vperm.xlu0 %633, %v606
      %v635 = vpop.permute.xlu0 %634
      %v637 = vadd.f32 %v595, %v610
      %v638 = vadd.f32 %v596, %v615
      %v639 = vadd.f32 %v597, %v620
      %v640 = vadd.f32 %v598, %v625
      %v641 = vadd.f32 %v599, %v630
      %v642 = vadd.f32 %v600, %v635
      %v643 = vmax.f32 %v637, 0.0
      %v644 = vmax.f32 %v638, 0.0
      %v645 = vmax.f32 %v639, 0.0
      %v646 = vmax.f32 %v640, 0.0
      %v647 = vmax.f32 %v641, 0.0
      %v648 = vmax.f32 %v642, 0.0
      %s649 = smul.u32 %s21, 48
      %s650 = sshra.s32 %s649, 3
      %s651 = sand.u32 %s649, 7
      %s652 = smul.addr %s650, 4
      %s653 = scalar_lea.vmem %s301, %s652
      %v654 = vld [vmem:[%s653] sm:$0xf]
      %v655 = vld [vmem:[%s653 + $0x4] sm:$0xf]
      %v656 = vld [vmem:[%s653 + $0x8] sm:$0xf]
      %v657 = vld [vmem:[%s653 + $0xc] sm:$0xf]
      %v658 = vld [vmem:[%s653 + $0x10] sm:$0xf]
      %v659 = vld [vmem:[%s653 + $0x14] sm:$0xf]
      %v660 = vunpack.c.l.bf16 %v654
      %v661 = vunpack.c.l.bf16 %v655
      %v662 = vunpack.c.l.bf16 %v656
      %v663 = vunpack.c.l.bf16 %v657
      %v664 = vunpack.c.l.bf16 %v658
      %v665 = vunpack.c.l.bf16 %v659
      %v666 = vadd.f32 %v643, %v660
      %v667 = vadd.f32 %v644, %v661
      %v668 = vadd.f32 %v645, %v662
      %v669 = vadd.f32 %v646, %v663
      %v670 = vadd.f32 %v647, %v664
      %v671 = vadd.f32 %v648, %v665
      %vm672 = vcmask 64512
      %v673 = vsel %vm672, %v666, 0.0
      %674 = vadd.xlane.f32.xlu0 %v673
      %v675 = vpop.xlane.xlu0 %674
      %v676 = vsel %vm672, %v667, 0.0
      %677 = vadd.xlane.f32.xlu0 %v676
      %v678 = vpop.xlane.xlu0 %677
      %v679 = vsel %vm672, %v668, 0.0
      %680 = vadd.xlane.f32.xlu0 %v679
      %v681 = vpop.xlane.xlu0 %680
      %v682 = vsel %vm672, %v669, 0.0
      %683 = vadd.xlane.f32.xlu0 %v682
      %v684 = vpop.xlane.xlu0 %683
      %v685 = vsel %vm672, %v670, 0.0
      %686 = vadd.xlane.f32.xlu0 %v685
      %v687 = vpop.xlane.xlu0 %686
      %v688 = vsel %vm672, %v671, 0.0
      %689 = vadd.xlane.f32.xlu0 %v688
      %v690 = vpop.xlane.xlu0 %689
      %v691 = vrcp.pop 8.0
      %v692 = vmul.f32 8.0, %v691
      %v693 = vsub.f32 1.0, %v692
      %v694 = vmul.f32 %v691, %v693
      %v695 = vadd.f32 %v691, %v694
      %vm696 = vweird.f32 %v691
      %v697 = vsel %vm696, %v691, %v695
      %v698 = vmul.f32 %v675, %v697
      %v699 = vmul.f32 %v678, %v697
      %v700 = vmul.f32 %v681, %v697
      %v701 = vmul.f32 %v684, %v697
      %v702 = vmul.f32 %v687, %v697
      %v703 = vmul.f32 %v690, %v697
      %v704 = vsub.f32 %v666, %v698
      %v705 = vsub.f32 %v667, %v699
      %v706 = vsub.f32 %v668, %v700
      %v707 = vsub.f32 %v669, %v701
      %v708 = vsub.f32 %v670, %v702
      %v709 = vsub.f32 %v671, %v703
      %v710 = vmul.f32 %v704, %v704
      %v711 = vmul.f32 %v705, %v705
      %v712 = vmul.f32 %v706, %v706
      %v713 = vmul.f32 %v707, %v707
      %v714 = vmul.f32 %v708, %v708
      %v715 = vmul.f32 %v709, %v709
      %v716 = vsel %vm672, %v710, 0.0
      %717 = vadd.xlane.f32.xlu0 %v716
      %v718 = vpop.xlane.xlu0 %717
      %v719 = vsel %vm672, %v711, 0.0
      %720 = vadd.xlane.f32.xlu0 %v719
      %v721 = vpop.xlane.xlu0 %720
      %v722 = vsel %vm672, %v712, 0.0
      %723 = vadd.xlane.f32.xlu0 %v722
      %v724 = vpop.xlane.xlu0 %723
      %v725 = vsel %vm672, %v713, 0.0
      %726 = vadd.xlane.f32.xlu0 %v725
      %v727 = vpop.xlane.xlu0 %726
      %v728 = vsel %vm672, %v714, 0.0
      %729 = vadd.xlane.f32.xlu0 %v728
      %v730 = vpop.xlane.xlu0 %729
      %v731 = vsel %vm672, %v715, 0.0
      %732 = vadd.xlane.f32.xlu0 %v731
      %v733 = vpop.xlane.xlu0 %732
      %v734 = vmul.f32 %v718, %v697
      %v735 = vmul.f32 %v721, %v697
      %v736 = vmul.f32 %v724, %v697
      %v737 = vmul.f32 %v727, %v697
      %v738 = vmul.f32 %v730, %v697
      %v739 = vmul.f32 %v733, %v697
      %v740 = vadd.f32 %v734, 1e-05
      %v741 = vadd.f32 %v735, 1e-05
      %v742 = vadd.f32 %v736, 1e-05
      %v743 = vadd.f32 %v737, 1e-05
      %v744 = vadd.f32 %v738, 1e-05
      %v745 = vadd.f32 %v739, 1e-05
      %v746 = vrsqrt.pop %v740
      %v747 = vmul.f32 %v746, %v740
      %v748 = vmul.f32 %v747, %v746
      %v749 = vmul.f32 0.5, %v748
      %v750 = vsub.f32 1.5, %v749
      %v751 = vmul.f32 %v746, %v750
      %vm752 = vweird.f32 %v740
      %vm753 = vweird.f32 %v746
      %vm754 = vmor %vm752, %vm753
      %v755 = vsel %vm754, %v746, %v751
      %v756 = vrsqrt.pop %v741
      %v757 = vmul.f32 %v756, %v741
      %v758 = vmul.f32 %v757, %v756
      %v759 = vmul.f32 0.5, %v758
      %v760 = vsub.f32 1.5, %v759
      %v761 = vmul.f32 %v756, %v760
      %vm762 = vweird.f32 %v741
      %vm763 = vweird.f32 %v756
      %vm764 = vmor %vm762, %vm763
      %v765 = vsel %vm764, %v756, %v761
      %v766 = vrsqrt.pop %v742
      %v767 = vmul.f32 %v766, %v742
      %v768 = vmul.f32 %v767, %v766
      %v769 = vmul.f32 0.5, %v768
      %v770 = vsub.f32 1.5, %v769
      %v771 = vmul.f32 %v766, %v770
      %vm772 = vweird.f32 %v742
      %vm773 = vweird.f32 %v766
      %vm774 = vmor %vm772, %vm773
      %v775 = vsel %vm774, %v766, %v771
      %v776 = vrsqrt.pop %v743
      %v777 = vmul.f32 %v776, %v743
      %v778 = vmul.f32 %v777, %v776
      %v779 = vmul.f32 0.5, %v778
      %v780 = vsub.f32 1.5, %v779
      %v781 = vmul.f32 %v776, %v780
      %vm782 = vweird.f32 %v743
      %vm783 = vweird.f32 %v776
      %vm784 = vmor %vm782, %vm783
      %v785 = vsel %vm784, %v776, %v781
      %v786 = vrsqrt.pop %v744
      %v787 = vmul.f32 %v786, %v744
      %v788 = vmul.f32 %v787, %v786
      %v789 = vmul.f32 0.5, %v788
      %v790 = vsub.f32 1.5, %v789
      %v791 = vmul.f32 %v786, %v790
      %vm792 = vweird.f32 %v744
      %vm793 = vweird.f32 %v786
      %vm794 = vmor %vm792, %vm793
      %v795 = vsel %vm794, %v786, %v791
      %v796 = vrsqrt.pop %v745
      %v797 = vmul.f32 %v796, %v745
      %v798 = vmul.f32 %v797, %v796
      %v799 = vmul.f32 0.5, %v798
      %v800 = vsub.f32 1.5, %v799
      %v801 = vmul.f32 %v796, %v800
      %vm802 = vweird.f32 %v745
      %vm803 = vweird.f32 %v796
      %vm804 = vmor %vm802, %vm803
      %v805 = vsel %vm804, %v796, %v801
      %v806 = vmul.f32 %v704, %v755
      %v807 = vmul.f32 %v705, %v765
      %v808 = vmul.f32 %v706, %v775
      %v809 = vmul.f32 %v707, %v785
      %v810 = vmul.f32 %v708, %v795
      %v811 = vmul.f32 %v709, %v805
      %v812 = vld [vmem:[%s318] sm:$0xff]
      %v813 = vld [vmem:[%s318 + $0x8] sm:$0xff]
      %v814 = vld [vmem:[%s318 + $0x10] sm:$0xff]
      %v815 = vld [vmem:[%s318 + $0x18] sm:$0xff]
      %v816 = vld [vmem:[%s318 + $0x20] sm:$0xff]
      %v817 = vld [vmem:[%s318 + $0x28] sm:$0xff]
      %819 = vset.pattern.permute.xlu0 0
      %820 = vperm.xlu0 %819, %v812
      %v821 = vpop.permute.xlu0 %820
      %824 = vset.pattern.permute.xlu0 0
      %825 = vperm.xlu0 %824, %v813
      %v826 = vpop.permute.xlu0 %825
      %829 = vset.pattern.permute.xlu0 0
      %830 = vperm.xlu0 %829, %v814
      %v831 = vpop.permute.xlu0 %830
      %834 = vset.pattern.permute.xlu0 0
      %835 = vperm.xlu0 %834, %v815
      %v836 = vpop.permute.xlu0 %835
      %839 = vset.pattern.permute.xlu0 0
      %840 = vperm.xlu0 %839, %v816
      %v841 = vpop.permute.xlu0 %840
      %844 = vset.pattern.permute.xlu0 0
      %845 = vperm.xlu0 %844, %v817
      %v846 = vpop.permute.xlu0 %845
      %v848 = vmul.f32 %v806, %v821
      %v849 = vmul.f32 %v807, %v826
      %v850 = vmul.f32 %v808, %v831
      %v851 = vmul.f32 %v809, %v836
      %v852 = vmul.f32 %v810, %v841
      %v853 = vmul.f32 %v811, %v846
      %v854 = vld [vmem:[%s324] sm:$0xff]
      %v855 = vld [vmem:[%s324 + $0x8] sm:$0xff]
      %v856 = vld [vmem:[%s324 + $0x10] sm:$0xff]
      %v857 = vld [vmem:[%s324 + $0x18] sm:$0xff]
      %v858 = vld [vmem:[%s324 + $0x20] sm:$0xff]
      %v859 = vld [vmem:[%s324 + $0x28] sm:$0xff]
      %861 = vset.pattern.permute.xlu0 0
      %862 = vperm.xlu0 %861, %v854
      %v863 = vpop.permute.xlu0 %862
      %866 = vset.pattern.permute.xlu0 0
      %867 = vperm.xlu0 %866, %v855
      %v868 = vpop.permute.xlu0 %867
      %871 = vset.pattern.permute.xlu0 0
      %872 = vperm.xlu0 %871, %v856
      %v873 = vpop.permute.xlu0 %872
      %876 = vset.pattern.permute.xlu0 0
      %877 = vperm.xlu0 %876, %v857
      %v878 = vpop.permute.xlu0 %877
      %881 = vset.pattern.permute.xlu0 0
      %882 = vperm.xlu0 %881, %v858
      %v883 = vpop.permute.xlu0 %882
      %886 = vset.pattern.permute.xlu0 0
      %887 = vperm.xlu0 %886, %v859
      %v888 = vpop.permute.xlu0 %887
      %v890 = vadd.f32 %v848, %v863
      %v891 = vadd.f32 %v849, %v868
      %v892 = vadd.f32 %v850, %v873
      %v893 = vadd.f32 %v851, %v878
      %v894 = vadd.f32 %v852, %v883
      %v895 = vadd.f32 %v853, %v888
      %v896 = vpack.c.bf16 %v890, %v890
      %v897 = vpack.c.bf16 %v891, %v891
      %v898 = vpack.c.bf16 %v892, %v892
      %v899 = vpack.c.bf16 %v893, %v893
      %v900 = vpack.c.bf16 %v894, %v894
      %v901 = vpack.c.bf16 %v895, %v895
      %vm902 = vcmask 60416
      %903 = vst.msk [vmem:[%s334] sm:$0xf] %vm902, %v896
      %904 = vst.msk [vmem:[%s334 + $0x4] sm:$0xf] %vm902, %v897
      %905 = vst.msk [vmem:[%s334 + $0x8] sm:$0xf] %vm902, %v898
      %906 = vst.msk [vmem:[%s334 + $0xc] sm:$0xf] %vm902, %v899
      %907 = vst.msk [vmem:[%s334 + $0x10] sm:$0xf] %vm902, %v900
      %908 = vst.msk [vmem:[%s334 + $0x14] sm:$0xf] %vm902, %v901
      %s909 = smul.u32 6, %s21
      %p910 = scmp.lt.s32.totalorder %s20, 1
      %s911 = scalar_select %p910, %s20, 1
      %p912 = scmp.lt.s32.totalorder %s909, 5
      %s913 = scalar_select %p912, %s909, 5
      %s914 = smul.addr %s911, 6
      %s915 = sadd.s32 %s913, %s914
      %s916 = smul.addr %s915, 4
      %s917 = scalar_lea.vmem %s5, %s916
      // Predicated region
      $region41: #{_lambda_.19} parent=39 // pred_check
        %p918 = pneg %p178
      $region42: #{_lambda_.19} parent=39 // pred_check_branch
        %920 = sbr.rel (%p918) target = $region44
      $region43: #{_lambda_.19} parent=39 // pred_region
        %s921 = smul.u32 6, %s21
      $region44: #{_lambda_.19} parent=39 // pred_fallthru
        _
    $region40: #{_lambda_.19} parent=5 // pred_fallthru
      _
    %p922 = scmp.le.s32.totalorder 2, %s11
    // Predicated region
    $region45: #{_lambda_.19} parent=5 // pred_check
      %p923 = pneg %p922
    $region46: #{_lambda_.19} parent=5 // pred_check_branch
      %925 = sbr.rel (%p923) target = $region48
    $region47: #{_lambda_.19} parent=5 // pred_region
      %s926 = ssub.s32 %s11, 2
      // Predicated region
      $region49: #{_lambda_.19} parent=47 // pred_check
        %p927 = pneg %p184
      $region50: #{_lambda_.19} parent=47 // pred_check_branch
        %929 = sbr.rel (%p927) target = $region52
      $region51: #{_lambda_.19} parent=47 // pred_region
        %s930 = smul.u32 6, %s23
        %p931 = scmp.lt.s32.totalorder %s22, 1
        %s932 = scalar_select %p931, %s22, 1
        %p933 = scmp.lt.s32.totalorder %s930, 5
        %s934 = scalar_select %p933, %s930, 5
        %s935 = smul.addr %s932, 6
        %s936 = sadd.s32 %s934, %s935
        %s937 = smul.addr %s936, 4
        %s938 = scalar_lea.vmem %s5, %s937
      $region52: #{_lambda_.19} parent=47 // pred_fallthru
        _
    $region48: #{_lambda_.19} parent=5 // pred_fallthru
      _
  $region6: #{_lambda_.19} parent=0 // loop_footer
    %s15 = sadd.s32 1, %s11
  $region7: #{_lambda_.19} parent=0 // loop_footer_branch
    %10 = sbr.rel target = $region3
  $region8: #{_lambda_.19} parent=0 // loop_exit
    _

// kernel: _lambda_.21
$region0: #{_lambda_.21}
  #allocation0 [shape = 'u32[]', space=smem, size = 0x4, offset = 0x4, fixed_abs, tag = 'smem constant byte address 0x4 - core index']
  #allocation1 [shape = 'u32[72,128]{1,0:T(1,128)}', space=vmem, size = 0x9000, scoped, tag = 'internal scratch']
  %s0 = inlined_call_operand.vmem [shape: bf16[2,48,8], index: 0, kind: input, shape index: {}]
  %s1 = inlined_call_operand.vmem [shape: bf16[1,10,48], index: 1, kind: input, shape index: {}]
  %s2 = inlined_call_operand.vmem [shape: f32[10,1], index: 2, kind: input, shape index: {}]
  %s3 = inlined_call_operand.vmem [shape: f32[2,10,8], index: 3, kind: output, shape index: {}]
  %s4 = sld [smem:[#allocation0]]
  $region45: #{_lambda_.21} parent=0
    _
  %s6 = ssub.s32 1, %s4
  %s7 = scalar_select 0, %s6, %s4
  loop: start=0, step=1, limit=4
  $region2: #{_lambda_.21} parent=0 // loop_pre_header
    _
  $region3: #{_lambda_.21} parent=0 // loop_header
    %s9 = sphi 0, %s13
    %p10 = scmp.ge.s32.totalorder %s9, 4
    %s16 = sphi 0, %s28
    %s17 = sphi 0, %s24
    %s18 = sphi 0, %s16
    %s19 = sphi 0, %s17
    %s20 = sphi 0, %s18
    %s21 = sphi 0, %s19
    %s31 = sphi 0, %s33
    %s34 = sphi 0, %s31
    %s35 = sphi 0, %s34
    %s51 = sphi 0, %s35
    %s57 = sphi 0, %s59
    %s60 = sphi 0, %s57
    %s61 = sphi 0, %s60
    %s77 = sphi 0, %s61
    %s83 = sphi 0, %s85
    %s86 = sphi 0, %s83
    %s87 = sphi 0, %s86
    %s103 = sphi 0, %s87
    %s111 = sphi 0, %s113
    %s114 = sphi 0, %s111
    %s115 = sphi 0, %s114
    %s131 = sphi 0, %s115
  $region4: #{_lambda_.21} parent=0 // loop_header_branch
    %12 = sbr.rel (%p10) target = $region8
  $region5: #{_lambda_.21} parent=0 // loop_body
    %s14 = ssub.s32 %s9, 1
    %s15 = ssub.s32 %s9, 2
    %s22 = sadd.s32 1, %s17
    %p23 = scmp.ge.s32.totalorder %s22, 1
    %s24 = scalar_select %p23, 0, %s22
    %s25 = sadd.s32 1, %s16
    %s26 = scalar_select %p23, %s25, %s16
    %p27 = scmp.ge.s32.totalorder %s26, 2
    %s28 = scalar_select %p27, 0, %s26
    %s29 = ssub.s32 %s16, %s28
    %p30 = scmp.eq.s32.totalorder %s29, 0
    %s32 = sadd.s32 %s31, 1
    %s33 = scalar_select %p30, %s31, %s32
    %p36 = pneg %p30
    %p37 = scmp.eq.s32.totalorder %s9, 1
    %p38 = por %p36, %p37
    %p39 = scmp.ne.s32.totalorder %s31, %s34
    %p40 = scmp.eq.s32.totalorder %s9, 0
    %p41 = por %p39, %p40
    %p42 = scmp.ne.s32.totalorder %s31, %s34
    %p43 = scmp.eq.s32.totalorder %s14, 1
    %p44 = por %p42, %p43
    %p45 = scmp.ne.s32.totalorder %s34, %s35
    %p46 = scmp.eq.s32.totalorder %s14, 0
    %p47 = por %p45, %p46
    %p48 = scmp.ne.s32.totalorder %s34, %s35
    %p49 = scmp.eq.s32.totalorder %s15, 1
    %p50 = por %p48, %p49
    %p52 = scmp.ne.s32.totalorder %s35, %s51
    %p53 = scmp.eq.s32.totalorder %s15, 0
    %p54 = por %p52, %p53
    %s55 = ssub.s32 %s17, %s24
    %p56 = scmp.eq.s32.totalorder %s55, 0
    %s58 = sadd.s32 %s57, 1
    %s59 = scalar_select %p56, %s57, %s58
    %p62 = pneg %p56
    %p63 = scmp.eq.s32.totalorder %s9, 1
    %p64 = por %p62, %p63
    %p65 = scmp.ne.s32.totalorder %s57, %s60
    %p66 = scmp.eq.s32.totalorder %s9, 0
    %p67 = por %p65, %p66
    %p68 = scmp.ne.s32.totalorder %s57, %s60
    %p69 = scmp.eq.s32.totalorder %s14, 1
    %p70 = por %p68, %p69
    %p71 = scmp.ne.s32.totalorder %s60, %s61
    %p72 = scmp.eq.s32.totalorder %s14, 0
    %p73 = por %p71, %p72
    %p74 = scmp.ne.s32.totalorder %s60, %s61
    %p75 = scmp.eq.s32.totalorder %s15, 1
    %p76 = por %p74, %p75
    %p78 = scmp.ne.s32.totalorder %s61, %s77
    %p79 = scmp.eq.s32.totalorder %s15, 0
    %p80 = por %p78, %p79
    %s81 = ssub.s32 %s17, %s24
    %p82 = scmp.eq.s32.totalorder %s81, 0
    %s84 = sadd.s32 %s83, 1
    %s85 = scalar_select %p82, %s83, %s84
    %p88 = pneg %p82
    %p89 = scmp.eq.s32.totalorder %s9, 1
    %p90 = por %p88, %p89
    %p91 = scmp.ne.s32.totalorder %s83, %s86
    %p92 = scmp.eq.s32.totalorder %s9, 0
    %p93 = por %p91, %p92
    %p94 = scmp.ne.s32.totalorder %s83, %s86
    %p95 = scmp.eq.s32.totalorder %s14, 1
    %p96 = por %p94, %p95
    %p97 = scmp.ne.s32.totalorder %s86, %s87
    %p98 = scmp.eq.s32.totalorder %s14, 0
    %p99 = por %p97, %p98
    %p100 = scmp.ne.s32.totalorder %s86, %s87
    %p101 = scmp.eq.s32.totalorder %s15, 1
    %p102 = por %p100, %p101
    %p104 = scmp.ne.s32.totalorder %s87, %s103
    %p105 = scmp.eq.s32.totalorder %s15, 0
    %p106 = por %p104, %p105
    %s107 = ssub.s32 %s16, %s28
    %s108 = ssub.s32 %s17, %s24
    %s109 = sor.u32 %s107, %s108
    %p110 = scmp.eq.s32.totalorder %s109, 0
    %s112 = sadd.s32 %s111, 1
    %s113 = scalar_select %p110, %s111, %s112
    %p116 = pneg %p110
    %p117 = scmp.eq.s32.totalorder %s9, 1
    %p118 = por %p116, %p117
    %p119 = scmp.ne.s32.totalorder %s111, %s114
    %p120 = scmp.eq.s32.totalorder %s9, 0
    %p121 = por %p119, %p120
    %p122 = scmp.ne.s32.totalorder %s111, %s114
    %p123 = scmp.eq.s32.totalorder %s14, 1
    %p124 = por %p122, %p123
    %p125 = scmp.ne.s32.totalorder %s114, %s115
    %p126 = scmp.eq.s32.totalorder %s14, 0
    %p127 = por %p125, %p126
    %p128 = scmp.ne.s32.totalorder %s114, %s115
    %p129 = scmp.eq.s32.totalorder %s15, 1
    %p130 = por %p128, %p129
    %p132 = scmp.ne.s32.totalorder %s115, %s131
    %p133 = scmp.eq.s32.totalorder %s15, 0
    %p134 = por %p132, %p133
    %p135 = scmp.le.s32.totalorder 1, %s9
    %p136 = scmp.lt.s32.totalorder %s9, 3
    %p137 = pnand %p135, %p136
    %p138 = pneg %p137
    // Predicated region
    $region9: #{_lambda_.21} parent=5 // pred_check
      _
    $region10: #{_lambda_.21} parent=5 // pred_check_branch
      %140 = sbr.rel (%p137) target = $region12
    $region11: #{_lambda_.21} parent=5 // pred_region
      %s141 = ssub.s32 %s9, 1
      // Predicated region
      $region13: #{_lambda_.21} parent=11 // pred_check
        %p142 = pneg %p73
      $region14: #{_lambda_.21} parent=11 // pred_check_branch
        %144 = sbr.rel (%p142) target = $region16
      $region15: #{_lambda_.21} parent=11 // pred_region
        %s145 = smul.u32 2, %s19
        %p146 = scmp.lt.s32.totalorder %s145, 1
        %s147 = scalar_select %p146, %s145, 1
        %s148 = smul.addr %s147, 4
        %s149 = scalar_lea.vmem %s1, %s148
        %s150 = smul.u32 2, %s19
      $region16: #{_lambda_.21} parent=11 // pred_fallthru
        _
      // Predicated region
      $region17: #{_lambda_.21} parent=11 // pred_check
        %p151 = pneg %p99
      $region18: #{_lambda_.21} parent=11 // pred_check_branch
        %153 = sbr.rel (%p151) target = $region20
      $region19: #{_lambda_.21} parent=11 // pred_region
        %s154 = smul.u32 2, %s19
        %p155 = scmp.lt.s32.totalorder %s154, 1
        %s156 = scalar_select %p155, %s154, 1
        %s157 = smul.addr %s156, 8
        %s158 = scalar_lea.vmem %s2, %s157
        %s159 = smul.u32 2, %s19
      $region20: #{_lambda_.21} parent=11 // pred_fallthru
        _
    $region12: #{_lambda_.21} parent=5 // pred_fallthru
      _
    %p160 = scmp.lt.s32.totalorder %s9, 2
    // Predicated region
    $region21: #{_lambda_.21} parent=5 // pred_check
      %p161 = pneg %p160
    $region22: #{_lambda_.21} parent=5 // pred_check_branch
      %163 = sbr.rel (%p161) target = $region24
    $region23: #{_lambda_.21} parent=5 // pred_region
      // Predicated region
      $region25: #{_lambda_.21} parent=23 // pred_check
        %p164 = pneg %p41
      $region26: #{_lambda_.21} parent=23 // pred_check_branch
        %166 = sbr.rel (%p164) target = $region28
      $region27: #{_lambda_.21} parent=23 // pred_region
        %p167 = scmp.lt.s32.totalorder %s16, 1
        %s168 = scalar_select %p167, %s16, 1
        %s169 = smul.addr %s168, 6
        %s170 = smul.addr %s169, 4
        %s171 = scalar_lea.vmem %s0, %s170
      $region28: #{_lambda_.21} parent=23 // pred_fallthru
        _
    $region24: #{_lambda_.21} parent=5 // pred_fallthru
      _
    %p172 = scmp.le.s32.totalorder 1, %s9
    %p173 = scmp.lt.s32.totalorder %s9, 3
    %p174 = pnand %p172, %p173
    %p175 = pneg %p174
    // Predicated region
    $region29: #{_lambda_.21} parent=5 // pred_check
      _
    $region30: #{_lambda_.21} parent=5 // pred_check_branch
      %177 = sbr.rel (%p174) target = $region32
    $region31: #{_lambda_.21} parent=5 // pred_region
      %s178 = ssub.s32 %s9, 1
      %p179 = scmp.lt.s32.totalorder %s18, 1
      %s180 = scalar_select %p179, %s18, 1
      %s181 = smul.addr %s180, 6
      %s182 = smul.addr %s181, 4
      %s183 = scalar_lea.vmem %s0, %s182
      %p184 = pneg %p47
      %p185 = pneg %p44
      %s186 = smul.u32 2, %s19
      %p187 = scmp.lt.s32.totalorder %s186, 1
      %s188 = scalar_select %p187, %s186, 1
      %s189 = smul.addr %s188, 4
      %s190 = scalar_lea.vmem %s1, %s189
      %p191 = pneg %p73
      %p192 = pneg %p70
      %s193 = smul.u32 2, %s19
      %p194 = scmp.lt.s32.totalorder %s193, 1
      %s195 = scalar_select %p194, %s193, 1
      %s196 = smul.addr %s195, 8
      %s197 = scalar_lea.vmem %s2, %s196
      %p198 = pneg %p99
      %p199 = pneg %p96
      %p200 = pneg %p127
      %p201 = pneg %p124
      %s202 = smul.u32 2, %s19
      %p203 = scmp.lt.s32.totalorder %s18, 1
      %s204 = scalar_select %p203, %s18, 1
      %p205 = scmp.lt.s32.totalorder %s202, 1
      %s206 = scalar_select %p205, %s202, 1
      %s207 = smul.addr %s204, 2
      %s208 = sadd.s32 %s206, %s207
      %s209 = smul.addr %s208, 8
      %s210 = scalar_lea.vmem %s3, %s209
      %p211 = scmp.lt.s32.totalorder %s18, 1
      %s212 = scalar_select %p211, %s18, 1
      %s213 = smul.addr %s212, 6
      %s214 = smul.addr %s213, 4
      %s215 = scalar_lea.vmem %s0, %s214
      %s216 = smul.u32 2, %s19
      %p217 = scmp.lt.s32.totalorder %s216, 1
      %s218 = scalar_select %p217, %s216, 1
      %s219 = smul.addr %s218, 4
      %s220 = scalar_lea.vmem %s1, %s219
      %s221 = smul.u32 2, %s19
      %s222 = smul.u32 2, %s19
      %p223 = scmp.lt.s32.totalorder %s222, 1
      %s224 = scalar_select %p223, %s222, 1
      %s225 = smul.addr %s224, 8
      %s226 = scalar_lea.vmem %s2, %s225
      %s227 = smul.u32 2, %s19
      %s228 = smul.u32 2, %s19
      %p229 = scmp.lt.s32.totalorder %s18, 1
      %s230 = scalar_select %p229, %s18, 1
      %p231 = scmp.lt.s32.totalorder %s228, 1
      %s232 = scalar_select %p231, %s228, 1
      %s233 = smul.addr %s230, 2
      %s234 = sadd.s32 %s232, %s233
      %s235 = smul.addr %s234, 8
      %s236 = scalar_lea.vmem %s3, %s235
      %s237 = smul.u32 2, %s19
      %v239 = vld [vmem:[%s220] sm:$0xf]
      %v240 = vld [vmem:[%s220 + $0x4] sm:$0x1]
      %v241 = vld [vmem:[%s215] sm:$0xf]
      %v242 = vld [vmem:[%s215 + $0x4] sm:$0xf]
      %v243 = vld [vmem:[%s215 + $0x8] sm:$0xf]
      %v244 = vld [vmem:[%s215 + $0xc] sm:$0xf]
      %v245 = vld [vmem:[%s215 + $0x10] sm:$0xf]
      %v246 = vld [vmem:[%s215 + $0x14] sm:$0xf]
      %v247 = vld [vmem:[%s226] sm:$0xff]
      %v248 = vld [vmem:[%s226 + $0x8] sm:$0x3]
      %250 = vset.pattern.permute.xlu0 0
      %251 = vperm.xlu0 %250, %v247
      %v252 = vpop.permute.xlu0 %251
      %255 = vset.pattern.permute.xlu0 0
      %256 = vperm.xlu0 %255, %v248
      %v257 = vpop.permute.xlu0 %256
      %v261 = vunpack.c.l.b16 %v239
      %v262 = vunpack.c.l.b16 %v240
      %v263 = vpack.c.b16 %v262, %v261
      %v270 = vunpack.c.l.b16 %v241
      %v271 = vunpack.c.l.b16 %v242
      %v272 = vunpack.c.l.b16 %v243
      %v273 = vunpack.c.l.b16 %v244
      %v274 = vunpack.c.l.b16 %v245
      %v275 = vunpack.c.l.b16 %v246
      %v276 = vpack.c.b16 %v271, %v270
      %v277 = vpack.c.b16 %v273, %v272
      %v278 = vpack.c.b16 %v275, %v274
      %vm282 = vcmask 392192
      %v284 = vsel %vm282, %v263, 0
      %286 = vmatpush.bf16.msra.mxu0 0
      %287 = vmatpush.bf16.msra.mxu0 0
      %288 = vmatpush.bf16.msra.mxu0 0
      %289 = vmatpush.bf16.msra.mxu0 0
      %290 = vmatpush.bf16.msra.mxu0 0
      %291 = vmatpush.bf16.msra.mxu0 %v278
      %292 = vmatpush.bf16.msra.mxu0 %v277
      %293 = vmatpush.bf16.msra.mxu0 %v276
      %294 = vmatmul.bf16.gmra.mxu0 %v284
      %v295 = vpop.f32.mrf.mxu0
      %v296 = vadd.f32 %v252, %v295
      %v297 = vpop.f32.mrf.mxu0
      %v298 = vadd.f32 %v257, %v297
      %299 = vdwg.mxu0
      %vm300 = vcmask 64512
      %301 = vst.msk [vmem:[%s236] sm:$0xff] %vm300, %v296
      %vm302 = vcmask 58368
      %303 = vst.msk [vmem:[%s236 + $0x8] sm:$0x3] %vm302, %v298
      %s304 = smul.u32 2, %s19
      %p305 = scmp.lt.s32.totalorder %s18, 1
      %s306 = scalar_select %p305, %s18, 1
      %p307 = scmp.lt.s32.totalorder %s304, 1
      %s308 = scalar_select %p307, %s304, 1
      %s309 = smul.addr %s306, 2
      %s310 = sadd.s32 %s308, %s309
      %s311 = smul.addr %s310, 8
      %s312 = scalar_lea.vmem %s3, %s311
      // Predicated region
      $region33: #{_lambda_.21} parent=31 // pred_check
        %p313 = pneg %p124
      $region34: #{_lambda_.21} parent=31 // pred_check_branch
        %315 = sbr.rel (%p313) target = $region36
      $region35: #{_lambda_.21} parent=31 // pred_region
        %s316 = smul.u32 2, %s19
      $region36: #{_lambda_.21} parent=31 // pred_fallthru
        _
    $region32: #{_lambda_.21} parent=5 // pred_fallthru
      _
    %p317 = scmp.le.s32.totalorder 2, %s9
    // Predicated region
    $region37: #{_lambda_.21} parent=5 // pred_check
      %p318 = pneg %p317
    $region38: #{_lambda_.21} parent=5 // pred_check_branch
      %320 = sbr.rel (%p318) target = $region40
    $region39: #{_lambda_.21} parent=5 // pred_region
      %s321 = ssub.s32 %s9, 2
      // Predicated region
      $region41: #{_lambda_.21} parent=39 // pred_check
        %p322 = pneg %p130
      $region42: #{_lambda_.21} parent=39 // pred_check_branch
        %324 = sbr.rel (%p322) target = $region44
      $region43: #{_lambda_.21} parent=39 // pred_region
        %s325 = smul.u32 2, %s21
        %p326 = scmp.lt.s32.totalorder %s20, 1
        %s327 = scalar_select %p326, %s20, 1
        %p328 = scmp.lt.s32.totalorder %s325, 1
        %s329 = scalar_select %p328, %s325, 1
        %s330 = smul.addr %s327, 2
        %s331 = sadd.s32 %s329, %s330
        %s332 = smul.addr %s331, 8
        %s333 = scalar_lea.vmem %s3, %s332
      $region44: #{_lambda_.21} parent=39 // pred_fallthru
        _
    $region40: #{_lambda_.21} parent=5 // pred_fallthru
      _
  $region6: #{_lambda_.21} parent=0 // loop_footer
    %s13 = sadd.s32 1, %s9
  $region7: #{_lambda_.21} parent=0 // loop_footer_branch
    %8 = sbr.rel target = $region3
  $region8: #{_lambda_.21} parent=0 // loop_exit
    _

// kernel: _lambda_.20
$region0: #{_lambda_.20}
  #allocation0 [shape = 'u32[]', space=smem, size = 0x4, offset = 0x4, fixed_abs, tag = 'smem constant byte address 0x4 - core index']
  #allocation1 [shape = 'u32[72,128]{1,0:T(1,128)}', space=vmem, size = 0x9000, scoped, tag = 'internal scratch']
  %s0 = inlined_call_operand.vmem [shape: bf16[2,48,8], index: 0, kind: input, shape index: {}]
  %s1 = inlined_call_operand.hbm [shape: bf16[48,48], index: 1, kind: input, shape index: {}]
  %s2 = inlined_call_operand.vmem [shape: f32[48,1], index: 2, kind: input, shape index: {}]
  %s3 = inlined_call_operand.vmem [shape: bf16[48,48], index: 3, kind: input, shape index: {}]
  %s4 = inlined_call_operand.vmem [shape: f32[48,1], index: 4, kind: input, shape index: {}]
  %s5 = inlined_call_operand.vmem [shape: f32[48,1], index: 5, kind: input, shape index: {}]
  %s6 = inlined_call_operand.vmem [shape: f32[48,1], index: 6, kind: input, shape index: {}]
  %s7 = inlined_call_operand.vmem [shape: bf16[2,48,8], index: 7, kind: output, shape index: {}]
  %s8 = sld [smem:[#allocation0]]
  $region65: #{_lambda_.20} parent=0
    _
  %s10 = ssub.s32 1, %s8
  %s11 = scalar_select 0, %s10, %s8
  $region1: #{_lambda_.20} parent=0
    #allocation2 [shape = 'u8[12288]{0}', space=vmem, size = 0x3000, scoped, tag = 'input window, operand 1, single buffered']
    #allocation3 [shape = 's32[2]{0}', space=sflag, size = 0x8, scoped, tag = 'scoped memory for _lambda_.20']
    %12 = vsyncpa [#allocation3], 0
    loop: start=0, step=1, limit=4
    $region2: #{_lambda_.20} parent=1 // loop_pre_header
      _
    $region3: #{_lambda_.20} parent=1 // loop_header
      %s14 = sphi 0, %s18
      %p15 = scmp.ge.s32.totalorder %s14, 4
      %s21 = sphi 0, %s33
      %s22 = sphi 0, %s29
      %s23 = sphi 0, %s21
      %s24 = sphi 0, %s22
      %s25 = sphi 0, %s23
      %s26 = sphi 0, %s24
      %s38 = sphi 0, %s40
      %s41 = sphi 0, %s38
      %s42 = sphi 0, %s41
      %s58 = sphi 0, %s42
      %s62 = sphi 0, %s62
      %s64 = sphi 0, %s62
      %s65 = sphi 0, %s64
      %s79 = sphi 0, %s65
      %s83 = sphi 0, %s83
      %s85 = sphi 0, %s83
      %s86 = sphi 0, %s85
      %s100 = sphi 0, %s86
      %s104 = sphi 0, %s104
      %s106 = sphi 0, %s104
      %s107 = sphi 0, %s106
      %s121 = sphi 0, %s107
      %s125 = sphi 0, %s125
      %s127 = sphi 0, %s125
      %s128 = sphi 0, %s127
      %s142 = sphi 0, %s128
      %s146 = sphi 0, %s146
      %s148 = sphi 0, %s146
      %s149 = sphi 0, %s148
      %s163 = sphi 0, %s149
      %s167 = sphi 0, %s167
      %s169 = sphi 0, %s167
      %s170 = sphi 0, %s169
      %s184 = sphi 0, %s170
      %s192 = sphi 0, %s194
      %s195 = sphi 0, %s192
      %s196 = sphi 0, %s195
      %s212 = sphi 0, %s196
    $region4: #{_lambda_.20} parent=1 // loop_header_branch
      %17 = sbr.rel (%p15) target = $region8
    $region5: #{_lambda_.20} parent=1 // loop_body
      %s19 = ssub.s32 %s14, 1
      %s20 = ssub.s32 %s14, 2
      %s27 = sadd.s32 1, %s22
      %p28 = scmp.ge.s32.totalorder %s27, 1
      %s29 = scalar_select %p28, 0, %s27
      %s30 = sadd.s32 1, %s21
      %s31 = scalar_select %p28, %s30, %s21
      %p32 = scmp.ge.s32.totalorder %s31, 2
      %s33 = scalar_select %p32, 0, %s31
      %s34 = ssub.s32 %s21, %s33
      %s35 = ssub.s32 %s22, %s29
      %s36 = sor.u32 %s34, %s35
      %p37 = scmp.eq.s32.totalorder %s36, 0
      %s39 = sadd.s32 %s38, 1
      %s40 = scalar_select %p37, %s38, %s39
      %p43 = pneg %p37
      %p44 = scmp.eq.s32.totalorder %s14, 1
      %p45 = por %p43, %p44
      %p46 = scmp.ne.s32.totalorder %s38, %s41
      %p47 = scmp.eq.s32.totalorder %s14, 0
      %p48 = por %p46, %p47
      %p49 = scmp.ne.s32.totalorder %s38, %s41
      %p50 = scmp.eq.s32.totalorder %s19, 1
      %p51 = por %p49, %p50
      %p52 = scmp.ne.s32.totalorder %s41, %s42
      %p53 = scmp.eq.s32.totalorder %s19, 0
      %p54 = por %p52, %p53
      %p55 = scmp.ne.s32.totalorder %s41, %s42
      %p56 = scmp.eq.s32.totalorder %s20, 1
      %p57 = por %p55, %p56
      %p59 = scmp.ne.s32.totalorder %s42, %s58
      %p60 = scmp.eq.s32.totalorder %s20, 0
      %p61 = por %p59, %p60
      %s63 = sadd.s32 %s62, 1
      %p66 = scmp.eq.s32.totalorder %s14, 1
      %p67 = scmp.ne.s32.totalorder %s62, %s64
      %p68 = scmp.eq.s32.totalorder %s14, 0
      %p69 = por %p67, %p68
      %p70 = scmp.ne.s32.totalorder %s62, %s64
      %p71 = scmp.eq.s32.totalorder %s19, 1
      %p72 = por %p70, %p71
      %p73 = scmp.ne.s32.totalorder %s64, %s65
      %p74 = scmp.eq.s32.totalorder %s19, 0
      %p75 = por %p73, %p74
      %p76 = scmp.ne.s32.totalorder %s64, %s65
      %p77 = scmp.eq.s32.totalorder %s20, 1
      %p78 = por %p76, %p77
      %p80 = scmp.ne.s32.totalorder %s65, %s79
      %p81 = scmp.eq.s32.totalorder %s20, 0
      %p82 = por %p80, %p81
      %s84 = sadd.s32 %s83, 1
      %p87 = scmp.eq.s32.totalorder %s14, 1
      %p88 = scmp.ne.s32.totalorder %s83, %s85
      %p89 = scmp.eq.s32.totalorder %s14, 0
      %p90 = por %p88, %p89
      %p91 = scmp.ne.s32.totalorder %s83, %s85
      %p92 = scmp.eq.s32.totalorder %s19, 1
      %p93 = por %p91, %p92
      %p94 = scmp.ne.s32.totalorder %s85, %s86
      %p95 = scmp.eq.s32.totalorder %s19, 0
      %p96 = por %p94, %p95
      %p97 = scmp.ne.s32.totalorder %s85, %s86
      %p98 = scmp.eq.s32.totalorder %s20, 1
      %p99 = por %p97, %p98
      %p101 = scmp.ne.s32.totalorder %s86, %s100
      %p102 = scmp.eq.s32.totalorder %s20, 0
      %p103 = por %p101, %p102
      %s105 = sadd.s32 %s104, 1
      %p108 = scmp.eq.s32.totalorder %s14, 1
      %p109 = scmp.ne.s32.totalorder %s104, %s106
      %p110 = scmp.eq.s32.totalorder %s14, 0
      %p111 = por %p109, %p110
      %p112 = scmp.ne.s32.totalorder %s104, %s106
      %p113 = scmp.eq.s32.totalorder %s19, 1
      %p114 = por %p112, %p113
      %p115 = scmp.ne.s32.totalorder %s106, %s107
      %p116 = scmp.eq.s32.totalorder %s19, 0
      %p117 = por %p115, %p116
      %p118 = scmp.ne.s32.totalorder %s106, %s107
      %p119 = scmp.eq.s32.totalorder %s20, 1
      %p120 = por %p118, %p119
      %p122 = scmp.ne.s32.totalorder %s107, %s121
      %p123 = scmp.eq.s32.totalorder %s20, 0
      %p124 = por %p122, %p123
      %s126 = sadd.s32 %s125, 1
      %p129 = scmp.eq.s32.totalorder %s14, 1
      %p130 = scmp.ne.s32.totalorder %s125, %s127
      %p131 = scmp.eq.s32.totalorder %s14, 0
      %p132 = por %p130, %p131
      %p133 = scmp.ne.s32.totalorder %s125, %s127
      %p134 = scmp.eq.s32.totalorder %s19, 1
      %p135 = por %p133, %p134
      %p136 = scmp.ne.s32.totalorder %s127, %s128
      %p137 = scmp.eq.s32.totalorder %s19, 0
      %p138 = por %p136, %p137
      %p139 = scmp.ne.s32.totalorder %s127, %s128
      %p140 = scmp.eq.s32.totalorder %s20, 1
      %p141 = por %p139, %p140
      %p143 = scmp.ne.s32.totalorder %s128, %s142
      %p144 = scmp.eq.s32.totalorder %s20, 0
      %p145 = por %p143, %p144
      %s147 = sadd.s32 %s146, 1
      %p150 = scmp.eq.s32.totalorder %s14, 1
      %p151 = scmp.ne.s32.totalorder %s146, %s148
      %p152 = scmp.eq.s32.totalorder %s14, 0
      %p153 = por %p151, %p152
      %p154 = scmp.ne.s32.totalorder %s146, %s148
      %p155 = scmp.eq.s32.totalorder %s19, 1
      %p156 = por %p154, %p155
      %p157 = scmp.ne.s32.totalorder %s148, %s149
      %p158 = scmp.eq.s32.totalorder %s19, 0
      %p159 = por %p157, %p158
      %p160 = scmp.ne.s32.totalorder %s148, %s149
      %p161 = scmp.eq.s32.totalorder %s20, 1
      %p162 = por %p160, %p161
      %p164 = scmp.ne.s32.totalorder %s149, %s163
      %p165 = scmp.eq.s32.totalorder %s20, 0
      %p166 = por %p164, %p165
      %s168 = sadd.s32 %s167, 1
      %p171 = scmp.eq.s32.totalorder %s14, 1
      %p172 = scmp.ne.s32.totalorder %s167, %s169
      %p173 = scmp.eq.s32.totalorder %s14, 0
      %p174 = por %p172, %p173
      %p175 = scmp.ne.s32.totalorder %s167, %s169
      %p176 = scmp.eq.s32.totalorder %s19, 1
      %p177 = por %p175, %p176
      %p178 = scmp.ne.s32.totalorder %s169, %s170
      %p179 = scmp.eq.s32.totalorder %s19, 0
      %p180 = por %p178, %p179
      %p181 = scmp.ne.s32.totalorder %s169, %s170
      %p182 = scmp.eq.s32.totalorder %s20, 1
      %p183 = por %p181, %p182
      %p185 = scmp.ne.s32.totalorder %s170, %s184
      %p186 = scmp.eq.s32.totalorder %s20, 0
      %p187 = por %p185, %p186
      %s188 = ssub.s32 %s21, %s33
      %s189 = ssub.s32 %s22, %s29
      %s190 = sor.u32 %s188, %s189
      %p191 = scmp.eq.s32.totalorder %s190, 0
      %s193 = sadd.s32 %s192, 1
      %s194 = scalar_select %p191, %s192, %s193
      %p197 = pneg %p191
      %p198 = scmp.eq.s32.totalorder %s14, 1
      %p199 = por %p197, %p198
      %p200 = scmp.ne.s32.totalorder %s192, %s195
      %p201 = scmp.eq.s32.totalorder %s14, 0
      %p202 = por %p200, %p201
      %p203 = scmp.ne.s32.totalorder %s192, %s195
      %p204 = scmp.eq.s32.totalorder %s19, 1
      %p205 = por %p203, %p204
      %p206 = scmp.ne.s32.totalorder %s195, %s196
      %p207 = scmp.eq.s32.totalorder %s19, 0
      %p208 = por %p206, %p207
      %p209 = scmp.ne.s32.totalorder %s195, %s196
      %p210 = scmp.eq.s32.totalorder %s20, 1
      %p211 = por %p209, %p210
      %p213 = scmp.ne.s32.totalorder %s196, %s212
      %p214 = scmp.eq.s32.totalorder %s20, 0
      %p215 = por %p213, %p214
      %p216 = scmp.le.s32.totalorder 1, %s14
      %p217 = scmp.lt.s32.totalorder %s14, 3
      %p218 = pnand %p216, %p217
      %p219 = pneg %p218
      // Predicated region
      $region9: #{_lambda_.20} parent=5 // pred_check
        _
      $region10: #{_lambda_.20} parent=5 // pred_check_branch
        %221 = sbr.rel (%p218) target = $region12
      $region11: #{_lambda_.20} parent=5 // pred_region
        %s222 = ssub.s32 %s14, 1
        // Predicated region
        $region13: #{_lambda_.20} parent=11 // pred_check
          %p223 = pneg %p75
        $region14: #{_lambda_.20} parent=11 // pred_check_branch
          %225 = sbr.rel (%p223) target = $region16
        $region15: #{_lambda_.20} parent=11 // pred_region
          %227 = vsyncadd [#allocation3], 0
          %s228 = sshll.u32 %s1, 4
          %s229 = int_to_ptr.hbm [resolvable:$true] %s228
          %s230 = sshll.u32 [#allocation2], 4
          %s231 = int_to_ptr.vmem [resolvable:$true] %s230
          %236 = dma.hbm_to_vmem [thread:$0]  %s229, 384, %s231, [#allocation3], 64, 64, 4
        $region16: #{_lambda_.20} parent=11 // pred_fallthru
          _
        // Predicated region
        $region17: #{_lambda_.20} parent=11 // pred_check
          %p237 = pneg %p96
        $region18: #{_lambda_.20} parent=11 // pred_check_branch
          %239 = sbr.rel (%p237) target = $region20
        $region19: #{_lambda_.20} parent=11 // pred_region
          _
        $region20: #{_lambda_.20} parent=11 // pred_fallthru
          _
        // Predicated region
        $region21: #{_lambda_.20} parent=11 // pred_check
          %p240 = pneg %p117
        $region22: #{_lambda_.20} parent=11 // pred_check_branch
          %242 = sbr.rel (%p240) target = $region24
        $region23: #{_lambda_.20} parent=11 // pred_region
          _
        $region24: #{_lambda_.20} parent=11 // pred_fallthru
          _
        // Predicated region
        $region25: #{_lambda_.20} parent=11 // pred_check
          %p243 = pneg %p138
        $region26: #{_lambda_.20} parent=11 // pred_check_branch
          %245 = sbr.rel (%p243) target = $region28
        $region27: #{_lambda_.20} parent=11 // pred_region
          _
        $region28: #{_lambda_.20} parent=11 // pred_fallthru
          _
        // Predicated region
        $region29: #{_lambda_.20} parent=11 // pred_check
          %p246 = pneg %p159
        $region30: #{_lambda_.20} parent=11 // pred_check_branch
          %248 = sbr.rel (%p246) target = $region32
        $region31: #{_lambda_.20} parent=11 // pred_region
          _
        $region32: #{_lambda_.20} parent=11 // pred_fallthru
          _
        // Predicated region
        $region33: #{_lambda_.20} parent=11 // pred_check
          %p249 = pneg %p180
        $region34: #{_lambda_.20} parent=11 // pred_check_branch
          %251 = sbr.rel (%p249) target = $region36
        $region35: #{_lambda_.20} parent=11 // pred_region
          _
        $region36: #{_lambda_.20} parent=11 // pred_fallthru
          _
      $region12: #{_lambda_.20} parent=5 // pred_fallthru
        _
      %p252 = scmp.lt.s32.totalorder %s14, 2
      // Predicated region
      $region37: #{_lambda_.20} parent=5 // pred_check
        %p253 = pneg %p252
      $region38: #{_lambda_.20} parent=5 // pred_check_branch
        %255 = sbr.rel (%p253) target = $region40
      $region39: #{_lambda_.20} parent=5 // pred_region
        // Predicated region
        $region41: #{_lambda_.20} parent=39 // pred_check
          %p256 = pneg %p48
        $region42: #{_lambda_.20} parent=39 // pred_check_branch
          %258 = sbr.rel (%p256) target = $region44
        $region43: #{_lambda_.20} parent=39 // pred_region
          %p259 = scmp.lt.s32.totalorder %s21, 1
          %s260 = scalar_select %p259, %s21, 1
          %p261 = scmp.lt.s32.totalorder %s22, 0
          %s262 = scalar_select %p261, %s22, 0
          %s263 = smul.addr %s260, 6
          %s264 = sadd.s32 %s262, %s263
          %s265 = smul.addr %s264, 4
          %s266 = scalar_lea.vmem %s0, %s265
        $region44: #{_lambda_.20} parent=39 // pred_fallthru
          _
      $region40: #{_lambda_.20} parent=5 // pred_fallthru
        _
      %p267 = scmp.le.s32.totalorder 1, %s14
      %p268 = scmp.lt.s32.totalorder %s14, 3
      %p269 = pnand %p267, %p268
      %p270 = pneg %p269
      // Predicated region
      $region45: #{_lambda_.20} parent=5 // pred_check
        _
      $region46: #{_lambda_.20} parent=5 // pred_check_branch
        %272 = sbr.rel (%p269) target = $region48
      $region47: #{_lambda_.20} parent=5 // pred_region
        %s273 = ssub.s32 %s14, 1
        // Predicated region
        $region49: #{_lambda_.20} parent=47 // pred_check
          %p274 = pneg %p75
        $region50: #{_lambda_.20} parent=47 // pred_check_branch
          %276 = sbr.rel (%p274) target = $region52
        $region51: #{_lambda_.20} parent=47 // pred_region
          %278 = dma.done [#allocation3], 384
        $region52: #{_lambda_.20} parent=47 // pred_fallthru
          _
        %p279 = scmp.lt.s32.totalorder %s23, 1
        %s280 = scalar_select %p279, %s23, 1
        %p281 = scmp.lt.s32.totalorder %s24, 0
        %s282 = scalar_select %p281, %s24, 0
        %s283 = smul.addr %s280, 6
        %s284 = sadd.s32 %s282, %s283
        %s285 = smul.addr %s284, 4
        %s286 = scalar_lea.vmem %s0, %s285
        %p287 = pneg %p54
        %p288 = pneg %p51
        %p289 = pneg %p75
        %p290 = pneg %p72
        %p291 = pneg %p96
        %p292 = pneg %p93
        %p293 = pneg %p117
        %p294 = pneg %p114
        %p295 = pneg %p138
        %p296 = pneg %p135
        %p297 = pneg %p159
        %p298 = pneg %p156
        %p299 = pneg %p180
        %p300 = pneg %p177
        %p301 = pneg %p208
        %p302 = pneg %p205
        %p303 = scmp.lt.s32.totalorder %s23, 1
        %s304 = scalar_select %p303, %s23, 1
        %p305 = scmp.lt.s32.totalorder %s24, 0
        %s306 = scalar_select %p305, %s24, 0
        %s307 = smul.addr %s304, 6
        %s308 = sadd.s32 %s306, %s307
        %s309 = smul.addr %s308, 4
        %s310 = scalar_lea.vmem %s7, %s309
        %p311 = scmp.lt.s32.totalorder %s23, 1
        %s312 = scalar_select %p311, %s23, 1
        %p313 = scmp.lt.s32.totalorder %s24, 0
        %s314 = scalar_select %p313, %s24, 0
        %s315 = smul.addr %s312, 6
        %s316 = sadd.s32 %s314, %s315
        %s317 = smul.addr %s316, 4
        %s318 = scalar_lea.vmem %s0, %s317
        %p319 = scmp.lt.s32.totalorder %s23, 1
        %s320 = scalar_select %p319, %s23, 1
        %p321 = scmp.lt.s32.totalorder %s24, 0
        %s322 = scalar_select %p321, %s24, 0
        %s323 = smul.addr %s320, 6
        %s324 = sadd.s32 %s322, %s323
        %s325 = smul.addr %s324, 4
        %s326 = scalar_lea.vmem %s7, %s325
        %v328 = vld [vmem:[%s318] sm:$0xf]
        %v329 = vld [vmem:[%s318 + $0x4] sm:$0xf]
        %v330 = vld [vmem:[%s318 + $0x8] sm:$0xf]
        %v331 = vld [vmem:[%s318 + $0xc] sm:$0xf]
        %v332 = vld [vmem:[%s318 + $0x10] sm:$0xf]
        %v333 = vld [vmem:[%s318 + $0x14] sm:$0xf]
        %v334 = vld [vmem:[#allocation2] sm:$0xf]
        %v335 = vld [vmem:[#allocation2 + $0x4] sm:$0xf]
        %v336 = vld [vmem:[#allocation2 + $0x8] sm:$0xf]
        %v337 = vld [vmem:[#allocation2 + $0xc] sm:$0xf]
        %v338 = vld [vmem:[#allocation2 + $0x10] sm:$0xf]
        %v339 = vld [vmem:[#allocation2 + $0x14] sm:$0xf]
        %v340 = vld [vmem:[%s2] sm:$0xff]
        %v341 = vld [vmem:[%s2 + $0x8] sm:$0xff]
        %v342 = vld [vmem:[%s2 + $0x10] sm:$0xff]
        %v343 = vld [vmem:[%s2 + $0x18] sm:$0xff]
        %v344 = vld [vmem:[%s2 + $0x20] sm:$0xff]
        %v345 = vld [vmem:[%s2 + $0x28] sm:$0xff]
        %347 = vset.pattern.permute.xlu0 0
        %348 = vperm.xlu0 %347, %v340
        %v349 = vpop.permute.xlu0 %348
        %352 = vset.pattern.permute.xlu0 0
        %353 = vperm.xlu0 %352, %v341
        %v354 = vpop.permute.xlu0 %353
        %357 = vset.pattern.permute.xlu0 0
        %358 = vperm.xlu0 %357, %v342
        %v359 = vpop.permute.xlu0 %358
        %362 = vset.pattern.permute.xlu0 0
        %363 = vperm.xlu0 %362, %v343
        %v364 = vpop.permute.xlu0 %363
        %367 = vset.pattern.permute.xlu0 0
        %368 = vperm.xlu0 %367, %v344
        %v369 = vpop.permute.xlu0 %368
        %372 = vset.pattern.permute.xlu0 0
        %373 = vperm.xlu0 %372, %v345
        %v374 = vpop.permute.xlu0 %373
        %v382 = vunpack.c.l.b16 %v334
        %v383 = vunpack.c.l.b16 %v335
        %v384 = vunpack.c.l.b16 %v336
        %v385 = vunpack.c.l.b16 %v337
        %v386 = vunpack.c.l.b16 %v338
        %v387 = vunpack.c.l.b16 %v339
        %v388 = vpack.c.b16 %v383, %v382
        %v389 = vpack.c.b16 %v385, %v384
        %v390 = vpack.c.b16 %v387, %v386
        %v397 = vunpack.c.l.b16 %v328
        %v398 = vunpack.c.l.b16 %v329
        %v399 = vunpack.c.l.b16 %v330
        %v400 = vunpack.c.l.b16 %v331
        %v401 = vunpack.c.l.b16 %v332
        %v402 = vunpack.c.l.b16 %v333
        %v403 = vpack.c.b16 %v398, %v397
        %v404 = vpack.c.b16 %v400, %v399
        %v405 = vpack.c.b16 %v402, %v401
        %vm409 = vcmask 392192
        %v411 = vsel %vm409, %v388, 0
        %v414 = vsel %vm409, %v389, 0
        %v417 = vsel %vm409, %v390, 0
        %419 = vmatpush.bf16.msra.mxu0 0
        %420 = vmatpush.bf16.msra.mxu0 0
        %421 = vmatpush.bf16.msra.mxu0 0
        %422 = vmatpush.bf16.msra.mxu0 0
        %423 = vmatpush.bf16.msra.mxu0 0
        %424 = vmatpush.bf16.msra.mxu0 %v405
        %425 = vmatpush.bf16.msra.mxu0 %v404
        %426 = vmatpush.bf16.msra.mxu0 %v403
        %427 = vmatmul.bf16.gmra.mxu0 %v411
        %v428 = vpop.f32.mrf.mxu0
        %v429 = vadd.f32 %v349, %v428
        %v430 = vpop.f32.mrf.mxu0
        %v431 = vadd.f32 %v354, %v430
        %432 = vmatmul.bf16.gmra.mxu0 %v414
        %v433 = vpop.f32.mrf.mxu0
        %v434 = vadd.f32 %v359, %v433
        %v435 = vpop.f32.mrf.mxu0
        %v436 = vadd.f32 %v364, %v435
        %437 = vmatmul.bf16.gmra.mxu0 %v417
        %v438 = vpop.f32.mrf.mxu0
        %v439 = vadd.f32 %v369, %v438
        %v440 = vpop.f32.mrf.mxu0
        %v441 = vadd.f32 %v374, %v440
        %442 = vdwg.mxu0
        %v443 = vmax.f32 %v429, 0.0
        %v444 = vmax.f32 %v431, 0.0
        %v445 = vmax.f32 %v434, 0.0
        %v446 = vmax.f32 %v436, 0.0
        %v447 = vmax.f32 %v439, 0.0
        %v448 = vmax.f32 %v441, 0.0
        %v449 = vpack.c.bf16 %v444, %v443
        %v450 = vpack.c.bf16 %v446, %v445
        %v451 = vpack.c.bf16 %v448, %v447
        %v452 = vld [vmem:[%s3] sm:$0xf]
        %v453 = vld [vmem:[%s3 + $0x4] sm:$0xf]
        %v454 = vld [vmem:[%s3 + $0x8] sm:$0xf]
        %v455 = vld [vmem:[%s3 + $0xc] sm:$0xf]
        %v456 = vld [vmem:[%s3 + $0x10] sm:$0xf]
        %v457 = vld [vmem:[%s3 + $0x14] sm:$0xf]
        %v458 = vld [vmem:[%s4] sm:$0xff]
        %v459 = vld [vmem:[%s4 + $0x8] sm:$0xff]
        %v460 = vld [vmem:[%s4 + $0x10] sm:$0xff]
        %v461 = vld [vmem:[%s4 + $0x18] sm:$0xff]
        %v462 = vld [vmem:[%s4 + $0x20] sm:$0xff]
        %v463 = vld [vmem:[%s4 + $0x28] sm:$0xff]
        %465 = vset.pattern.permute.xlu0 0
        %466 = vperm.xlu0 %465, %v458
        %v467 = vpop.permute.xlu0 %466
        %470 = vset.pattern.permute.xlu0 0
        %471 = vperm.xlu0 %470, %v459
        %v472 = vpop.permute.xlu0 %471
        %475 = vset.pattern.permute.xlu0 0
        %476 = vperm.xlu0 %475, %v460
        %v477 = vpop.permute.xlu0 %476
        %480 = vset.pattern.permute.xlu0 0
        %481 = vperm.xlu0 %480, %v461
        %v482 = vpop.permute.xlu0 %481
        %485 = vset.pattern.permute.xlu0 0
        %486 = vperm.xlu0 %485, %v462
        %v487 = vpop.permute.xlu0 %486
        %490 = vset.pattern.permute.xlu0 0
        %491 = vperm.xlu0 %490, %v463
        %v492 = vpop.permute.xlu0 %491
        %v500 = vunpack.c.l.b16 %v452
        %v501 = vunpack.c.l.b16 %v453
        %v502 = vunpack.c.l.b16 %v454
        %v503 = vunpack.c.l.b16 %v455
        %v504 = vunpack.c.l.b16 %v456
        %v505 = vunpack.c.l.b16 %v457
        %v506 = vpack.c.b16 %v501, %v500
        %v507 = vpack.c.b16 %v503, %v502
        %v508 = vpack.c.b16 %v505, %v504
        %v510 = vsel %vm409, %v506, 0
        %v513 = vsel %vm409, %v507, 0
        %v516 = vsel %vm409, %v508, 0
        %518 = vmatpush.bf16.msra.mxu0 0
        %519 = vmatpush.bf16.msra.mxu0 0
        %520 = vmatpush.bf16.msra.mxu0 0
        %521 = vmatpush.bf16.msra.mxu0 0
        %522 = vmatpush.bf16.msra.mxu0 0
        %523 = vmatpush.bf16.msra.mxu0 %v451
        %524 = vmatpush.bf16.msra.mxu0 %v450
        %525 = vmatpush.bf16.msra.mxu0 %v449
        %526 = vmatmul.bf16.gmra.mxu0 %v510
        %v527 = vpop.f32.mrf.mxu0
        %v528 = vadd.f32 %v467, %v527
        %v529 = vpop.f32.mrf.mxu0
        %v530 = vadd.f32 %v472, %v529
        %531 = vmatmul.bf16.gmra.mxu0 %v513
        %v532 = vpop.f32.mrf.mxu0
        %v533 = vadd.f32 %v477, %v532
        %v534 = vpop.f32.mrf.mxu0
        %v535 = vadd.f32 %v482, %v534
        %536 = vmatmul.bf16.gmra.mxu0 %v516
        %v537 = vpop.f32.mrf.mxu0
        %v538 = vadd.f32 %v487, %v537
        %v539 = vpop.f32.mrf.mxu0
        %v540 = vadd.f32 %v492, %v539
        %541 = vdwg.mxu0
        %v542 = vunpack.c.l.bf16 %v328
        %v543 = vunpack.c.l.bf16 %v329
        %v544 = vunpack.c.l.bf16 %v330
        %v545 = vunpack.c.l.bf16 %v331
        %v546 = vunpack.c.l.bf16 %v332
        %v547 = vunpack.c.l.bf16 %v333
        %v548 = vadd.f32 %v528, %v542
        %v549 = vadd.f32 %v530, %v543
        %v550 = vadd.f32 %v533, %v544
        %v551 = vadd.f32 %v535, %v545
        %v552 = vadd.f32 %v538, %v546
        %v553 = vadd.f32 %v540, %v547
        %vm554 = vcmask 64512
        %v555 = vsel %vm554, %v548, 0.0
        %556 = vadd.xlane.f32.xlu0 %v555
        %v557 = vpop.xlane.xlu0 %556
        %v558 = vsel %vm554, %v549, 0.0
        %559 = vadd.xlane.f32.xlu0 %v558
        %v560 = vpop.xlane.xlu0 %559
        %v561 = vsel %vm554, %v550, 0.0
        %562 = vadd.xlane.f32.xlu0 %v561
        %v563 = vpop.xlane.xlu0 %562
        %v564 = vsel %vm554, %v551, 0.0
        %565 = vadd.xlane.f32.xlu0 %v564
        %v566 = vpop.xlane.xlu0 %565
        %v567 = vsel %vm554, %v552, 0.0
        %568 = vadd.xlane.f32.xlu0 %v567
        %v569 = vpop.xlane.xlu0 %568
        %v570 = vsel %vm554, %v553, 0.0
        %571 = vadd.xlane.f32.xlu0 %v570
        %v572 = vpop.xlane.xlu0 %571
        %v573 = vrcp.pop 8.0
        %v574 = vmul.f32 8.0, %v573
        %v575 = vsub.f32 1.0, %v574
        %v576 = vmul.f32 %v573, %v575
        %v577 = vadd.f32 %v573, %v576
        %vm578 = vweird.f32 %v573
        %v579 = vsel %vm578, %v573, %v577
        %v580 = vmul.f32 %v557, %v579
        %v581 = vmul.f32 %v560, %v579
        %v582 = vmul.f32 %v563, %v579
        %v583 = vmul.f32 %v566, %v579
        %v584 = vmul.f32 %v569, %v579
        %v585 = vmul.f32 %v572, %v579
        %v586 = vsub.f32 %v548, %v580
        %v587 = vsub.f32 %v549, %v581
        %v588 = vsub.f32 %v550, %v582
        %v589 = vsub.f32 %v551, %v583
        %v590 = vsub.f32 %v552, %v584
        %v591 = vsub.f32 %v553, %v585
        %v592 = vmul.f32 %v586, %v586
        %v593 = vmul.f32 %v587, %v587
        %v594 = vmul.f32 %v588, %v588
        %v595 = vmul.f32 %v589, %v589
        %v596 = vmul.f32 %v590, %v590
        %v597 = vmul.f32 %v591, %v591
        %v598 = vsel %vm554, %v592, 0.0
        %599 = vadd.xlane.f32.xlu0 %v598
        %v600 = vpop.xlane.xlu0 %599
        %v601 = vsel %vm554, %v593, 0.0
        %602 = vadd.xlane.f32.xlu0 %v601
        %v603 = vpop.xlane.xlu0 %602
        %v604 = vsel %vm554, %v594, 0.0
        %605 = vadd.xlane.f32.xlu0 %v604
        %v606 = vpop.xlane.xlu0 %605
        %v607 = vsel %vm554, %v595, 0.0
        %608 = vadd.xlane.f32.xlu0 %v607
        %v609 = vpop.xlane.xlu0 %608
        %v610 = vsel %vm554, %v596, 0.0
        %611 = vadd.xlane.f32.xlu0 %v610
        %v612 = vpop.xlane.xlu0 %611
        %v613 = vsel %vm554, %v597, 0.0
        %614 = vadd.xlane.f32.xlu0 %v613
        %v615 = vpop.xlane.xlu0 %614
        %v616 = vmul.f32 %v600, %v579
        %v617 = vmul.f32 %v603, %v579
        %v618 = vmul.f32 %v606, %v579
        %v619 = vmul.f32 %v609, %v579
        %v620 = vmul.f32 %v612, %v579
        %v621 = vmul.f32 %v615, %v579
        %v622 = vadd.f32 %v616, 1e-05
        %v623 = vadd.f32 %v617, 1e-05
        %v624 = vadd.f32 %v618, 1e-05
        %v625 = vadd.f32 %v619, 1e-05
        %v626 = vadd.f32 %v620, 1e-05
        %v627 = vadd.f32 %v621, 1e-05
        %v628 = vrsqrt.pop %v622
        %v629 = vmul.f32 %v628, %v622
        %v630 = vmul.f32 %v629, %v628
        %v631 = vmul.f32 0.5, %v630
        %v632 = vsub.f32 1.5, %v631
        %v633 = vmul.f32 %v628, %v632
        %vm634 = vweird.f32 %v622
        %vm635 = vweird.f32 %v628
        %vm636 = vmor %vm634, %vm635
        %v637 = vsel %vm636, %v628, %v633
        %v638 = vrsqrt.pop %v623
        %v639 = vmul.f32 %v638, %v623
        %v640 = vmul.f32 %v639, %v638
        %v641 = vmul.f32 0.5, %v640
        %v642 = vsub.f32 1.5, %v641
        %v643 = vmul.f32 %v638, %v642
        %vm644 = vweird.f32 %v623
        %vm645 = vweird.f32 %v638
        %vm646 = vmor %vm644, %vm645
        %v647 = vsel %vm646, %v638, %v643
        %v648 = vrsqrt.pop %v624
        %v649 = vmul.f32 %v648, %v624
        %v650 = vmul.f32 %v649, %v648
        %v651 = vmul.f32 0.5, %v650
        %v652 = vsub.f32 1.5, %v651
        %v653 = vmul.f32 %v648, %v652
        %vm654 = vweird.f32 %v624
        %vm655 = vweird.f32 %v648
        %vm656 = vmor %vm654, %vm655
        %v657 = vsel %vm656, %v648, %v653
        %v658 = vrsqrt.pop %v625
        %v659 = vmul.f32 %v658, %v625
        %v660 = vmul.f32 %v659, %v658
        %v661 = vmul.f32 0.5, %v660
        %v662 = vsub.f32 1.5, %v661
        %v663 = vmul.f32 %v658, %v662
        %vm664 = vweird.f32 %v625
        %vm665 = vweird.f32 %v658
        %vm666 = vmor %vm664, %vm665
        %v667 = vsel %vm666, %v658, %v663
        %v668 = vrsqrt.pop %v626
        %v669 = vmul.f32 %v668, %v626
        %v670 = vmul.f32 %v669, %v668
        %v671 = vmul.f32 0.5, %v670
        %v672 = vsub.f32 1.5, %v671
        %v673 = vmul.f32 %v668, %v672
        %vm674 = vweird.f32 %v626
        %vm675 = vweird.f32 %v668
        %vm676 = vmor %vm674, %vm675
        %v677 = vsel %vm676, %v668, %v673
        %v678 = vrsqrt.pop %v627
        %v679 = vmul.f32 %v678, %v627
        %v680 = vmul.f32 %v679, %v678
        %v681 = vmul.f32 0.5, %v680
        %v682 = vsub.f32 1.5, %v681
        %v683 = vmul.f32 %v678, %v682
        %vm684 = vweird.f32 %v627
        %vm685 = vweird.f32 %v678
        %vm686 = vmor %vm684, %vm685
        %v687 = vsel %vm686, %v678, %v683
        %v688 = vmul.f32 %v586, %v637
        %v689 = vmul.f32 %v587, %v647
        %v690 = vmul.f32 %v588, %v657
        %v691 = vmul.f32 %v589, %v667
        %v692 = vmul.f32 %v590, %v677
        %v693 = vmul.f32 %v591, %v687
        %v694 = vld [vmem:[%s5] sm:$0xff]
        %v695 = vld [vmem:[%s5 + $0x8] sm:$0xff]
        %v696 = vld [vmem:[%s5 + $0x10] sm:$0xff]
        %v697 = vld [vmem:[%s5 + $0x18] sm:$0xff]
        %v698 = vld [vmem:[%s5 + $0x20] sm:$0xff]
        %v699 = vld [vmem:[%s5 + $0x28] sm:$0xff]
        %701 = vset.pattern.permute.xlu0 0
        %702 = vperm.xlu0 %701, %v694
        %v703 = vpop.permute.xlu0 %702
        %706 = vset.pattern.permute.xlu0 0
        %707 = vperm.xlu0 %706, %v695
        %v708 = vpop.permute.xlu0 %707
        %711 = vset.pattern.permute.xlu0 0
        %712 = vperm.xlu0 %711, %v696
        %v713 = vpop.permute.xlu0 %712
        %716 = vset.pattern.permute.xlu0 0
        %717 = vperm.xlu0 %716, %v697
        %v718 = vpop.permute.xlu0 %717
        %721 = vset.pattern.permute.xlu0 0
        %722 = vperm.xlu0 %721, %v698
        %v723 = vpop.permute.xlu0 %722
        %726 = vset.pattern.permute.xlu0 0
        %727 = vperm.xlu0 %726, %v699
        %v728 = vpop.permute.xlu0 %727
        %v730 = vmul.f32 %v688, %v703
        %v731 = vmul.f32 %v689, %v708
        %v732 = vmul.f32 %v690, %v713
        %v733 = vmul.f32 %v691, %v718
        %v734 = vmul.f32 %v692, %v723
        %v735 = vmul.f32 %v693, %v728
        %v736 = vld [vmem:[%s6] sm:$0xff]
        %v737 = vld [vmem:[%s6 + $0x8] sm:$0xff]
        %v738 = vld [vmem:[%s6 + $0x10] sm:$0xff]
        %v739 = vld [vmem:[%s6 + $0x18] sm:$0xff]
        %v740 = vld [vmem:[%s6 + $0x20] sm:$0xff]
        %v741 = vld [vmem:[%s6 + $0x28] sm:$0xff]
        %743 = vset.pattern.permute.xlu0 0
        %744 = vperm.xlu0 %743, %v736
        %v745 = vpop.permute.xlu0 %744
        %748 = vset.pattern.permute.xlu0 0
        %749 = vperm.xlu0 %748, %v737
        %v750 = vpop.permute.xlu0 %749
        %753 = vset.pattern.permute.xlu0 0
        %754 = vperm.xlu0 %753, %v738
        %v755 = vpop.permute.xlu0 %754
        %758 = vset.pattern.permute.xlu0 0
        %759 = vperm.xlu0 %758, %v739
        %v760 = vpop.permute.xlu0 %759
        %763 = vset.pattern.permute.xlu0 0
        %764 = vperm.xlu0 %763, %v740
        %v765 = vpop.permute.xlu0 %764
        %768 = vset.pattern.permute.xlu0 0
        %769 = vperm.xlu0 %768, %v741
        %v770 = vpop.permute.xlu0 %769
        %v772 = vadd.f32 %v730, %v745
        %v773 = vadd.f32 %v731, %v750
        %v774 = vadd.f32 %v732, %v755
        %v775 = vadd.f32 %v733, %v760
        %v776 = vadd.f32 %v734, %v765
        %v777 = vadd.f32 %v735, %v770
        %v778 = vpack.c.bf16 %v772, %v772
        %v779 = vpack.c.bf16 %v773, %v773
        %v780 = vpack.c.bf16 %v774, %v774
        %v781 = vpack.c.bf16 %v775, %v775
        %v782 = vpack.c.bf16 %v776, %v776
        %v783 = vpack.c.bf16 %v777, %v777
        %vm784 = vcmask 60416
        %785 = vst.msk [vmem:[%s326] sm:$0xf] %vm784, %v778
        %786 = vst.msk [vmem:[%s326 + $0x4] sm:$0xf] %vm784, %v779
        %787 = vst.msk [vmem:[%s326 + $0x8] sm:$0xf] %vm784, %v780
        %788 = vst.msk [vmem:[%s326 + $0xc] sm:$0xf] %vm784, %v781
        %789 = vst.msk [vmem:[%s326 + $0x10] sm:$0xf] %vm784, %v782
        %790 = vst.msk [vmem:[%s326 + $0x14] sm:$0xf] %vm784, %v783
        %p791 = scmp.lt.s32.totalorder %s23, 1
        %s792 = scalar_select %p791, %s23, 1
        %p793 = scmp.lt.s32.totalorder %s24, 0
        %s794 = scalar_select %p793, %s24, 0
        %s795 = smul.addr %s792, 6
        %s796 = sadd.s32 %s794, %s795
        %s797 = smul.addr %s796, 4
        %s798 = scalar_lea.vmem %s7, %s797
        // Predicated region
        $region53: #{_lambda_.20} parent=47 // pred_check
          %p799 = pneg %p205
        $region54: #{_lambda_.20} parent=47 // pred_check_branch
          %801 = sbr.rel (%p799) target = $region56
        $region55: #{_lambda_.20} parent=47 // pred_region
          _
        $region56: #{_lambda_.20} parent=47 // pred_fallthru
          _
      $region48: #{_lambda_.20} parent=5 // pred_fallthru
        _
      %p802 = scmp.le.s32.totalorder 2, %s14
      // Predicated region
      $region57: #{_lambda_.20} parent=5 // pred_check
        %p803 = pneg %p802
      $region58: #{_lambda_.20} parent=5 // pred_check_branch
        %805 = sbr.rel (%p803) target = $region60
      $region59: #{_lambda_.20} parent=5 // pred_region
        %s806 = ssub.s32 %s14, 2
        // Predicated region
        $region61: #{_lambda_.20} parent=59 // pred_check
          %p807 = pneg %p211
        $region62: #{_lambda_.20} parent=59 // pred_check_branch
          %809 = sbr.rel (%p807) target = $region64
        $region63: #{_lambda_.20} parent=59 // pred_region
          %p810 = scmp.lt.s32.totalorder %s25, 1
          %s811 = scalar_select %p810, %s25, 1
          %p812 = scmp.lt.s32.totalorder %s26, 0
          %s813 = scalar_select %p812, %s26, 0
          %s814 = smul.addr %s811, 6
          %s815 = sadd.s32 %s813, %s814
          %s816 = smul.addr %s815, 4
          %s817 = scalar_lea.vmem %s7, %s816
        $region64: #{_lambda_.20} parent=59 // pred_fallthru
          _
      $region60: #{_lambda_.20} parent=5 // pred_fallthru
        _
    $region6: #{_lambda_.20} parent=1 // loop_footer
      %s18 = sadd.s32 1, %s14
    $region7: #{_lambda_.20} parent=1 // loop_footer_branch
      %13 = sbr.rel target = $region3
    $region8: #{_lambda_.20} parent=1 // loop_exit
      _
    %818 = vsyncpa [#allocation3], 1
    %s819 = scalar_lea.sflag [#allocation3], 1
    %820 = vsyncpa %s819, 1

</llo_original>
